<compile_context>
chip_gen: v7x
topology: tpu7x:2x2x1
jax: 0.10.0
libtpu: 0.0.40
codegen_flags: <defaults>
</compile_context>

<pallas_src>
import functools
import math

import jax
import jax.numpy as jnp
import numpy as np
from jax.experimental import pallas as pl
from jax.experimental.pallas import tpu as pltpu


def _gelu(x):
    # TODO(synk): PyTorch nn.GELU() is the exact erf-GELU; tanh approximation
    # is used here (guaranteed Mosaic lowering, EUP path), deviation ~1e-3.
    return jax.nn.gelu(x, approximate=True)


def _whole(shape):
    """BlockSpec covering the full array (grid=(1,))."""
    nd = len(shape)
    return pl.BlockSpec(shape, lambda *_: (0,) * nd)


# ----------------------- static (numpy) mask builders -----------------------

def _band_masks_np(B, T, w, g):
    """Dense 'allowed key' masks on the flat [N=B*T] axis (compile-time consts).

    band_w : windowed attention  -- query in window p (non-overlapping, size w)
             attends keys in [p*w - w//2, p*w - w//2 + 2w) of the same batch.
    band_g : long-term attention -- query at within-patch offset j attends all
             keys with the same within-patch offset j in the same batch.
    """
    N = B * T
    tq = np.arange(N)[:, None]
    tk = np.arange(N)[None, :]
    same_b = (tq // T) == (tk // T)
    tql, tkl = tq % T, tk % T
    p = tql // w
    lo = p * w - w // 2
    band_w = same_b & (tkl >= lo) & (tkl < lo + 2 * w)
    band_g = same_b & ((tql % g) == (tkl % g))
    return band_w.astype(np.float32), band_g.astype(np.float32)


def _tap_masks_np(B, T, dilation):
    """Validity masks for the +/-dilation conv taps (zero at batch boundaries)."""
    t = np.arange(B * T) % T
    left = (t >= dilation).astype(np.float32).reshape(1, -1)       # uses x[t-d]
    right = (t < T - dilation).astype(np.float32).reshape(1, -1)   # uses x[t+d]
    return left, right


def _bias_layout(C, H, dhp, ncls, first, last):
    """Row offsets of every bias inside the single stacked [R,1] bias operand."""
    names, sizes = [], []
    if first:
        names.append("in"); sizes.append(C)
    names += ["conv", "wqkv", "wo_w", "lqkv", "wo_l", "lin"]
    sizes += [C, 3 * H * dhp, C, 3 * H * dhp, C, C]
    if last:
        names.append("out"); sizes.append(ncls)
    off, layout = 0, {}
    for n, s in zip(names, sizes):
        layout[n] = (off, s)
        off += s
    return layout, off


# ------------------------------ in-kernel math ------------------------------

def _project_qkv(w, b, x, prev, HD, has_prev):
    """q/k/v projections from the stacked (head-padded) [3*HD, C] weight."""
    if has_prev:
        qk = jnp.dot(w[:2 * HD], x, preferred_element_type=jnp.float32) + b[:2 * HD]
        v = jnp.dot(w[2 * HD:], prev, preferred_element_type=jnp.float32) + b[2 * HD:]
        return qk[:HD], qk[HD:], v
    qkv = jnp.dot(w, x, preferred_element_type=jnp.float32) + b
    return qkv[:HD], qkv[HD:2 * HD], qkv[2 * HD:]


def _banded_attention(q, k, v, allow, scale, nheads, dhp):
    """Dense banded multi-head attention on the flat N axis.

    q, k, v : [nheads*dhp, N]  (channel-major, head blocks 8-aligned)
    allow   : [N, N]  1.0 where key tk is allowed for query tq (band & mask)
    returns : [nheads*dhp, N]
    """
    neg = jnp.float32(-1e9)
    outs = []
    for h in range(nheads):
        sl = slice(h * dhp, (h + 1) * dhp)
        qh_t = jnp.transpose(q[sl])                               # [N, dhp]
        s = jnp.dot(qh_t, k[sl], preferred_element_type=jnp.float32) * scale
        s = jnp.where(allow > 0.0, s, neg)
        s = s - jnp.max(s, axis=1, keepdims=True)
        e = jnp.exp(s)
        p = e / jnp.sum(e, axis=1, keepdims=True)                 # exact divide
        # out[d, tq] = sum_tk v[d, tk] * p[tq, tk]
        outs.append(jnp.einsum("dk,qk->dq", v[sl], p,
                               preferred_element_type=jnp.float32))
    return jnp.concatenate(outs, axis=0)                          # [HD, N]


def _ltc_block_kernel(*refs, first, last, has_prev, dilation, nheads,
                      dh_true, dhp, boff):
    it = iter(refs)
    x_ref = next(it)
    prev_ref = next(it) if has_prev else None
    mask_ref, tapl_ref, tapr_ref = next(it), next(it), next(it)
    bandw_ref, bandg_ref = next(it), next(it)
    win_ref = next(it) if first else None
    wc_ref, wqkv_w_ref, wo_w_ref = next(it), next(it), next(it)
    wqkv_l_ref, wo_l_ref, wl_ref = next(it), next(it), next(it)
    wout_ref = next(it) if last else None
    b_ref = next(it)
    feat_out_ref = next(it)
    logits_ref = next(it) if last else None

    HD = nheads * dhp
    scale = 1.0 / math.sqrt(dh_true)
    N = mask_ref.shape[1]

    mask = mask_ref[...]                                          # [1, N]
    bias = b_ref[...]                                             # [R, 1]

    def bia(name):
        o, n = boff[name]
        return bias[o:o + n]                                      # [n, 1]

    x = x_ref[...]
    if first:  # fused module input_proj (Conv1d k=1)
        feat = jnp.dot(win_ref[...], x, preferred_element_type=jnp.float32) + bia("in")
    else:
        feat = x
    prev = prev_ref[...] if has_prev else None

    # ---- DilatedConv(k=3, dilation) -> GELU -> mask  (no im2col) ----------
    x_m = pltpu.roll(feat, dilation, axis=1) * tapl_ref[...]      # feat[t-d]
    x_p = pltpu.roll(feat, N - dilation, axis=1) * tapr_ref[...]  # feat[t+d]
    xcat = jnp.concatenate([x_m, feat, x_p], axis=0)              # [3C, N]
    d = jnp.dot(wc_ref[...], xcat, preferred_element_type=jnp.float32) + bia("conv")
    d = _gelu(d) * mask

    # ---- WindowedAttention + out_proj + residual ---------------------------
    allow_w = bandw_ref[...] * mask                               # band & key mask
    q, k, v = _project_qkv(wqkv_w_ref[...], bia("wqkv"), d, prev, HD, has_prev)
    aw = _banded_attention(q, k, v, allow_w, scale, nheads, dhp)
    ow = jnp.dot(wo_w_ref[...], _gelu(aw),
                 preferred_element_type=jnp.float32) + bia("wo_w")
    out1 = ow * mask + d

    # ---- LTContextAttention + out_proj + residual ---------------------------
    allow_g = bandg_ref[...] * mask
    q2, k2, v2 = _project_qkv(wqkv_l_ref[...], bia("lqkv"), out1, prev, HD, has_prev)
    al = _banded_attention(q2, k2, v2, allow_g, scale, nheads, dhp)
    ol = jnp.dot(wo_l_ref[...], _gelu(al),
                 preferred_element_type=jnp.float32) + bia("wo_l")
    out2 = out1 + ol * mask

    # ---- out_linear + input residual + mask --------------------------------
    y = jnp.dot(wl_ref[...], out2, preferred_element_type=jnp.float32) + bia("lin")
    feat_new = (y + feat) * mask
    feat_out_ref[...] = feat_new

    if last:  # fused module classifier out_proj (Conv1d k=1) + mask
        logits = jnp.dot(wout_ref[...], feat_new,
                         preferred_element_type=jnp.float32) + bia("out")
        logits_ref[...] = logits * mask


def ltc_block(lp, x_flat, mask_flat, tapl, tapr, band_w, band_g, in_w, out_w,
              prev_flat, cfg, dilation, first, last):
    """One fused pallas_call for a full LTCBlock (+ optional in/out proj)."""
    C = cfg["model_dim"]
    H = cfg["num_heads"]
    dk = C // 2
    dh = dk // H
    dhp = -(-dh // 8) * 8                       # head channels padded to 8
    ncls = cfg["num_classes"]
    N = mask_flat.shape[1]
    has_prev = prev_flat is not None
    boff, _ = _bias_layout(C, H, dhp, ncls, first, last)

    args = [x_flat]
    if has_prev:
        args.append(prev_flat)
    args += [mask_flat, jnp.asarray(tapl), jnp.asarray(tapr),
             jnp.asarray(band_w), jnp.asarray(band_g)]
    if first:
        args.append(in_w)
    args += [lp["wc"], lp["wqkv_w"], lp["wo_w"], lp["wqkv_l"], lp["wo_l"], lp["wl"]]
    if last:
        args.append(out_w)
    args.append(lp["b_all"])

    in_specs = [_whole(a.shape) for a in args]

    feat_shape = jax.ShapeDtypeStruct((C, N), jnp.float32)
    if last:
        out_shape = (feat_shape, jax.ShapeDtypeStruct((ncls, N), jnp.float32))
        out_specs = (_whole((C, N)), _whole((ncls, N)))
    else:
        out_shape = feat_shape
        out_specs = _whole((C, N))

    kernel = functools.partial(
        _ltc_block_kernel, first=first, last=last, has_prev=has_prev,
        dilation=dilation, nheads=H, dh_true=dh, dhp=dhp, boff=boff)

    return pl.pallas_call(
        kernel,
        out_shape=out_shape,
        grid_spec=pltpu.PrefetchScalarGridSpec(
            num_scalar_prefetch=0, grid=(1,),
            in_specs=in_specs, out_specs=out_specs),
        compiler_params=pltpu.CompilerParams(dimension_semantics=("arbitrary",)),
    )(*args)


# ------------------------------- thin XLA glue -------------------------------

def to_flat(x):                       # [B, C, T] -> [C, B*T]
    B, C, T = x.shape
    return x.transpose(1, 0, 2).reshape(C, B * T)


def from_flat(x_flat, B, T):          # [C, B*T] -> [B, C, T]
    C = x_flat.shape[0]
    return x_flat.reshape(C, B, T).transpose(1, 0, 2)


def ltc_module_forward(prepped, inputs, masks, cfg, prev_stage_feat=None):
    B, _, T = inputs.shape
    N = B * T
    x_flat = to_flat(inputs)                                      # [Din, N]
    mask_flat = masks.transpose(1, 0, 2).reshape(1, N)
    prev_flat = to_flat(prev_stage_feat) if prev_stage_feat is not None else None
    band_w, band_g = _band_masks_np(B, T, cfg["windowed_attn_w"],
                                    cfg["long_term_attn_g"])

    n_layers = len(prepped["layers"])
    feat = x_flat
    logits = None
    for i, lp in enumerate(prepped["layers"]):
        first, last = (i == 0), (i == n_layers - 1)
        dilation = cfg["dilation_factor"] ** i
        tapl, tapr = _tap_masks_np(B, T, dilation)
        outs = ltc_block(lp, feat, mask_flat, tapl, tapr, band_w, band_g,
                         prepped["in_w"] if first else None,
                         prepped["out_w"] if last else None,
                         prev_flat, cfg, dilation, first, last)
        if last:
            feat, logits = outs
        else:
            feat = outs
    return from_flat(logits, B, T), from_flat(feat, B, T)


# ----------------------- one-time parameter preparation ----------------------

def _pad_qkv_stack(p, H, dh, dhp):
    """Stack wq/wk/wv (and biases) with per-head zero padding to dhp channels."""
    def pad_w(w):
        if dhp == dh:
            return w
        cin = w.shape[1]
        return jnp.pad(w.reshape(H, dh, cin),
                       ((0, 0), (0, dhp - dh), (0, 0))).reshape(H * dhp, cin)

    def pad_b(b):
        if dhp == dh:
            return b
        return jnp.pad(b.reshape(H, dh), ((0, 0), (0, dhp - dh))).reshape(H * dhp)

    w = jnp.concatenate([pad_w(p["wq"]), pad_w(p["wk"]), pad_w(p["wv"])], axis=0)
    b = jnp.concatenate([pad_b(p["bq"]), pad_b(p["bk"]), pad_b(p["bv"])], axis=0)
    return w, b


def _pad_wo(wo, H, dh, dhp):
    if dhp == dh:
        return wo
    C = wo.shape[0]
    return jnp.pad(wo.reshape(C, H, dh), ((0, 0), (0, 0), (0, dhp - dh))).reshape(C, H * dhp)


def prepare_params(params, cfg):
    """Hoisted (call-once) weight re-layout: conv tap flattening, qkv stacking,
    head padding, and folding of all per-layer biases into one [R,1] operand."""
    C = cfg["model_dim"]
    H = cfg["num_heads"]
    assert C % 8 == 0, "model_dim must be a multiple of 8"
    dk = C // 2
    dh = dk // H
    dhp = -(-dh // 8) * 8
    n_layers = len(params["layers"])

    layers = []
    for i, lp in enumerate(params["layers"]):
        first, last = (i == 0), (i == n_layers - 1)
        wc = jnp.transpose(lp["conv_w"], (1, 0, 2)).reshape(C, 3 * C)
        wqkv_w, bqkv_w = _pad_qkv_stack(lp["wattn"], H, dh, dhp)
        wqkv_l, bqkv_l = _pad_qkv_stack(lp["lattn"], H, dh, dhp)
        pieces = []
        if first:
            pieces.append(params["in_b"])
        pieces += [lp["conv_b"], bqkv_w, lp["wattn"]["bo"], bqkv_l,
                   lp["lattn"]["bo"], lp["out_b"]]
        if last:
            pieces.append(params["out_b"])
        b_all = jnp.concatenate([b.reshape(-1) for b in pieces]).reshape(-1, 1)
        layers.append(dict(
            wc=wc,
            wqkv_w=wqkv_w, wo_w=_pad_wo(lp["wattn"]["wo"], H, dh, dhp),
            wqkv_l=wqkv_l, wo_l=_pad_wo(lp["lattn"]["wo"], H, dh, dhp),
            wl=lp["out_w"], b_all=b_all))
    return dict(in_w=params["in_w"], out_w=params["out_w"], layers=layers)


# ------------------------------ parameter init -------------------------------

def init_params(key, cfg):
    model_dim = cfg["model_dim"]
    dim_kv = model_dim // 2
    keys = iter(jax.random.split(key, 256))

    def w(shape, scale=0.05):
        return scale * jax.random.normal(next(keys), shape, jnp.float32)

    def attn_params():
        return dict(
            wq=w((dim_kv, model_dim)), bq=w((dim_kv,)),
            wk=w((dim_kv, model_dim)), bk=w((dim_kv,)),
            wv=w((dim_kv, model_dim)), bv=w((dim_kv,)),
            wo=w((model_dim, dim_kv)), bo=w((model_dim,)),
        )

    layers = []
    for _ in range(cfg["num_layers"]):
        layers.append(dict(
            conv_w=w((3, model_dim, model_dim)),   # Conv1d k=3 taps on axis 0
            conv_b=w((model_dim,)),
            wattn=attn_params(),
            lattn=attn_params(),
            out_w=w((model_dim, model_dim)),
            out_b=w((model_dim,)),
        ))
    return dict(
        in_w=w((model_dim, cfg["input_dim"])), in_b=w((model_dim,)),
        layers=layers,
        out_w=w((cfg["num_classes"], model_dim)), out_b=w((cfg["num_classes"],)),
    )


# ----------------------------------- main ------------------------------------

if __name__ == "__main__":
    cfg = dict(num_layers=2, input_dim=8, model_dim=32, num_classes=8,
               num_heads=4, dilation_factor=2, windowed_attn_w=8,
               long_term_attn_g=8)

    key = jax.random.PRNGKey(0)
    kp, kx = jax.random.split(key)
    params = init_params(kp, cfg)
    prepped = prepare_params(params, cfg)        # one-time weight re-layout

    B, T = 2, 64
    inputs = jax.random.normal(kx, (B, cfg["input_dim"], T), jnp.float32)
    masks = jnp.ones((B, 1, T), jnp.float32).at[:, :, 59:].set(0.0)

    fwd = jax.jit(lambda p, x, m: ltc_module_forward(p, x, m, cfg))
    out, feature = fwd(prepped, inputs, masks)
    jax.block_until_ready((out, feature))

    assert out.shape == (B, cfg["num_classes"], T)
    assert feature.shape == (B, cfg["model_dim"], T)
    assert bool(jnp.all(jnp.isfinite(out))) and bool(jnp.all(jnp.isfinite(feature)))
    # masked tail positions must be exactly zero (mask is applied in-kernel)
    assert bool(jnp.all(out[:, :, 59:] == 0.0))
    assert bool(jnp.all(feature[:, :, 59:] == 0.0))
    print("KERNEL_OK")
</pallas_src>

<mosaic_0001>
module attributes {stable_mosaic.version = 11 : i64} {
  func.func @_ltc_block_kernel(%arg0: i32, %arg1: memref<8x128xf32, #tpu.memory_space<vmem>>, %arg2: memref<1x128xf32, #tpu.memory_space<vmem>>, %arg3: memref<1x128xf32, #tpu.memory_space<vmem>>, %arg4: memref<1x128xf32, #tpu.memory_space<vmem>>, %arg5: memref<128x128xf32, #tpu.memory_space<vmem>>, %arg6: memref<128x128xf32, #tpu.memory_space<vmem>>, %arg7: memref<32x8xf32, #tpu.memory_space<vmem>>, %arg8: memref<32x96xf32, #tpu.memory_space<vmem>>, %arg9: memref<96x32xf32, #tpu.memory_space<vmem>>, %arg10: memref<32x32xf32, #tpu.memory_space<vmem>>, %arg11: memref<96x32xf32, #tpu.memory_space<vmem>>, %arg12: memref<32x32xf32, #tpu.memory_space<vmem>>, %arg13: memref<32x32xf32, #tpu.memory_space<vmem>>, %arg14: memref<352x1xf32, #tpu.memory_space<vmem>>, %arg15: memref<32x128xf32, #tpu.memory_space<vmem>>) attributes {dimension_semantics = [#tpu.dimension_semantics<arbitrary>], iteration_bounds = array<i64: 1>, scalar_prefetch = 0 : i64, scratch_operands = 0 : i64, tpu.core_type = #tpu.core_type<tc>, window_params = [{pipeline_mode = #tpu.pipeline_mode<synchronous>, transform_indices = @transform_0, window_bounds = array<i64: 8, 128>}, {pipeline_mode = #tpu.pipeline_mode<synchronous>, transform_indices = @transform_1, window_bounds = array<i64: 1, 128>}, {pipeline_mode = #tpu.pipeline_mode<synchronous>, transform_indices = @transform_2, window_bounds = array<i64: 1, 128>}, {pipeline_mode = #tpu.pipeline_mode<synchronous>, transform_indices = @transform_3, window_bounds = array<i64: 1, 128>}, {pipeline_mode = #tpu.pipeline_mode<synchronous>, transform_indices = @transform_4, window_bounds = array<i64: 128, 128>}, {pipeline_mode = #tpu.pipeline_mode<synchronous>, transform_indices = @transform_5, window_bounds = array<i64: 128, 128>}, {pipeline_mode = #tpu.pipeline_mode<synchronous>, transform_indices = @transform_6, window_bounds = array<i64: 32, 8>}, {pipeline_mode = #tpu.pipeline_mode<synchronous>, transform_indices = @transform_7, window_bounds = array<i64: 32, 96>}, {pipeline_mode = #tpu.pipeline_mode<synchronous>, transform_indices = @transform_8, window_bounds = array<i64: 96, 32>}, {pipeline_mode = #tpu.pipeline_mode<synchronous>, transform_indices = @transform_9, window_bounds = array<i64: 32, 32>}, {pipeline_mode = #tpu.pipeline_mode<synchronous>, transform_indices = @transform_10, window_bounds = array<i64: 96, 32>}, {pipeline_mode = #tpu.pipeline_mode<synchronous>, transform_indices = @transform_11, window_bounds = array<i64: 32, 32>}, {pipeline_mode = #tpu.pipeline_mode<synchronous>, transform_indices = @transform_12, window_bounds = array<i64: 32, 32>}, {pipeline_mode = #tpu.pipeline_mode<synchronous>, transform_indices = @transform_13, window_bounds = array<i64: 352, 1>}, {pipeline_mode = #tpu.pipeline_mode<synchronous>, transform_indices = @transform_14, window_bounds = array<i64: 32, 128>}]} {
    %c0 = arith.constant 0 : index
    %c0_0 = arith.constant 0 : index
    %0 = vector.load %arg2[%c0, %c0_0] : memref<1x128xf32, #tpu.memory_space<vmem>>, vector<1x128xf32>
    %c0_1 = arith.constant 0 : index
    %c0_2 = arith.constant 0 : index
    %1 = vector.load %arg14[%c0_1, %c0_2] : memref<352x1xf32, #tpu.memory_space<vmem>>, vector<352x1xf32>
    %c0_3 = arith.constant 0 : index
    %c0_4 = arith.constant 0 : index
    %2 = vector.load %arg1[%c0_3, %c0_4] : memref<8x128xf32, #tpu.memory_space<vmem>>, vector<8x128xf32>
    %c0_5 = arith.constant 0 : index
    %c0_6 = arith.constant 0 : index
    %3 = vector.load %arg7[%c0_5, %c0_6] : memref<32x8xf32, #tpu.memory_space<vmem>>, vector<32x8xf32>
    %cst = arith.constant dense<0.000000e+00> : vector<32x128xf32>
    %4 = tpu.matmul %3, %2, %cst {dimension_numbers = #tpu.dot_dimension_numbers<[1], [0], [0], [1], [0, 0, 1, 1], [], []>} : vector<32x8xf32>, vector<8x128xf32>, vector<32x128xf32> -> vector<32x128xf32>
    %5 = vector.extract_strided_slice %1 {offsets = [0, 0], sizes = [32, 1], strides = [1, 1]} : vector<352x1xf32> to vector<32x1xf32>
    %6 = vector.broadcast %5 : vector<32x1xf32> to vector<32x128xf32>
    %7 = arith.addf %4, %6 : vector<32x128xf32>
    %c1_i32 = arith.constant 1 : i32
    %8 = tpu.dynamic_rotate %7 by %c1_i32 dim 1 : vector<32x128xf32>, i32 -> vector<32x128xf32>
    %c0_7 = arith.constant 0 : index
    %c0_8 = arith.constant 0 : index
    %9 = vector.load %arg3[%c0_7, %c0_8] : memref<1x128xf32, #tpu.memory_space<vmem>>, vector<1x128xf32>
    %10 = vector.broadcast %9 : vector<1x128xf32> to vector<32x128xf32>
    %11 = arith.mulf %8, %10 : vector<32x128xf32>
    %c127_i32 = arith.constant 127 : i32
    %12 = tpu.dynamic_rotate %7 by %c127_i32 dim 1 : vector<32x128xf32>, i32 -> vector<32x128xf32>
    %c0_9 = arith.constant 0 : index
    %c0_10 = arith.constant 0 : index
    %13 = vector.load %arg4[%c0_9, %c0_10] : memref<1x128xf32, #tpu.memory_space<vmem>>, vector<1x128xf32>
    %14 = vector.broadcast %13 : vector<1x128xf32> to vector<32x128xf32>
    %15 = arith.mulf %12, %14 : vector<32x128xf32>
    %16 = tpu.concatenate %11, %7, %15 in 0 : vector<32x128xf32>, vector<32x128xf32>, vector<32x128xf32> -> vector<96x128xf32>
    %c0_11 = arith.constant 0 : index
    %c0_12 = arith.constant 0 : index
    %17 = vector.load %arg8[%c0_11, %c0_12] : memref<32x96xf32, #tpu.memory_space<vmem>>, vector<32x96xf32>
    %cst_13 = arith.constant dense<0.000000e+00> : vector<32x128xf32>
    %18 = tpu.matmul %17, %16, %cst_13 {dimension_numbers = #tpu.dot_dimension_numbers<[1], [0], [0], [1], [0, 0, 1, 1], [], []>} : vector<32x96xf32>, vector<96x128xf32>, vector<32x128xf32> -> vector<32x128xf32>
    %19 = vector.extract_strided_slice %1 {offsets = [32, 0], sizes = [32, 1], strides = [1, 1]} : vector<352x1xf32> to vector<32x1xf32>
    %20 = vector.broadcast %19 : vector<32x1xf32> to vector<32x128xf32>
    %21 = arith.addf %18, %20 : vector<32x128xf32>
    %22 = arith.mulf %21, %21 : vector<32x128xf32>
    %23 = arith.mulf %21, %22 : vector<32x128xf32>
    %cst_14 = arith.constant 4.471500e-02 : f32
    %24 = vector.broadcast %cst_14 : f32 to vector<32x128xf32>
    %25 = arith.mulf %24, %23 : vector<32x128xf32>
    %26 = arith.addf %21, %25 : vector<32x128xf32>
    %cst_15 = arith.constant 0.797884583 : f32
    %27 = vector.broadcast %cst_15 : f32 to vector<32x128xf32>
    %28 = arith.mulf %27, %26 : vector<32x128xf32>
    %29 = math.tanh %28 : vector<32x128xf32>
    %cst_16 = arith.constant 1.000000e+00 : f32
    %30 = vector.broadcast %cst_16 : f32 to vector<32x128xf32>
    %31 = arith.addf %30, %29 : vector<32x128xf32>
    %cst_17 = arith.constant 5.000000e-01 : f32
    %32 = vector.broadcast %cst_17 : f32 to vector<32x128xf32>
    %33 = arith.mulf %32, %31 : vector<32x128xf32>
    %34 = arith.mulf %21, %33 : vector<32x128xf32>
    %35 = vector.broadcast %0 : vector<1x128xf32> to vector<32x128xf32>
    %36 = arith.mulf %34, %35 : vector<32x128xf32>
    %c0_18 = arith.constant 0 : index
    %c0_19 = arith.constant 0 : index
    %37 = vector.load %arg5[%c0_18, %c0_19] : memref<128x128xf32, #tpu.memory_space<vmem>>, vector<128x128xf32>
    %38 = vector.broadcast %0 : vector<1x128xf32> to vector<128x128xf32>
    %39 = arith.mulf %37, %38 : vector<128x128xf32>
    %c0_20 = arith.constant 0 : index
    %c0_21 = arith.constant 0 : index
    %40 = vector.load %arg9[%c0_20, %c0_21] : memref<96x32xf32, #tpu.memory_space<vmem>>, vector<96x32xf32>
    %41 = vector.extract_strided_slice %1 {offsets = [64, 0], sizes = [96, 1], strides = [1, 1]} : vector<352x1xf32> to vector<96x1xf32>
    %cst_22 = arith.constant dense<0.000000e+00> : vector<96x128xf32>
    %42 = tpu.matmul %40, %36, %cst_22 {dimension_numbers = #tpu.dot_dimension_numbers<[1], [0], [0], [1], [0, 0, 1, 1], [], []>} : vector<96x32xf32>, vector<32x128xf32>, vector<96x128xf32> -> vector<96x128xf32>
    %43 = vector.broadcast %41 : vector<96x1xf32> to vector<96x128xf32>
    %44 = arith.addf %42, %43 : vector<96x128xf32>
    %45 = vector.extract_strided_slice %44 {offsets = [0, 0], sizes = [32, 128], strides = [1, 1]} : vector<96x128xf32> to vector<32x128xf32>
    %46 = vector.extract_strided_slice %44 {offsets = [32, 0], sizes = [32, 128], strides = [1, 1]} : vector<96x128xf32> to vector<32x128xf32>
    %47 = vector.extract_strided_slice %44 {offsets = [64, 0], sizes = [32, 128], strides = [1, 1]} : vector<96x128xf32> to vector<32x128xf32>
    %48 = vector.extract_strided_slice %45 {offsets = [0, 0], sizes = [8, 128], strides = [1, 1]} : vector<32x128xf32> to vector<8x128xf32>
    %49 = tpu.transpose %48, [1, 0] : vector<8x128xf32> -> vector<128x8xf32>
    %50 = vector.extract_strided_slice %46 {offsets = [0, 0], sizes = [8, 128], strides = [1, 1]} : vector<32x128xf32> to vector<8x128xf32>
    %cst_23 = arith.constant dense<0.000000e+00> : vector<128x128xf32>
    %51 = tpu.matmul %49, %50, %cst_23 {dimension_numbers = #tpu.dot_dimension_numbers<[1], [0], [0], [1], [0, 0, 1, 1], [], []>} : vector<128x8xf32>, vector<8x128xf32>, vector<128x128xf32> -> vector<128x128xf32>
    %cst_24 = arith.constant 5.000000e-01 : f32
    %52 = vector.broadcast %cst_24 : f32 to vector<128x128xf32>
    %53 = arith.mulf %51, %52 : vector<128x128xf32>
    %cst_25 = arith.constant 0.000000e+00 : f32
    %54 = vector.broadcast %cst_25 : f32 to vector<128x128xf32>
    %55 = arith.cmpf ogt, %39, %54 : vector<128x128xf32>
    %cst_26 = arith.constant -1.000000e+09 : f32
    %56 = vector.broadcast %cst_26 : f32 to vector<128x128xf32>
    %57 = arith.select %55, %53, %56 : vector<128x128xi1>, vector<128x128xf32>
    %cst_27 = arith.constant dense<0xFF800000> : vector<128xf32>
    %58 = vector.multi_reduction <maximumf>, %57, %cst_27 [1] : vector<128x128xf32> to vector<128xf32>
    %59 = vector.shape_cast %58 : vector<128xf32> to vector<128x1xf32>
    %60 = vector.broadcast %59 : vector<128x1xf32> to vector<128x128xf32>
    %61 = arith.subf %57, %60 : vector<128x128xf32>
    %62 = math.exp %61 : vector<128x128xf32>
    %cst_28 = arith.constant dense<0.000000e+00> : vector<128xf32>
    %63 = vector.multi_reduction <add>, %62, %cst_28 [1] : vector<128x128xf32> to vector<128xf32>
    %64 = vector.shape_cast %63 : vector<128xf32> to vector<128x1xf32>
    %65 = vector.broadcast %64 : vector<128x1xf32> to vector<128x128xf32>
    %66 = arith.divf %62, %65 : vector<128x128xf32>
    %67 = vector.extract_strided_slice %47 {offsets = [0, 0], sizes = [8, 128], strides = [1, 1]} : vector<32x128xf32> to vector<8x128xf32>
    "tpu.trace_start"() <{level = 10 : i32, message = "dk,qk->dq"}> : () -> ()
    %cst_29 = arith.constant dense<0.000000e+00> : vector<8x128xf32>
    %68 = tpu.matmul %67, %66, %cst_29 {dimension_numbers = #tpu.dot_dimension_numbers<[1], [1], [0], [0], [0, 0, 1, 0], [], []>} : vector<8x128xf32>, vector<128x128xf32>, vector<8x128xf32> -> vector<8x128xf32>
    "tpu.trace_stop"() : () -> ()
    %69 = vector.extract_strided_slice %45 {offsets = [8, 0], sizes = [8, 128], strides = [1, 1]} : vector<32x128xf32> to vector<8x128xf32>
    %70 = tpu.transpose %69, [1, 0] : vector<8x128xf32> -> vector<128x8xf32>
    %71 = vector.extract_strided_slice %46 {offsets = [8, 0], sizes = [8, 128], strides = [1, 1]} : vector<32x128xf32> to vector<8x128xf32>
    %cst_30 = arith.constant dense<0.000000e+00> : vector<128x128xf32>
    %72 = tpu.matmul %70, %71, %cst_30 {dimension_numbers = #tpu.dot_dimension_numbers<[1], [0], [0], [1], [0, 0, 1, 1], [], []>} : vector<128x8xf32>, vector<8x128xf32>, vector<128x128xf32> -> vector<128x128xf32>
    %cst_31 = arith.constant 5.000000e-01 : f32
    %73 = vector.broadcast %cst_31 : f32 to vector<128x128xf32>
    %74 = arith.mulf %72, %73 : vector<128x128xf32>
    %cst_32 = arith.constant 0.000000e+00 : f32
    %75 = vector.broadcast %cst_32 : f32 to vector<128x128xf32>
    %76 = arith.cmpf ogt, %39, %75 : vector<128x128xf32>
    %cst_33 = arith.constant -1.000000e+09 : f32
    %77 = vector.broadcast %cst_33 : f32 to vector<128x128xf32>
    %78 = arith.select %76, %74, %77 : vector<128x128xi1>, vector<128x128xf32>
    %cst_34 = arith.constant dense<0xFF800000> : vector<128xf32>
    %79 = vector.multi_reduction <maximumf>, %78, %cst_34 [1] : vector<128x128xf32> to vector<128xf32>
    %80 = vector.shape_cast %79 : vector<128xf32> to vector<128x1xf32>
    %81 = vector.broadcast %80 : vector<128x1xf32> to vector<128x128xf32>
    %82 = arith.subf %78, %81 : vector<128x128xf32>
    %83 = math.exp %82 : vector<128x128xf32>
    %cst_35 = arith.constant dense<0.000000e+00> : vector<128xf32>
    %84 = vector.multi_reduction <add>, %83, %cst_35 [1] : vector<128x128xf32> to vector<128xf32>
    %85 = vector.shape_cast %84 : vector<128xf32> to vector<128x1xf32>
    %86 = vector.broadcast %85 : vector<128x1xf32> to vector<128x128xf32>
    %87 = arith.divf %83, %86 : vector<128x128xf32>
    %88 = vector.extract_strided_slice %47 {offsets = [8, 0], sizes = [8, 128], strides = [1, 1]} : vector<32x128xf32> to vector<8x128xf32>
    "tpu.trace_start"() <{level = 10 : i32, message = "dk,qk->dq"}> : () -> ()
    %cst_36 = arith.constant dense<0.000000e+00> : vector<8x128xf32>
    %89 = tpu.matmul %88, %87, %cst_36 {dimension_numbers = #tpu.dot_dimension_numbers<[1], [1], [0], [0], [0, 0, 1, 0], [], []>} : vector<8x128xf32>, vector<128x128xf32>, vector<8x128xf32> -> vector<8x128xf32>
    "tpu.trace_stop"() : () -> ()
    %90 = vector.extract_strided_slice %45 {offsets = [16, 0], sizes = [8, 128], strides = [1, 1]} : vector<32x128xf32> to vector<8x128xf32>
    %91 = tpu.transpose %90, [1, 0] : vector<8x128xf32> -> vector<128x8xf32>
    %92 = vector.extract_strided_slice %46 {offsets = [16, 0], sizes = [8, 128], strides = [1, 1]} : vector<32x128xf32> to vector<8x128xf32>
    %cst_37 = arith.constant dense<0.000000e+00> : vector<128x128xf32>
    %93 = tpu.matmul %91, %92, %cst_37 {dimension_numbers = #tpu.dot_dimension_numbers<[1], [0], [0], [1], [0, 0, 1, 1], [], []>} : vector<128x8xf32>, vector<8x128xf32>, vector<128x128xf32> -> vector<128x128xf32>
    %cst_38 = arith.constant 5.000000e-01 : f32
    %94 = vector.broadcast %cst_38 : f32 to vector<128x128xf32>
    %95 = arith.mulf %93, %94 : vector<128x128xf32>
    %cst_39 = arith.constant 0.000000e+00 : f32
    %96 = vector.broadcast %cst_39 : f32 to vector<128x128xf32>
    %97 = arith.cmpf ogt, %39, %96 : vector<128x128xf32>
    %cst_40 = arith.constant -1.000000e+09 : f32
    %98 = vector.broadcast %cst_40 : f32 to vector<128x128xf32>
    %99 = arith.select %97, %95, %98 : vector<128x128xi1>, vector<128x128xf32>
    %cst_41 = arith.constant dense<0xFF800000> : vector<128xf32>
    %100 = vector.multi_reduction <maximumf>, %99, %cst_41 [1] : vector<128x128xf32> to vector<128xf32>
    %101 = vector.shape_cast %100 : vector<128xf32> to vector<128x1xf32>
    %102 = vector.broadcast %101 : vector<128x1xf32> to vector<128x128xf32>
    %103 = arith.subf %99, %102 : vector<128x128xf32>
    %104 = math.exp %103 : vector<128x128xf32>
    %cst_42 = arith.constant dense<0.000000e+00> : vector<128xf32>
    %105 = vector.multi_reduction <add>, %104, %cst_42 [1] : vector<128x128xf32> to vector<128xf32>
    %106 = vector.shape_cast %105 : vector<128xf32> to vector<128x1xf32>
    %107 = vector.broadcast %106 : vector<128x1xf32> to vector<128x128xf32>
    %108 = arith.divf %104, %107 : vector<128x128xf32>
    %109 = vector.extract_strided_slice %47 {offsets = [16, 0], sizes = [8, 128], strides = [1, 1]} : vector<32x128xf32> to vector<8x128xf32>
    "tpu.trace_start"() <{level = 10 : i32, message = "dk,qk->dq"}> : () -> ()
    %cst_43 = arith.constant dense<0.000000e+00> : vector<8x128xf32>
    %110 = tpu.matmul %109, %108, %cst_43 {dimension_numbers = #tpu.dot_dimension_numbers<[1], [1], [0], [0], [0, 0, 1, 0], [], []>} : vector<8x128xf32>, vector<128x128xf32>, vector<8x128xf32> -> vector<8x128xf32>
    "tpu.trace_stop"() : () -> ()
    %111 = vector.extract_strided_slice %45 {offsets = [24, 0], sizes = [8, 128], strides = [1, 1]} : vector<32x128xf32> to vector<8x128xf32>
    %112 = tpu.transpose %111, [1, 0] : vector<8x128xf32> -> vector<128x8xf32>
    %113 = vector.extract_strided_slice %46 {offsets = [24, 0], sizes = [8, 128], strides = [1, 1]} : vector<32x128xf32> to vector<8x128xf32>
    %cst_44 = arith.constant dense<0.000000e+00> : vector<128x128xf32>
    %114 = tpu.matmul %112, %113, %cst_44 {dimension_numbers = #tpu.dot_dimension_numbers<[1], [0], [0], [1], [0, 0, 1, 1], [], []>} : vector<128x8xf32>, vector<8x128xf32>, vector<128x128xf32> -> vector<128x128xf32>
    %cst_45 = arith.constant 5.000000e-01 : f32
    %115 = vector.broadcast %cst_45 : f32 to vector<128x128xf32>
    %116 = arith.mulf %114, %115 : vector<128x128xf32>
    %cst_46 = arith.constant 0.000000e+00 : f32
    %117 = vector.broadcast %cst_46 : f32 to vector<128x128xf32>
    %118 = arith.cmpf ogt, %39, %117 : vector<128x128xf32>
    %cst_47 = arith.constant -1.000000e+09 : f32
    %119 = vector.broadcast %cst_47 : f32 to vector<128x128xf32>
    %120 = arith.select %118, %116, %119 : vector<128x128xi1>, vector<128x128xf32>
    %cst_48 = arith.constant dense<0xFF800000> : vector<128xf32>
    %121 = vector.multi_reduction <maximumf>, %120, %cst_48 [1] : vector<128x128xf32> to vector<128xf32>
    %122 = vector.shape_cast %121 : vector<128xf32> to vector<128x1xf32>
    %123 = vector.broadcast %122 : vector<128x1xf32> to vector<128x128xf32>
    %124 = arith.subf %120, %123 : vector<128x128xf32>
    %125 = math.exp %124 : vector<128x128xf32>
    %cst_49 = arith.constant dense<0.000000e+00> : vector<128xf32>
    %126 = vector.multi_reduction <add>, %125, %cst_49 [1] : vector<128x128xf32> to vector<128xf32>
    %127 = vector.shape_cast %126 : vector<128xf32> to vector<128x1xf32>
    %128 = vector.broadcast %127 : vector<128x1xf32> to vector<128x128xf32>
    %129 = arith.divf %125, %128 : vector<128x128xf32>
    %130 = vector.extract_strided_slice %47 {offsets = [24, 0], sizes = [8, 128], strides = [1, 1]} : vector<32x128xf32> to vector<8x128xf32>
    "tpu.trace_start"() <{level = 10 : i32, message = "dk,qk->dq"}> : () -> ()
    %cst_50 = arith.constant dense<0.000000e+00> : vector<8x128xf32>
    %131 = tpu.matmul %130, %129, %cst_50 {dimension_numbers = #tpu.dot_dimension_numbers<[1], [1], [0], [0], [0, 0, 1, 0], [], []>} : vector<8x128xf32>, vector<128x128xf32>, vector<8x128xf32> -> vector<8x128xf32>
    "tpu.trace_stop"() : () -> ()
    %132 = tpu.concatenate %68, %89, %110, %131 in 0 : vector<8x128xf32>, vector<8x128xf32>, vector<8x128xf32>, vector<8x128xf32> -> vector<32x128xf32>
    %c0_51 = arith.constant 0 : index
    %c0_52 = arith.constant 0 : index
    %133 = vector.load %arg10[%c0_51, %c0_52] : memref<32x32xf32, #tpu.memory_space<vmem>>, vector<32x32xf32>
    %134 = arith.mulf %132, %132 : vector<32x128xf32>
    %135 = arith.mulf %132, %134 : vector<32x128xf32>
    %cst_53 = arith.constant 4.471500e-02 : f32
    %136 = vector.broadcast %cst_53 : f32 to vector<32x128xf32>
    %137 = arith.mulf %136, %135 : vector<32x128xf32>
    %138 = arith.addf %132, %137 : vector<32x128xf32>
    %cst_54 = arith.constant 0.797884583 : f32
    %139 = vector.broadcast %cst_54 : f32 to vector<32x128xf32>
    %140 = arith.mulf %139, %138 : vector<32x128xf32>
    %141 = math.tanh %140 : vector<32x128xf32>
    %cst_55 = arith.constant 1.000000e+00 : f32
    %142 = vector.broadcast %cst_55 : f32 to vector<32x128xf32>
    %143 = arith.addf %142, %141 : vector<32x128xf32>
    %cst_56 = arith.constant 5.000000e-01 : f32
    %144 = vector.broadcast %cst_56 : f32 to vector<32x128xf32>
    %145 = arith.mulf %144, %143 : vector<32x128xf32>
    %146 = arith.mulf %132, %145 : vector<32x128xf32>
    %cst_57 = arith.constant dense<0.000000e+00> : vector<32x128xf32>
    %147 = tpu.matmul %133, %146, %cst_57 {dimension_numbers = #tpu.dot_dimension_numbers<[1], [0], [0], [1], [0, 0, 1, 1], [], []>} : vector<32x32xf32>, vector<32x128xf32>, vector<32x128xf32> -> vector<32x128xf32>
    %148 = vector.extract_strided_slice %1 {offsets = [160, 0], sizes = [32, 1], strides = [1, 1]} : vector<352x1xf32> to vector<32x1xf32>
    %149 = vector.broadcast %148 : vector<32x1xf32> to vector<32x128xf32>
    %150 = arith.addf %147, %149 : vector<32x128xf32>
    %151 = vector.broadcast %0 : vector<1x128xf32> to vector<32x128xf32>
    %152 = arith.mulf %150, %151 : vector<32x128xf32>
    %153 = arith.addf %152, %36 : vector<32x128xf32>
    %c0_58 = arith.constant 0 : index
    %c0_59 = arith.constant 0 : index
    %154 = vector.load %arg6[%c0_58, %c0_59] : memref<128x128xf32, #tpu.memory_space<vmem>>, vector<128x128xf32>
    %155 = vector.broadcast %0 : vector<1x128xf32> to vector<128x128xf32>
    %156 = arith.mulf %154, %155 : vector<128x128xf32>
    %c0_60 = arith.constant 0 : index
    %c0_61 = arith.constant 0 : index
    %157 = vector.load %arg11[%c0_60, %c0_61] : memref<96x32xf32, #tpu.memory_space<vmem>>, vector<96x32xf32>
    %158 = vector.extract_strided_slice %1 {offsets = [192, 0], sizes = [96, 1], strides = [1, 1]} : vector<352x1xf32> to vector<96x1xf32>
    %cst_62 = arith.constant dense<0.000000e+00> : vector<96x128xf32>
    %159 = tpu.matmul %157, %153, %cst_62 {dimension_numbers = #tpu.dot_dimension_numbers<[1], [0], [0], [1], [0, 0, 1, 1], [], []>} : vector<96x32xf32>, vector<32x128xf32>, vector<96x128xf32> -> vector<96x128xf32>
    %160 = vector.broadcast %158 : vector<96x1xf32> to vector<96x128xf32>
    %161 = arith.addf %159, %160 : vector<96x128xf32>
    %162 = vector.extract_strided_slice %161 {offsets = [0, 0], sizes = [32, 128], strides = [1, 1]} : vector<96x128xf32> to vector<32x128xf32>
    %163 = vector.extract_strided_slice %161 {offsets = [32, 0], sizes = [32, 128], strides = [1, 1]} : vector<96x128xf32> to vector<32x128xf32>
    %164 = vector.extract_strided_slice %161 {offsets = [64, 0], sizes = [32, 128], strides = [1, 1]} : vector<96x128xf32> to vector<32x128xf32>
    %165 = vector.extract_strided_slice %162 {offsets = [0, 0], sizes = [8, 128], strides = [1, 1]} : vector<32x128xf32> to vector<8x128xf32>
    %166 = tpu.transpose %165, [1, 0] : vector<8x128xf32> -> vector<128x8xf32>
    %167 = vector.extract_strided_slice %163 {offsets = [0, 0], sizes = [8, 128], strides = [1, 1]} : vector<32x128xf32> to vector<8x128xf32>
    %cst_63 = arith.constant dense<0.000000e+00> : vector<128x128xf32>
    %168 = tpu.matmul %166, %167, %cst_63 {dimension_numbers = #tpu.dot_dimension_numbers<[1], [0], [0], [1], [0, 0, 1, 1], [], []>} : vector<128x8xf32>, vector<8x128xf32>, vector<128x128xf32> -> vector<128x128xf32>
    %cst_64 = arith.constant 5.000000e-01 : f32
    %169 = vector.broadcast %cst_64 : f32 to vector<128x128xf32>
    %170 = arith.mulf %168, %169 : vector<128x128xf32>
    %cst_65 = arith.constant 0.000000e+00 : f32
    %171 = vector.broadcast %cst_65 : f32 to vector<128x128xf32>
    %172 = arith.cmpf ogt, %156, %171 : vector<128x128xf32>
    %cst_66 = arith.constant -1.000000e+09 : f32
    %173 = vector.broadcast %cst_66 : f32 to vector<128x128xf32>
    %174 = arith.select %172, %170, %173 : vector<128x128xi1>, vector<128x128xf32>
    %cst_67 = arith.constant dense<0xFF800000> : vector<128xf32>
    %175 = vector.multi_reduction <maximumf>, %174, %cst_67 [1] : vector<128x128xf32> to vector<128xf32>
    %176 = vector.shape_cast %175 : vector<128xf32> to vector<128x1xf32>
    %177 = vector.broadcast %176 : vector<128x1xf32> to vector<128x128xf32>
    %178 = arith.subf %174, %177 : vector<128x128xf32>
    %179 = math.exp %178 : vector<128x128xf32>
    %cst_68 = arith.constant dense<0.000000e+00> : vector<128xf32>
    %180 = vector.multi_reduction <add>, %179, %cst_68 [1] : vector<128x128xf32> to vector<128xf32>
    %181 = vector.shape_cast %180 : vector<128xf32> to vector<128x1xf32>
    %182 = vector.broadcast %181 : vector<128x1xf32> to vector<128x128xf32>
    %183 = arith.divf %179, %182 : vector<128x128xf32>
    %184 = vector.extract_strided_slice %164 {offsets = [0, 0], sizes = [8, 128], strides = [1, 1]} : vector<32x128xf32> to vector<8x128xf32>
    "tpu.trace_start"() <{level = 10 : i32, message = "dk,qk->dq"}> : () -> ()
    %cst_69 = arith.constant dense<0.000000e+00> : vector<8x128xf32>
    %185 = tpu.matmul %184, %183, %cst_69 {dimension_numbers = #tpu.dot_dimension_numbers<[1], [1], [0], [0], [0, 0, 1, 0], [], []>} : vector<8x128xf32>, vector<128x128xf32>, vector<8x128xf32> -> vector<8x128xf32>
    "tpu.trace_stop"() : () -> ()
    %186 = vector.extract_strided_slice %162 {offsets = [8, 0], sizes = [8, 128], strides = [1, 1]} : vector<32x128xf32> to vector<8x128xf32>
    %187 = tpu.transpose %186, [1, 0] : vector<8x128xf32> -> vector<128x8xf32>
    %188 = vector.extract_strided_slice %163 {offsets = [8, 0], sizes = [8, 128], strides = [1, 1]} : vector<32x128xf32> to vector<8x128xf32>
    %cst_70 = arith.constant dense<0.000000e+00> : vector<128x128xf32>
    %189 = tpu.matmul %187, %188, %cst_70 {dimension_numbers = #tpu.dot_dimension_numbers<[1], [0], [0], [1], [0, 0, 1, 1], [], []>} : vector<128x8xf32>, vector<8x128xf32>, vector<128x128xf32> -> vector<128x128xf32>
    %cst_71 = arith.constant 5.000000e-01 : f32
    %190 = vector.broadcast %cst_71 : f32 to vector<128x128xf32>
    %191 = arith.mulf %189, %190 : vector<128x128xf32>
    %cst_72 = arith.constant 0.000000e+00 : f32
    %192 = vector.broadcast %cst_72 : f32 to vector<128x128xf32>
    %193 = arith.cmpf ogt, %156, %192 : vector<128x128xf32>
    %cst_73 = arith.constant -1.000000e+09 : f32
    %194 = vector.broadcast %cst_73 : f32 to vector<128x128xf32>
    %195 = arith.select %193, %191, %194 : vector<128x128xi1>, vector<128x128xf32>
    %cst_74 = arith.constant dense<0xFF800000> : vector<128xf32>
    %196 = vector.multi_reduction <maximumf>, %195, %cst_74 [1] : vector<128x128xf32> to vector<128xf32>
    %197 = vector.shape_cast %196 : vector<128xf32> to vector<128x1xf32>
    %198 = vector.broadcast %197 : vector<128x1xf32> to vector<128x128xf32>
    %199 = arith.subf %195, %198 : vector<128x128xf32>
    %200 = math.exp %199 : vector<128x128xf32>
    %cst_75 = arith.constant dense<0.000000e+00> : vector<128xf32>
    %201 = vector.multi_reduction <add>, %200, %cst_75 [1] : vector<128x128xf32> to vector<128xf32>
    %202 = vector.shape_cast %201 : vector<128xf32> to vector<128x1xf32>
    %203 = vector.broadcast %202 : vector<128x1xf32> to vector<128x128xf32>
    %204 = arith.divf %200, %203 : vector<128x128xf32>
    %205 = vector.extract_strided_slice %164 {offsets = [8, 0], sizes = [8, 128], strides = [1, 1]} : vector<32x128xf32> to vector<8x128xf32>
    "tpu.trace_start"() <{level = 10 : i32, message = "dk,qk->dq"}> : () -> ()
    %cst_76 = arith.constant dense<0.000000e+00> : vector<8x128xf32>
    %206 = tpu.matmul %205, %204, %cst_76 {dimension_numbers = #tpu.dot_dimension_numbers<[1], [1], [0], [0], [0, 0, 1, 0], [], []>} : vector<8x128xf32>, vector<128x128xf32>, vector<8x128xf32> -> vector<8x128xf32>
    "tpu.trace_stop"() : () -> ()
    %207 = vector.extract_strided_slice %162 {offsets = [16, 0], sizes = [8, 128], strides = [1, 1]} : vector<32x128xf32> to vector<8x128xf32>
    %208 = tpu.transpose %207, [1, 0] : vector<8x128xf32> -> vector<128x8xf32>
    %209 = vector.extract_strided_slice %163 {offsets = [16, 0], sizes = [8, 128], strides = [1, 1]} : vector<32x128xf32> to vector<8x128xf32>
    %cst_77 = arith.constant dense<0.000000e+00> : vector<128x128xf32>
    %210 = tpu.matmul %208, %209, %cst_77 {dimension_numbers = #tpu.dot_dimension_numbers<[1], [0], [0], [1], [0, 0, 1, 1], [], []>} : vector<128x8xf32>, vector<8x128xf32>, vector<128x128xf32> -> vector<128x128xf32>
    %cst_78 = arith.constant 5.000000e-01 : f32
    %211 = vector.broadcast %cst_78 : f32 to vector<128x128xf32>
    %212 = arith.mulf %210, %211 : vector<128x128xf32>
    %cst_79 = arith.constant 0.000000e+00 : f32
    %213 = vector.broadcast %cst_79 : f32 to vector<128x128xf32>
    %214 = arith.cmpf ogt, %156, %213 : vector<128x128xf32>
    %cst_80 = arith.constant -1.000000e+09 : f32
    %215 = vector.broadcast %cst_80 : f32 to vector<128x128xf32>
    %216 = arith.select %214, %212, %215 : vector<128x128xi1>, vector<128x128xf32>
    %cst_81 = arith.constant dense<0xFF800000> : vector<128xf32>
    %217 = vector.multi_reduction <maximumf>, %216, %cst_81 [1] : vector<128x128xf32> to vector<128xf32>
    %218 = vector.shape_cast %217 : vector<128xf32> to vector<128x1xf32>
    %219 = vector.broadcast %218 : vector<128x1xf32> to vector<128x128xf32>
    %220 = arith.subf %216, %219 : vector<128x128xf32>
    %221 = math.exp %220 : vector<128x128xf32>
    %cst_82 = arith.constant dense<0.000000e+00> : vector<128xf32>
    %222 = vector.multi_reduction <add>, %221, %cst_82 [1] : vector<128x128xf32> to vector<128xf32>
    %223 = vector.shape_cast %222 : vector<128xf32> to vector<128x1xf32>
    %224 = vector.broadcast %223 : vector<128x1xf32> to vector<128x128xf32>
    %225 = arith.divf %221, %224 : vector<128x128xf32>
    %226 = vector.extract_strided_slice %164 {offsets = [16, 0], sizes = [8, 128], strides = [1, 1]} : vector<32x128xf32> to vector<8x128xf32>
    "tpu.trace_start"() <{level = 10 : i32, message = "dk,qk->dq"}> : () -> ()
    %cst_83 = arith.constant dense<0.000000e+00> : vector<8x128xf32>
    %227 = tpu.matmul %226, %225, %cst_83 {dimension_numbers = #tpu.dot_dimension_numbers<[1], [1], [0], [0], [0, 0, 1, 0], [], []>} : vector<8x128xf32>, vector<128x128xf32>, vector<8x128xf32> -> vector<8x128xf32>
    "tpu.trace_stop"() : () -> ()
    %228 = vector.extract_strided_slice %162 {offsets = [24, 0], sizes = [8, 128], strides = [1, 1]} : vector<32x128xf32> to vector<8x128xf32>
    %229 = tpu.transpose %228, [1, 0] : vector<8x128xf32> -> vector<128x8xf32>
    %230 = vector.extract_strided_slice %163 {offsets = [24, 0], sizes = [8, 128], strides = [1, 1]} : vector<32x128xf32> to vector<8x128xf32>
    %cst_84 = arith.constant dense<0.000000e+00> : vector<128x128xf32>
    %231 = tpu.matmul %229, %230, %cst_84 {dimension_numbers = #tpu.dot_dimension_numbers<[1], [0], [0], [1], [0, 0, 1, 1], [], []>} : vector<128x8xf32>, vector<8x128xf32>, vector<128x128xf32> -> vector<128x128xf32>
    %cst_85 = arith.constant 5.000000e-01 : f32
    %232 = vector.broadcast %cst_85 : f32 to vector<128x128xf32>
    %233 = arith.mulf %231, %232 : vector<128x128xf32>
    %cst_86 = arith.constant 0.000000e+00 : f32
    %234 = vector.broadcast %cst_86 : f32 to vector<128x128xf32>
    %235 = arith.cmpf ogt, %156, %234 : vector<128x128xf32>
    %cst_87 = arith.constant -1.000000e+09 : f32
    %236 = vector.broadcast %cst_87 : f32 to vector<128x128xf32>
    %237 = arith.select %235, %233, %236 : vector<128x128xi1>, vector<128x128xf32>
    %cst_88 = arith.constant dense<0xFF800000> : vector<128xf32>
    %238 = vector.multi_reduction <maximumf>, %237, %cst_88 [1] : vector<128x128xf32> to vector<128xf32>
    %239 = vector.shape_cast %238 : vector<128xf32> to vector<128x1xf32>
    %240 = vector.broadcast %239 : vector<128x1xf32> to vector<128x128xf32>
    %241 = arith.subf %237, %240 : vector<128x128xf32>
    %242 = math.exp %241 : vector<128x128xf32>
    %cst_89 = arith.constant dense<0.000000e+00> : vector<128xf32>
    %243 = vector.multi_reduction <add>, %242, %cst_89 [1] : vector<128x128xf32> to vector<128xf32>
    %244 = vector.shape_cast %243 : vector<128xf32> to vector<128x1xf32>
    %245 = vector.broadcast %244 : vector<128x1xf32> to vector<128x128xf32>
    %246 = arith.divf %242, %245 : vector<128x128xf32>
    %247 = vector.extract_strided_slice %164 {offsets = [24, 0], sizes = [8, 128], strides = [1, 1]} : vector<32x128xf32> to vector<8x128xf32>
    "tpu.trace_start"() <{level = 10 : i32, message = "dk,qk->dq"}> : () -> ()
    %cst_90 = arith.constant dense<0.000000e+00> : vector<8x128xf32>
    %248 = tpu.matmul %247, %246, %cst_90 {dimension_numbers = #tpu.dot_dimension_numbers<[1], [1], [0], [0], [0, 0, 1, 0], [], []>} : vector<8x128xf32>, vector<128x128xf32>, vector<8x128xf32> -> vector<8x128xf32>
    "tpu.trace_stop"() : () -> ()
    %249 = tpu.concatenate %185, %206, %227, %248 in 0 : vector<8x128xf32>, vector<8x128xf32>, vector<8x128xf32>, vector<8x128xf32> -> vector<32x128xf32>
    %c0_91 = arith.constant 0 : index
    %c0_92 = arith.constant 0 : index
    %250 = vector.load %arg12[%c0_91, %c0_92] : memref<32x32xf32, #tpu.memory_space<vmem>>, vector<32x32xf32>
    %251 = arith.mulf %249, %249 : vector<32x128xf32>
    %252 = arith.mulf %249, %251 : vector<32x128xf32>
    %cst_93 = arith.constant 4.471500e-02 : f32
    %253 = vector.broadcast %cst_93 : f32 to vector<32x128xf32>
    %254 = arith.mulf %253, %252 : vector<32x128xf32>
    %255 = arith.addf %249, %254 : vector<32x128xf32>
    %cst_94 = arith.constant 0.797884583 : f32
    %256 = vector.broadcast %cst_94 : f32 to vector<32x128xf32>
    %257 = arith.mulf %256, %255 : vector<32x128xf32>
    %258 = math.tanh %257 : vector<32x128xf32>
    %cst_95 = arith.constant 1.000000e+00 : f32
    %259 = vector.broadcast %cst_95 : f32 to vector<32x128xf32>
    %260 = arith.addf %259, %258 : vector<32x128xf32>
    %cst_96 = arith.constant 5.000000e-01 : f32
    %261 = vector.broadcast %cst_96 : f32 to vector<32x128xf32>
    %262 = arith.mulf %261, %260 : vector<32x128xf32>
    %263 = arith.mulf %249, %262 : vector<32x128xf32>
    %cst_97 = arith.constant dense<0.000000e+00> : vector<32x128xf32>
    %264 = tpu.matmul %250, %263, %cst_97 {dimension_numbers = #tpu.dot_dimension_numbers<[1], [0], [0], [1], [0, 0, 1, 1], [], []>} : vector<32x32xf32>, vector<32x128xf32>, vector<32x128xf32> -> vector<32x128xf32>
    %265 = vector.extract_strided_slice %1 {offsets = [288, 0], sizes = [32, 1], strides = [1, 1]} : vector<352x1xf32> to vector<32x1xf32>
    %266 = vector.broadcast %265 : vector<32x1xf32> to vector<32x128xf32>
    %267 = arith.addf %264, %266 : vector<32x128xf32>
    %268 = vector.broadcast %0 : vector<1x128xf32> to vector<32x128xf32>
    %269 = arith.mulf %267, %268 : vector<32x128xf32>
    %270 = arith.addf %153, %269 : vector<32x128xf32>
    %c0_98 = arith.constant 0 : index
    %c0_99 = arith.constant 0 : index
    %271 = vector.load %arg13[%c0_98, %c0_99] : memref<32x32xf32, #tpu.memory_space<vmem>>, vector<32x32xf32>
    %cst_100 = arith.constant dense<0.000000e+00> : vector<32x128xf32>
    %272 = tpu.matmul %271, %270, %cst_100 {dimension_numbers = #tpu.dot_dimension_numbers<[1], [0], [0], [1], [0, 0, 1, 1], [], []>} : vector<32x32xf32>, vector<32x128xf32>, vector<32x128xf32> -> vector<32x128xf32>
    %273 = vector.extract_strided_slice %1 {offsets = [320, 0], sizes = [32, 1], strides = [1, 1]} : vector<352x1xf32> to vector<32x1xf32>
    %274 = vector.broadcast %273 : vector<32x1xf32> to vector<32x128xf32>
    %275 = arith.addf %272, %274 : vector<32x128xf32>
    %276 = arith.addf %275, %7 : vector<32x128xf32>
    %277 = vector.broadcast %0 : vector<1x128xf32> to vector<32x128xf32>
    %278 = arith.mulf %276, %277 : vector<32x128xf32>
    %c0_101 = arith.constant 0 : index
    %c0_102 = arith.constant 0 : index
    %279 = vector.load %arg15[%c0_101, %c0_102] : memref<32x128xf32, #tpu.memory_space<vmem>>, vector<32x128xf32>
    tpu.vector_store %arg15[%c0_101, %c0_102], %278 {strides = array<i32>} : memref<32x128xf32, #tpu.memory_space<vmem>>, vector<32x128xf32>,
    return
  }
  func.func @transform_0(%arg0: i32) -> (i32, i32) {
    %c0_i32 = arith.constant 0 : i32
    %c0_i32_0 = arith.constant 0 : i32
    %c0_i32_1 = arith.constant 0 : i32
    return %c0_i32, %c0_i32_0 : i32, i32
  }
  func.func @transform_1(%arg0: i32) -> (i32, i32) {
    %c0_i32 = arith.constant 0 : i32
    %c0_i32_0 = arith.constant 0 : i32
    %c0_i32_1 = arith.constant 0 : i32
    return %c0_i32, %c0_i32_0 : i32, i32
  }
  func.func @transform_2(%arg0: i32) -> (i32, i32) {
    %c0_i32 = arith.constant 0 : i32
    %c0_i32_0 = arith.constant 0 : i32
    %c0_i32_1 = arith.constant 0 : i32
    return %c0_i32, %c0_i32_0 : i32, i32
  }
  func.func @transform_3(%arg0: i32) -> (i32, i32) {
    %c0_i32 = arith.constant 0 : i32
    %c0_i32_0 = arith.constant 0 : i32
    %c0_i32_1 = arith.constant 0 : i32
    return %c0_i32, %c0_i32_0 : i32, i32
  }
  func.func @transform_4(%arg0: i32) -> (i32, i32) {
    %c0_i32 = arith.constant 0 : i32
    %c0_i32_0 = arith.constant 0 : i32
    %c0_i32_1 = arith.constant 0 : i32
    return %c0_i32, %c0_i32_0 : i32, i32
  }
  func.func @transform_5(%arg0: i32) -> (i32, i32) {
    %c0_i32 = arith.constant 0 : i32
    %c0_i32_0 = arith.constant 0 : i32
    %c0_i32_1 = arith.constant 0 : i32
    return %c0_i32, %c0_i32_0 : i32, i32
  }
  func.func @transform_6(%arg0: i32) -> (i32, i32) {
    %c0_i32 = arith.constant 0 : i32
    %c0_i32_0 = arith.constant 0 : i32
    %c0_i32_1 = arith.constant 0 : i32
    return %c0_i32, %c0_i32_0 : i32, i32
  }
  func.func @transform_7(%arg0: i32) -> (i32, i32) {
    %c0_i32 = arith.constant 0 : i32
    %c0_i32_0 = arith.constant 0 : i32
    %c0_i32_1 = arith.constant 0 : i32
    return %c0_i32, %c0_i32_0 : i32, i32
  }
  func.func @transform_8(%arg0: i32) -> (i32, i32) {
    %c0_i32 = arith.constant 0 : i32
    %c0_i32_0 = arith.constant 0 : i32
    %c0_i32_1 = arith.constant 0 : i32
    return %c0_i32, %c0_i32_0 : i32, i32
  }
  func.func @transform_9(%arg0: i32) -> (i32, i32) {
    %c0_i32 = arith.constant 0 : i32
    %c0_i32_0 = arith.constant 0 : i32
    %c0_i32_1 = arith.constant 0 : i32
    return %c0_i32, %c0_i32_0 : i32, i32
  }
  func.func @transform_10(%arg0: i32) -> (i32, i32) {
    %c0_i32 = arith.constant 0 : i32
    %c0_i32_0 = arith.constant 0 : i32
    %c0_i32_1 = arith.constant 0 : i32
    return %c0_i32, %c0_i32_0 : i32, i32
  }
  func.func @transform_11(%arg0: i32) -> (i32, i32) {
    %c0_i32 = arith.constant 0 : i32
    %c0_i32_0 = arith.constant 0 : i32
    %c0_i32_1 = arith.constant 0 : i32
    return %c0_i32, %c0_i32_0 : i32, i32
  }
  func.func @transform_12(%arg0: i32) -> (i32, i32) {
    %c0_i32 = arith.constant 0 : i32
    %c0_i32_0 = arith.constant 0 : i32
    %c0_i32_1 = arith.constant 0 : i32
    return %c0_i32, %c0_i32_0 : i32, i32
  }
  func.func @transform_13(%arg0: i32) -> (i32, i32) {
    %c0_i32 = arith.constant 0 : i32
    %c0_i32_0 = arith.constant 0 : i32
    %c0_i32_1 = arith.constant 0 : i32
    return %c0_i32, %c0_i32_0 : i32, i32
  }
  func.func @transform_14(%arg0: i32) -> (i32, i32) {
    %c0_i32 = arith.constant 0 : i32
    %c0_i32_0 = arith.constant 0 : i32
    %c0_i32_1 = arith.constant 0 : i32
    return %c0_i32, %c0_i32_0 : i32, i32
  }
}

module attributes {stable_mosaic.version = 11 : i64} {
  func.func @_ltc_block_kernel(%arg0: i32, %arg1: memref<32x128xf32, #tpu.memory_space<vmem>>, %arg2: memref<1x128xf32, #tpu.memory_space<vmem>>, %arg3: memref<1x128xf32, #tpu.memory_space<vmem>>, %arg4: memref<1x128xf32, #tpu.memory_space<vmem>>, %arg5: memref<128x128xf32, #tpu.memory_space<vmem>>, %arg6: memref<128x128xf32, #tpu.memory_space<vmem>>, %arg7: memref<32x96xf32, #tpu.memory_space<vmem>>, %arg8: memref<96x32xf32, #tpu.memory_space<vmem>>, %arg9: memref<32x32xf32, #tpu.memory_space<vmem>>, %arg10: memref<96x32xf32, #tpu.memory_space<vmem>>, %arg11: memref<32x32xf32, #tpu.memory_space<vmem>>, %arg12: memref<32x32xf32, #tpu.memory_space<vmem>>, %arg13: memref<8x32xf32, #tpu.memory_space<vmem>>, %arg14: memref<328x1xf32, #tpu.memory_space<vmem>>, %arg15: memref<32x128xf32, #tpu.memory_space<vmem>>, %arg16: memref<8x128xf32, #tpu.memory_space<vmem>>) attributes {dimension_semantics = [#tpu.dimension_semantics<arbitrary>], iteration_bounds = array<i64: 1>, scalar_prefetch = 0 : i64, scratch_operands = 0 : i64, tpu.core_type = #tpu.core_type<tc>, window_params = [{pipeline_mode = #tpu.pipeline_mode<synchronous>, transform_indices = @transform_0, window_bounds = array<i64: 32, 128>}, {pipeline_mode = #tpu.pipeline_mode<synchronous>, transform_indices = @transform_1, window_bounds = array<i64: 1, 128>}, {pipeline_mode = #tpu.pipeline_mode<synchronous>, transform_indices = @transform_2, window_bounds = array<i64: 1, 128>}, {pipeline_mode = #tpu.pipeline_mode<synchronous>, transform_indices = @transform_3, window_bounds = array<i64: 1, 128>}, {pipeline_mode = #tpu.pipeline_mode<synchronous>, transform_indices = @transform_4, window_bounds = array<i64: 128, 128>}, {pipeline_mode = #tpu.pipeline_mode<synchronous>, transform_indices = @transform_5, window_bounds = array<i64: 128, 128>}, {pipeline_mode = #tpu.pipeline_mode<synchronous>, transform_indices = @transform_6, window_bounds = array<i64: 32, 96>}, {pipeline_mode = #tpu.pipeline_mode<synchronous>, transform_indices = @transform_7, window_bounds = array<i64: 96, 32>}, {pipeline_mode = #tpu.pipeline_mode<synchronous>, transform_indices = @transform_8, window_bounds = array<i64: 32, 32>}, {pipeline_mode = #tpu.pipeline_mode<synchronous>, transform_indices = @transform_9, window_bounds = array<i64: 96, 32>}, {pipeline_mode = #tpu.pipeline_mode<synchronous>, transform_indices = @transform_10, window_bounds = array<i64: 32, 32>}, {pipeline_mode = #tpu.pipeline_mode<synchronous>, transform_indices = @transform_11, window_bounds = array<i64: 32, 32>}, {pipeline_mode = #tpu.pipeline_mode<synchronous>, transform_indices = @transform_12, window_bounds = array<i64: 8, 32>}, {pipeline_mode = #tpu.pipeline_mode<synchronous>, transform_indices = @transform_13, window_bounds = array<i64: 328, 1>}, {pipeline_mode = #tpu.pipeline_mode<synchronous>, transform_indices = @transform_14, window_bounds = array<i64: 32, 128>}, {pipeline_mode = #tpu.pipeline_mode<synchronous>, transform_indices = @transform_15, window_bounds = array<i64: 8, 128>}]} {
    %c0 = arith.constant 0 : index
    %c0_0 = arith.constant 0 : index
    %0 = vector.load %arg2[%c0, %c0_0] : memref<1x128xf32, #tpu.memory_space<vmem>>, vector<1x128xf32>
    %c0_1 = arith.constant 0 : index
    %c0_2 = arith.constant 0 : index
    %1 = vector.load %arg14[%c0_1, %c0_2] : memref<328x1xf32, #tpu.memory_space<vmem>>, vector<328x1xf32>
    %c0_3 = arith.constant 0 : index
    %c0_4 = arith.constant 0 : index
    %2 = vector.load %arg1[%c0_3, %c0_4] : memref<32x128xf32, #tpu.memory_space<vmem>>, vector<32x128xf32>
    %c2_i32 = arith.constant 2 : i32
    %3 = tpu.dynamic_rotate %2 by %c2_i32 dim 1 : vector<32x128xf32>, i32 -> vector<32x128xf32>
    %c0_5 = arith.constant 0 : index
    %c0_6 = arith.constant 0 : index
    %4 = vector.load %arg3[%c0_5, %c0_6] : memref<1x128xf32, #tpu.memory_space<vmem>>, vector<1x128xf32>
    %5 = vector.broadcast %4 : vector<1x128xf32> to vector<32x128xf32>
    %6 = arith.mulf %3, %5 : vector<32x128xf32>
    %c126_i32 = arith.constant 126 : i32
    %7 = tpu.dynamic_rotate %2 by %c126_i32 dim 1 : vector<32x128xf32>, i32 -> vector<32x128xf32>
    %c0_7 = arith.constant 0 : index
    %c0_8 = arith.constant 0 : index
    %8 = vector.load %arg4[%c0_7, %c0_8] : memref<1x128xf32, #tpu.memory_space<vmem>>, vector<1x128xf32>
    %9 = vector.broadcast %8 : vector<1x128xf32> to vector<32x128xf32>
    %10 = arith.mulf %7, %9 : vector<32x128xf32>
    %11 = tpu.concatenate %6, %2, %10 in 0 : vector<32x128xf32>, vector<32x128xf32>, vector<32x128xf32> -> vector<96x128xf32>
    %c0_9 = arith.constant 0 : index
    %c0_10 = arith.constant 0 : index
    %12 = vector.load %arg7[%c0_9, %c0_10] : memref<32x96xf32, #tpu.memory_space<vmem>>, vector<32x96xf32>
    %cst = arith.constant dense<0.000000e+00> : vector<32x128xf32>
    %13 = tpu.matmul %12, %11, %cst {dimension_numbers = #tpu.dot_dimension_numbers<[1], [0], [0], [1], [0, 0, 1, 1], [], []>} : vector<32x96xf32>, vector<96x128xf32>, vector<32x128xf32> -> vector<32x128xf32>
    %14 = vector.extract_strided_slice %1 {offsets = [0, 0], sizes = [32, 1], strides = [1, 1]} : vector<328x1xf32> to vector<32x1xf32>
    %15 = vector.broadcast %14 : vector<32x1xf32> to vector<32x128xf32>
    %16 = arith.addf %13, %15 : vector<32x128xf32>
    %17 = arith.mulf %16, %16 : vector<32x128xf32>
    %18 = arith.mulf %16, %17 : vector<32x128xf32>
    %cst_11 = arith.constant 4.471500e-02 : f32
    %19 = vector.broadcast %cst_11 : f32 to vector<32x128xf32>
    %20 = arith.mulf %19, %18 : vector<32x128xf32>
    %21 = arith.addf %16, %20 : vector<32x128xf32>
    %cst_12 = arith.constant 0.797884583 : f32
    %22 = vector.broadcast %cst_12 : f32 to vector<32x128xf32>
    %23 = arith.mulf %22, %21 : vector<32x128xf32>
    %24 = math.tanh %23 : vector<32x128xf32>
    %cst_13 = arith.constant 1.000000e+00 : f32
    %25 = vector.broadcast %cst_13 : f32 to vector<32x128xf32>
    %26 = arith.addf %25, %24 : vector<32x128xf32>
    %cst_14 = arith.constant 5.000000e-01 : f32
    %27 = vector.broadcast %cst_14 : f32 to vector<32x128xf32>
    %28 = arith.mulf %27, %26 : vector<32x128xf32>
    %29 = arith.mulf %16, %28 : vector<32x128xf32>
    %30 = vector.broadcast %0 : vector<1x128xf32> to vector<32x128xf32>
    %31 = arith.mulf %29, %30 : vector<32x128xf32>
    %c0_15 = arith.constant 0 : index
    %c0_16 = arith.constant 0 : index
    %32 = vector.load %arg5[%c0_15, %c0_16] : memref<128x128xf32, #tpu.memory_space<vmem>>, vector<128x128xf32>
    %33 = vector.broadcast %0 : vector<1x128xf32> to vector<128x128xf32>
    %34 = arith.mulf %32, %33 : vector<128x128xf32>
    %c0_17 = arith.constant 0 : index
    %c0_18 = arith.constant 0 : index
    %35 = vector.load %arg8[%c0_17, %c0_18] : memref<96x32xf32, #tpu.memory_space<vmem>>, vector<96x32xf32>
    %36 = vector.extract_strided_slice %1 {offsets = [32, 0], sizes = [96, 1], strides = [1, 1]} : vector<328x1xf32> to vector<96x1xf32>
    %cst_19 = arith.constant dense<0.000000e+00> : vector<96x128xf32>
    %37 = tpu.matmul %35, %31, %cst_19 {dimension_numbers = #tpu.dot_dimension_numbers<[1], [0], [0], [1], [0, 0, 1, 1], [], []>} : vector<96x32xf32>, vector<32x128xf32>, vector<96x128xf32> -> vector<96x128xf32>
    %38 = vector.broadcast %36 : vector<96x1xf32> to vector<96x128xf32>
    %39 = arith.addf %37, %38 : vector<96x128xf32>
    %40 = vector.extract_strided_slice %39 {offsets = [0, 0], sizes = [32, 128], strides = [1, 1]} : vector<96x128xf32> to vector<32x128xf32>
    %41 = vector.extract_strided_slice %39 {offsets = [32, 0], sizes = [32, 128], strides = [1, 1]} : vector<96x128xf32> to vector<32x128xf32>
    %42 = vector.extract_strided_slice %39 {offsets = [64, 0], sizes = [32, 128], strides = [1, 1]} : vector<96x128xf32> to vector<32x128xf32>
    %43 = vector.extract_strided_slice %40 {offsets = [0, 0], sizes = [8, 128], strides = [1, 1]} : vector<32x128xf32> to vector<8x128xf32>
    %44 = tpu.transpose %43, [1, 0] : vector<8x128xf32> -> vector<128x8xf32>
    %45 = vector.extract_strided_slice %41 {offsets = [0, 0], sizes = [8, 128], strides = [1, 1]} : vector<32x128xf32> to vector<8x128xf32>
    %cst_20 = arith.constant dense<0.000000e+00> : vector<128x128xf32>
    %46 = tpu.matmul %44, %45, %cst_20 {dimension_numbers = #tpu.dot_dimension_numbers<[1], [0], [0], [1], [0, 0, 1, 1], [], []>} : vector<128x8xf32>, vector<8x128xf32>, vector<128x128xf32> -> vector<128x128xf32>
    %cst_21 = arith.constant 5.000000e-01 : f32
    %47 = vector.broadcast %cst_21 : f32 to vector<128x128xf32>
    %48 = arith.mulf %46, %47 : vector<128x128xf32>
    %cst_22 = arith.constant 0.000000e+00 : f32
    %49 = vector.broadcast %cst_22 : f32 to vector<128x128xf32>
    %50 = arith.cmpf ogt, %34, %49 : vector<128x128xf32>
    %cst_23 = arith.constant -1.000000e+09 : f32
    %51 = vector.broadcast %cst_23 : f32 to vector<128x128xf32>
    %52 = arith.select %50, %48, %51 : vector<128x128xi1>, vector<128x128xf32>
    %cst_24 = arith.constant dense<0xFF800000> : vector<128xf32>
    %53 = vector.multi_reduction <maximumf>, %52, %cst_24 [1] : vector<128x128xf32> to vector<128xf32>
    %54 = vector.shape_cast %53 : vector<128xf32> to vector<128x1xf32>
    %55 = vector.broadcast %54 : vector<128x1xf32> to vector<128x128xf32>
    %56 = arith.subf %52, %55 : vector<128x128xf32>
    %57 = math.exp %56 : vector<128x128xf32>
    %cst_25 = arith.constant dense<0.000000e+00> : vector<128xf32>
    %58 = vector.multi_reduction <add>, %57, %cst_25 [1] : vector<128x128xf32> to vector<128xf32>
    %59 = vector.shape_cast %58 : vector<128xf32> to vector<128x1xf32>
    %60 = vector.broadcast %59 : vector<128x1xf32> to vector<128x128xf32>
    %61 = arith.divf %57, %60 : vector<128x128xf32>
    %62 = vector.extract_strided_slice %42 {offsets = [0, 0], sizes = [8, 128], strides = [1, 1]} : vector<32x128xf32> to vector<8x128xf32>
    "tpu.trace_start"() <{level = 10 : i32, message = "dk,qk->dq"}> : () -> ()
    %cst_26 = arith.constant dense<0.000000e+00> : vector<8x128xf32>
    %63 = tpu.matmul %62, %61, %cst_26 {dimension_numbers = #tpu.dot_dimension_numbers<[1], [1], [0], [0], [0, 0, 1, 0], [], []>} : vector<8x128xf32>, vector<128x128xf32>, vector<8x128xf32> -> vector<8x128xf32>
    "tpu.trace_stop"() : () -> ()
    %64 = vector.extract_strided_slice %40 {offsets = [8, 0], sizes = [8, 128], strides = [1, 1]} : vector<32x128xf32> to vector<8x128xf32>
    %65 = tpu.transpose %64, [1, 0] : vector<8x128xf32> -> vector<128x8xf32>
    %66 = vector.extract_strided_slice %41 {offsets = [8, 0], sizes = [8, 128], strides = [1, 1]} : vector<32x128xf32> to vector<8x128xf32>
    %cst_27 = arith.constant dense<0.000000e+00> : vector<128x128xf32>
    %67 = tpu.matmul %65, %66, %cst_27 {dimension_numbers = #tpu.dot_dimension_numbers<[1], [0], [0], [1], [0, 0, 1, 1], [], []>} : vector<128x8xf32>, vector<8x128xf32>, vector<128x128xf32> -> vector<128x128xf32>
    %cst_28 = arith.constant 5.000000e-01 : f32
    %68 = vector.broadcast %cst_28 : f32 to vector<128x128xf32>
    %69 = arith.mulf %67, %68 : vector<128x128xf32>
    %cst_29 = arith.constant 0.000000e+00 : f32
    %70 = vector.broadcast %cst_29 : f32 to vector<128x128xf32>
    %71 = arith.cmpf ogt, %34, %70 : vector<128x128xf32>
    %cst_30 = arith.constant -1.000000e+09 : f32
    %72 = vector.broadcast %cst_30 : f32 to vector<128x128xf32>
    %73 = arith.select %71, %69, %72 : vector<128x128xi1>, vector<128x128xf32>
    %cst_31 = arith.constant dense<0xFF800000> : vector<128xf32>
    %74 = vector.multi_reduction <maximumf>, %73, %cst_31 [1] : vector<128x128xf32> to vector<128xf32>
    %75 = vector.shape_cast %74 : vector<128xf32> to vector<128x1xf32>
    %76 = vector.broadcast %75 : vector<128x1xf32> to vector<128x128xf32>
    %77 = arith.subf %73, %76 : vector<128x128xf32>
    %78 = math.exp %77 : vector<128x128xf32>
    %cst_32 = arith.constant dense<0.000000e+00> : vector<128xf32>
    %79 = vector.multi_reduction <add>, %78, %cst_32 [1] : vector<128x128xf32> to vector<128xf32>
    %80 = vector.shape_cast %79 : vector<128xf32> to vector<128x1xf32>
    %81 = vector.broadcast %80 : vector<128x1xf32> to vector<128x128xf32>
    %82 = arith.divf %78, %81 : vector<128x128xf32>
    %83 = vector.extract_strided_slice %42 {offsets = [8, 0], sizes = [8, 128], strides = [1, 1]} : vector<32x128xf32> to vector<8x128xf32>
    "tpu.trace_start"() <{level = 10 : i32, message = "dk,qk->dq"}> : () -> ()
    %cst_33 = arith.constant dense<0.000000e+00> : vector<8x128xf32>
    %84 = tpu.matmul %83, %82, %cst_33 {dimension_numbers = #tpu.dot_dimension_numbers<[1], [1], [0], [0], [0, 0, 1, 0], [], []>} : vector<8x128xf32>, vector<128x128xf32>, vector<8x128xf32> -> vector<8x128xf32>
    "tpu.trace_stop"() : () -> ()
    %85 = vector.extract_strided_slice %40 {offsets = [16, 0], sizes = [8, 128], strides = [1, 1]} : vector<32x128xf32> to vector<8x128xf32>
    %86 = tpu.transpose %85, [1, 0] : vector<8x128xf32> -> vector<128x8xf32>
    %87 = vector.extract_strided_slice %41 {offsets = [16, 0], sizes = [8, 128], strides = [1, 1]} : vector<32x128xf32> to vector<8x128xf32>
    %cst_34 = arith.constant dense<0.000000e+00> : vector<128x128xf32>
    %88 = tpu.matmul %86, %87, %cst_34 {dimension_numbers = #tpu.dot_dimension_numbers<[1], [0], [0], [1], [0, 0, 1, 1], [], []>} : vector<128x8xf32>, vector<8x128xf32>, vector<128x128xf32> -> vector<128x128xf32>
    %cst_35 = arith.constant 5.000000e-01 : f32
    %89 = vector.broadcast %cst_35 : f32 to vector<128x128xf32>
    %90 = arith.mulf %88, %89 : vector<128x128xf32>
    %cst_36 = arith.constant 0.000000e+00 : f32
    %91 = vector.broadcast %cst_36 : f32 to vector<128x128xf32>
    %92 = arith.cmpf ogt, %34, %91 : vector<128x128xf32>
    %cst_37 = arith.constant -1.000000e+09 : f32
    %93 = vector.broadcast %cst_37 : f32 to vector<128x128xf32>
    %94 = arith.select %92, %90, %93 : vector<128x128xi1>, vector<128x128xf32>
    %cst_38 = arith.constant dense<0xFF800000> : vector<128xf32>
    %95 = vector.multi_reduction <maximumf>, %94, %cst_38 [1] : vector<128x128xf32> to vector<128xf32>
    %96 = vector.shape_cast %95 : vector<128xf32> to vector<128x1xf32>
    %97 = vector.broadcast %96 : vector<128x1xf32> to vector<128x128xf32>
    %98 = arith.subf %94, %97 : vector<128x128xf32>
    %99 = math.exp %98 : vector<128x128xf32>
    %cst_39 = arith.constant dense<0.000000e+00> : vector<128xf32>
    %100 = vector.multi_reduction <add>, %99, %cst_39 [1] : vector<128x128xf32> to vector<128xf32>
    %101 = vector.shape_cast %100 : vector<128xf32> to vector<128x1xf32>
    %102 = vector.broadcast %101 : vector<128x1xf32> to vector<128x128xf32>
    %103 = arith.divf %99, %102 : vector<128x128xf32>
    %104 = vector.extract_strided_slice %42 {offsets = [16, 0], sizes = [8, 128], strides = [1, 1]} : vector<32x128xf32> to vector<8x128xf32>
    "tpu.trace_start"() <{level = 10 : i32, message = "dk,qk->dq"}> : () -> ()
    %cst_40 = arith.constant dense<0.000000e+00> : vector<8x128xf32>
    %105 = tpu.matmul %104, %103, %cst_40 {dimension_numbers = #tpu.dot_dimension_numbers<[1], [1], [0], [0], [0, 0, 1, 0], [], []>} : vector<8x128xf32>, vector<128x128xf32>, vector<8x128xf32> -> vector<8x128xf32>
    "tpu.trace_stop"() : () -> ()
    %106 = vector.extract_strided_slice %40 {offsets = [24, 0], sizes = [8, 128], strides = [1, 1]} : vector<32x128xf32> to vector<8x128xf32>
    %107 = tpu.transpose %106, [1, 0] : vector<8x128xf32> -> vector<128x8xf32>
    %108 = vector.extract_strided_slice %41 {offsets = [24, 0], sizes = [8, 128], strides = [1, 1]} : vector<32x128xf32> to vector<8x128xf32>
    %cst_41 = arith.constant dense<0.000000e+00> : vector<128x128xf32>
    %109 = tpu.matmul %107, %108, %cst_41 {dimension_numbers = #tpu.dot_dimension_numbers<[1], [0], [0], [1], [0, 0, 1, 1], [], []>} : vector<128x8xf32>, vector<8x128xf32>, vector<128x128xf32> -> vector<128x128xf32>
    %cst_42 = arith.constant 5.000000e-01 : f32
    %110 = vector.broadcast %cst_42 : f32 to vector<128x128xf32>
    %111 = arith.mulf %109, %110 : vector<128x128xf32>
    %cst_43 = arith.constant 0.000000e+00 : f32
    %112 = vector.broadcast %cst_43 : f32 to vector<128x128xf32>
    %113 = arith.cmpf ogt, %34, %112 : vector<128x128xf32>
    %cst_44 = arith.constant -1.000000e+09 : f32
    %114 = vector.broadcast %cst_44 : f32 to vector<128x128xf32>
    %115 = arith.select %113, %111, %114 : vector<128x128xi1>, vector<128x128xf32>
    %cst_45 = arith.constant dense<0xFF800000> : vector<128xf32>
    %116 = vector.multi_reduction <maximumf>, %115, %cst_45 [1] : vector<128x128xf32> to vector<128xf32>
    %117 = vector.shape_cast %116 : vector<128xf32> to vector<128x1xf32>
    %118 = vector.broadcast %117 : vector<128x1xf32> to vector<128x128xf32>
    %119 = arith.subf %115, %118 : vector<128x128xf32>
    %120 = math.exp %119 : vector<128x128xf32>
    %cst_46 = arith.constant dense<0.000000e+00> : vector<128xf32>
    %121 = vector.multi_reduction <add>, %120, %cst_46 [1] : vector<128x128xf32> to vector<128xf32>
    %122 = vector.shape_cast %121 : vector<128xf32> to vector<128x1xf32>
    %123 = vector.broadcast %122 : vector<128x1xf32> to vector<128x128xf32>
    %124 = arith.divf %120, %123 : vector<128x128xf32>
    %125 = vector.extract_strided_slice %42 {offsets = [24, 0], sizes = [8, 128], strides = [1, 1]} : vector<32x128xf32> to vector<8x128xf32>
    "tpu.trace_start"() <{level = 10 : i32, message = "dk,qk->dq"}> : () -> ()
    %cst_47 = arith.constant dense<0.000000e+00> : vector<8x128xf32>
    %126 = tpu.matmul %125, %124, %cst_47 {dimension_numbers = #tpu.dot_dimension_numbers<[1], [1], [0], [0], [0, 0, 1, 0], [], []>} : vector<8x128xf32>, vector<128x128xf32>, vector<8x128xf32> -> vector<8x128xf32>
    "tpu.trace_stop"() : () -> ()
    %127 = tpu.concatenate %63, %84, %105, %126 in 0 : vector<8x128xf32>, vector<8x128xf32>, vector<8x128xf32>, vector<8x128xf32> -> vector<32x128xf32>
    %c0_48 = arith.constant 0 : index
    %c0_49 = arith.constant 0 : index
    %128 = vector.load %arg9[%c0_48, %c0_49] : memref<32x32xf32, #tpu.memory_space<vmem>>, vector<32x32xf32>
    %129 = arith.mulf %127, %127 : vector<32x128xf32>
    %130 = arith.mulf %127, %129 : vector<32x128xf32>
    %cst_50 = arith.constant 4.471500e-02 : f32
    %131 = vector.broadcast %cst_50 : f32 to vector<32x128xf32>
    %132 = arith.mulf %131, %130 : vector<32x128xf32>
    %133 = arith.addf %127, %132 : vector<32x128xf32>
    %cst_51 = arith.constant 0.797884583 : f32
    %134 = vector.broadcast %cst_51 : f32 to vector<32x128xf32>
    %135 = arith.mulf %134, %133 : vector<32x128xf32>
    %136 = math.tanh %135 : vector<32x128xf32>
    %cst_52 = arith.constant 1.000000e+00 : f32
    %137 = vector.broadcast %cst_52 : f32 to vector<32x128xf32>
    %138 = arith.addf %137, %136 : vector<32x128xf32>
    %cst_53 = arith.constant 5.000000e-01 : f32
    %139 = vector.broadcast %cst_53 : f32 to vector<32x128xf32>
    %140 = arith.mulf %139, %138 : vector<32x128xf32>
    %141 = arith.mulf %127, %140 : vector<32x128xf32>
    %cst_54 = arith.constant dense<0.000000e+00> : vector<32x128xf32>
    %142 = tpu.matmul %128, %141, %cst_54 {dimension_numbers = #tpu.dot_dimension_numbers<[1], [0], [0], [1], [0, 0, 1, 1], [], []>} : vector<32x32xf32>, vector<32x128xf32>, vector<32x128xf32> -> vector<32x128xf32>
    %143 = vector.extract_strided_slice %1 {offsets = [128, 0], sizes = [32, 1], strides = [1, 1]} : vector<328x1xf32> to vector<32x1xf32>
    %144 = vector.broadcast %143 : vector<32x1xf32> to vector<32x128xf32>
    %145 = arith.addf %142, %144 : vector<32x128xf32>
    %146 = vector.broadcast %0 : vector<1x128xf32> to vector<32x128xf32>
    %147 = arith.mulf %145, %146 : vector<32x128xf32>
    %148 = arith.addf %147, %31 : vector<32x128xf32>
    %c0_55 = arith.constant 0 : index
    %c0_56 = arith.constant 0 : index
    %149 = vector.load %arg6[%c0_55, %c0_56] : memref<128x128xf32, #tpu.memory_space<vmem>>, vector<128x128xf32>
    %150 = vector.broadcast %0 : vector<1x128xf32> to vector<128x128xf32>
    %151 = arith.mulf %149, %150 : vector<128x128xf32>
    %c0_57 = arith.constant 0 : index
    %c0_58 = arith.constant 0 : index
    %152 = vector.load %arg10[%c0_57, %c0_58] : memref<96x32xf32, #tpu.memory_space<vmem>>, vector<96x32xf32>
    %153 = vector.extract_strided_slice %1 {offsets = [160, 0], sizes = [96, 1], strides = [1, 1]} : vector<328x1xf32> to vector<96x1xf32>
    %cst_59 = arith.constant dense<0.000000e+00> : vector<96x128xf32>
    %154 = tpu.matmul %152, %148, %cst_59 {dimension_numbers = #tpu.dot_dimension_numbers<[1], [0], [0], [1], [0, 0, 1, 1], [], []>} : vector<96x32xf32>, vector<32x128xf32>, vector<96x128xf32> -> vector<96x128xf32>
    %155 = vector.broadcast %153 : vector<96x1xf32> to vector<96x128xf32>
    %156 = arith.addf %154, %155 : vector<96x128xf32>
    %157 = vector.extract_strided_slice %156 {offsets = [0, 0], sizes = [32, 128], strides = [1, 1]} : vector<96x128xf32> to vector<32x128xf32>
    %158 = vector.extract_strided_slice %156 {offsets = [32, 0], sizes = [32, 128], strides = [1, 1]} : vector<96x128xf32> to vector<32x128xf32>
    %159 = vector.extract_strided_slice %156 {offsets = [64, 0], sizes = [32, 128], strides = [1, 1]} : vector<96x128xf32> to vector<32x128xf32>
    %160 = vector.extract_strided_slice %157 {offsets = [0, 0], sizes = [8, 128], strides = [1, 1]} : vector<32x128xf32> to vector<8x128xf32>
    %161 = tpu.transpose %160, [1, 0] : vector<8x128xf32> -> vector<128x8xf32>
    %162 = vector.extract_strided_slice %158 {offsets = [0, 0], sizes = [8, 128], strides = [1, 1]} : vector<32x128xf32> to vector<8x128xf32>
    %cst_60 = arith.constant dense<0.000000e+00> : vector<128x128xf32>
    %163 = tpu.matmul %161, %162, %cst_60 {dimension_numbers = #tpu.dot_dimension_numbers<[1], [0], [0], [1], [0, 0, 1, 1], [], []>} : vector<128x8xf32>, vector<8x128xf32>, vector<128x128xf32> -> vector<128x128xf32>
    %cst_61 = arith.constant 5.000000e-01 : f32
    %164 = vector.broadcast %cst_61 : f32 to vector<128x128xf32>
    %165 = arith.mulf %163, %164 : vector<128x128xf32>
    %cst_62 = arith.constant 0.000000e+00 : f32
    %166 = vector.broadcast %cst_62 : f32 to vector<128x128xf32>
    %167 = arith.cmpf ogt, %151, %166 : vector<128x128xf32>
    %cst_63 = arith.constant -1.000000e+09 : f32
    %168 = vector.broadcast %cst_63 : f32 to vector<128x128xf32>
    %169 = arith.select %167, %165, %168 : vector<128x128xi1>, vector<128x128xf32>
    %cst_64 = arith.constant dense<0xFF800000> : vector<128xf32>
    %170 = vector.multi_reduction <maximumf>, %169, %cst_64 [1] : vector<128x128xf32> to vector<128xf32>
    %171 = vector.shape_cast %170 : vector<128xf32> to vector<128x1xf32>
    %172 = vector.broadcast %171 : vector<128x1xf32> to vector<128x128xf32>
    %173 = arith.subf %169, %172 : vector<128x128xf32>
    %174 = math.exp %173 : vector<128x128xf32>
    %cst_65 = arith.constant dense<0.000000e+00> : vector<128xf32>
    %175 = vector.multi_reduction <add>, %174, %cst_65 [1] : vector<128x128xf32> to vector<128xf32>
    %176 = vector.shape_cast %175 : vector<128xf32> to vector<128x1xf32>
    %177 = vector.broadcast %176 : vector<128x1xf32> to vector<128x128xf32>
    %178 = arith.divf %174, %177 : vector<128x128xf32>
    %179 = vector.extract_strided_slice %159 {offsets = [0, 0], sizes = [8, 128], strides = [1, 1]} : vector<32x128xf32> to vector<8x128xf32>
    "tpu.trace_start"() <{level = 10 : i32, message = "dk,qk->dq"}> : () -> ()
    %cst_66 = arith.constant dense<0.000000e+00> : vector<8x128xf32>
    %180 = tpu.matmul %179, %178, %cst_66 {dimension_numbers = #tpu.dot_dimension_numbers<[1], [1], [0], [0], [0, 0, 1, 0], [], []>} : vector<8x128xf32>, vector<128x128xf32>, vector<8x128xf32> -> vector<8x128xf32>
    "tpu.trace_stop"() : () -> ()
    %181 = vector.extract_strided_slice %157 {offsets = [8, 0], sizes = [8, 128], strides = [1, 1]} : vector<32x128xf32> to vector<8x128xf32>
    %182 = tpu.transpose %181, [1, 0] : vector<8x128xf32> -> vector<128x8xf32>
    %183 = vector.extract_strided_slice %158 {offsets = [8, 0], sizes = [8, 128], strides = [1, 1]} : vector<32x128xf32> to vector<8x128xf32>
    %cst_67 = arith.constant dense<0.000000e+00> : vector<128x128xf32>
    %184 = tpu.matmul %182, %183, %cst_67 {dimension_numbers = #tpu.dot_dimension_numbers<[1], [0], [0], [1], [0, 0, 1, 1], [], []>} : vector<128x8xf32>, vector<8x128xf32>, vector<128x128xf32> -> vector<128x128xf32>
    %cst_68 = arith.constant 5.000000e-01 : f32
    %185 = vector.broadcast %cst_68 : f32 to vector<128x128xf32>
    %186 = arith.mulf %184, %185 : vector<128x128xf32>
    %cst_69 = arith.constant 0.000000e+00 : f32
    %187 = vector.broadcast %cst_69 : f32 to vector<128x128xf32>
    %188 = arith.cmpf ogt, %151, %187 : vector<128x128xf32>
    %cst_70 = arith.constant -1.000000e+09 : f32
    %189 = vector.broadcast %cst_70 : f32 to vector<128x128xf32>
    %190 = arith.select %188, %186, %189 : vector<128x128xi1>, vector<128x128xf32>
    %cst_71 = arith.constant dense<0xFF800000> : vector<128xf32>
    %191 = vector.multi_reduction <maximumf>, %190, %cst_71 [1] : vector<128x128xf32> to vector<128xf32>
    %192 = vector.shape_cast %191 : vector<128xf32> to vector<128x1xf32>
    %193 = vector.broadcast %192 : vector<128x1xf32> to vector<128x128xf32>
    %194 = arith.subf %190, %193 : vector<128x128xf32>
    %195 = math.exp %194 : vector<128x128xf32>
    %cst_72 = arith.constant dense<0.000000e+00> : vector<128xf32>
    %196 = vector.multi_reduction <add>, %195, %cst_72 [1] : vector<128x128xf32> to vector<128xf32>
    %197 = vector.shape_cast %196 : vector<128xf32> to vector<128x1xf32>
    %198 = vector.broadcast %197 : vector<128x1xf32> to vector<128x128xf32>
    %199 = arith.divf %195, %198 : vector<128x128xf32>
    %200 = vector.extract_strided_slice %159 {offsets = [8, 0], sizes = [8, 128], strides = [1, 1]} : vector<32x128xf32> to vector<8x128xf32>
    "tpu.trace_start"() <{level = 10 : i32, message = "dk,qk->dq"}> : () -> ()
    %cst_73 = arith.constant dense<0.000000e+00> : vector<8x128xf32>
    %201 = tpu.matmul %200, %199, %cst_73 {dimension_numbers = #tpu.dot_dimension_numbers<[1], [1], [0], [0], [0, 0, 1, 0], [], []>} : vector<8x128xf32>, vector<128x128xf32>, vector<8x128xf32> -> vector<8x128xf32>
    "tpu.trace_stop"() : () -> ()
    %202 = vector.extract_strided_slice %157 {offsets = [16, 0], sizes = [8, 128], strides = [1, 1]} : vector<32x128xf32> to vector<8x128xf32>
    %203 = tpu.transpose %202, [1, 0] : vector<8x128xf32> -> vector<128x8xf32>
    %204 = vector.extract_strided_slice %158 {offsets = [16, 0], sizes = [8, 128], strides = [1, 1]} : vector<32x128xf32> to vector<8x128xf32>
    %cst_74 = arith.constant dense<0.000000e+00> : vector<128x128xf32>
    %205 = tpu.matmul %203, %204, %cst_74 {dimension_numbers = #tpu.dot_dimension_numbers<[1], [0], [0], [1], [0, 0, 1, 1], [], []>} : vector<128x8xf32>, vector<8x128xf32>, vector<128x128xf32> -> vector<128x128xf32>
    %cst_75 = arith.constant 5.000000e-01 : f32
    %206 = vector.broadcast %cst_75 : f32 to vector<128x128xf32>
    %207 = arith.mulf %205, %206 : vector<128x128xf32>
    %cst_76 = arith.constant 0.000000e+00 : f32
    %208 = vector.broadcast %cst_76 : f32 to vector<128x128xf32>
    %209 = arith.cmpf ogt, %151, %208 : vector<128x128xf32>
    %cst_77 = arith.constant -1.000000e+09 : f32
    %210 = vector.broadcast %cst_77 : f32 to vector<128x128xf32>
    %211 = arith.select %209, %207, %210 : vector<128x128xi1>, vector<128x128xf32>
    %cst_78 = arith.constant dense<0xFF800000> : vector<128xf32>
    %212 = vector.multi_reduction <maximumf>, %211, %cst_78 [1] : vector<128x128xf32> to vector<128xf32>
    %213 = vector.shape_cast %212 : vector<128xf32> to vector<128x1xf32>
    %214 = vector.broadcast %213 : vector<128x1xf32> to vector<128x128xf32>
    %215 = arith.subf %211, %214 : vector<128x128xf32>
    %216 = math.exp %215 : vector<128x128xf32>
    %cst_79 = arith.constant dense<0.000000e+00> : vector<128xf32>
    %217 = vector.multi_reduction <add>, %216, %cst_79 [1] : vector<128x128xf32> to vector<128xf32>
    %218 = vector.shape_cast %217 : vector<128xf32> to vector<128x1xf32>
    %219 = vector.broadcast %218 : vector<128x1xf32> to vector<128x128xf32>
    %220 = arith.divf %216, %219 : vector<128x128xf32>
    %221 = vector.extract_strided_slice %159 {offsets = [16, 0], sizes = [8, 128], strides = [1, 1]} : vector<32x128xf32> to vector<8x128xf32>
    "tpu.trace_start"() <{level = 10 : i32, message = "dk,qk->dq"}> : () -> ()
    %cst_80 = arith.constant dense<0.000000e+00> : vector<8x128xf32>
    %222 = tpu.matmul %221, %220, %cst_80 {dimension_numbers = #tpu.dot_dimension_numbers<[1], [1], [0], [0], [0, 0, 1, 0], [], []>} : vector<8x128xf32>, vector<128x128xf32>, vector<8x128xf32> -> vector<8x128xf32>
    "tpu.trace_stop"() : () -> ()
    %223 = vector.extract_strided_slice %157 {offsets = [24, 0], sizes = [8, 128], strides = [1, 1]} : vector<32x128xf32> to vector<8x128xf32>
    %224 = tpu.transpose %223, [1, 0] : vector<8x128xf32> -> vector<128x8xf32>
    %225 = vector.extract_strided_slice %158 {offsets = [24, 0], sizes = [8, 128], strides = [1, 1]} : vector<32x128xf32> to vector<8x128xf32>
    %cst_81 = arith.constant dense<0.000000e+00> : vector<128x128xf32>
    %226 = tpu.matmul %224, %225, %cst_81 {dimension_numbers = #tpu.dot_dimension_numbers<[1], [0], [0], [1], [0, 0, 1, 1], [], []>} : vector<128x8xf32>, vector<8x128xf32>, vector<128x128xf32> -> vector<128x128xf32>
    %cst_82 = arith.constant 5.000000e-01 : f32
    %227 = vector.broadcast %cst_82 : f32 to vector<128x128xf32>
    %228 = arith.mulf %226, %227 : vector<128x128xf32>
    %cst_83 = arith.constant 0.000000e+00 : f32
    %229 = vector.broadcast %cst_83 : f32 to vector<128x128xf32>
    %230 = arith.cmpf ogt, %151, %229 : vector<128x128xf32>
    %cst_84 = arith.constant -1.000000e+09 : f32
    %231 = vector.broadcast %cst_84 : f32 to vector<128x128xf32>
    %232 = arith.select %230, %228, %231 : vector<128x128xi1>, vector<128x128xf32>
    %cst_85 = arith.constant dense<0xFF800000> : vector<128xf32>
    %233 = vector.multi_reduction <maximumf>, %232, %cst_85 [1] : vector<128x128xf32> to vector<128xf32>
    %234 = vector.shape_cast %233 : vector<128xf32> to vector<128x1xf32>
    %235 = vector.broadcast %234 : vector<128x1xf32> to vector<128x128xf32>
    %236 = arith.subf %232, %235 : vector<128x128xf32>
    %237 = math.exp %236 : vector<128x128xf32>
    %cst_86 = arith.constant dense<0.000000e+00> : vector<128xf32>
    %238 = vector.multi_reduction <add>, %237, %cst_86 [1] : vector<128x128xf32> to vector<128xf32>
    %239 = vector.shape_cast %238 : vector<128xf32> to vector<128x1xf32>
    %240 = vector.broadcast %239 : vector<128x1xf32> to vector<128x128xf32>
    %241 = arith.divf %237, %240 : vector<128x128xf32>
    %242 = vector.extract_strided_slice %159 {offsets = [24, 0], sizes = [8, 128], strides = [1, 1]} : vector<32x128xf32> to vector<8x128xf32>
    "tpu.trace_start"() <{level = 10 : i32, message = "dk,qk->dq"}> : () -> ()
    %cst_87 = arith.constant dense<0.000000e+00> : vector<8x128xf32>
    %243 = tpu.matmul %242, %241, %cst_87 {dimension_numbers = #tpu.dot_dimension_numbers<[1], [1], [0], [0], [0, 0, 1, 0], [], []>} : vector<8x128xf32>, vector<128x128xf32>, vector<8x128xf32> -> vector<8x128xf32>
    "tpu.trace_stop"() : () -> ()
    %244 = tpu.concatenate %180, %201, %222, %243 in 0 : vector<8x128xf32>, vector<8x128xf32>, vector<8x128xf32>, vector<8x128xf32> -> vector<32x128xf32>
    %c0_88 = arith.constant 0 : index
    %c0_89 = arith.constant 0 : index
    %245 = vector.load %arg11[%c0_88, %c0_89] : memref<32x32xf32, #tpu.memory_space<vmem>>, vector<32x32xf32>
    %246 = arith.mulf %244, %244 : vector<32x128xf32>
    %247 = arith.mulf %244, %246 : vector<32x128xf32>
    %cst_90 = arith.constant 4.471500e-02 : f32
    %248 = vector.broadcast %cst_90 : f32 to vector<32x128xf32>
    %249 = arith.mulf %248, %247 : vector<32x128xf32>
    %250 = arith.addf %244, %249 : vector<32x128xf32>
    %cst_91 = arith.constant 0.797884583 : f32
    %251 = vector.broadcast %cst_91 : f32 to vector<32x128xf32>
    %252 = arith.mulf %251, %250 : vector<32x128xf32>
    %253 = math.tanh %252 : vector<32x128xf32>
    %cst_92 = arith.constant 1.000000e+00 : f32
    %254 = vector.broadcast %cst_92 : f32 to vector<32x128xf32>
    %255 = arith.addf %254, %253 : vector<32x128xf32>
    %cst_93 = arith.constant 5.000000e-01 : f32
    %256 = vector.broadcast %cst_93 : f32 to vector<32x128xf32>
    %257 = arith.mulf %256, %255 : vector<32x128xf32>
    %258 = arith.mulf %244, %257 : vector<32x128xf32>
    %cst_94 = arith.constant dense<0.000000e+00> : vector<32x128xf32>
    %259 = tpu.matmul %245, %258, %cst_94 {dimension_numbers = #tpu.dot_dimension_numbers<[1], [0], [0], [1], [0, 0, 1, 1], [], []>} : vector<32x32xf32>, vector<32x128xf32>, vector<32x128xf32> -> vector<32x128xf32>
    %260 = vector.extract_strided_slice %1 {offsets = [256, 0], sizes = [32, 1], strides = [1, 1]} : vector<328x1xf32> to vector<32x1xf32>
    %261 = vector.broadcast %260 : vector<32x1xf32> to vector<32x128xf32>
    %262 = arith.addf %259, %261 : vector<32x128xf32>
    %263 = vector.broadcast %0 : vector<1x128xf32> to vector<32x128xf32>
    %264 = arith.mulf %262, %263 : vector<32x128xf32>
    %265 = arith.addf %148, %264 : vector<32x128xf32>
    %c0_95 = arith.constant 0 : index
    %c0_96 = arith.constant 0 : index
    %266 = vector.load %arg12[%c0_95, %c0_96] : memref<32x32xf32, #tpu.memory_space<vmem>>, vector<32x32xf32>
    %cst_97 = arith.constant dense<0.000000e+00> : vector<32x128xf32>
    %267 = tpu.matmul %266, %265, %cst_97 {dimension_numbers = #tpu.dot_dimension_numbers<[1], [0], [0], [1], [0, 0, 1, 1], [], []>} : vector<32x32xf32>, vector<32x128xf32>, vector<32x128xf32> -> vector<32x128xf32>
    %268 = vector.extract_strided_slice %1 {offsets = [288, 0], sizes = [32, 1], strides = [1, 1]} : vector<328x1xf32> to vector<32x1xf32>
    %269 = vector.broadcast %268 : vector<32x1xf32> to vector<32x128xf32>
    %270 = arith.addf %267, %269 : vector<32x128xf32>
    %271 = arith.addf %270, %2 : vector<32x128xf32>
    %272 = vector.broadcast %0 : vector<1x128xf32> to vector<32x128xf32>
    %273 = arith.mulf %271, %272 : vector<32x128xf32>
    %c0_98 = arith.constant 0 : index
    %c0_99 = arith.constant 0 : index
    %274 = vector.load %arg15[%c0_98, %c0_99] : memref<32x128xf32, #tpu.memory_space<vmem>>, vector<32x128xf32>
    tpu.vector_store %arg15[%c0_98, %c0_99], %273 {strides = array<i32>} : memref<32x128xf32, #tpu.memory_space<vmem>>, vector<32x128xf32>,
    %c0_100 = arith.constant 0 : index
    %c0_101 = arith.constant 0 : index
    %275 = vector.load %arg13[%c0_100, %c0_101] : memref<8x32xf32, #tpu.memory_space<vmem>>, vector<8x32xf32>
    %cst_102 = arith.constant dense<0.000000e+00> : vector<8x128xf32>
    %276 = tpu.matmul %275, %273, %cst_102 {dimension_numbers = #tpu.dot_dimension_numbers<[1], [0], [0], [1], [0, 0, 1, 1], [], []>} : vector<8x32xf32>, vector<32x128xf32>, vector<8x128xf32> -> vector<8x128xf32>
    %277 = vector.extract_strided_slice %1 {offsets = [320, 0], sizes = [8, 1], strides = [1, 1]} : vector<328x1xf32> to vector<8x1xf32>
    %278 = vector.broadcast %277 : vector<8x1xf32> to vector<8x128xf32>
    %279 = arith.addf %276, %278 : vector<8x128xf32>
    %280 = vector.broadcast %0 : vector<1x128xf32> to vector<8x128xf32>
    %281 = arith.mulf %279, %280 : vector<8x128xf32>
    %c0_103 = arith.constant 0 : index
    %c0_104 = arith.constant 0 : index
    %282 = vector.load %arg16[%c0_103, %c0_104] : memref<8x128xf32, #tpu.memory_space<vmem>>, vector<8x128xf32>
    tpu.vector_store %arg16[%c0_103, %c0_104], %281 {strides = array<i32>} : memref<8x128xf32, #tpu.memory_space<vmem>>, vector<8x128xf32>,
    return
  }
  func.func @transform_0(%arg0: i32) -> (i32, i32) {
    %c0_i32 = arith.constant 0 : i32
    %c0_i32_0 = arith.constant 0 : i32
    %c0_i32_1 = arith.constant 0 : i32
    return %c0_i32, %c0_i32_0 : i32, i32
  }
  func.func @transform_1(%arg0: i32) -> (i32, i32) {
    %c0_i32 = arith.constant 0 : i32
    %c0_i32_0 = arith.constant 0 : i32
    %c0_i32_1 = arith.constant 0 : i32
    return %c0_i32, %c0_i32_0 : i32, i32
  }
  func.func @transform_2(%arg0: i32) -> (i32, i32) {
    %c0_i32 = arith.constant 0 : i32
    %c0_i32_0 = arith.constant 0 : i32
    %c0_i32_1 = arith.constant 0 : i32
    return %c0_i32, %c0_i32_0 : i32, i32
  }
  func.func @transform_3(%arg0: i32) -> (i32, i32) {
    %c0_i32 = arith.constant 0 : i32
    %c0_i32_0 = arith.constant 0 : i32
    %c0_i32_1 = arith.constant 0 : i32
    return %c0_i32, %c0_i32_0 : i32, i32
  }
  func.func @transform_4(%arg0: i32) -> (i32, i32) {
    %c0_i32 = arith.constant 0 : i32
    %c0_i32_0 = arith.constant 0 : i32
    %c0_i32_1 = arith.constant 0 : i32
    return %c0_i32, %c0_i32_0 : i32, i32
  }
  func.func @transform_5(%arg0: i32) -> (i32, i32) {
    %c0_i32 = arith.constant 0 : i32
    %c0_i32_0 = arith.constant 0 : i32
    %c0_i32_1 = arith.constant 0 : i32
    return %c0_i32, %c0_i32_0 : i32, i32
  }
  func.func @transform_6(%arg0: i32) -> (i32, i32) {
    %c0_i32 = arith.constant 0 : i32
    %c0_i32_0 = arith.constant 0 : i32
    %c0_i32_1 = arith.constant 0 : i32
    return %c0_i32, %c0_i32_0 : i32, i32
  }
  func.func @transform_7(%arg0: i32) -> (i32, i32) {
    %c0_i32 = arith.constant 0 : i32
    %c0_i32_0 = arith.constant 0 : i32
    %c0_i32_1 = arith.constant 0 : i32
    return %c0_i32, %c0_i32_0 : i32, i32
  }
  func.func @transform_8(%arg0: i32) -> (i32, i32) {
    %c0_i32 = arith.constant 0 : i32
    %c0_i32_0 = arith.constant 0 : i32
    %c0_i32_1 = arith.constant 0 : i32
    return %c0_i32, %c0_i32_0 : i32, i32
  }
  func.func @transform_9(%arg0: i32) -> (i32, i32) {
    %c0_i32 = arith.constant 0 : i32
    %c0_i32_0 = arith.constant 0 : i32
    %c0_i32_1 = arith.constant 0 : i32
    return %c0_i32, %c0_i32_0 : i32, i32
  }
  func.func @transform_10(%arg0: i32) -> (i32, i32) {
    %c0_i32 = arith.constant 0 : i32
    %c0_i32_0 = arith.constant 0 : i32
    %c0_i32_1 = arith.constant 0 : i32
    return %c0_i32, %c0_i32_0 : i32, i32
  }
  func.func @transform_11(%arg0: i32) -> (i32, i32) {
    %c0_i32 = arith.constant 0 : i32
    %c0_i32_0 = arith.constant 0 : i32
    %c0_i32_1 = arith.constant 0 : i32
    return %c0_i32, %c0_i32_0 : i32, i32
  }
  func.func @transform_12(%arg0: i32) -> (i32, i32) {
    %c0_i32 = arith.constant 0 : i32
    %c0_i32_0 = arith.constant 0 : i32
    %c0_i32_1 = arith.constant 0 : i32
    return %c0_i32, %c0_i32_0 : i32, i32
  }
  func.func @transform_13(%arg0: i32) -> (i32, i32) {
    %c0_i32 = arith.constant 0 : i32
    %c0_i32_0 = arith.constant 0 : i32
    %c0_i32_1 = arith.constant 0 : i32
    return %c0_i32, %c0_i32_0 : i32, i32
  }
  func.func @transform_14(%arg0: i32) -> (i32, i32) {
    %c0_i32 = arith.constant 0 : i32
    %c0_i32_0 = arith.constant 0 : i32
    %c0_i32_1 = arith.constant 0 : i32
    return %c0_i32, %c0_i32_0 : i32, i32
  }
  func.func @transform_15(%arg0: i32) -> (i32, i32) {
    %c0_i32 = arith.constant 0 : i32
    %c0_i32_0 = arith.constant 0 : i32
    %c0_i32_1 = arith.constant 0 : i32
    return %c0_i32, %c0_i32_0 : i32, i32
  }
}

</mosaic_0001>

<llo_original>
// kernel: _lambda_.2
$region0: #{_lambda_.2}
  #allocation0 [shape = 'u32[]', space=smem, size = 0x4, offset = 0x4, fixed_abs, tag = 'smem constant byte address 0x4 - core index']
  #allocation1 [shape = 'u32[144,128]{1,0:T(1,128)}', space=vmem, size = 0x12000, scoped, tag = 'internal scratch']
  %s0 = inlined_call_operand.vmem [shape: f32[8,128], index: 0, kind: input, shape index: {}]
  %s1 = inlined_call_operand.vmem [shape: f32[1,128], index: 1, kind: input, shape index: {}]
  %s2 = inlined_call_operand.vmem [shape: f32[1,128], index: 2, kind: input, shape index: {}]
  %s3 = inlined_call_operand.vmem [shape: f32[1,128], index: 3, kind: input, shape index: {}]
  %s4 = inlined_call_operand.vmem [shape: f32[128,128], index: 4, kind: input, shape index: {}]
  %s5 = inlined_call_operand.vmem [shape: f32[128,128], index: 5, kind: input, shape index: {}]
  %s6 = inlined_call_operand.vmem [shape: f32[32,8], index: 6, kind: input, shape index: {}]
  %s7 = inlined_call_operand.vmem [shape: f32[32,96], index: 7, kind: input, shape index: {}]
  %s8 = inlined_call_operand.vmem [shape: f32[96,32], index: 8, kind: input, shape index: {}]
  %s9 = inlined_call_operand.vmem [shape: f32[32,32], index: 9, kind: input, shape index: {}]
  %s10 = inlined_call_operand.vmem [shape: f32[96,32], index: 10, kind: input, shape index: {}]
  %s11 = inlined_call_operand.vmem [shape: f32[32,32], index: 11, kind: input, shape index: {}]
  %s12 = inlined_call_operand.vmem [shape: f32[32,32], index: 12, kind: input, shape index: {}]
  %s13 = inlined_call_operand.vmem [shape: f32[352,1], index: 13, kind: input, shape index: {}]
  %s14 = inlined_call_operand.vmem [shape: f32[32,128], index: 14, kind: output, shape index: {}]
  %s15 = sld [smem:[#allocation0]]
  $region66: #{_lambda_.2} parent=0
    _
  %s17 = ssub.s32 1, %s15
  %s18 = scalar_select 0, %s17, %s15
  // Predicated region
  $region2: #{_lambda_.2} parent=0 // pred_check
    _
  $region3: #{_lambda_.2} parent=0 // pred_check_branch
    %20 = sbr.rel (0) target = $region5
  $region4: #{_lambda_.2} parent=0 // pred_region
    _
  $region5: #{_lambda_.2} parent=0 // pred_fallthru
    _
  // Predicated region
  $region6: #{_lambda_.2} parent=0 // pred_check
    _
  $region7: #{_lambda_.2} parent=0 // pred_check_branch
    %22 = sbr.rel (0) target = $region9
  $region8: #{_lambda_.2} parent=0 // pred_region
    _
  $region9: #{_lambda_.2} parent=0 // pred_fallthru
    _
  // Predicated region
  $region10: #{_lambda_.2} parent=0 // pred_check
    _
  $region11: #{_lambda_.2} parent=0 // pred_check_branch
    %24 = sbr.rel (0) target = $region13
  $region12: #{_lambda_.2} parent=0 // pred_region
    _
  $region13: #{_lambda_.2} parent=0 // pred_fallthru
    _
  // Predicated region
  $region14: #{_lambda_.2} parent=0 // pred_check
    _
  $region15: #{_lambda_.2} parent=0 // pred_check_branch
    %26 = sbr.rel (0) target = $region17
  $region16: #{_lambda_.2} parent=0 // pred_region
    _
  $region17: #{_lambda_.2} parent=0 // pred_fallthru
    _
  // Predicated region
  $region18: #{_lambda_.2} parent=0 // pred_check
    _
  $region19: #{_lambda_.2} parent=0 // pred_check_branch
    %28 = sbr.rel (0) target = $region21
  $region20: #{_lambda_.2} parent=0 // pred_region
    _
  $region21: #{_lambda_.2} parent=0 // pred_fallthru
    _
  // Predicated region
  $region22: #{_lambda_.2} parent=0 // pred_check
    _
  $region23: #{_lambda_.2} parent=0 // pred_check_branch
    %30 = sbr.rel (0) target = $region25
  $region24: #{_lambda_.2} parent=0 // pred_region
    _
  $region25: #{_lambda_.2} parent=0 // pred_fallthru
    _
  // Predicated region
  $region26: #{_lambda_.2} parent=0 // pred_check
    _
  $region27: #{_lambda_.2} parent=0 // pred_check_branch
    %32 = sbr.rel (0) target = $region29
  $region28: #{_lambda_.2} parent=0 // pred_region
    _
  $region29: #{_lambda_.2} parent=0 // pred_fallthru
    _
  // Predicated region
  $region30: #{_lambda_.2} parent=0 // pred_check
    _
  $region31: #{_lambda_.2} parent=0 // pred_check_branch
    %34 = sbr.rel (0) target = $region33
  $region32: #{_lambda_.2} parent=0 // pred_region
    _
  $region33: #{_lambda_.2} parent=0 // pred_fallthru
    _
  // Predicated region
  $region34: #{_lambda_.2} parent=0 // pred_check
    _
  $region35: #{_lambda_.2} parent=0 // pred_check_branch
    %36 = sbr.rel (0) target = $region37
  $region36: #{_lambda_.2} parent=0 // pred_region
    _
  $region37: #{_lambda_.2} parent=0 // pred_fallthru
    _
  // Predicated region
  $region38: #{_lambda_.2} parent=0 // pred_check
    _
  $region39: #{_lambda_.2} parent=0 // pred_check_branch
    %38 = sbr.rel (0) target = $region41
  $region40: #{_lambda_.2} parent=0 // pred_region
    _
  $region41: #{_lambda_.2} parent=0 // pred_fallthru
    _
  // Predicated region
  $region42: #{_lambda_.2} parent=0 // pred_check
    _
  $region43: #{_lambda_.2} parent=0 // pred_check_branch
    %40 = sbr.rel (0) target = $region45
  $region44: #{_lambda_.2} parent=0 // pred_region
    _
  $region45: #{_lambda_.2} parent=0 // pred_fallthru
    _
  // Predicated region
  $region46: #{_lambda_.2} parent=0 // pred_check
    _
  $region47: #{_lambda_.2} parent=0 // pred_check_branch
    %42 = sbr.rel (0) target = $region49
  $region48: #{_lambda_.2} parent=0 // pred_region
    _
  $region49: #{_lambda_.2} parent=0 // pred_fallthru
    _
  // Predicated region
  $region50: #{_lambda_.2} parent=0 // pred_check
    _
  $region51: #{_lambda_.2} parent=0 // pred_check_branch
    %44 = sbr.rel (0) target = $region53
  $region52: #{_lambda_.2} parent=0 // pred_region
    _
  $region53: #{_lambda_.2} parent=0 // pred_fallthru
    _
  // Predicated region
  $region54: #{_lambda_.2} parent=0 // pred_check
    _
  $region55: #{_lambda_.2} parent=0 // pred_check_branch
    %46 = sbr.rel (0) target = $region57
  $region56: #{_lambda_.2} parent=0 // pred_region
    _
  $region57: #{_lambda_.2} parent=0 // pred_fallthru
    _
  %v47 = vld [vmem:[%s1] sm:$0x1]
  %v48 = vld [vmem:[%s13] sm:$0xff]
  %v49 = vld [vmem:[%s13 + $0x8] sm:$0xff]
  %v50 = vld [vmem:[%s13 + $0x10] sm:$0xff]
  %v51 = vld [vmem:[%s13 + $0x18] sm:$0xff]
  %v52 = vld [vmem:[%s13 + $0x20] sm:$0xff]
  %v53 = vld [vmem:[%s13 + $0x28] sm:$0xff]
  %v54 = vld [vmem:[%s13 + $0x30] sm:$0xff]
  %v55 = vld [vmem:[%s13 + $0x38] sm:$0xff]
  %v56 = vld [vmem:[%s13 + $0x40] sm:$0xff]
  %v57 = vld [vmem:[%s13 + $0x48] sm:$0xff]
  %v58 = vld [vmem:[%s13 + $0x50] sm:$0xff]
  %v59 = vld [vmem:[%s13 + $0x58] sm:$0xff]
  %v60 = vld [vmem:[%s13 + $0x60] sm:$0xff]
  %v61 = vld [vmem:[%s13 + $0x68] sm:$0xff]
  %v62 = vld [vmem:[%s13 + $0x70] sm:$0xff]
  %v63 = vld [vmem:[%s13 + $0x78] sm:$0xff]
  %v64 = vld [vmem:[%s13 + $0x80] sm:$0xff]
  %v65 = vld [vmem:[%s13 + $0x88] sm:$0xff]
  %v66 = vld [vmem:[%s13 + $0x90] sm:$0xff]
  %v67 = vld [vmem:[%s13 + $0x98] sm:$0xff]
  %v68 = vld [vmem:[%s13 + $0xa0] sm:$0xff]
  %v69 = vld [vmem:[%s13 + $0xa8] sm:$0xff]
  %v70 = vld [vmem:[%s13 + $0xb0] sm:$0xff]
  %v71 = vld [vmem:[%s13 + $0xb8] sm:$0xff]
  %v72 = vld [vmem:[%s13 + $0xc0] sm:$0xff]
  %v73 = vld [vmem:[%s13 + $0xc8] sm:$0xff]
  %v74 = vld [vmem:[%s13 + $0xd0] sm:$0xff]
  %v75 = vld [vmem:[%s13 + $0xd8] sm:$0xff]
  %v76 = vld [vmem:[%s13 + $0xe0] sm:$0xff]
  %v77 = vld [vmem:[%s13 + $0xe8] sm:$0xff]
  %v78 = vld [vmem:[%s13 + $0xf0] sm:$0xff]
  %v79 = vld [vmem:[%s13 + $0xf8] sm:$0xff]
  %v80 = vld [vmem:[%s13 + $0x100] sm:$0xff]
  %v81 = vld [vmem:[%s13 + $0x108] sm:$0xff]
  %v82 = vld [vmem:[%s13 + $0x110] sm:$0xff]
  %v83 = vld [vmem:[%s13 + $0x118] sm:$0xff]
  %v84 = vld [vmem:[%s13 + $0x120] sm:$0xff]
  %v85 = vld [vmem:[%s13 + $0x128] sm:$0xff]
  %v86 = vld [vmem:[%s13 + $0x130] sm:$0xff]
  %v87 = vld [vmem:[%s13 + $0x138] sm:$0xff]
  %v88 = vld [vmem:[%s13 + $0x140] sm:$0xff]
  %v89 = vld [vmem:[%s13 + $0x148] sm:$0xff]
  %v90 = vld [vmem:[%s13 + $0x150] sm:$0xff]
  %v91 = vld [vmem:[%s13 + $0x158] sm:$0xff]
  %v92 = vld [vmem:[%s0] sm:$0xff]
  %v93 = vld [vmem:[%s6] sm:$0xff]
  %v94 = vld [vmem:[%s6 + $0x8] sm:$0xff]
  %v95 = vld [vmem:[%s6 + $0x10] sm:$0xff]
  %v96 = vld [vmem:[%s6 + $0x18] sm:$0xff]
  %98 = vset.pattern.permute.xlu0 0
  %99 = vperm.xlu0 %98, %v48
  %v100 = vpop.permute.xlu0 %99
  %103 = vset.pattern.permute.xlu0 0
  %104 = vperm.xlu0 %103, %v49
  %v105 = vpop.permute.xlu0 %104
  %108 = vset.pattern.permute.xlu0 0
  %109 = vperm.xlu0 %108, %v50
  %v110 = vpop.permute.xlu0 %109
  %113 = vset.pattern.permute.xlu0 0
  %114 = vperm.xlu0 %113, %v51
  %v115 = vpop.permute.xlu0 %114
  %vm117 = vcmask 64512
  %v119 = vsel %vm117, %v93, 0
  %v122 = vsel %vm117, %v94, 0
  %v125 = vsel %vm117, %v95, 0
  %v128 = vsel %vm117, %v96, 0
  %130 = vmatprep.subr.mxu0 0.0
  %131 = vmatpush1.msra.mxu0 %v92
  %132 = vmatprep.subr.mxu0 0.0
  %133 = vmatpush1.msra.mxu0 0.0
  %134 = vmatprep.subr.mxu0 0.0
  %135 = vmatpush1.msra.mxu0 0.0
  %136 = vmatprep.subr.mxu0 0.0
  %137 = vmatpush1.msra.mxu0 0.0
  %138 = vmatprep.subr.mxu0 0.0
  %139 = vmatpush1.msra.mxu0 0.0
  %140 = vmatprep.subr.mxu0 0.0
  %141 = vmatpush1.msra.mxu0 0.0
  %142 = vmatprep.subr.mxu0 0.0
  %143 = vmatpush1.msra.mxu0 0.0
  %144 = vmatprep.subr.mxu0 0.0
  %145 = vmatpush1.msra.mxu0 0.0
  %146 = vmatprep.subr.mxu0 0.0
  %147 = vmatpush1.msra.mxu0 0.0
  %148 = vmatprep.subr.mxu0 0.0
  %149 = vmatpush1.msra.mxu0 0.0
  %150 = vmatprep.subr.mxu0 0.0
  %151 = vmatpush1.msra.mxu0 0.0
  %152 = vmatprep.subr.mxu0 0.0
  %153 = vmatpush1.msra.mxu0 0.0
  %154 = vmatprep.subr.mxu0 0.0
  %155 = vmatpush1.msra.mxu0 0.0
  %156 = vmatprep.subr.mxu0 0.0
  %157 = vmatpush1.msra.mxu0 0.0
  %158 = vmatprep.subr.mxu0 0.0
  %159 = vmatpush1.msra.mxu0 0.0
  %160 = vmatprep.subr.mxu0 0.0
  %161 = vmatpush1.msra.mxu0 0.0
  %162 = vmatprep.subr.mxu0 0.0
  %163 = vmatpush1.msra.mxu0 0.0
  %164 = vmatprep.subr.mxu0 0.0
  %165 = vmatpush1.msra.mxu0 0.0
  %166 = vmatprep.subr.mxu0 0.0
  %167 = vmatpush1.msra.mxu0 0.0
  %168 = vmatprep.subr.mxu0 0.0
  %169 = vmatpush1.msra.mxu0 0.0
  %170 = vmatprep.subr.mxu0 0.0
  %171 = vmatpush1.msra.mxu0 0.0
  %172 = vmatprep.subr.mxu0 0.0
  %173 = vmatpush1.msra.mxu0 0.0
  %174 = vmatprep.subr.mxu0 0.0
  %175 = vmatpush1.msra.mxu0 0.0
  %176 = vmatprep.subr.mxu0 0.0
  %177 = vmatpush1.msra.mxu0 0.0
  %178 = vmatprep.subr.mxu0 0.0
  %179 = vmatpush1.msra.mxu0 0.0
  %180 = vmatprep.subr.mxu0 0.0
  %181 = vmatpush1.msra.mxu0 0.0
  %182 = vmatprep.subr.mxu0 0.0
  %183 = vmatpush1.msra.mxu0 0.0
  %184 = vmatprep.subr.mxu0 0.0
  %185 = vmatpush1.msra.mxu0 0.0
  %186 = vmatprep.subr.mxu0 0.0
  %187 = vmatpush1.msra.mxu0 0.0
  %188 = vmatprep.subr.mxu0 0.0
  %189 = vmatpush1.msra.mxu0 0.0
  %190 = vmatprep.subr.mxu0 0.0
  %191 = vmatpush1.msra.mxu0 0.0
  %192 = vmatprep.subr.mxu0 0.0
  %193 = vmatpush1.msra.mxu0 0.0
  %194 = vmatprep.mubr.f32.mxu0 0.0
  %195 = vmatmul.mubr.f32.gmra.mrb[0].mxu0 %v119
  %v196 = vpop.f32.mrb[0].mxu0
  %v197 = vadd.f32 %v100, %v196
  %v198 = vpop.f32.mrb[0].mxu0
  %199 = vmatprep.mubr.f32.mxu0 0.0
  %200 = vmatmul.mubr.f32.gmra.mrb[0].mxu0 %v122
  %v201 = vpop.f32.mrb[0].mxu0
  %v202 = vadd.f32 %v105, %v201
  %v203 = vpop.f32.mrb[0].mxu0
  %204 = vmatprep.mubr.f32.mxu0 0.0
  %205 = vmatmul.mubr.f32.gmra.mrb[0].mxu0 %v125
  %v206 = vpop.f32.mrb[0].mxu0
  %v207 = vadd.f32 %v110, %v206
  %v208 = vpop.f32.mrb[0].mxu0
  %209 = vmatprep.mubr.f32.mxu0 0.0
  %210 = vmatmul.mubr.f32.gmra.mrb[0].mxu0 %v128
  %v211 = vpop.f32.mrb[0].mxu0
  %v212 = vadd.f32 %v115, %v211
  %v213 = vpop.f32.mrb[0].mxu0
  %214 = vdwg.mxu0
  %215 = vrot.lane.b32.xlu0 %v197, 1
  %v216 = vpop.permute.xlu0 %215
  %217 = vrot.lane.b32.xlu0 %v202, 1
  %v218 = vpop.permute.xlu0 %217
  %219 = vrot.lane.b32.xlu0 %v207, 1
  %v220 = vpop.permute.xlu0 %219
  %221 = vrot.lane.b32.xlu0 %v212, 1
  %v222 = vpop.permute.xlu0 %221
  %v223 = vld [vmem:[%s2] sm:$0x1]
  %v225 = vlaneseq
  %v226 = vshrl.u32 %v225, 7
  %v227 = vsub.s32 0, %v226
  %v228 = vrot.slane %v223, %v227
  %v230 = vmul.f32 %v216, %v228
  %v231 = vmul.f32 %v218, %v228
  %v232 = vmul.f32 %v220, %v228
  %v233 = vmul.f32 %v222, %v228
  %234 = vrot.lane.b32.xlu0 %v197, 127
  %v235 = vpop.permute.xlu0 %234
  %236 = vrot.lane.b32.xlu0 %v202, 127
  %v237 = vpop.permute.xlu0 %236
  %238 = vrot.lane.b32.xlu0 %v207, 127
  %v239 = vpop.permute.xlu0 %238
  %240 = vrot.lane.b32.xlu0 %v212, 127
  %v241 = vpop.permute.xlu0 %240
  %v242 = vld [vmem:[%s3] sm:$0x1]
  %v244 = vlaneseq
  %v245 = vshrl.u32 %v244, 7
  %v246 = vsub.s32 0, %v245
  %v247 = vrot.slane %v242, %v246
  %v249 = vmul.f32 %v235, %v247
  %v250 = vmul.f32 %v237, %v247
  %v251 = vmul.f32 %v239, %v247
  %v252 = vmul.f32 %v241, %v247
  %v253 = vld [vmem:[%s7] sm:$0xff]
  %v254 = vld [vmem:[%s7 + $0x8] sm:$0xff]
  %v255 = vld [vmem:[%s7 + $0x10] sm:$0xff]
  %v256 = vld [vmem:[%s7 + $0x18] sm:$0xff]
  %258 = vset.pattern.permute.xlu0 0
  %259 = vperm.xlu0 %258, %v52
  %v260 = vpop.permute.xlu0 %259
  %263 = vset.pattern.permute.xlu0 0
  %264 = vperm.xlu0 %263, %v53
  %v265 = vpop.permute.xlu0 %264
  %268 = vset.pattern.permute.xlu0 0
  %269 = vperm.xlu0 %268, %v54
  %v270 = vpop.permute.xlu0 %269
  %273 = vset.pattern.permute.xlu0 0
  %274 = vperm.xlu0 %273, %v55
  %v275 = vpop.permute.xlu0 %274
  %vm277 = vcmask 785408
  %v279 = vsel %vm277, %v253, 0
  %v282 = vsel %vm277, %v254, 0
  %v285 = vsel %vm277, %v255, 0
  %v288 = vsel %vm277, %v256, 0
  %290 = vmatprep.subr.mxu0 0.0
  %291 = vmatpush1.msra.mxu0 %v230
  %292 = vmatprep.subr.mxu0 0.0
  %293 = vmatpush1.msra.mxu0 %v231
  %294 = vmatprep.subr.mxu0 0.0
  %295 = vmatpush1.msra.mxu0 %v232
  %296 = vmatprep.subr.mxu0 0.0
  %297 = vmatpush1.msra.mxu0 %v233
  %298 = vmatprep.subr.mxu0 0.0
  %299 = vmatpush1.msra.mxu0 %v197
  %300 = vmatprep.subr.mxu0 0.0
  %301 = vmatpush1.msra.mxu0 %v202
  %302 = vmatprep.subr.mxu0 0.0
  %303 = vmatpush1.msra.mxu0 %v207
  %304 = vmatprep.subr.mxu0 0.0
  %305 = vmatpush1.msra.mxu0 %v212
  %306 = vmatprep.subr.mxu0 0.0
  %307 = vmatpush1.msra.mxu0 %v249
  %308 = vmatprep.subr.mxu0 0.0
  %309 = vmatpush1.msra.mxu0 %v250
  %310 = vmatprep.subr.mxu0 0.0
  %311 = vmatpush1.msra.mxu0 %v251
  %312 = vmatprep.subr.mxu0 0.0
  %313 = vmatpush1.msra.mxu0 %v252
  %314 = vmatprep.subr.mxu0 0.0
  %315 = vmatpush1.msra.mxu0 0.0
  %316 = vmatprep.subr.mxu0 0.0
  %317 = vmatpush1.msra.mxu0 0.0
  %318 = vmatprep.subr.mxu0 0.0
  %319 = vmatpush1.msra.mxu0 0.0
  %320 = vmatprep.subr.mxu0 0.0
  %321 = vmatpush1.msra.mxu0 0.0
  %322 = vmatprep.subr.mxu0 0.0
  %323 = vmatpush1.msra.mxu0 0.0
  %324 = vmatprep.subr.mxu0 0.0
  %325 = vmatpush1.msra.mxu0 0.0
  %326 = vmatprep.subr.mxu0 0.0
  %327 = vmatpush1.msra.mxu0 0.0
  %328 = vmatprep.subr.mxu0 0.0
  %329 = vmatpush1.msra.mxu0 0.0
  %330 = vmatprep.subr.mxu0 0.0
  %331 = vmatpush1.msra.mxu0 0.0
  %332 = vmatprep.subr.mxu0 0.0
  %333 = vmatpush1.msra.mxu0 0.0
  %334 = vmatprep.subr.mxu0 0.0
  %335 = vmatpush1.msra.mxu0 0.0
  %336 = vmatprep.subr.mxu0 0.0
  %337 = vmatpush1.msra.mxu0 0.0
  %338 = vmatprep.subr.mxu0 0.0
  %339 = vmatpush1.msra.mxu0 0.0
  %340 = vmatprep.subr.mxu0 0.0
  %341 = vmatpush1.msra.mxu0 0.0
  %342 = vmatprep.subr.mxu0 0.0
  %343 = vmatpush1.msra.mxu0 0.0
  %344 = vmatprep.subr.mxu0 0.0
  %345 = vmatpush1.msra.mxu0 0.0
  %346 = vmatprep.subr.mxu0 0.0
  %347 = vmatpush1.msra.mxu0 0.0
  %348 = vmatprep.subr.mxu0 0.0
  %349 = vmatpush1.msra.mxu0 0.0
  %350 = vmatprep.subr.mxu0 0.0
  %351 = vmatpush1.msra.mxu0 0.0
  %352 = vmatprep.subr.mxu0 0.0
  %353 = vmatpush1.msra.mxu0 0.0
  %354 = vmatprep.mubr.f32.mxu0 0.0
  %355 = vmatmul.mubr.f32.gmra.mrb[0].mxu0 %v279
  %v356 = vpop.f32.mrb[0].mxu0
  %v357 = vadd.f32 %v260, %v356
  %v358 = vpop.f32.mrb[0].mxu0
  %359 = vmatprep.mubr.f32.mxu0 0.0
  %360 = vmatmul.mubr.f32.gmra.mrb[0].mxu0 %v282
  %v361 = vpop.f32.mrb[0].mxu0
  %v362 = vadd.f32 %v265, %v361
  %v363 = vpop.f32.mrb[0].mxu0
  %364 = vmatprep.mubr.f32.mxu0 0.0
  %365 = vmatmul.mubr.f32.gmra.mrb[0].mxu0 %v285
  %v366 = vpop.f32.mrb[0].mxu0
  %v367 = vadd.f32 %v270, %v366
  %v368 = vpop.f32.mrb[0].mxu0
  %369 = vmatprep.mubr.f32.mxu0 0.0
  %370 = vmatmul.mubr.f32.gmra.mrb[0].mxu0 %v288
  %v371 = vpop.f32.mrb[0].mxu0
  %v372 = vadd.f32 %v275, %v371
  %v373 = vpop.f32.mrb[0].mxu0
  %374 = vdwg.mxu0
  %v375 = vmul.f32 %v357, %v357
  %v376 = vmul.f32 %v362, %v362
  %v377 = vmul.f32 %v367, %v367
  %v378 = vmul.f32 %v372, %v372
  %v379 = vmul.f32 %v357, %v375
  %v380 = vmul.f32 %v362, %v376
  %v381 = vmul.f32 %v367, %v377
  %v382 = vmul.f32 %v372, %v378
  %v383 = vmul.f32 %v379, 0.044715
  %v384 = vmul.f32 %v380, 0.044715
  %v385 = vmul.f32 %v381, 0.044715
  %v386 = vmul.f32 %v382, 0.044715
  %v387 = vadd.f32 %v357, %v383
  %v388 = vadd.f32 %v362, %v384
  %v389 = vadd.f32 %v367, %v385
  %v390 = vadd.f32 %v372, %v386
  %v391 = vmul.f32 %v387, 0.7978846
  %v392 = vmul.f32 %v388, 0.7978846
  %v393 = vmul.f32 %v389, 0.7978846
  %v394 = vmul.f32 %v390, 0.7978846
  %v395 = vtanh.pop %v391
  %v396 = vtanh.pop %v392
  %v397 = vtanh.pop %v393
  %v398 = vtanh.pop %v394
  %v399 = vadd.f32 %v395, 1.0
  %v400 = vadd.f32 %v396, 1.0
  %v401 = vadd.f32 %v397, 1.0
  %v402 = vadd.f32 %v398, 1.0
  %v403 = vmul.f32 %v399, 0.5
  %v404 = vmul.f32 %v400, 0.5
  %v405 = vmul.f32 %v401, 0.5
  %v406 = vmul.f32 %v402, 0.5
  %v407 = vmul.f32 %v357, %v403
  %v408 = vmul.f32 %v362, %v404
  %v409 = vmul.f32 %v367, %v405
  %v410 = vmul.f32 %v372, %v406
  %v412 = vlaneseq
  %v413 = vshrl.u32 %v412, 7
  %v414 = vsub.s32 0, %v413
  %v415 = vrot.slane %v47, %v414
  %v417 = vmul.f32 %v407, %v415
  %v418 = vmul.f32 %v408, %v415
  %v419 = vmul.f32 %v409, %v415
  %v420 = vmul.f32 %v410, %v415
  %v421 = vld [vmem:[%s4] sm:$0xff]
  %v422 = vld [vmem:[%s4 + $0x8] sm:$0xff]
  %v423 = vld [vmem:[%s4 + $0x10] sm:$0xff]
  %v424 = vld [vmem:[%s4 + $0x18] sm:$0xff]
  %v425 = vld [vmem:[%s4 + $0x20] sm:$0xff]
  %v426 = vld [vmem:[%s4 + $0x28] sm:$0xff]
  %v427 = vld [vmem:[%s4 + $0x30] sm:$0xff]
  %v428 = vld [vmem:[%s4 + $0x38] sm:$0xff]
  %v429 = vld [vmem:[%s4 + $0x40] sm:$0xff]
  %v430 = vld [vmem:[%s4 + $0x48] sm:$0xff]
  %v431 = vld [vmem:[%s4 + $0x50] sm:$0xff]
  %v432 = vld [vmem:[%s4 + $0x58] sm:$0xff]
  %v433 = vld [vmem:[%s4 + $0x60] sm:$0xff]
  %v434 = vld [vmem:[%s4 + $0x68] sm:$0xff]
  %v435 = vld [vmem:[%s4 + $0x70] sm:$0xff]
  %v436 = vld [vmem:[%s4 + $0x78] sm:$0xff]
  %v437 = vmul.f32 %v421, %v415
  %v438 = vmul.f32 %v422, %v415
  %v439 = vmul.f32 %v423, %v415
  %v440 = vmul.f32 %v424, %v415
  %v441 = vmul.f32 %v425, %v415
  %v442 = vmul.f32 %v426, %v415
  %v443 = vmul.f32 %v427, %v415
  %v444 = vmul.f32 %v428, %v415
  %v445 = vmul.f32 %v429, %v415
  %v446 = vmul.f32 %v430, %v415
  %v447 = vmul.f32 %v431, %v415
  %v448 = vmul.f32 %v432, %v415
  %v449 = vmul.f32 %v433, %v415
  %v450 = vmul.f32 %v434, %v415
  %v451 = vmul.f32 %v435, %v415
  %v452 = vmul.f32 %v436, %v415
  %v453 = vld [vmem:[%s8] sm:$0xff]
  %v454 = vld [vmem:[%s8 + $0x8] sm:$0xff]
  %v455 = vld [vmem:[%s8 + $0x10] sm:$0xff]
  %v456 = vld [vmem:[%s8 + $0x18] sm:$0xff]
  %v457 = vld [vmem:[%s8 + $0x20] sm:$0xff]
  %v458 = vld [vmem:[%s8 + $0x28] sm:$0xff]
  %v459 = vld [vmem:[%s8 + $0x30] sm:$0xff]
  %v460 = vld [vmem:[%s8 + $0x38] sm:$0xff]
  %v461 = vld [vmem:[%s8 + $0x40] sm:$0xff]
  %v462 = vld [vmem:[%s8 + $0x48] sm:$0xff]
  %v463 = vld [vmem:[%s8 + $0x50] sm:$0xff]
  %v464 = vld [vmem:[%s8 + $0x58] sm:$0xff]
  %466 = vset.pattern.permute.xlu0 0
  %467 = vperm.xlu0 %466, %v56
  %v468 = vpop.permute.xlu0 %467
  %471 = vset.pattern.permute.xlu0 0
  %472 = vperm.xlu0 %471, %v57
  %v473 = vpop.permute.xlu0 %472
  %476 = vset.pattern.permute.xlu0 0
  %477 = vperm.xlu0 %476, %v58
  %v478 = vpop.permute.xlu0 %477
  %481 = vset.pattern.permute.xlu0 0
  %482 = vperm.xlu0 %481, %v59
  %v483 = vpop.permute.xlu0 %482
  %486 = vset.pattern.permute.xlu0 0
  %487 = vperm.xlu0 %486, %v60
  %v488 = vpop.permute.xlu0 %487
  %491 = vset.pattern.permute.xlu0 0
  %492 = vperm.xlu0 %491, %v61
  %v493 = vpop.permute.xlu0 %492
  %496 = vset.pattern.permute.xlu0 0
  %497 = vperm.xlu0 %496, %v62
  %v498 = vpop.permute.xlu0 %497
  %501 = vset.pattern.permute.xlu0 0
  %502 = vperm.xlu0 %501, %v63
  %v503 = vpop.permute.xlu0 %502
  %506 = vset.pattern.permute.xlu0 0
  %507 = vperm.xlu0 %506, %v64
  %v508 = vpop.permute.xlu0 %507
  %511 = vset.pattern.permute.xlu0 0
  %512 = vperm.xlu0 %511, %v65
  %v513 = vpop.permute.xlu0 %512
  %516 = vset.pattern.permute.xlu0 0
  %517 = vperm.xlu0 %516, %v66
  %v518 = vpop.permute.xlu0 %517
  %521 = vset.pattern.permute.xlu0 0
  %522 = vperm.xlu0 %521, %v67
  %v523 = vpop.permute.xlu0 %522
  %vm525 = vcmask 261120
  %v527 = vsel %vm525, %v453, 0
  %v530 = vsel %vm525, %v454, 0
  %v533 = vsel %vm525, %v455, 0
  %v536 = vsel %vm525, %v456, 0
  %v539 = vsel %vm525, %v457, 0
  %v542 = vsel %vm525, %v458, 0
  %v545 = vsel %vm525, %v459, 0
  %v548 = vsel %vm525, %v460, 0
  %v551 = vsel %vm525, %v461, 0
  %v554 = vsel %vm525, %v462, 0
  %v557 = vsel %vm525, %v463, 0
  %v560 = vsel %vm525, %v464, 0
  %562 = vmatprep.subr.mxu0 0.0
  %563 = vmatpush1.msra.mxu0 %v417
  %564 = vmatprep.subr.mxu0 0.0
  %565 = vmatpush1.msra.mxu0 %v418
  %566 = vmatprep.subr.mxu0 0.0
  %567 = vmatpush1.msra.mxu0 %v419
  %568 = vmatprep.subr.mxu0 0.0
  %569 = vmatpush1.msra.mxu0 %v420
  %570 = vmatprep.subr.mxu0 0.0
  %571 = vmatpush1.msra.mxu0 0.0
  %572 = vmatprep.subr.mxu0 0.0
  %573 = vmatpush1.msra.mxu0 0.0
  %574 = vmatprep.subr.mxu0 0.0
  %575 = vmatpush1.msra.mxu0 0.0
  %576 = vmatprep.subr.mxu0 0.0
  %577 = vmatpush1.msra.mxu0 0.0
  %578 = vmatprep.subr.mxu0 0.0
  %579 = vmatpush1.msra.mxu0 0.0
  %580 = vmatprep.subr.mxu0 0.0
  %581 = vmatpush1.msra.mxu0 0.0
  %582 = vmatprep.subr.mxu0 0.0
  %583 = vmatpush1.msra.mxu0 0.0
  %584 = vmatprep.subr.mxu0 0.0
  %585 = vmatpush1.msra.mxu0 0.0
  %586 = vmatprep.subr.mxu0 0.0
  %587 = vmatpush1.msra.mxu0 0.0
  %588 = vmatprep.subr.mxu0 0.0
  %589 = vmatpush1.msra.mxu0 0.0
  %590 = vmatprep.subr.mxu0 0.0
  %591 = vmatpush1.msra.mxu0 0.0
  %592 = vmatprep.subr.mxu0 0.0
  %593 = vmatpush1.msra.mxu0 0.0
  %594 = vmatprep.subr.mxu0 0.0
  %595 = vmatpush1.msra.mxu0 0.0
  %596 = vmatprep.subr.mxu0 0.0
  %597 = vmatpush1.msra.mxu0 0.0
  %598 = vmatprep.subr.mxu0 0.0
  %599 = vmatpush1.msra.mxu0 0.0
  %600 = vmatprep.subr.mxu0 0.0
  %601 = vmatpush1.msra.mxu0 0.0
  %602 = vmatprep.subr.mxu0 0.0
  %603 = vmatpush1.msra.mxu0 0.0
  %604 = vmatprep.subr.mxu0 0.0
  %605 = vmatpush1.msra.mxu0 0.0
  %606 = vmatprep.subr.mxu0 0.0
  %607 = vmatpush1.msra.mxu0 0.0
  %608 = vmatprep.subr.mxu0 0.0
  %609 = vmatpush1.msra.mxu0 0.0
  %610 = vmatprep.subr.mxu0 0.0
  %611 = vmatpush1.msra.mxu0 0.0
  %612 = vmatprep.subr.mxu0 0.0
  %613 = vmatpush1.msra.mxu0 0.0
  %614 = vmatprep.subr.mxu0 0.0
  %615 = vmatpush1.msra.mxu0 0.0
  %616 = vmatprep.subr.mxu0 0.0
  %617 = vmatpush1.msra.mxu0 0.0
  %618 = vmatprep.subr.mxu0 0.0
  %619 = vmatpush1.msra.mxu0 0.0
  %620 = vmatprep.subr.mxu0 0.0
  %621 = vmatpush1.msra.mxu0 0.0
  %622 = vmatprep.subr.mxu0 0.0
  %623 = vmatpush1.msra.mxu0 0.0
  %624 = vmatprep.subr.mxu0 0.0
  %625 = vmatpush1.msra.mxu0 0.0
  %626 = vmatprep.mubr.f32.mxu0 0.0
  %627 = vmatmul.mubr.f32.gmra.mrb[0].mxu0 %v527
  %v628 = vpop.f32.mrb[0].mxu0
  %v629 = vadd.f32 %v468, %v628
  %v630 = vpop.f32.mrb[0].mxu0
  %631 = vmatprep.mubr.f32.mxu0 0.0
  %632 = vmatmul.mubr.f32.gmra.mrb[0].mxu0 %v530
  %v633 = vpop.f32.mrb[0].mxu0
  %v634 = vadd.f32 %v473, %v633
  %v635 = vpop.f32.mrb[0].mxu0
  %636 = vmatprep.mubr.f32.mxu0 0.0
  %637 = vmatmul.mubr.f32.gmra.mrb[0].mxu0 %v533
  %v638 = vpop.f32.mrb[0].mxu0
  %v639 = vadd.f32 %v478, %v638
  %v640 = vpop.f32.mrb[0].mxu0
  %641 = vmatprep.mubr.f32.mxu0 0.0
  %642 = vmatmul.mubr.f32.gmra.mrb[0].mxu0 %v536
  %v643 = vpop.f32.mrb[0].mxu0
  %v644 = vadd.f32 %v483, %v643
  %v645 = vpop.f32.mrb[0].mxu0
  %646 = vmatprep.mubr.f32.mxu0 0.0
  %647 = vmatmul.mubr.f32.gmra.mrb[0].mxu0 %v539
  %v648 = vpop.f32.mrb[0].mxu0
  %v649 = vadd.f32 %v488, %v648
  %v650 = vpop.f32.mrb[0].mxu0
  %651 = vmatprep.mubr.f32.mxu0 0.0
  %652 = vmatmul.mubr.f32.gmra.mrb[0].mxu0 %v542
  %v653 = vpop.f32.mrb[0].mxu0
  %v654 = vadd.f32 %v493, %v653
  %v655 = vpop.f32.mrb[0].mxu0
  %656 = vmatprep.mubr.f32.mxu0 0.0
  %657 = vmatmul.mubr.f32.gmra.mrb[0].mxu0 %v545
  %v658 = vpop.f32.mrb[0].mxu0
  %v659 = vadd.f32 %v498, %v658
  %v660 = vpop.f32.mrb[0].mxu0
  %661 = vmatprep.mubr.f32.mxu0 0.0
  %662 = vmatmul.mubr.f32.gmra.mrb[0].mxu0 %v548
  %v663 = vpop.f32.mrb[0].mxu0
  %v664 = vadd.f32 %v503, %v663
  %v665 = vpop.f32.mrb[0].mxu0
  %666 = vmatprep.mubr.f32.mxu0 0.0
  %667 = vmatmul.mubr.f32.gmra.mrb[0].mxu0 %v551
  %v668 = vpop.f32.mrb[0].mxu0
  %v669 = vadd.f32 %v508, %v668
  %v670 = vpop.f32.mrb[0].mxu0
  %671 = vmatprep.mubr.f32.mxu0 0.0
  %672 = vmatmul.mubr.f32.gmra.mrb[0].mxu0 %v554
  %v673 = vpop.f32.mrb[0].mxu0
  %v674 = vadd.f32 %v513, %v673
  %v675 = vpop.f32.mrb[0].mxu0
  %676 = vmatprep.mubr.f32.mxu0 0.0
  %677 = vmatmul.mubr.f32.gmra.mrb[0].mxu0 %v557
  %v678 = vpop.f32.mrb[0].mxu0
  %v679 = vadd.f32 %v518, %v678
  %v680 = vpop.f32.mrb[0].mxu0
  %681 = vmatprep.mubr.f32.mxu0 0.0
  %682 = vmatmul.mubr.f32.gmra.mrb[0].mxu0 %v560
  %v683 = vpop.f32.mrb[0].mxu0
  %v684 = vadd.f32 %v523, %v683
  %v685 = vpop.f32.mrb[0].mxu0
  %686 = vdwg.mxu0
  %687 = vxpose.xlu0.b32.start [1/16] %v629, 128
  %688 = vxpose.xlu0.b32.cont [2/16] 0.0, 128
  %689 = vxpose.xlu0.b32.cont [3/16] 0.0, 128
  %690 = vxpose.xlu0.b32.cont [4/16] 0.0, 128
  %691 = vxpose.xlu0.b32.cont [5/16] 0.0, 128
  %692 = vxpose.xlu0.b32.cont [6/16] 0.0, 128
  %693 = vxpose.xlu0.b32.cont [7/16] 0.0, 128
  %694 = vxpose.xlu0.b32.cont [8/16] 0.0, 128
  %695 = vxpose.xlu0.b32.cont [9/16] 0.0, 128
  %696 = vxpose.xlu0.b32.cont [10/16] 0.0, 128
  %697 = vxpose.xlu0.b32.cont [11/16] 0.0, 128
  %698 = vxpose.xlu0.b32.cont [12/16] 0.0, 128
  %699 = vxpose.xlu0.b32.cont [13/16] 0.0, 128
  %700 = vxpose.xlu0.b32.cont [14/16] 0.0, 128
  %701 = vxpose.xlu0.b32.cont [15/16] 0.0, 128
  %702 = vxpose.xlu0.b32.end [16/16] 0.0, 128
  %v703 = vpop.trf.xlu0
  %v704 = vpop.trf.xlu0
  %v705 = vpop.trf.xlu0
  %v706 = vpop.trf.xlu0
  %v707 = vpop.trf.xlu0
  %v708 = vpop.trf.xlu0
  %v709 = vpop.trf.xlu0
  %v710 = vpop.trf.xlu0
  %v711 = vpop.trf.xlu0
  %v712 = vpop.trf.xlu0
  %v713 = vpop.trf.xlu0
  %v714 = vpop.trf.xlu0
  %v715 = vpop.trf.xlu0
  %v716 = vpop.trf.xlu0
  %v717 = vpop.trf.xlu0
  %v718 = vpop.trf.xlu0
  %v720 = vsel %vm117, %v703, 0
  %v723 = vsel %vm117, %v704, 0
  %v726 = vsel %vm117, %v705, 0
  %v729 = vsel %vm117, %v706, 0
  %v732 = vsel %vm117, %v707, 0
  %v735 = vsel %vm117, %v708, 0
  %v738 = vsel %vm117, %v709, 0
  %v741 = vsel %vm117, %v710, 0
  %v744 = vsel %vm117, %v711, 0
  %v747 = vsel %vm117, %v712, 0
  %v750 = vsel %vm117, %v713, 0
  %v753 = vsel %vm117, %v714, 0
  %v756 = vsel %vm117, %v715, 0
  %v759 = vsel %vm117, %v716, 0
  %v762 = vsel %vm117, %v717, 0
  %v765 = vsel %vm117, %v718, 0
  %767 = vmatprep.subr.mxu0 0.0
  %768 = vmatpush1.msra.mxu0 %v649
  %769 = vmatprep.subr.mxu0 0.0
  %770 = vmatpush1.msra.mxu0 0.0
  %771 = vmatprep.subr.mxu0 0.0
  %772 = vmatpush1.msra.mxu0 0.0
  %773 = vmatprep.subr.mxu0 0.0
  %774 = vmatpush1.msra.mxu0 0.0
  %775 = vmatprep.subr.mxu0 0.0
  %776 = vmatpush1.msra.mxu0 0.0
  %777 = vmatprep.subr.mxu0 0.0
  %778 = vmatpush1.msra.mxu0 0.0
  %779 = vmatprep.subr.mxu0 0.0
  %780 = vmatpush1.msra.mxu0 0.0
  %781 = vmatprep.subr.mxu0 0.0
  %782 = vmatpush1.msra.mxu0 0.0
  %783 = vmatprep.subr.mxu0 0.0
  %784 = vmatpush1.msra.mxu0 0.0
  %785 = vmatprep.subr.mxu0 0.0
  %786 = vmatpush1.msra.mxu0 0.0
  %787 = vmatprep.subr.mxu0 0.0
  %788 = vmatpush1.msra.mxu0 0.0
  %789 = vmatprep.subr.mxu0 0.0
  %790 = vmatpush1.msra.mxu0 0.0
  %791 = vmatprep.subr.mxu0 0.0
  %792 = vmatpush1.msra.mxu0 0.0
  %793 = vmatprep.subr.mxu0 0.0
  %794 = vmatpush1.msra.mxu0 0.0
  %795 = vmatprep.subr.mxu0 0.0
  %796 = vmatpush1.msra.mxu0 0.0
  %797 = vmatprep.subr.mxu0 0.0
  %798 = vmatpush1.msra.mxu0 0.0
  %799 = vmatprep.subr.mxu0 0.0
  %800 = vmatpush1.msra.mxu0 0.0
  %801 = vmatprep.subr.mxu0 0.0
  %802 = vmatpush1.msra.mxu0 0.0
  %803 = vmatprep.subr.mxu0 0.0
  %804 = vmatpush1.msra.mxu0 0.0
  %805 = vmatprep.subr.mxu0 0.0
  %806 = vmatpush1.msra.mxu0 0.0
  %807 = vmatprep.subr.mxu0 0.0
  %808 = vmatpush1.msra.mxu0 0.0
  %809 = vmatprep.subr.mxu0 0.0
  %810 = vmatpush1.msra.mxu0 0.0
  %811 = vmatprep.subr.mxu0 0.0
  %812 = vmatpush1.msra.mxu0 0.0
  %813 = vmatprep.subr.mxu0 0.0
  %814 = vmatpush1.msra.mxu0 0.0
  %815 = vmatprep.subr.mxu0 0.0
  %816 = vmatpush1.msra.mxu0 0.0
  %817 = vmatprep.subr.mxu0 0.0
  %818 = vmatpush1.msra.mxu0 0.0
  %819 = vmatprep.subr.mxu0 0.0
  %820 = vmatpush1.msra.mxu0 0.0
  %821 = vmatprep.subr.mxu0 0.0
  %822 = vmatpush1.msra.mxu0 0.0
  %823 = vmatprep.subr.mxu0 0.0
  %824 = vmatpush1.msra.mxu0 0.0
  %825 = vmatprep.subr.mxu0 0.0
  %826 = vmatpush1.msra.mxu0 0.0
  %827 = vmatprep.subr.mxu0 0.0
  %828 = vmatpush1.msra.mxu0 0.0
  %829 = vmatprep.subr.mxu0 0.0
  %830 = vmatpush1.msra.mxu0 0.0
  %831 = vmatprep.mubr.f32.mxu0 0.0
  %832 = vmatmul.mubr.f32.gmra.mrb[0].mxu0 %v720
  %v833 = vpop.f32.mrb[0].mxu0
  %v834 = vadd.f32 0.0, %v833
  %v835 = vpop.f32.mrb[0].mxu0
  %836 = vmatprep.mubr.f32.mxu0 0.0
  %837 = vmatmul.mubr.f32.gmra.mrb[0].mxu0 %v723
  %v838 = vpop.f32.mrb[0].mxu0
  %v839 = vadd.f32 0.0, %v838
  %v840 = vpop.f32.mrb[0].mxu0
  %841 = vmatprep.mubr.f32.mxu0 0.0
  %842 = vmatmul.mubr.f32.gmra.mrb[0].mxu0 %v726
  %v843 = vpop.f32.mrb[0].mxu0
  %v844 = vadd.f32 0.0, %v843
  %v845 = vpop.f32.mrb[0].mxu0
  %846 = vmatprep.mubr.f32.mxu0 0.0
  %847 = vmatmul.mubr.f32.gmra.mrb[0].mxu0 %v729
  %v848 = vpop.f32.mrb[0].mxu0
  %v849 = vadd.f32 0.0, %v848
  %v850 = vpop.f32.mrb[0].mxu0
  %851 = vmatprep.mubr.f32.mxu0 0.0
  %852 = vmatmul.mubr.f32.gmra.mrb[0].mxu0 %v732
  %v853 = vpop.f32.mrb[0].mxu0
  %v854 = vadd.f32 0.0, %v853
  %v855 = vpop.f32.mrb[0].mxu0
  %856 = vmatprep.mubr.f32.mxu0 0.0
  %857 = vmatmul.mubr.f32.gmra.mrb[0].mxu0 %v735
  %v858 = vpop.f32.mrb[0].mxu0
  %v859 = vadd.f32 0.0, %v858
  %v860 = vpop.f32.mrb[0].mxu0
  %861 = vmatprep.mubr.f32.mxu0 0.0
  %862 = vmatmul.mubr.f32.gmra.mrb[0].mxu0 %v738
  %v863 = vpop.f32.mrb[0].mxu0
  %v864 = vadd.f32 0.0, %v863
  %v865 = vpop.f32.mrb[0].mxu0
  %866 = vmatprep.mubr.f32.mxu0 0.0
  %867 = vmatmul.mubr.f32.gmra.mrb[0].mxu0 %v741
  %v868 = vpop.f32.mrb[0].mxu0
  %v869 = vadd.f32 0.0, %v868
  %v870 = vpop.f32.mrb[0].mxu0
  %871 = vmatprep.mubr.f32.mxu0 0.0
  %872 = vmatmul.mubr.f32.gmra.mrb[0].mxu0 %v744
  %v873 = vpop.f32.mrb[0].mxu0
  %v874 = vadd.f32 0.0, %v873
  %v875 = vpop.f32.mrb[0].mxu0
  %876 = vmatprep.mubr.f32.mxu0 0.0
  %877 = vmatmul.mubr.f32.gmra.mrb[0].mxu0 %v747
  %v878 = vpop.f32.mrb[0].mxu0
  %v879 = vadd.f32 0.0, %v878
  %v880 = vpop.f32.mrb[0].mxu0
  %881 = vmatprep.mubr.f32.mxu0 0.0
  %882 = vmatmul.mubr.f32.gmra.mrb[0].mxu0 %v750
  %v883 = vpop.f32.mrb[0].mxu0
  %v884 = vadd.f32 0.0, %v883
  %v885 = vpop.f32.mrb[0].mxu0
  %886 = vmatprep.mubr.f32.mxu0 0.0
  %887 = vmatmul.mubr.f32.gmra.mrb[0].mxu0 %v753
  %v888 = vpop.f32.mrb[0].mxu0
  %v889 = vadd.f32 0.0, %v888
  %v890 = vpop.f32.mrb[0].mxu0
  %891 = vmatprep.mubr.f32.mxu0 0.0
  %892 = vmatmul.mubr.f32.gmra.mrb[0].mxu0 %v756
  %v893 = vpop.f32.mrb[0].mxu0
  %v894 = vadd.f32 0.0, %v893
  %v895 = vpop.f32.mrb[0].mxu0
  %896 = vmatprep.mubr.f32.mxu0 0.0
  %897 = vmatmul.mubr.f32.gmra.mrb[0].mxu0 %v759
  %v898 = vpop.f32.mrb[0].mxu0
  %v899 = vadd.f32 0.0, %v898
  %v900 = vpop.f32.mrb[0].mxu0
  %901 = vmatprep.mubr.f32.mxu0 0.0
  %902 = vmatmul.mubr.f32.gmra.mrb[0].mxu0 %v762
  %v903 = vpop.f32.mrb[0].mxu0
  %v904 = vadd.f32 0.0, %v903
  %v905 = vpop.f32.mrb[0].mxu0
  %906 = vmatprep.mubr.f32.mxu0 0.0
  %907 = vmatmul.mubr.f32.gmra.mrb[0].mxu0 %v765
  %v908 = vpop.f32.mrb[0].mxu0
  %v909 = vadd.f32 0.0, %v908
  %v910 = vpop.f32.mrb[0].mxu0
  %911 = vdwg.mxu0
  %v912 = vmul.f32 %v834, 0.5
  %v913 = vmul.f32 %v839, 0.5
  %v914 = vmul.f32 %v844, 0.5
  %v915 = vmul.f32 %v849, 0.5
  %v916 = vmul.f32 %v854, 0.5
  %v917 = vmul.f32 %v859, 0.5
  %v918 = vmul.f32 %v864, 0.5
  %v919 = vmul.f32 %v869, 0.5
  %v920 = vmul.f32 %v874, 0.5
  %v921 = vmul.f32 %v879, 0.5
  %v922 = vmul.f32 %v884, 0.5
  %v923 = vmul.f32 %v889, 0.5
  %v924 = vmul.f32 %v894, 0.5
  %v925 = vmul.f32 %v899, 0.5
  %v926 = vmul.f32 %v904, 0.5
  %v927 = vmul.f32 %v909, 0.5
  %vm928 = vcmp.gt.f32.partialorder %v437, 0.0
  %vm929 = vcmp.gt.f32.partialorder %v438, 0.0
  %vm930 = vcmp.gt.f32.partialorder %v439, 0.0
  %vm931 = vcmp.gt.f32.partialorder %v440, 0.0
  %vm932 = vcmp.gt.f32.partialorder %v441, 0.0
  %vm933 = vcmp.gt.f32.partialorder %v442, 0.0
  %vm934 = vcmp.gt.f32.partialorder %v443, 0.0
  %vm935 = vcmp.gt.f32.partialorder %v444, 0.0
  %vm936 = vcmp.gt.f32.partialorder %v445, 0.0
  %vm937 = vcmp.gt.f32.partialorder %v446, 0.0
  %vm938 = vcmp.gt.f32.partialorder %v447, 0.0
  %vm939 = vcmp.gt.f32.partialorder %v448, 0.0
  %vm940 = vcmp.gt.f32.partialorder %v449, 0.0
  %vm941 = vcmp.gt.f32.partialorder %v450, 0.0
  %vm942 = vcmp.gt.f32.partialorder %v451, 0.0
  %vm943 = vcmp.gt.f32.partialorder %v452, 0.0
  %v944 = vsel %vm928, %v912, -1e+09
  %v945 = vsel %vm929, %v913, -1e+09
  %v946 = vsel %vm930, %v914, -1e+09
  %v947 = vsel %vm931, %v915, -1e+09
  %v948 = vsel %vm932, %v916, -1e+09
  %v949 = vsel %vm933, %v917, -1e+09
  %v950 = vsel %vm934, %v918, -1e+09
  %v951 = vsel %vm935, %v919, -1e+09
  %v952 = vsel %vm936, %v920, -1e+09
  %v953 = vsel %vm937, %v921, -1e+09
  %v954 = vsel %vm938, %v922, -1e+09
  %v955 = vsel %vm939, %v923, -1e+09
  %v956 = vsel %vm940, %v924, -1e+09
  %v957 = vsel %vm941, %v925, -1e+09
  %v958 = vsel %vm942, %v926, -1e+09
  %v959 = vsel %vm943, %v927, -1e+09
  %960 = vmax.xlane.f32.xlu0 %v944
  %v961 = vpop.xlane.xlu0 %960
  %962 = vmax.xlane.f32.xlu0 %v945
  %v963 = vpop.xlane.xlu0 %962
  %964 = vmax.xlane.f32.xlu0 %v946
  %v965 = vpop.xlane.xlu0 %964
  %966 = vmax.xlane.f32.xlu0 %v947
  %v967 = vpop.xlane.xlu0 %966
  %968 = vmax.xlane.f32.xlu0 %v948
  %v969 = vpop.xlane.xlu0 %968
  %970 = vmax.xlane.f32.xlu0 %v949
  %v971 = vpop.xlane.xlu0 %970
  %972 = vmax.xlane.f32.xlu0 %v950
  %v973 = vpop.xlane.xlu0 %972
  %974 = vmax.xlane.f32.xlu0 %v951
  %v975 = vpop.xlane.xlu0 %974
  %976 = vmax.xlane.f32.xlu0 %v952
  %v977 = vpop.xlane.xlu0 %976
  %978 = vmax.xlane.f32.xlu0 %v953
  %v979 = vpop.xlane.xlu0 %978
  %980 = vmax.xlane.f32.xlu0 %v954
  %v981 = vpop.xlane.xlu0 %980
  %982 = vmax.xlane.f32.xlu0 %v955
  %v983 = vpop.xlane.xlu0 %982
  %984 = vmax.xlane.f32.xlu0 %v956
  %v985 = vpop.xlane.xlu0 %984
  %986 = vmax.xlane.f32.xlu0 %v957
  %v987 = vpop.xlane.xlu0 %986
  %988 = vmax.xlane.f32.xlu0 %v958
  %v989 = vpop.xlane.xlu0 %988
  %990 = vmax.xlane.f32.xlu0 %v959
  %v991 = vpop.xlane.xlu0 %990
  %v992 = vsub.f32 %v944, %v961
  %v993 = vsub.f32 %v945, %v963
  %v994 = vsub.f32 %v946, %v965
  %v995 = vsub.f32 %v947, %v967
  %v996 = vsub.f32 %v948, %v969
  %v997 = vsub.f32 %v949, %v971
  %v998 = vsub.f32 %v950, %v973
  %v999 = vsub.f32 %v951, %v975
  %v1000 = vsub.f32 %v952, %v977
  %v1001 = vsub.f32 %v953, %v979
  %v1002 = vsub.f32 %v954, %v981
  %v1003 = vsub.f32 %v955, %v983
  %v1004 = vsub.f32 %v956, %v985
  %v1005 = vsub.f32 %v957, %v987
  %v1006 = vsub.f32 %v958, %v989
  %v1007 = vsub.f32 %v959, %v991
  %v1008 = vmul.f32 %v992, 1.442695
  %v1009 = vpow.pop %v1008
  %v1010 = vmul.f32 %v993, 1.442695
  %v1011 = vpow.pop %v1010
  %v1012 = vmul.f32 %v994, 1.442695
  %v1013 = vpow.pop %v1012
  %v1014 = vmul.f32 %v995, 1.442695
  %v1015 = vpow.pop %v1014
  %v1016 = vmul.f32 %v996, 1.442695
  %v1017 = vpow.pop %v1016
  %v1018 = vmul.f32 %v997, 1.442695
  %v1019 = vpow.pop %v1018
  %v1020 = vmul.f32 %v998, 1.442695
  %v1021 = vpow.pop %v1020
  %v1022 = vmul.f32 %v999, 1.442695
  %v1023 = vpow.pop %v1022
  %v1024 = vmul.f32 %v1000, 1.442695
  %v1025 = vpow.pop %v1024
  %v1026 = vmul.f32 %v1001, 1.442695
  %v1027 = vpow.pop %v1026
  %v1028 = vmul.f32 %v1002, 1.442695
  %v1029 = vpow.pop %v1028
  %v1030 = vmul.f32 %v1003, 1.442695
  %v1031 = vpow.pop %v1030
  %v1032 = vmul.f32 %v1004, 1.442695
  %v1033 = vpow.pop %v1032
  %v1034 = vmul.f32 %v1005, 1.442695
  %v1035 = vpow.pop %v1034
  %v1036 = vmul.f32 %v1006, 1.442695
  %v1037 = vpow.pop %v1036
  %v1038 = vmul.f32 %v1007, 1.442695
  %v1039 = vpow.pop %v1038
  %1040 = vadd.xlane.f32.xlu0 %v1009
  %v1041 = vpop.xlane.xlu0 %1040
  %1042 = vadd.xlane.f32.xlu0 %v1011
  %v1043 = vpop.xlane.xlu0 %1042
  %1044 = vadd.xlane.f32.xlu0 %v1013
  %v1045 = vpop.xlane.xlu0 %1044
  %1046 = vadd.xlane.f32.xlu0 %v1015
  %v1047 = vpop.xlane.xlu0 %1046
  %1048 = vadd.xlane.f32.xlu0 %v1017
  %v1049 = vpop.xlane.xlu0 %1048
  %1050 = vadd.xlane.f32.xlu0 %v1019
  %v1051 = vpop.xlane.xlu0 %1050
  %1052 = vadd.xlane.f32.xlu0 %v1021
  %v1053 = vpop.xlane.xlu0 %1052
  %1054 = vadd.xlane.f32.xlu0 %v1023
  %v1055 = vpop.xlane.xlu0 %1054
  %1056 = vadd.xlane.f32.xlu0 %v1025
  %v1057 = vpop.xlane.xlu0 %1056
  %1058 = vadd.xlane.f32.xlu0 %v1027
  %v1059 = vpop.xlane.xlu0 %1058
  %1060 = vadd.xlane.f32.xlu0 %v1029
  %v1061 = vpop.xlane.xlu0 %1060
  %1062 = vadd.xlane.f32.xlu0 %v1031
  %v1063 = vpop.xlane.xlu0 %1062
  %1064 = vadd.xlane.f32.xlu0 %v1033
  %v1065 = vpop.xlane.xlu0 %1064
  %1066 = vadd.xlane.f32.xlu0 %v1035
  %v1067 = vpop.xlane.xlu0 %1066
  %1068 = vadd.xlane.f32.xlu0 %v1037
  %v1069 = vpop.xlane.xlu0 %1068
  %1070 = vadd.xlane.f32.xlu0 %v1039
  %v1071 = vpop.xlane.xlu0 %1070
  %v1072 = vrcp.pop %v1041
  %v1073 = vmul.f32 %v1009, %v1072
  %v1074 = vrcp.pop %v1043
  %v1075 = vmul.f32 %v1011, %v1074
  %v1076 = vrcp.pop %v1045
  %v1077 = vmul.f32 %v1013, %v1076
  %v1078 = vrcp.pop %v1047
  %v1079 = vmul.f32 %v1015, %v1078
  %v1080 = vrcp.pop %v1049
  %v1081 = vmul.f32 %v1017, %v1080
  %v1082 = vrcp.pop %v1051
  %v1083 = vmul.f32 %v1019, %v1082
  %v1084 = vrcp.pop %v1053
  %v1085 = vmul.f32 %v1021, %v1084
  %v1086 = vrcp.pop %v1055
  %v1087 = vmul.f32 %v1023, %v1086
  %v1088 = vrcp.pop %v1057
  %v1089 = vmul.f32 %v1025, %v1088
  %v1090 = vrcp.pop %v1059
  %v1091 = vmul.f32 %v1027, %v1090
  %v1092 = vrcp.pop %v1061
  %v1093 = vmul.f32 %v1029, %v1092
  %v1094 = vrcp.pop %v1063
  %v1095 = vmul.f32 %v1031, %v1094
  %v1096 = vrcp.pop %v1065
  %v1097 = vmul.f32 %v1033, %v1096
  %v1098 = vrcp.pop %v1067
  %v1099 = vmul.f32 %v1035, %v1098
  %v1100 = vrcp.pop %v1069
  %v1101 = vmul.f32 %v1037, %v1100
  %v1102 = vrcp.pop %v1071
  %v1103 = vmul.f32 %v1039, %v1102
  %1104 = vmatprep.subr.mxu0 0.0
  %1105 = vmatpush1.xpose.msra.mxu0 %v1073
  %1106 = vmatprep.subr.mxu0 0.0
  %1107 = vmatpush1.xpose.msra.mxu0 %v1075
  %1108 = vmatprep.subr.mxu0 0.0
  %1109 = vmatpush1.xpose.msra.mxu0 %v1077
  %1110 = vmatprep.subr.mxu0 0.0
  %1111 = vmatpush1.xpose.msra.mxu0 %v1079
  %1112 = vmatprep.subr.mxu0 0.0
  %1113 = vmatpush1.xpose.msra.mxu0 %v1081
  %1114 = vmatprep.subr.mxu0 0.0
  %1115 = vmatpush1.xpose.msra.mxu0 %v1083
  %1116 = vmatprep.subr.mxu0 0.0
  %1117 = vmatpush1.xpose.msra.mxu0 %v1085
  %1118 = vmatprep.subr.mxu0 0.0
  %1119 = vmatpush1.xpose.msra.mxu0 %v1087
  %1120 = vmatprep.subr.mxu0 0.0
  %1121 = vmatpush1.xpose.msra.mxu0 %v1089
  %1122 = vmatprep.subr.mxu0 0.0
  %1123 = vmatpush1.xpose.msra.mxu0 %v1091
  %1124 = vmatprep.subr.mxu0 0.0
  %1125 = vmatpush1.xpose.msra.mxu0 %v1093
  %1126 = vmatprep.subr.mxu0 0.0
  %1127 = vmatpush1.xpose.msra.mxu0 %v1095
  %1128 = vmatprep.subr.mxu0 0.0
  %1129 = vmatpush1.xpose.msra.mxu0 %v1097
  %1130 = vmatprep.subr.mxu0 0.0
  %1131 = vmatpush1.xpose.msra.mxu0 %v1099
  %1132 = vmatprep.subr.mxu0 0.0
  %1133 = vmatpush1.xpose.msra.mxu0 %v1101
  %1134 = vmatprep.subr.mxu0 0.0
  %1135 = vmatpush1.xpose.msra.mxu0 %v1103
  %1136 = vmatprep.subr.mxu0 0.0
  %1137 = vmatpush1.xpose.msra.mxu0 0.0
  %1138 = vmatprep.subr.mxu0 0.0
  %1139 = vmatpush1.xpose.msra.mxu0 0.0
  %1140 = vmatprep.subr.mxu0 0.0
  %1141 = vmatpush1.xpose.msra.mxu0 0.0
  %1142 = vmatprep.subr.mxu0 0.0
  %1143 = vmatpush1.xpose.msra.mxu0 0.0
  %1144 = vmatprep.subr.mxu0 0.0
  %1145 = vmatpush1.xpose.msra.mxu0 0.0
  %1146 = vmatprep.subr.mxu0 0.0
  %1147 = vmatpush1.xpose.msra.mxu0 0.0
  %1148 = vmatprep.subr.mxu0 0.0
  %1149 = vmatpush1.xpose.msra.mxu0 0.0
  %1150 = vmatprep.subr.mxu0 0.0
  %1151 = vmatpush1.xpose.msra.mxu0 0.0
  %1152 = vmatprep.subr.mxu0 0.0
  %1153 = vmatpush1.xpose.msra.mxu0 0.0
  %1154 = vmatprep.subr.mxu0 0.0
  %1155 = vmatpush1.xpose.msra.mxu0 0.0
  %1156 = vmatprep.subr.mxu0 0.0
  %1157 = vmatpush1.xpose.msra.mxu0 0.0
  %1158 = vmatprep.subr.mxu0 0.0
  %1159 = vmatpush1.xpose.msra.mxu0 0.0
  %1160 = vmatprep.subr.mxu0 0.0
  %1161 = vmatpush1.xpose.msra.mxu0 0.0
  %1162 = vmatprep.subr.mxu0 0.0
  %1163 = vmatpush1.xpose.msra.mxu0 0.0
  %1164 = vmatprep.subr.mxu0 0.0
  %1165 = vmatpush1.xpose.msra.mxu0 0.0
  %1166 = vmatprep.subr.mxu0 0.0
  %1167 = vmatpush1.xpose.msra.mxu0 0.0
  %1168 = vmatprep.mubr.f32.mxu0 0.0
  %1169 = vmatmul.mubr.f32.gmra.mrb[0].mxu0 %v669
  %v1170 = vpop.f32.mrb[0].mxu0
  %v1171 = vadd.f32 0.0, %v1170
  %v1172 = vpop.f32.mrb[0].mxu0
  %1173 = vdwg.mxu0
  %1174 = vxpose.xlu0.b32.start [1/16] %v634, 128
  %1175 = vxpose.xlu0.b32.cont [2/16] 0.0, 128
  %1176 = vxpose.xlu0.b32.cont [3/16] 0.0, 128
  %1177 = vxpose.xlu0.b32.cont [4/16] 0.0, 128
  %1178 = vxpose.xlu0.b32.cont [5/16] 0.0, 128
  %1179 = vxpose.xlu0.b32.cont [6/16] 0.0, 128
  %1180 = vxpose.xlu0.b32.cont [7/16] 0.0, 128
  %1181 = vxpose.xlu0.b32.cont [8/16] 0.0, 128
  %1182 = vxpose.xlu0.b32.cont [9/16] 0.0, 128
  %1183 = vxpose.xlu0.b32.cont [10/16] 0.0, 128
  %1184 = vxpose.xlu0.b32.cont [11/16] 0.0, 128
  %1185 = vxpose.xlu0.b32.cont [12/16] 0.0, 128
  %1186 = vxpose.xlu0.b32.cont [13/16] 0.0, 128
  %1187 = vxpose.xlu0.b32.cont [14/16] 0.0, 128
  %1188 = vxpose.xlu0.b32.cont [15/16] 0.0, 128
  %1189 = vxpose.xlu0.b32.end [16/16] 0.0, 128
  %v1190 = vpop.trf.xlu0
  %v1191 = vpop.trf.xlu0
  %v1192 = vpop.trf.xlu0
  %v1193 = vpop.trf.xlu0
  %v1194 = vpop.trf.xlu0
  %v1195 = vpop.trf.xlu0
  %v1196 = vpop.trf.xlu0
  %v1197 = vpop.trf.xlu0
  %v1198 = vpop.trf.xlu0
  %v1199 = vpop.trf.xlu0
  %v1200 = vpop.trf.xlu0
  %v1201 = vpop.trf.xlu0
  %v1202 = vpop.trf.xlu0
  %v1203 = vpop.trf.xlu0
  %v1204 = vpop.trf.xlu0
  %v1205 = vpop.trf.xlu0
  %v1207 = vsel %vm117, %v1190, 0
  %v1210 = vsel %vm117, %v1191, 0
  %v1213 = vsel %vm117, %v1192, 0
  %v1216 = vsel %vm117, %v1193, 0
  %v1219 = vsel %vm117, %v1194, 0
  %v1222 = vsel %vm117, %v1195, 0
  %v1225 = vsel %vm117, %v1196, 0
  %v1228 = vsel %vm117, %v1197, 0
  %v1231 = vsel %vm117, %v1198, 0
  %v1234 = vsel %vm117, %v1199, 0
  %v1237 = vsel %vm117, %v1200, 0
  %v1240 = vsel %vm117, %v1201, 0
  %v1243 = vsel %vm117, %v1202, 0
  %v1246 = vsel %vm117, %v1203, 0
  %v1249 = vsel %vm117, %v1204, 0
  %v1252 = vsel %vm117, %v1205, 0
  %1254 = vmatprep.subr.mxu0 0.0
  %1255 = vmatpush1.msra.mxu0 %v654
  %1256 = vmatprep.subr.mxu0 0.0
  %1257 = vmatpush1.msra.mxu0 0.0
  %1258 = vmatprep.subr.mxu0 0.0
  %1259 = vmatpush1.msra.mxu0 0.0
  %1260 = vmatprep.subr.mxu0 0.0
  %1261 = vmatpush1.msra.mxu0 0.0
  %1262 = vmatprep.subr.mxu0 0.0
  %1263 = vmatpush1.msra.mxu0 0.0
  %1264 = vmatprep.subr.mxu0 0.0
  %1265 = vmatpush1.msra.mxu0 0.0
  %1266 = vmatprep.subr.mxu0 0.0
  %1267 = vmatpush1.msra.mxu0 0.0
  %1268 = vmatprep.subr.mxu0 0.0
  %1269 = vmatpush1.msra.mxu0 0.0
  %1270 = vmatprep.subr.mxu0 0.0
  %1271 = vmatpush1.msra.mxu0 0.0
  %1272 = vmatprep.subr.mxu0 0.0
  %1273 = vmatpush1.msra.mxu0 0.0
  %1274 = vmatprep.subr.mxu0 0.0
  %1275 = vmatpush1.msra.mxu0 0.0
  %1276 = vmatprep.subr.mxu0 0.0
  %1277 = vmatpush1.msra.mxu0 0.0
  %1278 = vmatprep.subr.mxu0 0.0
  %1279 = vmatpush1.msra.mxu0 0.0
  %1280 = vmatprep.subr.mxu0 0.0
  %1281 = vmatpush1.msra.mxu0 0.0
  %1282 = vmatprep.subr.mxu0 0.0
  %1283 = vmatpush1.msra.mxu0 0.0
  %1284 = vmatprep.subr.mxu0 0.0
  %1285 = vmatpush1.msra.mxu0 0.0
  %1286 = vmatprep.subr.mxu0 0.0
  %1287 = vmatpush1.msra.mxu0 0.0
  %1288 = vmatprep.subr.mxu0 0.0
  %1289 = vmatpush1.msra.mxu0 0.0
  %1290 = vmatprep.subr.mxu0 0.0
  %1291 = vmatpush1.msra.mxu0 0.0
  %1292 = vmatprep.subr.mxu0 0.0
  %1293 = vmatpush1.msra.mxu0 0.0
  %1294 = vmatprep.subr.mxu0 0.0
  %1295 = vmatpush1.msra.mxu0 0.0
  %1296 = vmatprep.subr.mxu0 0.0
  %1297 = vmatpush1.msra.mxu0 0.0
  %1298 = vmatprep.subr.mxu0 0.0
  %1299 = vmatpush1.msra.mxu0 0.0
  %1300 = vmatprep.subr.mxu0 0.0
  %1301 = vmatpush1.msra.mxu0 0.0
  %1302 = vmatprep.subr.mxu0 0.0
  %1303 = vmatpush1.msra.mxu0 0.0
  %1304 = vmatprep.subr.mxu0 0.0
  %1305 = vmatpush1.msra.mxu0 0.0
  %1306 = vmatprep.subr.mxu0 0.0
  %1307 = vmatpush1.msra.mxu0 0.0
  %1308 = vmatprep.subr.mxu0 0.0
  %1309 = vmatpush1.msra.mxu0 0.0
  %1310 = vmatprep.subr.mxu0 0.0
  %1311 = vmatpush1.msra.mxu0 0.0
  %1312 = vmatprep.subr.mxu0 0.0
  %1313 = vmatpush1.msra.mxu0 0.0
  %1314 = vmatprep.subr.mxu0 0.0
  %1315 = vmatpush1.msra.mxu0 0.0
  %1316 = vmatprep.subr.mxu0 0.0
  %1317 = vmatpush1.msra.mxu0 0.0
  %1318 = vmatprep.mubr.f32.mxu0 0.0
  %1319 = vmatmul.mubr.f32.gmra.mrb[0].mxu0 %v1207
  %v1320 = vpop.f32.mrb[0].mxu0
  %v1321 = vadd.f32 0.0, %v1320
  %v1322 = vpop.f32.mrb[0].mxu0
  %1323 = vmatprep.mubr.f32.mxu0 0.0
  %1324 = vmatmul.mubr.f32.gmra.mrb[0].mxu0 %v1210
  %v1325 = vpop.f32.mrb[0].mxu0
  %v1326 = vadd.f32 0.0, %v1325
  %v1327 = vpop.f32.mrb[0].mxu0
  %1328 = vmatprep.mubr.f32.mxu0 0.0
  %1329 = vmatmul.mubr.f32.gmra.mrb[0].mxu0 %v1213
  %v1330 = vpop.f32.mrb[0].mxu0
  %v1331 = vadd.f32 0.0, %v1330
  %v1332 = vpop.f32.mrb[0].mxu0
  %1333 = vmatprep.mubr.f32.mxu0 0.0
  %1334 = vmatmul.mubr.f32.gmra.mrb[0].mxu0 %v1216
  %v1335 = vpop.f32.mrb[0].mxu0
  %v1336 = vadd.f32 0.0, %v1335
  %v1337 = vpop.f32.mrb[0].mxu0
  %1338 = vmatprep.mubr.f32.mxu0 0.0
  %1339 = vmatmul.mubr.f32.gmra.mrb[0].mxu0 %v1219
  %v1340 = vpop.f32.mrb[0].mxu0
  %v1341 = vadd.f32 0.0, %v1340
  %v1342 = vpop.f32.mrb[0].mxu0
  %1343 = vmatprep.mubr.f32.mxu0 0.0
  %1344 = vmatmul.mubr.f32.gmra.mrb[0].mxu0 %v1222
  %v1345 = vpop.f32.mrb[0].mxu0
  %v1346 = vadd.f32 0.0, %v1345
  %v1347 = vpop.f32.mrb[0].mxu0
  %1348 = vmatprep.mubr.f32.mxu0 0.0
  %1349 = vmatmul.mubr.f32.gmra.mrb[0].mxu0 %v1225
  %v1350 = vpop.f32.mrb[0].mxu0
  %v1351 = vadd.f32 0.0, %v1350
  %v1352 = vpop.f32.mrb[0].mxu0
  %1353 = vmatprep.mubr.f32.mxu0 0.0
  %1354 = vmatmul.mubr.f32.gmra.mrb[0].mxu0 %v1228
  %v1355 = vpop.f32.mrb[0].mxu0
  %v1356 = vadd.f32 0.0, %v1355
  %v1357 = vpop.f32.mrb[0].mxu0
  %1358 = vmatprep.mubr.f32.mxu0 0.0
  %1359 = vmatmul.mubr.f32.gmra.mrb[0].mxu0 %v1231
  %v1360 = vpop.f32.mrb[0].mxu0
  %v1361 = vadd.f32 0.0, %v1360
  %v1362 = vpop.f32.mrb[0].mxu0
  %1363 = vmatprep.mubr.f32.mxu0 0.0
  %1364 = vmatmul.mubr.f32.gmra.mrb[0].mxu0 %v1234
  %v1365 = vpop.f32.mrb[0].mxu0
  %v1366 = vadd.f32 0.0, %v1365
  %v1367 = vpop.f32.mrb[0].mxu0
  %1368 = vmatprep.mubr.f32.mxu0 0.0
  %1369 = vmatmul.mubr.f32.gmra.mrb[0].mxu0 %v1237
  %v1370 = vpop.f32.mrb[0].mxu0
  %v1371 = vadd.f32 0.0, %v1370
  %v1372 = vpop.f32.mrb[0].mxu0
  %1373 = vmatprep.mubr.f32.mxu0 0.0
  %1374 = vmatmul.mubr.f32.gmra.mrb[0].mxu0 %v1240
  %v1375 = vpop.f32.mrb[0].mxu0
  %v1376 = vadd.f32 0.0, %v1375
  %v1377 = vpop.f32.mrb[0].mxu0
  %1378 = vmatprep.mubr.f32.mxu0 0.0
  %1379 = vmatmul.mubr.f32.gmra.mrb[0].mxu0 %v1243
  %v1380 = vpop.f32.mrb[0].mxu0
  %v1381 = vadd.f32 0.0, %v1380
  %v1382 = vpop.f32.mrb[0].mxu0
  %1383 = vmatprep.mubr.f32.mxu0 0.0
  %1384 = vmatmul.mubr.f32.gmra.mrb[0].mxu0 %v1246
  %v1385 = vpop.f32.mrb[0].mxu0
  %v1386 = vadd.f32 0.0, %v1385
  %v1387 = vpop.f32.mrb[0].mxu0
  %1388 = vmatprep.mubr.f32.mxu0 0.0
  %1389 = vmatmul.mubr.f32.gmra.mrb[0].mxu0 %v1249
  %v1390 = vpop.f32.mrb[0].mxu0
  %v1391 = vadd.f32 0.0, %v1390
  %v1392 = vpop.f32.mrb[0].mxu0
  %1393 = vmatprep.mubr.f32.mxu0 0.0
  %1394 = vmatmul.mubr.f32.gmra.mrb[0].mxu0 %v1252
  %v1395 = vpop.f32.mrb[0].mxu0
  %v1396 = vadd.f32 0.0, %v1395
  %v1397 = vpop.f32.mrb[0].mxu0
  %1398 = vdwg.mxu0
  %v1399 = vmul.f32 %v1321, 0.5
  %v1400 = vmul.f32 %v1326, 0.5
  %v1401 = vmul.f32 %v1331, 0.5
  %v1402 = vmul.f32 %v1336, 0.5
  %v1403 = vmul.f32 %v1341, 0.5
  %v1404 = vmul.f32 %v1346, 0.5
  %v1405 = vmul.f32 %v1351, 0.5
  %v1406 = vmul.f32 %v1356, 0.5
  %v1407 = vmul.f32 %v1361, 0.5
  %v1408 = vmul.f32 %v1366, 0.5
  %v1409 = vmul.f32 %v1371, 0.5
  %v1410 = vmul.f32 %v1376, 0.5
  %v1411 = vmul.f32 %v1381, 0.5
  %v1412 = vmul.f32 %v1386, 0.5
  %v1413 = vmul.f32 %v1391, 0.5
  %v1414 = vmul.f32 %v1396, 0.5
  %v1415 = vsel %vm928, %v1399, -1e+09
  %v1416 = vsel %vm929, %v1400, -1e+09
  %v1417 = vsel %vm930, %v1401, -1e+09
  %v1418 = vsel %vm931, %v1402, -1e+09
  %v1419 = vsel %vm932, %v1403, -1e+09
  %v1420 = vsel %vm933, %v1404, -1e+09
  %v1421 = vsel %vm934, %v1405, -1e+09
  %v1422 = vsel %vm935, %v1406, -1e+09
  %v1423 = vsel %vm936, %v1407, -1e+09
  %v1424 = vsel %vm937, %v1408, -1e+09
  %v1425 = vsel %vm938, %v1409, -1e+09
  %v1426 = vsel %vm939, %v1410, -1e+09
  %v1427 = vsel %vm940, %v1411, -1e+09
  %v1428 = vsel %vm941, %v1412, -1e+09
  %v1429 = vsel %vm942, %v1413, -1e+09
  %v1430 = vsel %vm943, %v1414, -1e+09
  %1431 = vmax.xlane.f32.xlu0 %v1415
  %v1432 = vpop.xlane.xlu0 %1431
  %1433 = vmax.xlane.f32.xlu0 %v1416
  %v1434 = vpop.xlane.xlu0 %1433
  %1435 = vmax.xlane.f32.xlu0 %v1417
  %v1436 = vpop.xlane.xlu0 %1435
  %1437 = vmax.xlane.f32.xlu0 %v1418
  %v1438 = vpop.xlane.xlu0 %1437
  %1439 = vmax.xlane.f32.xlu0 %v1419
  %v1440 = vpop.xlane.xlu0 %1439
  %1441 = vmax.xlane.f32.xlu0 %v1420
  %v1442 = vpop.xlane.xlu0 %1441
  %1443 = vmax.xlane.f32.xlu0 %v1421
  %v1444 = vpop.xlane.xlu0 %1443
  %1445 = vmax.xlane.f32.xlu0 %v1422
  %v1446 = vpop.xlane.xlu0 %1445
  %1447 = vmax.xlane.f32.xlu0 %v1423
  %v1448 = vpop.xlane.xlu0 %1447
  %1449 = vmax.xlane.f32.xlu0 %v1424
  %v1450 = vpop.xlane.xlu0 %1449
  %1451 = vmax.xlane.f32.xlu0 %v1425
  %v1452 = vpop.xlane.xlu0 %1451
  %1453 = vmax.xlane.f32.xlu0 %v1426
  %v1454 = vpop.xlane.xlu0 %1453
  %1455 = vmax.xlane.f32.xlu0 %v1427
  %v1456 = vpop.xlane.xlu0 %1455
  %1457 = vmax.xlane.f32.xlu0 %v1428
  %v1458 = vpop.xlane.xlu0 %1457
  %1459 = vmax.xlane.f32.xlu0 %v1429
  %v1460 = vpop.xlane.xlu0 %1459
  %1461 = vmax.xlane.f32.xlu0 %v1430
  %v1462 = vpop.xlane.xlu0 %1461
  %v1463 = vsub.f32 %v1415, %v1432
  %v1464 = vsub.f32 %v1416, %v1434
  %v1465 = vsub.f32 %v1417, %v1436
  %v1466 = vsub.f32 %v1418, %v1438
  %v1467 = vsub.f32 %v1419, %v1440
  %v1468 = vsub.f32 %v1420, %v1442
  %v1469 = vsub.f32 %v1421, %v1444
  %v1470 = vsub.f32 %v1422, %v1446
  %v1471 = vsub.f32 %v1423, %v1448
  %v1472 = vsub.f32 %v1424, %v1450
  %v1473 = vsub.f32 %v1425, %v1452
  %v1474 = vsub.f32 %v1426, %v1454
  %v1475 = vsub.f32 %v1427, %v1456
  %v1476 = vsub.f32 %v1428, %v1458
  %v1477 = vsub.f32 %v1429, %v1460
  %v1478 = vsub.f32 %v1430, %v1462
  %v1479 = vmul.f32 %v1463, 1.442695
  %v1480 = vpow.pop %v1479
  %v1481 = vmul.f32 %v1464, 1.442695
  %v1482 = vpow.pop %v1481
  %v1483 = vmul.f32 %v1465, 1.442695
  %v1484 = vpow.pop %v1483
  %v1485 = vmul.f32 %v1466, 1.442695
  %v1486 = vpow.pop %v1485
  %v1487 = vmul.f32 %v1467, 1.442695
  %v1488 = vpow.pop %v1487
  %v1489 = vmul.f32 %v1468, 1.442695
  %v1490 = vpow.pop %v1489
  %v1491 = vmul.f32 %v1469, 1.442695
  %v1492 = vpow.pop %v1491
  %v1493 = vmul.f32 %v1470, 1.442695
  %v1494 = vpow.pop %v1493
  %v1495 = vmul.f32 %v1471, 1.442695
  %v1496 = vpow.pop %v1495
  %v1497 = vmul.f32 %v1472, 1.442695
  %v1498 = vpow.pop %v1497
  %v1499 = vmul.f32 %v1473, 1.442695
  %v1500 = vpow.pop %v1499
  %v1501 = vmul.f32 %v1474, 1.442695
  %v1502 = vpow.pop %v1501
  %v1503 = vmul.f32 %v1475, 1.442695
  %v1504 = vpow.pop %v1503
  %v1505 = vmul.f32 %v1476, 1.442695
  %v1506 = vpow.pop %v1505
  %v1507 = vmul.f32 %v1477, 1.442695
  %v1508 = vpow.pop %v1507
  %v1509 = vmul.f32 %v1478, 1.442695
  %v1510 = vpow.pop %v1509
  %1511 = vadd.xlane.f32.xlu0 %v1480
  %v1512 = vpop.xlane.xlu0 %1511
  %1513 = vadd.xlane.f32.xlu0 %v1482
  %v1514 = vpop.xlane.xlu0 %1513
  %1515 = vadd.xlane.f32.xlu0 %v1484
  %v1516 = vpop.xlane.xlu0 %1515
  %1517 = vadd.xlane.f32.xlu0 %v1486
  %v1518 = vpop.xlane.xlu0 %1517
  %1519 = vadd.xlane.f32.xlu0 %v1488
  %v1520 = vpop.xlane.xlu0 %1519
  %1521 = vadd.xlane.f32.xlu0 %v1490
  %v1522 = vpop.xlane.xlu0 %1521
  %1523 = vadd.xlane.f32.xlu0 %v1492
  %v1524 = vpop.xlane.xlu0 %1523
  %1525 = vadd.xlane.f32.xlu0 %v1494
  %v1526 = vpop.xlane.xlu0 %1525
  %1527 = vadd.xlane.f32.xlu0 %v1496
  %v1528 = vpop.xlane.xlu0 %1527
  %1529 = vadd.xlane.f32.xlu0 %v1498
  %v1530 = vpop.xlane.xlu0 %1529
  %1531 = vadd.xlane.f32.xlu0 %v1500
  %v1532 = vpop.xlane.xlu0 %1531
  %1533 = vadd.xlane.f32.xlu0 %v1502
  %v1534 = vpop.xlane.xlu0 %1533
  %1535 = vadd.xlane.f32.xlu0 %v1504
  %v1536 = vpop.xlane.xlu0 %1535
  %1537 = vadd.xlane.f32.xlu0 %v1506
  %v1538 = vpop.xlane.xlu0 %1537
  %1539 = vadd.xlane.f32.xlu0 %v1508
  %v1540 = vpop.xlane.xlu0 %1539
  %1541 = vadd.xlane.f32.xlu0 %v1510
  %v1542 = vpop.xlane.xlu0 %1541
  %v1543 = vrcp.pop %v1512
  %v1544 = vmul.f32 %v1480, %v1543
  %v1545 = vrcp.pop %v1514
  %v1546 = vmul.f32 %v1482, %v1545
  %v1547 = vrcp.pop %v1516
  %v1548 = vmul.f32 %v1484, %v1547
  %v1549 = vrcp.pop %v1518
  %v1550 = vmul.f32 %v1486, %v1549
  %v1551 = vrcp.pop %v1520
  %v1552 = vmul.f32 %v1488, %v1551
  %v1553 = vrcp.pop %v1522
  %v1554 = vmul.f32 %v1490, %v1553
  %v1555 = vrcp.pop %v1524
  %v1556 = vmul.f32 %v1492, %v1555
  %v1557 = vrcp.pop %v1526
  %v1558 = vmul.f32 %v1494, %v1557
  %v1559 = vrcp.pop %v1528
  %v1560 = vmul.f32 %v1496, %v1559
  %v1561 = vrcp.pop %v1530
  %v1562 = vmul.f32 %v1498, %v1561
  %v1563 = vrcp.pop %v1532
  %v1564 = vmul.f32 %v1500, %v1563
  %v1565 = vrcp.pop %v1534
  %v1566 = vmul.f32 %v1502, %v1565
  %v1567 = vrcp.pop %v1536
  %v1568 = vmul.f32 %v1504, %v1567
  %v1569 = vrcp.pop %v1538
  %v1570 = vmul.f32 %v1506, %v1569
  %v1571 = vrcp.pop %v1540
  %v1572 = vmul.f32 %v1508, %v1571
  %v1573 = vrcp.pop %v1542
  %v1574 = vmul.f32 %v1510, %v1573
  %1575 = vmatprep.subr.mxu0 0.0
  %1576 = vmatpush1.xpose.msra.mxu0 %v1544
  %1577 = vmatprep.subr.mxu0 0.0
  %1578 = vmatpush1.xpose.msra.mxu0 %v1546
  %1579 = vmatprep.subr.mxu0 0.0
  %1580 = vmatpush1.xpose.msra.mxu0 %v1548
  %1581 = vmatprep.subr.mxu0 0.0
  %1582 = vmatpush1.xpose.msra.mxu0 %v1550
  %1583 = vmatprep.subr.mxu0 0.0
  %1584 = vmatpush1.xpose.msra.mxu0 %v1552
  %1585 = vmatprep.subr.mxu0 0.0
  %1586 = vmatpush1.xpose.msra.mxu0 %v1554
  %1587 = vmatprep.subr.mxu0 0.0
  %1588 = vmatpush1.xpose.msra.mxu0 %v1556
  %1589 = vmatprep.subr.mxu0 0.0
  %1590 = vmatpush1.xpose.msra.mxu0 %v1558
  %1591 = vmatprep.subr.mxu0 0.0
  %1592 = vmatpush1.xpose.msra.mxu0 %v1560
  %1593 = vmatprep.subr.mxu0 0.0
  %1594 = vmatpush1.xpose.msra.mxu0 %v1562
  %1595 = vmatprep.subr.mxu0 0.0
  %1596 = vmatpush1.xpose.msra.mxu0 %v1564
  %1597 = vmatprep.subr.mxu0 0.0
  %1598 = vmatpush1.xpose.msra.mxu0 %v1566
  %1599 = vmatprep.subr.mxu0 0.0
  %1600 = vmatpush1.xpose.msra.mxu0 %v1568
  %1601 = vmatprep.subr.mxu0 0.0
  %1602 = vmatpush1.xpose.msra.mxu0 %v1570
  %1603 = vmatprep.subr.mxu0 0.0
  %1604 = vmatpush1.xpose.msra.mxu0 %v1572
  %1605 = vmatprep.subr.mxu0 0.0
  %1606 = vmatpush1.xpose.msra.mxu0 %v1574
  %1607 = vmatprep.subr.mxu0 0.0
  %1608 = vmatpush1.xpose.msra.mxu0 0.0
  %1609 = vmatprep.subr.mxu0 0.0
  %1610 = vmatpush1.xpose.msra.mxu0 0.0
  %1611 = vmatprep.subr.mxu0 0.0
  %1612 = vmatpush1.xpose.msra.mxu0 0.0
  %1613 = vmatprep.subr.mxu0 0.0
  %1614 = vmatpush1.xpose.msra.mxu0 0.0
  %1615 = vmatprep.subr.mxu0 0.0
  %1616 = vmatpush1.xpose.msra.mxu0 0.0
  %1617 = vmatprep.subr.mxu0 0.0
  %1618 = vmatpush1.xpose.msra.mxu0 0.0
  %1619 = vmatprep.subr.mxu0 0.0
  %1620 = vmatpush1.xpose.msra.mxu0 0.0
  %1621 = vmatprep.subr.mxu0 0.0
  %1622 = vmatpush1.xpose.msra.mxu0 0.0
  %1623 = vmatprep.subr.mxu0 0.0
  %1624 = vmatpush1.xpose.msra.mxu0 0.0
  %1625 = vmatprep.subr.mxu0 0.0
  %1626 = vmatpush1.xpose.msra.mxu0 0.0
  %1627 = vmatprep.subr.mxu0 0.0
  %1628 = vmatpush1.xpose.msra.mxu0 0.0
  %1629 = vmatprep.subr.mxu0 0.0
  %1630 = vmatpush1.xpose.msra.mxu0 0.0
  %1631 = vmatprep.subr.mxu0 0.0
  %1632 = vmatpush1.xpose.msra.mxu0 0.0
  %1633 = vmatprep.subr.mxu0 0.0
  %1634 = vmatpush1.xpose.msra.mxu0 0.0
  %1635 = vmatprep.subr.mxu0 0.0
  %1636 = vmatpush1.xpose.msra.mxu0 0.0
  %1637 = vmatprep.subr.mxu0 0.0
  %1638 = vmatpush1.xpose.msra.mxu0 0.0
  %1639 = vmatprep.mubr.f32.mxu0 0.0
  %1640 = vmatmul.mubr.f32.gmra.mrb[0].mxu0 %v674
  %v1641 = vpop.f32.mrb[0].mxu0
  %v1642 = vadd.f32 0.0, %v1641
  %v1643 = vpop.f32.mrb[0].mxu0
  %1644 = vdwg.mxu0
  %1645 = vxpose.xlu0.b32.start [1/16] %v639, 128
  %1646 = vxpose.xlu0.b32.cont [2/16] 0.0, 128
  %1647 = vxpose.xlu0.b32.cont [3/16] 0.0, 128
  %1648 = vxpose.xlu0.b32.cont [4/16] 0.0, 128
  %1649 = vxpose.xlu0.b32.cont [5/16] 0.0, 128
  %1650 = vxpose.xlu0.b32.cont [6/16] 0.0, 128
  %1651 = vxpose.xlu0.b32.cont [7/16] 0.0, 128
  %1652 = vxpose.xlu0.b32.cont [8/16] 0.0, 128
  %1653 = vxpose.xlu0.b32.cont [9/16] 0.0, 128
  %1654 = vxpose.xlu0.b32.cont [10/16] 0.0, 128
  %1655 = vxpose.xlu0.b32.cont [11/16] 0.0, 128
  %1656 = vxpose.xlu0.b32.cont [12/16] 0.0, 128
  %1657 = vxpose.xlu0.b32.cont [13/16] 0.0, 128
  %1658 = vxpose.xlu0.b32.cont [14/16] 0.0, 128
  %1659 = vxpose.xlu0.b32.cont [15/16] 0.0, 128
  %1660 = vxpose.xlu0.b32.end [16/16] 0.0, 128
  %v1661 = vpop.trf.xlu0
  %v1662 = vpop.trf.xlu0
  %v1663 = vpop.trf.xlu0
  %v1664 = vpop.trf.xlu0
  %v1665 = vpop.trf.xlu0
  %v1666 = vpop.trf.xlu0
  %v1667 = vpop.trf.xlu0
  %v1668 = vpop.trf.xlu0
  %v1669 = vpop.trf.xlu0
  %v1670 = vpop.trf.xlu0
  %v1671 = vpop.trf.xlu0
  %v1672 = vpop.trf.xlu0
  %v1673 = vpop.trf.xlu0
  %v1674 = vpop.trf.xlu0
  %v1675 = vpop.trf.xlu0
  %v1676 = vpop.trf.xlu0
  %v1678 = vsel %vm117, %v1661, 0
  %v1681 = vsel %vm117, %v1662, 0
  %v1684 = vsel %vm117, %v1663, 0
  %v1687 = vsel %vm117, %v1664, 0
  %v1690 = vsel %vm117, %v1665, 0
  %v1693 = vsel %vm117, %v1666, 0
  %v1696 = vsel %vm117, %v1667, 0
  %v1699 = vsel %vm117, %v1668, 0
  %v1702 = vsel %vm117, %v1669, 0
  %v1705 = vsel %vm117, %v1670, 0
  %v1708 = vsel %vm117, %v1671, 0
  %v1711 = vsel %vm117, %v1672, 0
  %v1714 = vsel %vm117, %v1673, 0
  %v1717 = vsel %vm117, %v1674, 0
  %v1720 = vsel %vm117, %v1675, 0
  %v1723 = vsel %vm117, %v1676, 0
  %1725 = vmatprep.subr.mxu0 0.0
  %1726 = vmatpush1.msra.mxu0 %v659
  %1727 = vmatprep.subr.mxu0 0.0
  %1728 = vmatpush1.msra.mxu0 0.0
  %1729 = vmatprep.subr.mxu0 0.0
  %1730 = vmatpush1.msra.mxu0 0.0
  %1731 = vmatprep.subr.mxu0 0.0
  %1732 = vmatpush1.msra.mxu0 0.0
  %1733 = vmatprep.subr.mxu0 0.0
  %1734 = vmatpush1.msra.mxu0 0.0
  %1735 = vmatprep.subr.mxu0 0.0
  %1736 = vmatpush1.msra.mxu0 0.0
  %1737 = vmatprep.subr.mxu0 0.0
  %1738 = vmatpush1.msra.mxu0 0.0
  %1739 = vmatprep.subr.mxu0 0.0
  %1740 = vmatpush1.msra.mxu0 0.0
  %1741 = vmatprep.subr.mxu0 0.0
  %1742 = vmatpush1.msra.mxu0 0.0
  %1743 = vmatprep.subr.mxu0 0.0
  %1744 = vmatpush1.msra.mxu0 0.0
  %1745 = vmatprep.subr.mxu0 0.0
  %1746 = vmatpush1.msra.mxu0 0.0
  %1747 = vmatprep.subr.mxu0 0.0
  %1748 = vmatpush1.msra.mxu0 0.0
  %1749 = vmatprep.subr.mxu0 0.0
  %1750 = vmatpush1.msra.mxu0 0.0
  %1751 = vmatprep.subr.mxu0 0.0
  %1752 = vmatpush1.msra.mxu0 0.0
  %1753 = vmatprep.subr.mxu0 0.0
  %1754 = vmatpush1.msra.mxu0 0.0
  %1755 = vmatprep.subr.mxu0 0.0
  %1756 = vmatpush1.msra.mxu0 0.0
  %1757 = vmatprep.subr.mxu0 0.0
  %1758 = vmatpush1.msra.mxu0 0.0
  %1759 = vmatprep.subr.mxu0 0.0
  %1760 = vmatpush1.msra.mxu0 0.0
  %1761 = vmatprep.subr.mxu0 0.0
  %1762 = vmatpush1.msra.mxu0 0.0
  %1763 = vmatprep.subr.mxu0 0.0
  %1764 = vmatpush1.msra.mxu0 0.0
  %1765 = vmatprep.subr.mxu0 0.0
  %1766 = vmatpush1.msra.mxu0 0.0
  %1767 = vmatprep.subr.mxu0 0.0
  %1768 = vmatpush1.msra.mxu0 0.0
  %1769 = vmatprep.subr.mxu0 0.0
  %1770 = vmatpush1.msra.mxu0 0.0
  %1771 = vmatprep.subr.mxu0 0.0
  %1772 = vmatpush1.msra.mxu0 0.0
  %1773 = vmatprep.subr.mxu0 0.0
  %1774 = vmatpush1.msra.mxu0 0.0
  %1775 = vmatprep.subr.mxu0 0.0
  %1776 = vmatpush1.msra.mxu0 0.0
  %1777 = vmatprep.subr.mxu0 0.0
  %1778 = vmatpush1.msra.mxu0 0.0
  %1779 = vmatprep.subr.mxu0 0.0
  %1780 = vmatpush1.msra.mxu0 0.0
  %1781 = vmatprep.subr.mxu0 0.0
  %1782 = vmatpush1.msra.mxu0 0.0
  %1783 = vmatprep.subr.mxu0 0.0
  %1784 = vmatpush1.msra.mxu0 0.0
  %1785 = vmatprep.subr.mxu0 0.0
  %1786 = vmatpush1.msra.mxu0 0.0
  %1787 = vmatprep.subr.mxu0 0.0
  %1788 = vmatpush1.msra.mxu0 0.0
  %1789 = vmatprep.mubr.f32.mxu0 0.0
  %1790 = vmatmul.mubr.f32.gmra.mrb[0].mxu0 %v1678
  %v1791 = vpop.f32.mrb[0].mxu0
  %v1792 = vadd.f32 0.0, %v1791
  %v1793 = vpop.f32.mrb[0].mxu0
  %1794 = vmatprep.mubr.f32.mxu0 0.0
  %1795 = vmatmul.mubr.f32.gmra.mrb[0].mxu0 %v1681
  %v1796 = vpop.f32.mrb[0].mxu0
  %v1797 = vadd.f32 0.0, %v1796
  %v1798 = vpop.f32.mrb[0].mxu0
  %1799 = vmatprep.mubr.f32.mxu0 0.0
  %1800 = vmatmul.mubr.f32.gmra.mrb[0].mxu0 %v1684
  %v1801 = vpop.f32.mrb[0].mxu0
  %v1802 = vadd.f32 0.0, %v1801
  %v1803 = vpop.f32.mrb[0].mxu0
  %1804 = vmatprep.mubr.f32.mxu0 0.0
  %1805 = vmatmul.mubr.f32.gmra.mrb[0].mxu0 %v1687
  %v1806 = vpop.f32.mrb[0].mxu0
  %v1807 = vadd.f32 0.0, %v1806
  %v1808 = vpop.f32.mrb[0].mxu0
  %1809 = vmatprep.mubr.f32.mxu0 0.0
  %1810 = vmatmul.mubr.f32.gmra.mrb[0].mxu0 %v1690
  %v1811 = vpop.f32.mrb[0].mxu0
  %v1812 = vadd.f32 0.0, %v1811
  %v1813 = vpop.f32.mrb[0].mxu0
  %1814 = vmatprep.mubr.f32.mxu0 0.0
  %1815 = vmatmul.mubr.f32.gmra.mrb[0].mxu0 %v1693
  %v1816 = vpop.f32.mrb[0].mxu0
  %v1817 = vadd.f32 0.0, %v1816
  %v1818 = vpop.f32.mrb[0].mxu0
  %1819 = vmatprep.mubr.f32.mxu0 0.0
  %1820 = vmatmul.mubr.f32.gmra.mrb[0].mxu0 %v1696
  %v1821 = vpop.f32.mrb[0].mxu0
  %v1822 = vadd.f32 0.0, %v1821
  %v1823 = vpop.f32.mrb[0].mxu0
  %1824 = vmatprep.mubr.f32.mxu0 0.0
  %1825 = vmatmul.mubr.f32.gmra.mrb[0].mxu0 %v1699
  %v1826 = vpop.f32.mrb[0].mxu0
  %v1827 = vadd.f32 0.0, %v1826
  %v1828 = vpop.f32.mrb[0].mxu0
  %1829 = vmatprep.mubr.f32.mxu0 0.0
  %1830 = vmatmul.mubr.f32.gmra.mrb[0].mxu0 %v1702
  %v1831 = vpop.f32.mrb[0].mxu0
  %v1832 = vadd.f32 0.0, %v1831
  %v1833 = vpop.f32.mrb[0].mxu0
  %1834 = vmatprep.mubr.f32.mxu0 0.0
  %1835 = vmatmul.mubr.f32.gmra.mrb[0].mxu0 %v1705
  %v1836 = vpop.f32.mrb[0].mxu0
  %v1837 = vadd.f32 0.0, %v1836
  %v1838 = vpop.f32.mrb[0].mxu0
  %1839 = vmatprep.mubr.f32.mxu0 0.0
  %1840 = vmatmul.mubr.f32.gmra.mrb[0].mxu0 %v1708
  %v1841 = vpop.f32.mrb[0].mxu0
  %v1842 = vadd.f32 0.0, %v1841
  %v1843 = vpop.f32.mrb[0].mxu0
  %1844 = vmatprep.mubr.f32.mxu0 0.0
  %1845 = vmatmul.mubr.f32.gmra.mrb[0].mxu0 %v1711
  %v1846 = vpop.f32.mrb[0].mxu0
  %v1847 = vadd.f32 0.0, %v1846
  %v1848 = vpop.f32.mrb[0].mxu0
  %1849 = vmatprep.mubr.f32.mxu0 0.0
  %1850 = vmatmul.mubr.f32.gmra.mrb[0].mxu0 %v1714
  %v1851 = vpop.f32.mrb[0].mxu0
  %v1852 = vadd.f32 0.0, %v1851
  %v1853 = vpop.f32.mrb[0].mxu0
  %1854 = vmatprep.mubr.f32.mxu0 0.0
  %1855 = vmatmul.mubr.f32.gmra.mrb[0].mxu0 %v1717
  %v1856 = vpop.f32.mrb[0].mxu0
  %v1857 = vadd.f32 0.0, %v1856
  %v1858 = vpop.f32.mrb[0].mxu0
  %1859 = vmatprep.mubr.f32.mxu0 0.0
  %1860 = vmatmul.mubr.f32.gmra.mrb[0].mxu0 %v1720
  %v1861 = vpop.f32.mrb[0].mxu0
  %v1862 = vadd.f32 0.0, %v1861
  %v1863 = vpop.f32.mrb[0].mxu0
  %1864 = vmatprep.mubr.f32.mxu0 0.0
  %1865 = vmatmul.mubr.f32.gmra.mrb[0].mxu0 %v1723
  %v1866 = vpop.f32.mrb[0].mxu0
  %v1867 = vadd.f32 0.0, %v1866
  %v1868 = vpop.f32.mrb[0].mxu0
  %1869 = vdwg.mxu0
  %v1870 = vmul.f32 %v1792, 0.5
  %v1871 = vmul.f32 %v1797, 0.5
  %v1872 = vmul.f32 %v1802, 0.5
  %v1873 = vmul.f32 %v1807, 0.5
  %v1874 = vmul.f32 %v1812, 0.5
  %v1875 = vmul.f32 %v1817, 0.5
  %v1876 = vmul.f32 %v1822, 0.5
  %v1877 = vmul.f32 %v1827, 0.5
  %v1878 = vmul.f32 %v1832, 0.5
  %v1879 = vmul.f32 %v1837, 0.5
  %v1880 = vmul.f32 %v1842, 0.5
  %v1881 = vmul.f32 %v1847, 0.5
  %v1882 = vmul.f32 %v1852, 0.5
  %v1883 = vmul.f32 %v1857, 0.5
  %v1884 = vmul.f32 %v1862, 0.5
  %v1885 = vmul.f32 %v1867, 0.5
  %v1886 = vsel %vm928, %v1870, -1e+09
  %v1887 = vsel %vm929, %v1871, -1e+09
  %v1888 = vsel %vm930, %v1872, -1e+09
  %v1889 = vsel %vm931, %v1873, -1e+09
  %v1890 = vsel %vm932, %v1874, -1e+09
  %v1891 = vsel %vm933, %v1875, -1e+09
  %v1892 = vsel %vm934, %v1876, -1e+09
  %v1893 = vsel %vm935, %v1877, -1e+09
  %v1894 = vsel %vm936, %v1878, -1e+09
  %v1895 = vsel %vm937, %v1879, -1e+09
  %v1896 = vsel %vm938, %v1880, -1e+09
  %v1897 = vsel %vm939, %v1881, -1e+09
  %v1898 = vsel %vm940, %v1882, -1e+09
  %v1899 = vsel %vm941, %v1883, -1e+09
  %v1900 = vsel %vm942, %v1884, -1e+09
  %v1901 = vsel %vm943, %v1885, -1e+09
  %1902 = vmax.xlane.f32.xlu0 %v1886
  %v1903 = vpop.xlane.xlu0 %1902
  %1904 = vmax.xlane.f32.xlu0 %v1887
  %v1905 = vpop.xlane.xlu0 %1904
  %1906 = vmax.xlane.f32.xlu0 %v1888
  %v1907 = vpop.xlane.xlu0 %1906
  %1908 = vmax.xlane.f32.xlu0 %v1889
  %v1909 = vpop.xlane.xlu0 %1908
  %1910 = vmax.xlane.f32.xlu0 %v1890
  %v1911 = vpop.xlane.xlu0 %1910
  %1912 = vmax.xlane.f32.xlu0 %v1891
  %v1913 = vpop.xlane.xlu0 %1912
  %1914 = vmax.xlane.f32.xlu0 %v1892
  %v1915 = vpop.xlane.xlu0 %1914
  %1916 = vmax.xlane.f32.xlu0 %v1893
  %v1917 = vpop.xlane.xlu0 %1916
  %1918 = vmax.xlane.f32.xlu0 %v1894
  %v1919 = vpop.xlane.xlu0 %1918
  %1920 = vmax.xlane.f32.xlu0 %v1895
  %v1921 = vpop.xlane.xlu0 %1920
  %1922 = vmax.xlane.f32.xlu0 %v1896
  %v1923 = vpop.xlane.xlu0 %1922
  %1924 = vmax.xlane.f32.xlu0 %v1897
  %v1925 = vpop.xlane.xlu0 %1924
  %1926 = vmax.xlane.f32.xlu0 %v1898
  %v1927 = vpop.xlane.xlu0 %1926
  %1928 = vmax.xlane.f32.xlu0 %v1899
  %v1929 = vpop.xlane.xlu0 %1928
  %1930 = vmax.xlane.f32.xlu0 %v1900
  %v1931 = vpop.xlane.xlu0 %1930
  %1932 = vmax.xlane.f32.xlu0 %v1901
  %v1933 = vpop.xlane.xlu0 %1932
  %v1934 = vsub.f32 %v1886, %v1903
  %v1935 = vsub.f32 %v1887, %v1905
  %v1936 = vsub.f32 %v1888, %v1907
  %v1937 = vsub.f32 %v1889, %v1909
  %v1938 = vsub.f32 %v1890, %v1911
  %v1939 = vsub.f32 %v1891, %v1913
  %v1940 = vsub.f32 %v1892, %v1915
  %v1941 = vsub.f32 %v1893, %v1917
  %v1942 = vsub.f32 %v1894, %v1919
  %v1943 = vsub.f32 %v1895, %v1921
  %v1944 = vsub.f32 %v1896, %v1923
  %v1945 = vsub.f32 %v1897, %v1925
  %v1946 = vsub.f32 %v1898, %v1927
  %v1947 = vsub.f32 %v1899, %v1929
  %v1948 = vsub.f32 %v1900, %v1931
  %v1949 = vsub.f32 %v1901, %v1933
  %v1950 = vmul.f32 %v1934, 1.442695
  %v1951 = vpow.pop %v1950
  %v1952 = vmul.f32 %v1935, 1.442695
  %v1953 = vpow.pop %v1952
  %v1954 = vmul.f32 %v1936, 1.442695
  %v1955 = vpow.pop %v1954
  %v1956 = vmul.f32 %v1937, 1.442695
  %v1957 = vpow.pop %v1956
  %v1958 = vmul.f32 %v1938, 1.442695
  %v1959 = vpow.pop %v1958
  %v1960 = vmul.f32 %v1939, 1.442695
  %v1961 = vpow.pop %v1960
  %v1962 = vmul.f32 %v1940, 1.442695
  %v1963 = vpow.pop %v1962
  %v1964 = vmul.f32 %v1941, 1.442695
  %v1965 = vpow.pop %v1964
  %v1966 = vmul.f32 %v1942, 1.442695
  %v1967 = vpow.pop %v1966
  %v1968 = vmul.f32 %v1943, 1.442695
  %v1969 = vpow.pop %v1968
  %v1970 = vmul.f32 %v1944, 1.442695
  %v1971 = vpow.pop %v1970
  %v1972 = vmul.f32 %v1945, 1.442695
  %v1973 = vpow.pop %v1972
  %v1974 = vmul.f32 %v1946, 1.442695
  %v1975 = vpow.pop %v1974
  %v1976 = vmul.f32 %v1947, 1.442695
  %v1977 = vpow.pop %v1976
  %v1978 = vmul.f32 %v1948, 1.442695
  %v1979 = vpow.pop %v1978
  %v1980 = vmul.f32 %v1949, 1.442695
  %v1981 = vpow.pop %v1980
  %1982 = vadd.xlane.f32.xlu0 %v1951
  %v1983 = vpop.xlane.xlu0 %1982
  %1984 = vadd.xlane.f32.xlu0 %v1953
  %v1985 = vpop.xlane.xlu0 %1984
  %1986 = vadd.xlane.f32.xlu0 %v1955
  %v1987 = vpop.xlane.xlu0 %1986
  %1988 = vadd.xlane.f32.xlu0 %v1957
  %v1989 = vpop.xlane.xlu0 %1988
  %1990 = vadd.xlane.f32.xlu0 %v1959
  %v1991 = vpop.xlane.xlu0 %1990
  %1992 = vadd.xlane.f32.xlu0 %v1961
  %v1993 = vpop.xlane.xlu0 %1992
  %1994 = vadd.xlane.f32.xlu0 %v1963
  %v1995 = vpop.xlane.xlu0 %1994
  %1996 = vadd.xlane.f32.xlu0 %v1965
  %v1997 = vpop.xlane.xlu0 %1996
  %1998 = vadd.xlane.f32.xlu0 %v1967
  %v1999 = vpop.xlane.xlu0 %1998
  %2000 = vadd.xlane.f32.xlu0 %v1969
  %v2001 = vpop.xlane.xlu0 %2000
  %2002 = vadd.xlane.f32.xlu0 %v1971
  %v2003 = vpop.xlane.xlu0 %2002
  %2004 = vadd.xlane.f32.xlu0 %v1973
  %v2005 = vpop.xlane.xlu0 %2004
  %2006 = vadd.xlane.f32.xlu0 %v1975
  %v2007 = vpop.xlane.xlu0 %2006
  %2008 = vadd.xlane.f32.xlu0 %v1977
  %v2009 = vpop.xlane.xlu0 %2008
  %2010 = vadd.xlane.f32.xlu0 %v1979
  %v2011 = vpop.xlane.xlu0 %2010
  %2012 = vadd.xlane.f32.xlu0 %v1981
  %v2013 = vpop.xlane.xlu0 %2012
  %v2014 = vrcp.pop %v1983
  %v2015 = vmul.f32 %v1951, %v2014
  %v2016 = vrcp.pop %v1985
  %v2017 = vmul.f32 %v1953, %v2016
  %v2018 = vrcp.pop %v1987
  %v2019 = vmul.f32 %v1955, %v2018
  %v2020 = vrcp.pop %v1989
  %v2021 = vmul.f32 %v1957, %v2020
  %v2022 = vrcp.pop %v1991
  %v2023 = vmul.f32 %v1959, %v2022
  %v2024 = vrcp.pop %v1993
  %v2025 = vmul.f32 %v1961, %v2024
  %v2026 = vrcp.pop %v1995
  %v2027 = vmul.f32 %v1963, %v2026
  %v2028 = vrcp.pop %v1997
  %v2029 = vmul.f32 %v1965, %v2028
  %v2030 = vrcp.pop %v1999
  %v2031 = vmul.f32 %v1967, %v2030
  %v2032 = vrcp.pop %v2001
  %v2033 = vmul.f32 %v1969, %v2032
  %v2034 = vrcp.pop %v2003
  %v2035 = vmul.f32 %v1971, %v2034
  %v2036 = vrcp.pop %v2005
  %v2037 = vmul.f32 %v1973, %v2036
  %v2038 = vrcp.pop %v2007
  %v2039 = vmul.f32 %v1975, %v2038
  %v2040 = vrcp.pop %v2009
  %v2041 = vmul.f32 %v1977, %v2040
  %v2042 = vrcp.pop %v2011
  %v2043 = vmul.f32 %v1979, %v2042
  %v2044 = vrcp.pop %v2013
  %v2045 = vmul.f32 %v1981, %v2044
  %2046 = vmatprep.subr.mxu0 0.0
  %2047 = vmatpush1.xpose.msra.mxu0 %v2015
  %2048 = vmatprep.subr.mxu0 0.0
  %2049 = vmatpush1.xpose.msra.mxu0 %v2017
  %2050 = vmatprep.subr.mxu0 0.0
  %2051 = vmatpush1.xpose.msra.mxu0 %v2019
  %2052 = vmatprep.subr.mxu0 0.0
  %2053 = vmatpush1.xpose.msra.mxu0 %v2021
  %2054 = vmatprep.subr.mxu0 0.0
  %2055 = vmatpush1.xpose.msra.mxu0 %v2023
  %2056 = vmatprep.subr.mxu0 0.0
  %2057 = vmatpush1.xpose.msra.mxu0 %v2025
  %2058 = vmatprep.subr.mxu0 0.0
  %2059 = vmatpush1.xpose.msra.mxu0 %v2027
  %2060 = vmatprep.subr.mxu0 0.0
  %2061 = vmatpush1.xpose.msra.mxu0 %v2029
  %2062 = vmatprep.subr.mxu0 0.0
  %2063 = vmatpush1.xpose.msra.mxu0 %v2031
  %2064 = vmatprep.subr.mxu0 0.0
  %2065 = vmatpush1.xpose.msra.mxu0 %v2033
  %2066 = vmatprep.subr.mxu0 0.0
  %2067 = vmatpush1.xpose.msra.mxu0 %v2035
  %2068 = vmatprep.subr.mxu0 0.0
  %2069 = vmatpush1.xpose.msra.mxu0 %v2037
  %2070 = vmatprep.subr.mxu0 0.0
  %2071 = vmatpush1.xpose.msra.mxu0 %v2039
  %2072 = vmatprep.subr.mxu0 0.0
  %2073 = vmatpush1.xpose.msra.mxu0 %v2041
  %2074 = vmatprep.subr.mxu0 0.0
  %2075 = vmatpush1.xpose.msra.mxu0 %v2043
  %2076 = vmatprep.subr.mxu0 0.0
  %2077 = vmatpush1.xpose.msra.mxu0 %v2045
  %2078 = vmatprep.subr.mxu0 0.0
  %2079 = vmatpush1.xpose.msra.mxu0 0.0
  %2080 = vmatprep.subr.mxu0 0.0
  %2081 = vmatpush1.xpose.msra.mxu0 0.0
  %2082 = vmatprep.subr.mxu0 0.0
  %2083 = vmatpush1.xpose.msra.mxu0 0.0
  %2084 = vmatprep.subr.mxu0 0.0
  %2085 = vmatpush1.xpose.msra.mxu0 0.0
  %2086 = vmatprep.subr.mxu0 0.0
  %2087 = vmatpush1.xpose.msra.mxu0 0.0
  %2088 = vmatprep.subr.mxu0 0.0
  %2089 = vmatpush1.xpose.msra.mxu0 0.0
  %2090 = vmatprep.subr.mxu0 0.0
  %2091 = vmatpush1.xpose.msra.mxu0 0.0
  %2092 = vmatprep.subr.mxu0 0.0
  %2093 = vmatpush1.xpose.msra.mxu0 0.0
  %2094 = vmatprep.subr.mxu0 0.0
  %2095 = vmatpush1.xpose.msra.mxu0 0.0
  %2096 = vmatprep.subr.mxu0 0.0
  %2097 = vmatpush1.xpose.msra.mxu0 0.0
  %2098 = vmatprep.subr.mxu0 0.0
  %2099 = vmatpush1.xpose.msra.mxu0 0.0
  %2100 = vmatprep.subr.mxu0 0.0
  %2101 = vmatpush1.xpose.msra.mxu0 0.0
  %2102 = vmatprep.subr.mxu0 0.0
  %2103 = vmatpush1.xpose.msra.mxu0 0.0
  %2104 = vmatprep.subr.mxu0 0.0
  %2105 = vmatpush1.xpose.msra.mxu0 0.0
  %2106 = vmatprep.subr.mxu0 0.0
  %2107 = vmatpush1.xpose.msra.mxu0 0.0
  %2108 = vmatprep.subr.mxu0 0.0
  %2109 = vmatpush1.xpose.msra.mxu0 0.0
  %2110 = vmatprep.mubr.f32.mxu0 0.0
  %2111 = vmatmul.mubr.f32.gmra.mrb[0].mxu0 %v679
  %v2112 = vpop.f32.mrb[0].mxu0
  %v2113 = vadd.f32 0.0, %v2112
  %v2114 = vpop.f32.mrb[0].mxu0
  %2115 = vdwg.mxu0
  %2116 = vxpose.xlu0.b32.start [1/16] %v644, 128
  %2117 = vxpose.xlu0.b32.cont [2/16] 0.0, 128
  %2118 = vxpose.xlu0.b32.cont [3/16] 0.0, 128
  %2119 = vxpose.xlu0.b32.cont [4/16] 0.0, 128
  %2120 = vxpose.xlu0.b32.cont [5/16] 0.0, 128
  %2121 = vxpose.xlu0.b32.cont [6/16] 0.0, 128
  %2122 = vxpose.xlu0.b32.cont [7/16] 0.0, 128
  %2123 = vxpose.xlu0.b32.cont [8/16] 0.0, 128
  %2124 = vxpose.xlu0.b32.cont [9/16] 0.0, 128
  %2125 = vxpose.xlu0.b32.cont [10/16] 0.0, 128
  %2126 = vxpose.xlu0.b32.cont [11/16] 0.0, 128
  %2127 = vxpose.xlu0.b32.cont [12/16] 0.0, 128
  %2128 = vxpose.xlu0.b32.cont [13/16] 0.0, 128
  %2129 = vxpose.xlu0.b32.cont [14/16] 0.0, 128
  %2130 = vxpose.xlu0.b32.cont [15/16] 0.0, 128
  %2131 = vxpose.xlu0.b32.end [16/16] 0.0, 128
  %v2132 = vpop.trf.xlu0
  %v2133 = vpop.trf.xlu0
  %v2134 = vpop.trf.xlu0
  %v2135 = vpop.trf.xlu0
  %v2136 = vpop.trf.xlu0
  %v2137 = vpop.trf.xlu0
  %v2138 = vpop.trf.xlu0
  %v2139 = vpop.trf.xlu0
  %v2140 = vpop.trf.xlu0
  %v2141 = vpop.trf.xlu0
  %v2142 = vpop.trf.xlu0
  %v2143 = vpop.trf.xlu0
  %v2144 = vpop.trf.xlu0
  %v2145 = vpop.trf.xlu0
  %v2146 = vpop.trf.xlu0
  %v2147 = vpop.trf.xlu0
  %v2149 = vsel %vm117, %v2132, 0
  %v2152 = vsel %vm117, %v2133, 0
  %v2155 = vsel %vm117, %v2134, 0
  %v2158 = vsel %vm117, %v2135, 0
  %v2161 = vsel %vm117, %v2136, 0
  %v2164 = vsel %vm117, %v2137, 0
  %v2167 = vsel %vm117, %v2138, 0
  %v2170 = vsel %vm117, %v2139, 0
  %v2173 = vsel %vm117, %v2140, 0
  %v2176 = vsel %vm117, %v2141, 0
  %v2179 = vsel %vm117, %v2142, 0
  %v2182 = vsel %vm117, %v2143, 0
  %v2185 = vsel %vm117, %v2144, 0
  %v2188 = vsel %vm117, %v2145, 0
  %v2191 = vsel %vm117, %v2146, 0
  %v2194 = vsel %vm117, %v2147, 0
  %2196 = vmatprep.subr.mxu0 0.0
  %2197 = vmatpush1.msra.mxu0 %v664
  %2198 = vmatprep.subr.mxu0 0.0
  %2199 = vmatpush1.msra.mxu0 0.0
  %2200 = vmatprep.subr.mxu0 0.0
  %2201 = vmatpush1.msra.mxu0 0.0
  %2202 = vmatprep.subr.mxu0 0.0
  %2203 = vmatpush1.msra.mxu0 0.0
  %2204 = vmatprep.subr.mxu0 0.0
  %2205 = vmatpush1.msra.mxu0 0.0
  %2206 = vmatprep.subr.mxu0 0.0
  %2207 = vmatpush1.msra.mxu0 0.0
  %2208 = vmatprep.subr.mxu0 0.0
  %2209 = vmatpush1.msra.mxu0 0.0
  %2210 = vmatprep.subr.mxu0 0.0
  %2211 = vmatpush1.msra.mxu0 0.0
  %2212 = vmatprep.subr.mxu0 0.0
  %2213 = vmatpush1.msra.mxu0 0.0
  %2214 = vmatprep.subr.mxu0 0.0
  %2215 = vmatpush1.msra.mxu0 0.0
  %2216 = vmatprep.subr.mxu0 0.0
  %2217 = vmatpush1.msra.mxu0 0.0
  %2218 = vmatprep.subr.mxu0 0.0
  %2219 = vmatpush1.msra.mxu0 0.0
  %2220 = vmatprep.subr.mxu0 0.0
  %2221 = vmatpush1.msra.mxu0 0.0
  %2222 = vmatprep.subr.mxu0 0.0
  %2223 = vmatpush1.msra.mxu0 0.0
  %2224 = vmatprep.subr.mxu0 0.0
  %2225 = vmatpush1.msra.mxu0 0.0
  %2226 = vmatprep.subr.mxu0 0.0
  %2227 = vmatpush1.msra.mxu0 0.0
  %2228 = vmatprep.subr.mxu0 0.0
  %2229 = vmatpush1.msra.mxu0 0.0
  %2230 = vmatprep.subr.mxu0 0.0
  %2231 = vmatpush1.msra.mxu0 0.0
  %2232 = vmatprep.subr.mxu0 0.0
  %2233 = vmatpush1.msra.mxu0 0.0
  %2234 = vmatprep.subr.mxu0 0.0
  %2235 = vmatpush1.msra.mxu0 0.0
  %2236 = vmatprep.subr.mxu0 0.0
  %2237 = vmatpush1.msra.mxu0 0.0
  %2238 = vmatprep.subr.mxu0 0.0
  %2239 = vmatpush1.msra.mxu0 0.0
  %2240 = vmatprep.subr.mxu0 0.0
  %2241 = vmatpush1.msra.mxu0 0.0
  %2242 = vmatprep.subr.mxu0 0.0
  %2243 = vmatpush1.msra.mxu0 0.0
  %2244 = vmatprep.subr.mxu0 0.0
  %2245 = vmatpush1.msra.mxu0 0.0
  %2246 = vmatprep.subr.mxu0 0.0
  %2247 = vmatpush1.msra.mxu0 0.0
  %2248 = vmatprep.subr.mxu0 0.0
  %2249 = vmatpush1.msra.mxu0 0.0
  %2250 = vmatprep.subr.mxu0 0.0
  %2251 = vmatpush1.msra.mxu0 0.0
  %2252 = vmatprep.subr.mxu0 0.0
  %2253 = vmatpush1.msra.mxu0 0.0
  %2254 = vmatprep.subr.mxu0 0.0
  %2255 = vmatpush1.msra.mxu0 0.0
  %2256 = vmatprep.subr.mxu0 0.0
  %2257 = vmatpush1.msra.mxu0 0.0
  %2258 = vmatprep.subr.mxu0 0.0
  %2259 = vmatpush1.msra.mxu0 0.0
  %2260 = vmatprep.mubr.f32.mxu0 0.0
  %2261 = vmatmul.mubr.f32.gmra.mrb[0].mxu0 %v2149
  %v2262 = vpop.f32.mrb[0].mxu0
  %v2263 = vadd.f32 0.0, %v2262
  %v2264 = vpop.f32.mrb[0].mxu0
  %2265 = vmatprep.mubr.f32.mxu0 0.0
  %2266 = vmatmul.mubr.f32.gmra.mrb[0].mxu0 %v2152
  %v2267 = vpop.f32.mrb[0].mxu0
  %v2268 = vadd.f32 0.0, %v2267
  %v2269 = vpop.f32.mrb[0].mxu0
  %2270 = vmatprep.mubr.f32.mxu0 0.0
  %2271 = vmatmul.mubr.f32.gmra.mrb[0].mxu0 %v2155
  %v2272 = vpop.f32.mrb[0].mxu0
  %v2273 = vadd.f32 0.0, %v2272
  %v2274 = vpop.f32.mrb[0].mxu0
  %2275 = vmatprep.mubr.f32.mxu0 0.0
  %2276 = vmatmul.mubr.f32.gmra.mrb[0].mxu0 %v2158
  %v2277 = vpop.f32.mrb[0].mxu0
  %v2278 = vadd.f32 0.0, %v2277
  %v2279 = vpop.f32.mrb[0].mxu0
  %2280 = vmatprep.mubr.f32.mxu0 0.0
  %2281 = vmatmul.mubr.f32.gmra.mrb[0].mxu0 %v2161
  %v2282 = vpop.f32.mrb[0].mxu0
  %v2283 = vadd.f32 0.0, %v2282
  %v2284 = vpop.f32.mrb[0].mxu0
  %2285 = vmatprep.mubr.f32.mxu0 0.0
  %2286 = vmatmul.mubr.f32.gmra.mrb[0].mxu0 %v2164
  %v2287 = vpop.f32.mrb[0].mxu0
  %v2288 = vadd.f32 0.0, %v2287
  %v2289 = vpop.f32.mrb[0].mxu0
  %2290 = vmatprep.mubr.f32.mxu0 0.0
  %2291 = vmatmul.mubr.f32.gmra.mrb[0].mxu0 %v2167
  %v2292 = vpop.f32.mrb[0].mxu0
  %v2293 = vadd.f32 0.0, %v2292
  %v2294 = vpop.f32.mrb[0].mxu0
  %2295 = vmatprep.mubr.f32.mxu0 0.0
  %2296 = vmatmul.mubr.f32.gmra.mrb[0].mxu0 %v2170
  %v2297 = vpop.f32.mrb[0].mxu0
  %v2298 = vadd.f32 0.0, %v2297
  %v2299 = vpop.f32.mrb[0].mxu0
  %2300 = vmatprep.mubr.f32.mxu0 0.0
  %2301 = vmatmul.mubr.f32.gmra.mrb[0].mxu0 %v2173
  %v2302 = vpop.f32.mrb[0].mxu0
  %v2303 = vadd.f32 0.0, %v2302
  %v2304 = vpop.f32.mrb[0].mxu0
  %2305 = vmatprep.mubr.f32.mxu0 0.0
  %2306 = vmatmul.mubr.f32.gmra.mrb[0].mxu0 %v2176
  %v2307 = vpop.f32.mrb[0].mxu0
  %v2308 = vadd.f32 0.0, %v2307
  %v2309 = vpop.f32.mrb[0].mxu0
  %2310 = vmatprep.mubr.f32.mxu0 0.0
  %2311 = vmatmul.mubr.f32.gmra.mrb[0].mxu0 %v2179
  %v2312 = vpop.f32.mrb[0].mxu0
  %v2313 = vadd.f32 0.0, %v2312
  %v2314 = vpop.f32.mrb[0].mxu0
  %2315 = vmatprep.mubr.f32.mxu0 0.0
  %2316 = vmatmul.mubr.f32.gmra.mrb[0].mxu0 %v2182
  %v2317 = vpop.f32.mrb[0].mxu0
  %v2318 = vadd.f32 0.0, %v2317
  %v2319 = vpop.f32.mrb[0].mxu0
  %2320 = vmatprep.mubr.f32.mxu0 0.0
  %2321 = vmatmul.mubr.f32.gmra.mrb[0].mxu0 %v2185
  %v2322 = vpop.f32.mrb[0].mxu0
  %v2323 = vadd.f32 0.0, %v2322
  %v2324 = vpop.f32.mrb[0].mxu0
  %2325 = vmatprep.mubr.f32.mxu0 0.0
  %2326 = vmatmul.mubr.f32.gmra.mrb[0].mxu0 %v2188
  %v2327 = vpop.f32.mrb[0].mxu0
  %v2328 = vadd.f32 0.0, %v2327
  %v2329 = vpop.f32.mrb[0].mxu0
  %2330 = vmatprep.mubr.f32.mxu0 0.0
  %2331 = vmatmul.mubr.f32.gmra.mrb[0].mxu0 %v2191
  %v2332 = vpop.f32.mrb[0].mxu0
  %v2333 = vadd.f32 0.0, %v2332
  %v2334 = vpop.f32.mrb[0].mxu0
  %2335 = vmatprep.mubr.f32.mxu0 0.0
  %2336 = vmatmul.mubr.f32.gmra.mrb[0].mxu0 %v2194
  %v2337 = vpop.f32.mrb[0].mxu0
  %v2338 = vadd.f32 0.0, %v2337
  %v2339 = vpop.f32.mrb[0].mxu0
  %2340 = vdwg.mxu0
  %v2341 = vmul.f32 %v2263, 0.5
  %v2342 = vmul.f32 %v2268, 0.5
  %v2343 = vmul.f32 %v2273, 0.5
  %v2344 = vmul.f32 %v2278, 0.5
  %v2345 = vmul.f32 %v2283, 0.5
  %v2346 = vmul.f32 %v2288, 0.5
  %v2347 = vmul.f32 %v2293, 0.5
  %v2348 = vmul.f32 %v2298, 0.5
  %v2349 = vmul.f32 %v2303, 0.5
  %v2350 = vmul.f32 %v2308, 0.5
  %v2351 = vmul.f32 %v2313, 0.5
  %v2352 = vmul.f32 %v2318, 0.5
  %v2353 = vmul.f32 %v2323, 0.5
  %v2354 = vmul.f32 %v2328, 0.5
  %v2355 = vmul.f32 %v2333, 0.5
  %v2356 = vmul.f32 %v2338, 0.5
  %v2357 = vsel %vm928, %v2341, -1e+09
  %v2358 = vsel %vm929, %v2342, -1e+09
  %v2359 = vsel %vm930, %v2343, -1e+09
  %v2360 = vsel %vm931, %v2344, -1e+09
  %v2361 = vsel %vm932, %v2345, -1e+09
  %v2362 = vsel %vm933, %v2346, -1e+09
  %v2363 = vsel %vm934, %v2347, -1e+09
  %v2364 = vsel %vm935, %v2348, -1e+09
  %v2365 = vsel %vm936, %v2349, -1e+09
  %v2366 = vsel %vm937, %v2350, -1e+09
  %v2367 = vsel %vm938, %v2351, -1e+09
  %v2368 = vsel %vm939, %v2352, -1e+09
  %v2369 = vsel %vm940, %v2353, -1e+09
  %v2370 = vsel %vm941, %v2354, -1e+09
  %v2371 = vsel %vm942, %v2355, -1e+09
  %v2372 = vsel %vm943, %v2356, -1e+09
  %2373 = vmax.xlane.f32.xlu0 %v2357
  %v2374 = vpop.xlane.xlu0 %2373
  %2375 = vmax.xlane.f32.xlu0 %v2358
  %v2376 = vpop.xlane.xlu0 %2375
  %2377 = vmax.xlane.f32.xlu0 %v2359
  %v2378 = vpop.xlane.xlu0 %2377
  %2379 = vmax.xlane.f32.xlu0 %v2360
  %v2380 = vpop.xlane.xlu0 %2379
  %2381 = vmax.xlane.f32.xlu0 %v2361
  %v2382 = vpop.xlane.xlu0 %2381
  %2383 = vmax.xlane.f32.xlu0 %v2362
  %v2384 = vpop.xlane.xlu0 %2383
  %2385 = vmax.xlane.f32.xlu0 %v2363
  %v2386 = vpop.xlane.xlu0 %2385
  %2387 = vmax.xlane.f32.xlu0 %v2364
  %v2388 = vpop.xlane.xlu0 %2387
  %2389 = vmax.xlane.f32.xlu0 %v2365
  %v2390 = vpop.xlane.xlu0 %2389
  %2391 = vmax.xlane.f32.xlu0 %v2366
  %v2392 = vpop.xlane.xlu0 %2391
  %2393 = vmax.xlane.f32.xlu0 %v2367
  %v2394 = vpop.xlane.xlu0 %2393
  %2395 = vmax.xlane.f32.xlu0 %v2368
  %v2396 = vpop.xlane.xlu0 %2395
  %2397 = vmax.xlane.f32.xlu0 %v2369
  %v2398 = vpop.xlane.xlu0 %2397
  %2399 = vmax.xlane.f32.xlu0 %v2370
  %v2400 = vpop.xlane.xlu0 %2399
  %2401 = vmax.xlane.f32.xlu0 %v2371
  %v2402 = vpop.xlane.xlu0 %2401
  %2403 = vmax.xlane.f32.xlu0 %v2372
  %v2404 = vpop.xlane.xlu0 %2403
  %v2405 = vsub.f32 %v2357, %v2374
  %v2406 = vsub.f32 %v2358, %v2376
  %v2407 = vsub.f32 %v2359, %v2378
  %v2408 = vsub.f32 %v2360, %v2380
  %v2409 = vsub.f32 %v2361, %v2382
  %v2410 = vsub.f32 %v2362, %v2384
  %v2411 = vsub.f32 %v2363, %v2386
  %v2412 = vsub.f32 %v2364, %v2388
  %v2413 = vsub.f32 %v2365, %v2390
  %v2414 = vsub.f32 %v2366, %v2392
  %v2415 = vsub.f32 %v2367, %v2394
  %v2416 = vsub.f32 %v2368, %v2396
  %v2417 = vsub.f32 %v2369, %v2398
  %v2418 = vsub.f32 %v2370, %v2400
  %v2419 = vsub.f32 %v2371, %v2402
  %v2420 = vsub.f32 %v2372, %v2404
  %v2421 = vmul.f32 %v2405, 1.442695
  %v2422 = vpow.pop %v2421
  %v2423 = vmul.f32 %v2406, 1.442695
  %v2424 = vpow.pop %v2423
  %v2425 = vmul.f32 %v2407, 1.442695
  %v2426 = vpow.pop %v2425
  %v2427 = vmul.f32 %v2408, 1.442695
  %v2428 = vpow.pop %v2427
  %v2429 = vmul.f32 %v2409, 1.442695
  %v2430 = vpow.pop %v2429
  %v2431 = vmul.f32 %v2410, 1.442695
  %v2432 = vpow.pop %v2431
  %v2433 = vmul.f32 %v2411, 1.442695
  %v2434 = vpow.pop %v2433
  %v2435 = vmul.f32 %v2412, 1.442695
  %v2436 = vpow.pop %v2435
  %v2437 = vmul.f32 %v2413, 1.442695
  %v2438 = vpow.pop %v2437
  %v2439 = vmul.f32 %v2414, 1.442695
  %v2440 = vpow.pop %v2439
  %v2441 = vmul.f32 %v2415, 1.442695
  %v2442 = vpow.pop %v2441
  %v2443 = vmul.f32 %v2416, 1.442695
  %v2444 = vpow.pop %v2443
  %v2445 = vmul.f32 %v2417, 1.442695
  %v2446 = vpow.pop %v2445
  %v2447 = vmul.f32 %v2418, 1.442695
  %v2448 = vpow.pop %v2447
  %v2449 = vmul.f32 %v2419, 1.442695
  %v2450 = vpow.pop %v2449
  %v2451 = vmul.f32 %v2420, 1.442695
  %v2452 = vpow.pop %v2451
  %2453 = vadd.xlane.f32.xlu0 %v2422
  %v2454 = vpop.xlane.xlu0 %2453
  %2455 = vadd.xlane.f32.xlu0 %v2424
  %v2456 = vpop.xlane.xlu0 %2455
  %2457 = vadd.xlane.f32.xlu0 %v2426
  %v2458 = vpop.xlane.xlu0 %2457
  %2459 = vadd.xlane.f32.xlu0 %v2428
  %v2460 = vpop.xlane.xlu0 %2459
  %2461 = vadd.xlane.f32.xlu0 %v2430
  %v2462 = vpop.xlane.xlu0 %2461
  %2463 = vadd.xlane.f32.xlu0 %v2432
  %v2464 = vpop.xlane.xlu0 %2463
  %2465 = vadd.xlane.f32.xlu0 %v2434
  %v2466 = vpop.xlane.xlu0 %2465
  %2467 = vadd.xlane.f32.xlu0 %v2436
  %v2468 = vpop.xlane.xlu0 %2467
  %2469 = vadd.xlane.f32.xlu0 %v2438
  %v2470 = vpop.xlane.xlu0 %2469
  %2471 = vadd.xlane.f32.xlu0 %v2440
  %v2472 = vpop.xlane.xlu0 %2471
  %2473 = vadd.xlane.f32.xlu0 %v2442
  %v2474 = vpop.xlane.xlu0 %2473
  %2475 = vadd.xlane.f32.xlu0 %v2444
  %v2476 = vpop.xlane.xlu0 %2475
  %2477 = vadd.xlane.f32.xlu0 %v2446
  %v2478 = vpop.xlane.xlu0 %2477
  %2479 = vadd.xlane.f32.xlu0 %v2448
  %v2480 = vpop.xlane.xlu0 %2479
  %2481 = vadd.xlane.f32.xlu0 %v2450
  %v2482 = vpop.xlane.xlu0 %2481
  %2483 = vadd.xlane.f32.xlu0 %v2452
  %v2484 = vpop.xlane.xlu0 %2483
  %v2485 = vrcp.pop %v2454
  %v2486 = vmul.f32 %v2422, %v2485
  %v2487 = vrcp.pop %v2456
  %v2488 = vmul.f32 %v2424, %v2487
  %v2489 = vrcp.pop %v2458
  %v2490 = vmul.f32 %v2426, %v2489
  %v2491 = vrcp.pop %v2460
  %v2492 = vmul.f32 %v2428, %v2491
  %v2493 = vrcp.pop %v2462
  %v2494 = vmul.f32 %v2430, %v2493
  %v2495 = vrcp.pop %v2464
  %v2496 = vmul.f32 %v2432, %v2495
  %v2497 = vrcp.pop %v2466
  %v2498 = vmul.f32 %v2434, %v2497
  %v2499 = vrcp.pop %v2468
  %v2500 = vmul.f32 %v2436, %v2499
  %v2501 = vrcp.pop %v2470
  %v2502 = vmul.f32 %v2438, %v2501
  %v2503 = vrcp.pop %v2472
  %v2504 = vmul.f32 %v2440, %v2503
  %v2505 = vrcp.pop %v2474
  %v2506 = vmul.f32 %v2442, %v2505
  %v2507 = vrcp.pop %v2476
  %v2508 = vmul.f32 %v2444, %v2507
  %v2509 = vrcp.pop %v2478
  %v2510 = vmul.f32 %v2446, %v2509
  %v2511 = vrcp.pop %v2480
  %v2512 = vmul.f32 %v2448, %v2511
  %v2513 = vrcp.pop %v2482
  %v2514 = vmul.f32 %v2450, %v2513
  %v2515 = vrcp.pop %v2484
  %v2516 = vmul.f32 %v2452, %v2515
  %2517 = vmatprep.subr.mxu0 0.0
  %2518 = vmatpush1.xpose.msra.mxu0 %v2486
  %2519 = vmatprep.subr.mxu0 0.0
  %2520 = vmatpush1.xpose.msra.mxu0 %v2488
  %2521 = vmatprep.subr.mxu0 0.0
  %2522 = vmatpush1.xpose.msra.mxu0 %v2490
  %2523 = vmatprep.subr.mxu0 0.0
  %2524 = vmatpush1.xpose.msra.mxu0 %v2492
  %2525 = vmatprep.subr.mxu0 0.0
  %2526 = vmatpush1.xpose.msra.mxu0 %v2494
  %2527 = vmatprep.subr.mxu0 0.0
  %2528 = vmatpush1.xpose.msra.mxu0 %v2496
  %2529 = vmatprep.subr.mxu0 0.0
  %2530 = vmatpush1.xpose.msra.mxu0 %v2498
  %2531 = vmatprep.subr.mxu0 0.0
  %2532 = vmatpush1.xpose.msra.mxu0 %v2500
  %2533 = vmatprep.subr.mxu0 0.0
  %2534 = vmatpush1.xpose.msra.mxu0 %v2502
  %2535 = vmatprep.subr.mxu0 0.0
  %2536 = vmatpush1.xpose.msra.mxu0 %v2504
  %2537 = vmatprep.subr.mxu0 0.0
  %2538 = vmatpush1.xpose.msra.mxu0 %v2506
  %2539 = vmatprep.subr.mxu0 0.0
  %2540 = vmatpush1.xpose.msra.mxu0 %v2508
  %2541 = vmatprep.subr.mxu0 0.0
  %2542 = vmatpush1.xpose.msra.mxu0 %v2510
  %2543 = vmatprep.subr.mxu0 0.0
  %2544 = vmatpush1.xpose.msra.mxu0 %v2512
  %2545 = vmatprep.subr.mxu0 0.0
  %2546 = vmatpush1.xpose.msra.mxu0 %v2514
  %2547 = vmatprep.subr.mxu0 0.0
  %2548 = vmatpush1.xpose.msra.mxu0 %v2516
  %2549 = vmatprep.subr.mxu0 0.0
  %2550 = vmatpush1.xpose.msra.mxu0 0.0
  %2551 = vmatprep.subr.mxu0 0.0
  %2552 = vmatpush1.xpose.msra.mxu0 0.0
  %2553 = vmatprep.subr.mxu0 0.0
  %2554 = vmatpush1.xpose.msra.mxu0 0.0
  %2555 = vmatprep.subr.mxu0 0.0
  %2556 = vmatpush1.xpose.msra.mxu0 0.0
  %2557 = vmatprep.subr.mxu0 0.0
  %2558 = vmatpush1.xpose.msra.mxu0 0.0
  %2559 = vmatprep.subr.mxu0 0.0
  %2560 = vmatpush1.xpose.msra.mxu0 0.0
  %2561 = vmatprep.subr.mxu0 0.0
  %2562 = vmatpush1.xpose.msra.mxu0 0.0
  %2563 = vmatprep.subr.mxu0 0.0
  %2564 = vmatpush1.xpose.msra.mxu0 0.0
  %2565 = vmatprep.subr.mxu0 0.0
  %2566 = vmatpush1.xpose.msra.mxu0 0.0
  %2567 = vmatprep.subr.mxu0 0.0
  %2568 = vmatpush1.xpose.msra.mxu0 0.0
  %2569 = vmatprep.subr.mxu0 0.0
  %2570 = vmatpush1.xpose.msra.mxu0 0.0
  %2571 = vmatprep.subr.mxu0 0.0
  %2572 = vmatpush1.xpose.msra.mxu0 0.0
  %2573 = vmatprep.subr.mxu0 0.0
  %2574 = vmatpush1.xpose.msra.mxu0 0.0
  %2575 = vmatprep.subr.mxu0 0.0
  %2576 = vmatpush1.xpose.msra.mxu0 0.0
  %2577 = vmatprep.subr.mxu0 0.0
  %2578 = vmatpush1.xpose.msra.mxu0 0.0
  %2579 = vmatprep.subr.mxu0 0.0
  %2580 = vmatpush1.xpose.msra.mxu0 0.0
  %2581 = vmatprep.mubr.f32.mxu0 0.0
  %2582 = vmatmul.mubr.f32.gmra.mrb[0].mxu0 %v684
  %v2583 = vpop.f32.mrb[0].mxu0
  %v2584 = vadd.f32 0.0, %v2583
  %v2585 = vpop.f32.mrb[0].mxu0
  %2586 = vdwg.mxu0
  %v2587 = vld [vmem:[%s9] sm:$0xff]
  %v2588 = vld [vmem:[%s9 + $0x8] sm:$0xff]
  %v2589 = vld [vmem:[%s9 + $0x10] sm:$0xff]
  %v2590 = vld [vmem:[%s9 + $0x18] sm:$0xff]
  %v2591 = vmul.f32 %v1171, %v1171
  %v2592 = vmul.f32 %v1642, %v1642
  %v2593 = vmul.f32 %v2113, %v2113
  %v2594 = vmul.f32 %v2584, %v2584
  %v2595 = vmul.f32 %v1171, %v2591
  %v2596 = vmul.f32 %v1642, %v2592
  %v2597 = vmul.f32 %v2113, %v2593
  %v2598 = vmul.f32 %v2584, %v2594
  %v2599 = vmul.f32 %v2595, 0.044715
  %v2600 = vmul.f32 %v2596, 0.044715
  %v2601 = vmul.f32 %v2597, 0.044715
  %v2602 = vmul.f32 %v2598, 0.044715
  %v2603 = vadd.f32 %v1171, %v2599
  %v2604 = vadd.f32 %v1642, %v2600
  %v2605 = vadd.f32 %v2113, %v2601
  %v2606 = vadd.f32 %v2584, %v2602
  %v2607 = vmul.f32 %v2603, 0.7978846
  %v2608 = vmul.f32 %v2604, 0.7978846
  %v2609 = vmul.f32 %v2605, 0.7978846
  %v2610 = vmul.f32 %v2606, 0.7978846
  %v2611 = vtanh.pop %v2607
  %v2612 = vtanh.pop %v2608
  %v2613 = vtanh.pop %v2609
  %v2614 = vtanh.pop %v2610
  %v2615 = vadd.f32 %v2611, 1.0
  %v2616 = vadd.f32 %v2612, 1.0
  %v2617 = vadd.f32 %v2613, 1.0
  %v2618 = vadd.f32 %v2614, 1.0
  %v2619 = vmul.f32 %v2615, 0.5
  %v2620 = vmul.f32 %v2616, 0.5
  %v2621 = vmul.f32 %v2617, 0.5
  %v2622 = vmul.f32 %v2618, 0.5
  %v2623 = vmul.f32 %v1171, %v2619
  %v2624 = vmul.f32 %v1642, %v2620
  %v2625 = vmul.f32 %v2113, %v2621
  %v2626 = vmul.f32 %v2584, %v2622
  %2628 = vset.pattern.permute.xlu0 0
  %2629 = vperm.xlu0 %2628, %v68
  %v2630 = vpop.permute.xlu0 %2629
  %2633 = vset.pattern.permute.xlu0 0
  %2634 = vperm.xlu0 %2633, %v69
  %v2635 = vpop.permute.xlu0 %2634
  %2638 = vset.pattern.permute.xlu0 0
  %2639 = vperm.xlu0 %2638, %v70
  %v2640 = vpop.permute.xlu0 %2639
  %2643 = vset.pattern.permute.xlu0 0
  %2644 = vperm.xlu0 %2643, %v71
  %v2645 = vpop.permute.xlu0 %2644
  %v2648 = vsel %vm525, %v2587, 0
  %v2651 = vsel %vm525, %v2588, 0
  %v2654 = vsel %vm525, %v2589, 0
  %v2657 = vsel %vm525, %v2590, 0
  %2659 = vmatprep.subr.mxu0 0.0
  %2660 = vmatpush1.msra.mxu0 %v2623
  %2661 = vmatprep.subr.mxu0 0.0
  %2662 = vmatpush1.msra.mxu0 %v2624
  %2663 = vmatprep.subr.mxu0 0.0
  %2664 = vmatpush1.msra.mxu0 %v2625
  %2665 = vmatprep.subr.mxu0 0.0
  %2666 = vmatpush1.msra.mxu0 %v2626
  %2667 = vmatprep.subr.mxu0 0.0
  %2668 = vmatpush1.msra.mxu0 0.0
  %2669 = vmatprep.subr.mxu0 0.0
  %2670 = vmatpush1.msra.mxu0 0.0
  %2671 = vmatprep.subr.mxu0 0.0
  %2672 = vmatpush1.msra.mxu0 0.0
  %2673 = vmatprep.subr.mxu0 0.0
  %2674 = vmatpush1.msra.mxu0 0.0
  %2675 = vmatprep.subr.mxu0 0.0
  %2676 = vmatpush1.msra.mxu0 0.0
  %2677 = vmatprep.subr.mxu0 0.0
  %2678 = vmatpush1.msra.mxu0 0.0
  %2679 = vmatprep.subr.mxu0 0.0
  %2680 = vmatpush1.msra.mxu0 0.0
  %2681 = vmatprep.subr.mxu0 0.0
  %2682 = vmatpush1.msra.mxu0 0.0
  %2683 = vmatprep.subr.mxu0 0.0
  %2684 = vmatpush1.msra.mxu0 0.0
  %2685 = vmatprep.subr.mxu0 0.0
  %2686 = vmatpush1.msra.mxu0 0.0
  %2687 = vmatprep.subr.mxu0 0.0
  %2688 = vmatpush1.msra.mxu0 0.0
  %2689 = vmatprep.subr.mxu0 0.0
  %2690 = vmatpush1.msra.mxu0 0.0
  %2691 = vmatprep.subr.mxu0 0.0
  %2692 = vmatpush1.msra.mxu0 0.0
  %2693 = vmatprep.subr.mxu0 0.0
  %2694 = vmatpush1.msra.mxu0 0.0
  %2695 = vmatprep.subr.mxu0 0.0
  %2696 = vmatpush1.msra.mxu0 0.0
  %2697 = vmatprep.subr.mxu0 0.0
  %2698 = vmatpush1.msra.mxu0 0.0
  %2699 = vmatprep.subr.mxu0 0.0
  %2700 = vmatpush1.msra.mxu0 0.0
  %2701 = vmatprep.subr.mxu0 0.0
  %2702 = vmatpush1.msra.mxu0 0.0
  %2703 = vmatprep.subr.mxu0 0.0
  %2704 = vmatpush1.msra.mxu0 0.0
  %2705 = vmatprep.subr.mxu0 0.0
  %2706 = vmatpush1.msra.mxu0 0.0
  %2707 = vmatprep.subr.mxu0 0.0
  %2708 = vmatpush1.msra.mxu0 0.0
  %2709 = vmatprep.subr.mxu0 0.0
  %2710 = vmatpush1.msra.mxu0 0.0
  %2711 = vmatprep.subr.mxu0 0.0
  %2712 = vmatpush1.msra.mxu0 0.0
  %2713 = vmatprep.subr.mxu0 0.0
  %2714 = vmatpush1.msra.mxu0 0.0
  %2715 = vmatprep.subr.mxu0 0.0
  %2716 = vmatpush1.msra.mxu0 0.0
  %2717 = vmatprep.subr.mxu0 0.0
  %2718 = vmatpush1.msra.mxu0 0.0
  %2719 = vmatprep.subr.mxu0 0.0
  %2720 = vmatpush1.msra.mxu0 0.0
  %2721 = vmatprep.subr.mxu0 0.0
  %2722 = vmatpush1.msra.mxu0 0.0
  %2723 = vmatprep.mubr.f32.mxu0 0.0
  %2724 = vmatmul.mubr.f32.gmra.mrb[0].mxu0 %v2648
  %v2725 = vpop.f32.mrb[0].mxu0
  %v2726 = vadd.f32 %v2630, %v2725
  %v2727 = vpop.f32.mrb[0].mxu0
  %2728 = vmatprep.mubr.f32.mxu0 0.0
  %2729 = vmatmul.mubr.f32.gmra.mrb[0].mxu0 %v2651
  %v2730 = vpop.f32.mrb[0].mxu0
  %v2731 = vadd.f32 %v2635, %v2730
  %v2732 = vpop.f32.mrb[0].mxu0
  %2733 = vmatprep.mubr.f32.mxu0 0.0
  %2734 = vmatmul.mubr.f32.gmra.mrb[0].mxu0 %v2654
  %v2735 = vpop.f32.mrb[0].mxu0
  %v2736 = vadd.f32 %v2640, %v2735
  %v2737 = vpop.f32.mrb[0].mxu0
  %2738 = vmatprep.mubr.f32.mxu0 0.0
  %2739 = vmatmul.mubr.f32.gmra.mrb[0].mxu0 %v2657
  %v2740 = vpop.f32.mrb[0].mxu0
  %v2741 = vadd.f32 %v2645, %v2740
  %v2742 = vpop.f32.mrb[0].mxu0
  %2743 = vdwg.mxu0
  %v2744 = vmul.f32 %v2726, %v415
  %v2745 = vmul.f32 %v2731, %v415
  %v2746 = vmul.f32 %v2736, %v415
  %v2747 = vmul.f32 %v2741, %v415
  %v2748 = vadd.f32 %v2744, %v417
  %v2749 = vadd.f32 %v2745, %v418
  %v2750 = vadd.f32 %v2746, %v419
  %v2751 = vadd.f32 %v2747, %v420
  %v2752 = vld [vmem:[%s5] sm:$0xff]
  %v2753 = vld [vmem:[%s5 + $0x8] sm:$0xff]
  %v2754 = vld [vmem:[%s5 + $0x10] sm:$0xff]
  %v2755 = vld [vmem:[%s5 + $0x18] sm:$0xff]
  %v2756 = vld [vmem:[%s5 + $0x20] sm:$0xff]
  %v2757 = vld [vmem:[%s5 + $0x28] sm:$0xff]
  %v2758 = vld [vmem:[%s5 + $0x30] sm:$0xff]
  %v2759 = vld [vmem:[%s5 + $0x38] sm:$0xff]
  %v2760 = vld [vmem:[%s5 + $0x40] sm:$0xff]
  %v2761 = vld [vmem:[%s5 + $0x48] sm:$0xff]
  %v2762 = vld [vmem:[%s5 + $0x50] sm:$0xff]
  %v2763 = vld [vmem:[%s5 + $0x58] sm:$0xff]
  %v2764 = vld [vmem:[%s5 + $0x60] sm:$0xff]
  %v2765 = vld [vmem:[%s5 + $0x68] sm:$0xff]
  %v2766 = vld [vmem:[%s5 + $0x70] sm:$0xff]
  %v2767 = vld [vmem:[%s5 + $0x78] sm:$0xff]
  %v2768 = vmul.f32 %v2752, %v415
  %v2769 = vmul.f32 %v2753, %v415
  %v2770 = vmul.f32 %v2754, %v415
  %v2771 = vmul.f32 %v2755, %v415
  %v2772 = vmul.f32 %v2756, %v415
  %v2773 = vmul.f32 %v2757, %v415
  %v2774 = vmul.f32 %v2758, %v415
  %v2775 = vmul.f32 %v2759, %v415
  %v2776 = vmul.f32 %v2760, %v415
  %v2777 = vmul.f32 %v2761, %v415
  %v2778 = vmul.f32 %v2762, %v415
  %v2779 = vmul.f32 %v2763, %v415
  %v2780 = vmul.f32 %v2764, %v415
  %v2781 = vmul.f32 %v2765, %v415
  %v2782 = vmul.f32 %v2766, %v415
  %v2783 = vmul.f32 %v2767, %v415
  %v2784 = vld [vmem:[%s10] sm:$0xff]
  %v2785 = vld [vmem:[%s10 + $0x8] sm:$0xff]
  %v2786 = vld [vmem:[%s10 + $0x10] sm:$0xff]
  %v2787 = vld [vmem:[%s10 + $0x18] sm:$0xff]
  %v2788 = vld [vmem:[%s10 + $0x20] sm:$0xff]
  %v2789 = vld [vmem:[%s10 + $0x28] sm:$0xff]
  %v2790 = vld [vmem:[%s10 + $0x30] sm:$0xff]
  %v2791 = vld [vmem:[%s10 + $0x38] sm:$0xff]
  %v2792 = vld [vmem:[%s10 + $0x40] sm:$0xff]
  %v2793 = vld [vmem:[%s10 + $0x48] sm:$0xff]
  %v2794 = vld [vmem:[%s10 + $0x50] sm:$0xff]
  %v2795 = vld [vmem:[%s10 + $0x58] sm:$0xff]
  %2797 = vset.pattern.permute.xlu0 0
  %2798 = vperm.xlu0 %2797, %v72
  %v2799 = vpop.permute.xlu0 %2798
  %2802 = vset.pattern.permute.xlu0 0
  %2803 = vperm.xlu0 %2802, %v73
  %v2804 = vpop.permute.xlu0 %2803
  %2807 = vset.pattern.permute.xlu0 0
  %2808 = vperm.xlu0 %2807, %v74
  %v2809 = vpop.permute.xlu0 %2808
  %2812 = vset.pattern.permute.xlu0 0
  %2813 = vperm.xlu0 %2812, %v75
  %v2814 = vpop.permute.xlu0 %2813
  %2817 = vset.pattern.permute.xlu0 0
  %2818 = vperm.xlu0 %2817, %v76
  %v2819 = vpop.permute.xlu0 %2818
  %2822 = vset.pattern.permute.xlu0 0
  %2823 = vperm.xlu0 %2822, %v77
  %v2824 = vpop.permute.xlu0 %2823
  %2827 = vset.pattern.permute.xlu0 0
  %2828 = vperm.xlu0 %2827, %v78
  %v2829 = vpop.permute.xlu0 %2828
  %2832 = vset.pattern.permute.xlu0 0
  %2833 = vperm.xlu0 %2832, %v79
  %v2834 = vpop.permute.xlu0 %2833
  %2837 = vset.pattern.permute.xlu0 0
  %2838 = vperm.xlu0 %2837, %v80
  %v2839 = vpop.permute.xlu0 %2838
  %2842 = vset.pattern.permute.xlu0 0
  %2843 = vperm.xlu0 %2842, %v81
  %v2844 = vpop.permute.xlu0 %2843
  %2847 = vset.pattern.permute.xlu0 0
  %2848 = vperm.xlu0 %2847, %v82
  %v2849 = vpop.permute.xlu0 %2848
  %2852 = vset.pattern.permute.xlu0 0
  %2853 = vperm.xlu0 %2852, %v83
  %v2854 = vpop.permute.xlu0 %2853
  %v2857 = vsel %vm525, %v2784, 0
  %v2860 = vsel %vm525, %v2785, 0
  %v2863 = vsel %vm525, %v2786, 0
  %v2866 = vsel %vm525, %v2787, 0
  %v2869 = vsel %vm525, %v2788, 0
  %v2872 = vsel %vm525, %v2789, 0
  %v2875 = vsel %vm525, %v2790, 0
  %v2878 = vsel %vm525, %v2791, 0
  %v2881 = vsel %vm525, %v2792, 0
  %v2884 = vsel %vm525, %v2793, 0
  %v2887 = vsel %vm525, %v2794, 0
  %v2890 = vsel %vm525, %v2795, 0
  %2892 = vmatprep.subr.mxu0 0.0
  %2893 = vmatpush1.msra.mxu0 %v2748
  %2894 = vmatprep.subr.mxu0 0.0
  %2895 = vmatpush1.msra.mxu0 %v2749
  %2896 = vmatprep.subr.mxu0 0.0
  %2897 = vmatpush1.msra.mxu0 %v2750
  %2898 = vmatprep.subr.mxu0 0.0
  %2899 = vmatpush1.msra.mxu0 %v2751
  %2900 = vmatprep.subr.mxu0 0.0
  %2901 = vmatpush1.msra.mxu0 0.0
  %2902 = vmatprep.subr.mxu0 0.0
  %2903 = vmatpush1.msra.mxu0 0.0
  %2904 = vmatprep.subr.mxu0 0.0
  %2905 = vmatpush1.msra.mxu0 0.0
  %2906 = vmatprep.subr.mxu0 0.0
  %2907 = vmatpush1.msra.mxu0 0.0
  %2908 = vmatprep.subr.mxu0 0.0
  %2909 = vmatpush1.msra.mxu0 0.0
  %2910 = vmatprep.subr.mxu0 0.0
  %2911 = vmatpush1.msra.mxu0 0.0
  %2912 = vmatprep.subr.mxu0 0.0
  %2913 = vmatpush1.msra.mxu0 0.0
  %2914 = vmatprep.subr.mxu0 0.0
  %2915 = vmatpush1.msra.mxu0 0.0
  %2916 = vmatprep.subr.mxu0 0.0
  %2917 = vmatpush1.msra.mxu0 0.0
  %2918 = vmatprep.subr.mxu0 0.0
  %2919 = vmatpush1.msra.mxu0 0.0
  %2920 = vmatprep.subr.mxu0 0.0
  %2921 = vmatpush1.msra.mxu0 0.0
  %2922 = vmatprep.subr.mxu0 0.0
  %2923 = vmatpush1.msra.mxu0 0.0
  %2924 = vmatprep.subr.mxu0 0.0
  %2925 = vmatpush1.msra.mxu0 0.0
  %2926 = vmatprep.subr.mxu0 0.0
  %2927 = vmatpush1.msra.mxu0 0.0
  %2928 = vmatprep.subr.mxu0 0.0
  %2929 = vmatpush1.msra.mxu0 0.0
  %2930 = vmatprep.subr.mxu0 0.0
  %2931 = vmatpush1.msra.mxu0 0.0
  %2932 = vmatprep.subr.mxu0 0.0
  %2933 = vmatpush1.msra.mxu0 0.0
  %2934 = vmatprep.subr.mxu0 0.0
  %2935 = vmatpush1.msra.mxu0 0.0
  %2936 = vmatprep.subr.mxu0 0.0
  %2937 = vmatpush1.msra.mxu0 0.0
  %2938 = vmatprep.subr.mxu0 0.0
  %2939 = vmatpush1.msra.mxu0 0.0
  %2940 = vmatprep.subr.mxu0 0.0
  %2941 = vmatpush1.msra.mxu0 0.0
  %2942 = vmatprep.subr.mxu0 0.0
  %2943 = vmatpush1.msra.mxu0 0.0
  %2944 = vmatprep.subr.mxu0 0.0
  %2945 = vmatpush1.msra.mxu0 0.0
  %2946 = vmatprep.subr.mxu0 0.0
  %2947 = vmatpush1.msra.mxu0 0.0
  %2948 = vmatprep.subr.mxu0 0.0
  %2949 = vmatpush1.msra.mxu0 0.0
  %2950 = vmatprep.subr.mxu0 0.0
  %2951 = vmatpush1.msra.mxu0 0.0
  %2952 = vmatprep.subr.mxu0 0.0
  %2953 = vmatpush1.msra.mxu0 0.0
  %2954 = vmatprep.subr.mxu0 0.0
  %2955 = vmatpush1.msra.mxu0 0.0
  %2956 = vmatprep.mubr.f32.mxu0 0.0
  %2957 = vmatmul.mubr.f32.gmra.mrb[0].mxu0 %v2857
  %v2958 = vpop.f32.mrb[0].mxu0
  %v2959 = vadd.f32 %v2799, %v2958
  %v2960 = vpop.f32.mrb[0].mxu0
  %2961 = vmatprep.mubr.f32.mxu0 0.0
  %2962 = vmatmul.mubr.f32.gmra.mrb[0].mxu0 %v2860
  %v2963 = vpop.f32.mrb[0].mxu0
  %v2964 = vadd.f32 %v2804, %v2963
  %v2965 = vpop.f32.mrb[0].mxu0
  %2966 = vmatprep.mubr.f32.mxu0 0.0
  %2967 = vmatmul.mubr.f32.gmra.mrb[0].mxu0 %v2863
  %v2968 = vpop.f32.mrb[0].mxu0
  %v2969 = vadd.f32 %v2809, %v2968
  %v2970 = vpop.f32.mrb[0].mxu0
  %2971 = vmatprep.mubr.f32.mxu0 0.0
  %2972 = vmatmul.mubr.f32.gmra.mrb[0].mxu0 %v2866
  %v2973 = vpop.f32.mrb[0].mxu0
  %v2974 = vadd.f32 %v2814, %v2973
  %v2975 = vpop.f32.mrb[0].mxu0
  %2976 = vmatprep.mubr.f32.mxu0 0.0
  %2977 = vmatmul.mubr.f32.gmra.mrb[0].mxu0 %v2869
  %v2978 = vpop.f32.mrb[0].mxu0
  %v2979 = vadd.f32 %v2819, %v2978
  %v2980 = vpop.f32.mrb[0].mxu0
  %2981 = vmatprep.mubr.f32.mxu0 0.0
  %2982 = vmatmul.mubr.f32.gmra.mrb[0].mxu0 %v2872
  %v2983 = vpop.f32.mrb[0].mxu0
  %v2984 = vadd.f32 %v2824, %v2983
  %v2985 = vpop.f32.mrb[0].mxu0
  %2986 = vmatprep.mubr.f32.mxu0 0.0
  %2987 = vmatmul.mubr.f32.gmra.mrb[0].mxu0 %v2875
  %v2988 = vpop.f32.mrb[0].mxu0
  %v2989 = vadd.f32 %v2829, %v2988
  %v2990 = vpop.f32.mrb[0].mxu0
  %2991 = vmatprep.mubr.f32.mxu0 0.0
  %2992 = vmatmul.mubr.f32.gmra.mrb[0].mxu0 %v2878
  %v2993 = vpop.f32.mrb[0].mxu0
  %v2994 = vadd.f32 %v2834, %v2993
  %v2995 = vpop.f32.mrb[0].mxu0
  %2996 = vmatprep.mubr.f32.mxu0 0.0
  %2997 = vmatmul.mubr.f32.gmra.mrb[0].mxu0 %v2881
  %v2998 = vpop.f32.mrb[0].mxu0
  %v2999 = vadd.f32 %v2839, %v2998
  %v3000 = vpop.f32.mrb[0].mxu0
  %3001 = vmatprep.mubr.f32.mxu0 0.0
  %3002 = vmatmul.mubr.f32.gmra.mrb[0].mxu0 %v2884
  %v3003 = vpop.f32.mrb[0].mxu0
  %v3004 = vadd.f32 %v2844, %v3003
  %v3005 = vpop.f32.mrb[0].mxu0
  %3006 = vmatprep.mubr.f32.mxu0 0.0
  %3007 = vmatmul.mubr.f32.gmra.mrb[0].mxu0 %v2887
  %v3008 = vpop.f32.mrb[0].mxu0
  %v3009 = vadd.f32 %v2849, %v3008
  %v3010 = vpop.f32.mrb[0].mxu0
  %3011 = vmatprep.mubr.f32.mxu0 0.0
  %3012 = vmatmul.mubr.f32.gmra.mrb[0].mxu0 %v2890
  %v3013 = vpop.f32.mrb[0].mxu0
  %v3014 = vadd.f32 %v2854, %v3013
  %v3015 = vpop.f32.mrb[0].mxu0
  %3016 = vdwg.mxu0
  %3017 = vxpose.xlu0.b32.start [1/16] %v2959, 128
  %3018 = vxpose.xlu0.b32.cont [2/16] 0.0, 128
  %3019 = vxpose.xlu0.b32.cont [3/16] 0.0, 128
  %3020 = vxpose.xlu0.b32.cont [4/16] 0.0, 128
  %3021 = vxpose.xlu0.b32.cont [5/16] 0.0, 128
  %3022 = vxpose.xlu0.b32.cont [6/16] 0.0, 128
  %3023 = vxpose.xlu0.b32.cont [7/16] 0.0, 128
  %3024 = vxpose.xlu0.b32.cont [8/16] 0.0, 128
  %3025 = vxpose.xlu0.b32.cont [9/16] 0.0, 128
  %3026 = vxpose.xlu0.b32.cont [10/16] 0.0, 128
  %3027 = vxpose.xlu0.b32.cont [11/16] 0.0, 128
  %3028 = vxpose.xlu0.b32.cont [12/16] 0.0, 128
  %3029 = vxpose.xlu0.b32.cont [13/16] 0.0, 128
  %3030 = vxpose.xlu0.b32.cont [14/16] 0.0, 128
  %3031 = vxpose.xlu0.b32.cont [15/16] 0.0, 128
  %3032 = vxpose.xlu0.b32.end [16/16] 0.0, 128
  %v3033 = vpop.trf.xlu0
  %v3034 = vpop.trf.xlu0
  %v3035 = vpop.trf.xlu0
  %v3036 = vpop.trf.xlu0
  %v3037 = vpop.trf.xlu0
  %v3038 = vpop.trf.xlu0
  %v3039 = vpop.trf.xlu0
  %v3040 = vpop.trf.xlu0
  %v3041 = vpop.trf.xlu0
  %v3042 = vpop.trf.xlu0
  %v3043 = vpop.trf.xlu0
  %v3044 = vpop.trf.xlu0
  %v3045 = vpop.trf.xlu0
  %v3046 = vpop.trf.xlu0
  %v3047 = vpop.trf.xlu0
  %v3048 = vpop.trf.xlu0
  %v3050 = vsel %vm117, %v3033, 0
  %v3053 = vsel %vm117, %v3034, 0
  %v3056 = vsel %vm117, %v3035, 0
  %v3059 = vsel %vm117, %v3036, 0
  %v3062 = vsel %vm117, %v3037, 0
  %v3065 = vsel %vm117, %v3038, 0
  %v3068 = vsel %vm117, %v3039, 0
  %v3071 = vsel %vm117, %v3040, 0
  %v3074 = vsel %vm117, %v3041, 0
  %v3077 = vsel %vm117, %v3042, 0
  %v3080 = vsel %vm117, %v3043, 0
  %v3083 = vsel %vm117, %v3044, 0
  %v3086 = vsel %vm117, %v3045, 0
  %v3089 = vsel %vm117, %v3046, 0
  %v3092 = vsel %vm117, %v3047, 0
  %v3095 = vsel %vm117, %v3048, 0
  %3097 = vmatprep.subr.mxu0 0.0
  %3098 = vmatpush1.msra.mxu0 %v2979
  %3099 = vmatprep.subr.mxu0 0.0
  %3100 = vmatpush1.msra.mxu0 0.0
  %3101 = vmatprep.subr.mxu0 0.0
  %3102 = vmatpush1.msra.mxu0 0.0
  %3103 = vmatprep.subr.mxu0 0.0
  %3104 = vmatpush1.msra.mxu0 0.0
  %3105 = vmatprep.subr.mxu0 0.0
  %3106 = vmatpush1.msra.mxu0 0.0
  %3107 = vmatprep.subr.mxu0 0.0
  %3108 = vmatpush1.msra.mxu0 0.0
  %3109 = vmatprep.subr.mxu0 0.0
  %3110 = vmatpush1.msra.mxu0 0.0
  %3111 = vmatprep.subr.mxu0 0.0
  %3112 = vmatpush1.msra.mxu0 0.0
  %3113 = vmatprep.subr.mxu0 0.0
  %3114 = vmatpush1.msra.mxu0 0.0
  %3115 = vmatprep.subr.mxu0 0.0
  %3116 = vmatpush1.msra.mxu0 0.0
  %3117 = vmatprep.subr.mxu0 0.0
  %3118 = vmatpush1.msra.mxu0 0.0
  %3119 = vmatprep.subr.mxu0 0.0
  %3120 = vmatpush1.msra.mxu0 0.0
  %3121 = vmatprep.subr.mxu0 0.0
  %3122 = vmatpush1.msra.mxu0 0.0
  %3123 = vmatprep.subr.mxu0 0.0
  %3124 = vmatpush1.msra.mxu0 0.0
  %3125 = vmatprep.subr.mxu0 0.0
  %3126 = vmatpush1.msra.mxu0 0.0
  %3127 = vmatprep.subr.mxu0 0.0
  %3128 = vmatpush1.msra.mxu0 0.0
  %3129 = vmatprep.subr.mxu0 0.0
  %3130 = vmatpush1.msra.mxu0 0.0
  %3131 = vmatprep.subr.mxu0 0.0
  %3132 = vmatpush1.msra.mxu0 0.0
  %3133 = vmatprep.subr.mxu0 0.0
  %3134 = vmatpush1.msra.mxu0 0.0
  %3135 = vmatprep.subr.mxu0 0.0
  %3136 = vmatpush1.msra.mxu0 0.0
  %3137 = vmatprep.subr.mxu0 0.0
  %3138 = vmatpush1.msra.mxu0 0.0
  %3139 = vmatprep.subr.mxu0 0.0
  %3140 = vmatpush1.msra.mxu0 0.0
  %3141 = vmatprep.subr.mxu0 0.0
  %3142 = vmatpush1.msra.mxu0 0.0
  %3143 = vmatprep.subr.mxu0 0.0
  %3144 = vmatpush1.msra.mxu0 0.0
  %3145 = vmatprep.subr.mxu0 0.0
  %3146 = vmatpush1.msra.mxu0 0.0
  %3147 = vmatprep.subr.mxu0 0.0
  %3148 = vmatpush1.msra.mxu0 0.0
  %3149 = vmatprep.subr.mxu0 0.0
  %3150 = vmatpush1.msra.mxu0 0.0
  %3151 = vmatprep.subr.mxu0 0.0
  %3152 = vmatpush1.msra.mxu0 0.0
  %3153 = vmatprep.subr.mxu0 0.0
  %3154 = vmatpush1.msra.mxu0 0.0
  %3155 = vmatprep.subr.mxu0 0.0
  %3156 = vmatpush1.msra.mxu0 0.0
  %3157 = vmatprep.subr.mxu0 0.0
  %3158 = vmatpush1.msra.mxu0 0.0
  %3159 = vmatprep.subr.mxu0 0.0
  %3160 = vmatpush1.msra.mxu0 0.0
  %3161 = vmatprep.mubr.f32.mxu0 0.0
  %3162 = vmatmul.mubr.f32.gmra.mrb[0].mxu0 %v3050
  %v3163 = vpop.f32.mrb[0].mxu0
  %v3164 = vadd.f32 0.0, %v3163
  %v3165 = vpop.f32.mrb[0].mxu0
  %3166 = vmatprep.mubr.f32.mxu0 0.0
  %3167 = vmatmul.mubr.f32.gmra.mrb[0].mxu0 %v3053
  %v3168 = vpop.f32.mrb[0].mxu0
  %v3169 = vadd.f32 0.0, %v3168
  %v3170 = vpop.f32.mrb[0].mxu0
  %3171 = vmatprep.mubr.f32.mxu0 0.0
  %3172 = vmatmul.mubr.f32.gmra.mrb[0].mxu0 %v3056
  %v3173 = vpop.f32.mrb[0].mxu0
  %v3174 = vadd.f32 0.0, %v3173
  %v3175 = vpop.f32.mrb[0].mxu0
  %3176 = vmatprep.mubr.f32.mxu0 0.0
  %3177 = vmatmul.mubr.f32.gmra.mrb[0].mxu0 %v3059
  %v3178 = vpop.f32.mrb[0].mxu0
  %v3179 = vadd.f32 0.0, %v3178
  %v3180 = vpop.f32.mrb[0].mxu0
  %3181 = vmatprep.mubr.f32.mxu0 0.0
  %3182 = vmatmul.mubr.f32.gmra.mrb[0].mxu0 %v3062
  %v3183 = vpop.f32.mrb[0].mxu0
  %v3184 = vadd.f32 0.0, %v3183
  %v3185 = vpop.f32.mrb[0].mxu0
  %3186 = vmatprep.mubr.f32.mxu0 0.0
  %3187 = vmatmul.mubr.f32.gmra.mrb[0].mxu0 %v3065
  %v3188 = vpop.f32.mrb[0].mxu0
  %v3189 = vadd.f32 0.0, %v3188
  %v3190 = vpop.f32.mrb[0].mxu0
  %3191 = vmatprep.mubr.f32.mxu0 0.0
  %3192 = vmatmul.mubr.f32.gmra.mrb[0].mxu0 %v3068
  %v3193 = vpop.f32.mrb[0].mxu0
  %v3194 = vadd.f32 0.0, %v3193
  %v3195 = vpop.f32.mrb[0].mxu0
  %3196 = vmatprep.mubr.f32.mxu0 0.0
  %3197 = vmatmul.mubr.f32.gmra.mrb[0].mxu0 %v3071
  %v3198 = vpop.f32.mrb[0].mxu0
  %v3199 = vadd.f32 0.0, %v3198
  %v3200 = vpop.f32.mrb[0].mxu0
  %3201 = vmatprep.mubr.f32.mxu0 0.0
  %3202 = vmatmul.mubr.f32.gmra.mrb[0].mxu0 %v3074
  %v3203 = vpop.f32.mrb[0].mxu0
  %v3204 = vadd.f32 0.0, %v3203
  %v3205 = vpop.f32.mrb[0].mxu0
  %3206 = vmatprep.mubr.f32.mxu0 0.0
  %3207 = vmatmul.mubr.f32.gmra.mrb[0].mxu0 %v3077
  %v3208 = vpop.f32.mrb[0].mxu0
  %v3209 = vadd.f32 0.0, %v3208
  %v3210 = vpop.f32.mrb[0].mxu0
  %3211 = vmatprep.mubr.f32.mxu0 0.0
  %3212 = vmatmul.mubr.f32.gmra.mrb[0].mxu0 %v3080
  %v3213 = vpop.f32.mrb[0].mxu0
  %v3214 = vadd.f32 0.0, %v3213
  %v3215 = vpop.f32.mrb[0].mxu0
  %3216 = vmatprep.mubr.f32.mxu0 0.0
  %3217 = vmatmul.mubr.f32.gmra.mrb[0].mxu0 %v3083
  %v3218 = vpop.f32.mrb[0].mxu0
  %v3219 = vadd.f32 0.0, %v3218
  %v3220 = vpop.f32.mrb[0].mxu0
  %3221 = vmatprep.mubr.f32.mxu0 0.0
  %3222 = vmatmul.mubr.f32.gmra.mrb[0].mxu0 %v3086
  %v3223 = vpop.f32.mrb[0].mxu0
  %v3224 = vadd.f32 0.0, %v3223
  %v3225 = vpop.f32.mrb[0].mxu0
  %3226 = vmatprep.mubr.f32.mxu0 0.0
  %3227 = vmatmul.mubr.f32.gmra.mrb[0].mxu0 %v3089
  %v3228 = vpop.f32.mrb[0].mxu0
  %v3229 = vadd.f32 0.0, %v3228
  %v3230 = vpop.f32.mrb[0].mxu0
  %3231 = vmatprep.mubr.f32.mxu0 0.0
  %3232 = vmatmul.mubr.f32.gmra.mrb[0].mxu0 %v3092
  %v3233 = vpop.f32.mrb[0].mxu0
  %v3234 = vadd.f32 0.0, %v3233
  %v3235 = vpop.f32.mrb[0].mxu0
  %3236 = vmatprep.mubr.f32.mxu0 0.0
  %3237 = vmatmul.mubr.f32.gmra.mrb[0].mxu0 %v3095
  %v3238 = vpop.f32.mrb[0].mxu0
  %v3239 = vadd.f32 0.0, %v3238
  %v3240 = vpop.f32.mrb[0].mxu0
  %3241 = vdwg.mxu0
  %v3242 = vmul.f32 %v3164, 0.5
  %v3243 = vmul.f32 %v3169, 0.5
  %v3244 = vmul.f32 %v3174, 0.5
  %v3245 = vmul.f32 %v3179, 0.5
  %v3246 = vmul.f32 %v3184, 0.5
  %v3247 = vmul.f32 %v3189, 0.5
  %v3248 = vmul.f32 %v3194, 0.5
  %v3249 = vmul.f32 %v3199, 0.5
  %v3250 = vmul.f32 %v3204, 0.5
  %v3251 = vmul.f32 %v3209, 0.5
  %v3252 = vmul.f32 %v3214, 0.5
  %v3253 = vmul.f32 %v3219, 0.5
  %v3254 = vmul.f32 %v3224, 0.5
  %v3255 = vmul.f32 %v3229, 0.5
  %v3256 = vmul.f32 %v3234, 0.5
  %v3257 = vmul.f32 %v3239, 0.5
  %vm3258 = vcmp.gt.f32.partialorder %v2768, 0.0
  %vm3259 = vcmp.gt.f32.partialorder %v2769, 0.0
  %vm3260 = vcmp.gt.f32.partialorder %v2770, 0.0
  %vm3261 = vcmp.gt.f32.partialorder %v2771, 0.0
  %vm3262 = vcmp.gt.f32.partialorder %v2772, 0.0
  %vm3263 = vcmp.gt.f32.partialorder %v2773, 0.0
  %vm3264 = vcmp.gt.f32.partialorder %v2774, 0.0
  %vm3265 = vcmp.gt.f32.partialorder %v2775, 0.0
  %vm3266 = vcmp.gt.f32.partialorder %v2776, 0.0
  %vm3267 = vcmp.gt.f32.partialorder %v2777, 0.0
  %vm3268 = vcmp.gt.f32.partialorder %v2778, 0.0
  %vm3269 = vcmp.gt.f32.partialorder %v2779, 0.0
  %vm3270 = vcmp.gt.f32.partialorder %v2780, 0.0
  %vm3271 = vcmp.gt.f32.partialorder %v2781, 0.0
  %vm3272 = vcmp.gt.f32.partialorder %v2782, 0.0
  %vm3273 = vcmp.gt.f32.partialorder %v2783, 0.0
  %v3274 = vsel %vm3258, %v3242, -1e+09
  %v3275 = vsel %vm3259, %v3243, -1e+09
  %v3276 = vsel %vm3260, %v3244, -1e+09
  %v3277 = vsel %vm3261, %v3245, -1e+09
  %v3278 = vsel %vm3262, %v3246, -1e+09
  %v3279 = vsel %vm3263, %v3247, -1e+09
  %v3280 = vsel %vm3264, %v3248, -1e+09
  %v3281 = vsel %vm3265, %v3249, -1e+09
  %v3282 = vsel %vm3266, %v3250, -1e+09
  %v3283 = vsel %vm3267, %v3251, -1e+09
  %v3284 = vsel %vm3268, %v3252, -1e+09
  %v3285 = vsel %vm3269, %v3253, -1e+09
  %v3286 = vsel %vm3270, %v3254, -1e+09
  %v3287 = vsel %vm3271, %v3255, -1e+09
  %v3288 = vsel %vm3272, %v3256, -1e+09
  %v3289 = vsel %vm3273, %v3257, -1e+09
  %3290 = vmax.xlane.f32.xlu0 %v3274
  %v3291 = vpop.xlane.xlu0 %3290
  %3292 = vmax.xlane.f32.xlu0 %v3275
  %v3293 = vpop.xlane.xlu0 %3292
  %3294 = vmax.xlane.f32.xlu0 %v3276
  %v3295 = vpop.xlane.xlu0 %3294
  %3296 = vmax.xlane.f32.xlu0 %v3277
  %v3297 = vpop.xlane.xlu0 %3296
  %3298 = vmax.xlane.f32.xlu0 %v3278
  %v3299 = vpop.xlane.xlu0 %3298
  %3300 = vmax.xlane.f32.xlu0 %v3279
  %v3301 = vpop.xlane.xlu0 %3300
  %3302 = vmax.xlane.f32.xlu0 %v3280
  %v3303 = vpop.xlane.xlu0 %3302
  %3304 = vmax.xlane.f32.xlu0 %v3281
  %v3305 = vpop.xlane.xlu0 %3304
  %3306 = vmax.xlane.f32.xlu0 %v3282
  %v3307 = vpop.xlane.xlu0 %3306
  %3308 = vmax.xlane.f32.xlu0 %v3283
  %v3309 = vpop.xlane.xlu0 %3308
  %3310 = vmax.xlane.f32.xlu0 %v3284
  %v3311 = vpop.xlane.xlu0 %3310
  %3312 = vmax.xlane.f32.xlu0 %v3285
  %v3313 = vpop.xlane.xlu0 %3312
  %3314 = vmax.xlane.f32.xlu0 %v3286
  %v3315 = vpop.xlane.xlu0 %3314
  %3316 = vmax.xlane.f32.xlu0 %v3287
  %v3317 = vpop.xlane.xlu0 %3316
  %3318 = vmax.xlane.f32.xlu0 %v3288
  %v3319 = vpop.xlane.xlu0 %3318
  %3320 = vmax.xlane.f32.xlu0 %v3289
  %v3321 = vpop.xlane.xlu0 %3320
  %v3322 = vsub.f32 %v3274, %v3291
  %v3323 = vsub.f32 %v3275, %v3293
  %v3324 = vsub.f32 %v3276, %v3295
  %v3325 = vsub.f32 %v3277, %v3297
  %v3326 = vsub.f32 %v3278, %v3299
  %v3327 = vsub.f32 %v3279, %v3301
  %v3328 = vsub.f32 %v3280, %v3303
  %v3329 = vsub.f32 %v3281, %v3305
  %v3330 = vsub.f32 %v3282, %v3307
  %v3331 = vsub.f32 %v3283, %v3309
  %v3332 = vsub.f32 %v3284, %v3311
  %v3333 = vsub.f32 %v3285, %v3313
  %v3334 = vsub.f32 %v3286, %v3315
  %v3335 = vsub.f32 %v3287, %v3317
  %v3336 = vsub.f32 %v3288, %v3319
  %v3337 = vsub.f32 %v3289, %v3321
  %v3338 = vmul.f32 %v3322, 1.442695
  %v3339 = vpow.pop %v3338
  %v3340 = vmul.f32 %v3323, 1.442695
  %v3341 = vpow.pop %v3340
  %v3342 = vmul.f32 %v3324, 1.442695
  %v3343 = vpow.pop %v3342
  %v3344 = vmul.f32 %v3325, 1.442695
  %v3345 = vpow.pop %v3344
  %v3346 = vmul.f32 %v3326, 1.442695
  %v3347 = vpow.pop %v3346
  %v3348 = vmul.f32 %v3327, 1.442695
  %v3349 = vpow.pop %v3348
  %v3350 = vmul.f32 %v3328, 1.442695
  %v3351 = vpow.pop %v3350
  %v3352 = vmul.f32 %v3329, 1.442695
  %v3353 = vpow.pop %v3352
  %v3354 = vmul.f32 %v3330, 1.442695
  %v3355 = vpow.pop %v3354
  %v3356 = vmul.f32 %v3331, 1.442695
  %v3357 = vpow.pop %v3356
  %v3358 = vmul.f32 %v3332, 1.442695
  %v3359 = vpow.pop %v3358
  %v3360 = vmul.f32 %v3333, 1.442695
  %v3361 = vpow.pop %v3360
  %v3362 = vmul.f32 %v3334, 1.442695
  %v3363 = vpow.pop %v3362
  %v3364 = vmul.f32 %v3335, 1.442695
  %v3365 = vpow.pop %v3364
  %v3366 = vmul.f32 %v3336, 1.442695
  %v3367 = vpow.pop %v3366
  %v3368 = vmul.f32 %v3337, 1.442695
  %v3369 = vpow.pop %v3368
  %3370 = vadd.xlane.f32.xlu0 %v3339
  %v3371 = vpop.xlane.xlu0 %3370
  %3372 = vadd.xlane.f32.xlu0 %v3341
  %v3373 = vpop.xlane.xlu0 %3372
  %3374 = vadd.xlane.f32.xlu0 %v3343
  %v3375 = vpop.xlane.xlu0 %3374
  %3376 = vadd.xlane.f32.xlu0 %v3345
  %v3377 = vpop.xlane.xlu0 %3376
  %3378 = vadd.xlane.f32.xlu0 %v3347
  %v3379 = vpop.xlane.xlu0 %3378
  %3380 = vadd.xlane.f32.xlu0 %v3349
  %v3381 = vpop.xlane.xlu0 %3380
  %3382 = vadd.xlane.f32.xlu0 %v3351
  %v3383 = vpop.xlane.xlu0 %3382
  %3384 = vadd.xlane.f32.xlu0 %v3353
  %v3385 = vpop.xlane.xlu0 %3384
  %3386 = vadd.xlane.f32.xlu0 %v3355
  %v3387 = vpop.xlane.xlu0 %3386
  %3388 = vadd.xlane.f32.xlu0 %v3357
  %v3389 = vpop.xlane.xlu0 %3388
  %3390 = vadd.xlane.f32.xlu0 %v3359
  %v3391 = vpop.xlane.xlu0 %3390
  %3392 = vadd.xlane.f32.xlu0 %v3361
  %v3393 = vpop.xlane.xlu0 %3392
  %3394 = vadd.xlane.f32.xlu0 %v3363
  %v3395 = vpop.xlane.xlu0 %3394
  %3396 = vadd.xlane.f32.xlu0 %v3365
  %v3397 = vpop.xlane.xlu0 %3396
  %3398 = vadd.xlane.f32.xlu0 %v3367
  %v3399 = vpop.xlane.xlu0 %3398
  %3400 = vadd.xlane.f32.xlu0 %v3369
  %v3401 = vpop.xlane.xlu0 %3400
  %v3402 = vrcp.pop %v3371
  %v3403 = vmul.f32 %v3339, %v3402
  %v3404 = vrcp.pop %v3373
  %v3405 = vmul.f32 %v3341, %v3404
  %v3406 = vrcp.pop %v3375
  %v3407 = vmul.f32 %v3343, %v3406
  %v3408 = vrcp.pop %v3377
  %v3409 = vmul.f32 %v3345, %v3408
  %v3410 = vrcp.pop %v3379
  %v3411 = vmul.f32 %v3347, %v3410
  %v3412 = vrcp.pop %v3381
  %v3413 = vmul.f32 %v3349, %v3412
  %v3414 = vrcp.pop %v3383
  %v3415 = vmul.f32 %v3351, %v3414
  %v3416 = vrcp.pop %v3385
  %v3417 = vmul.f32 %v3353, %v3416
  %v3418 = vrcp.pop %v3387
  %v3419 = vmul.f32 %v3355, %v3418
  %v3420 = vrcp.pop %v3389
  %v3421 = vmul.f32 %v3357, %v3420
  %v3422 = vrcp.pop %v3391
  %v3423 = vmul.f32 %v3359, %v3422
  %v3424 = vrcp.pop %v3393
  %v3425 = vmul.f32 %v3361, %v3424
  %v3426 = vrcp.pop %v3395
  %v3427 = vmul.f32 %v3363, %v3426
  %v3428 = vrcp.pop %v3397
  %v3429 = vmul.f32 %v3365, %v3428
  %v3430 = vrcp.pop %v3399
  %v3431 = vmul.f32 %v3367, %v3430
  %v3432 = vrcp.pop %v3401
  %v3433 = vmul.f32 %v3369, %v3432
  %3434 = vmatprep.subr.mxu0 0.0
  %3435 = vmatpush1.xpose.msra.mxu0 %v3403
  %3436 = vmatprep.subr.mxu0 0.0
  %3437 = vmatpush1.xpose.msra.mxu0 %v3405
  %3438 = vmatprep.subr.mxu0 0.0
  %3439 = vmatpush1.xpose.msra.mxu0 %v3407
  %3440 = vmatprep.subr.mxu0 0.0
  %3441 = vmatpush1.xpose.msra.mxu0 %v3409
  %3442 = vmatprep.subr.mxu0 0.0
  %3443 = vmatpush1.xpose.msra.mxu0 %v3411
  %3444 = vmatprep.subr.mxu0 0.0
  %3445 = vmatpush1.xpose.msra.mxu0 %v3413
  %3446 = vmatprep.subr.mxu0 0.0
  %3447 = vmatpush1.xpose.msra.mxu0 %v3415
  %3448 = vmatprep.subr.mxu0 0.0
  %3449 = vmatpush1.xpose.msra.mxu0 %v3417
  %3450 = vmatprep.subr.mxu0 0.0
  %3451 = vmatpush1.xpose.msra.mxu0 %v3419
  %3452 = vmatprep.subr.mxu0 0.0
  %3453 = vmatpush1.xpose.msra.mxu0 %v3421
  %3454 = vmatprep.subr.mxu0 0.0
  %3455 = vmatpush1.xpose.msra.mxu0 %v3423
  %3456 = vmatprep.subr.mxu0 0.0
  %3457 = vmatpush1.xpose.msra.mxu0 %v3425
  %3458 = vmatprep.subr.mxu0 0.0
  %3459 = vmatpush1.xpose.msra.mxu0 %v3427
  %3460 = vmatprep.subr.mxu0 0.0
  %3461 = vmatpush1.xpose.msra.mxu0 %v3429
  %3462 = vmatprep.subr.mxu0 0.0
  %3463 = vmatpush1.xpose.msra.mxu0 %v3431
  %3464 = vmatprep.subr.mxu0 0.0
  %3465 = vmatpush1.xpose.msra.mxu0 %v3433
  %3466 = vmatprep.subr.mxu0 0.0
  %3467 = vmatpush1.xpose.msra.mxu0 0.0
  %3468 = vmatprep.subr.mxu0 0.0
  %3469 = vmatpush1.xpose.msra.mxu0 0.0
  %3470 = vmatprep.subr.mxu0 0.0
  %3471 = vmatpush1.xpose.msra.mxu0 0.0
  %3472 = vmatprep.subr.mxu0 0.0
  %3473 = vmatpush1.xpose.msra.mxu0 0.0
  %3474 = vmatprep.subr.mxu0 0.0
  %3475 = vmatpush1.xpose.msra.mxu0 0.0
  %3476 = vmatprep.subr.mxu0 0.0
  %3477 = vmatpush1.xpose.msra.mxu0 0.0
  %3478 = vmatprep.subr.mxu0 0.0
  %3479 = vmatpush1.xpose.msra.mxu0 0.0
  %3480 = vmatprep.subr.mxu0 0.0
  %3481 = vmatpush1.xpose.msra.mxu0 0.0
  %3482 = vmatprep.subr.mxu0 0.0
  %3483 = vmatpush1.xpose.msra.mxu0 0.0
  %3484 = vmatprep.subr.mxu0 0.0
  %3485 = vmatpush1.xpose.msra.mxu0 0.0
  %3486 = vmatprep.subr.mxu0 0.0
  %3487 = vmatpush1.xpose.msra.mxu0 0.0
  %3488 = vmatprep.subr.mxu0 0.0
  %3489 = vmatpush1.xpose.msra.mxu0 0.0
  %3490 = vmatprep.subr.mxu0 0.0
  %3491 = vmatpush1.xpose.msra.mxu0 0.0
  %3492 = vmatprep.subr.mxu0 0.0
  %3493 = vmatpush1.xpose.msra.mxu0 0.0
  %3494 = vmatprep.subr.mxu0 0.0
  %3495 = vmatpush1.xpose.msra.mxu0 0.0
  %3496 = vmatprep.subr.mxu0 0.0
  %3497 = vmatpush1.xpose.msra.mxu0 0.0
  %3498 = vmatprep.mubr.f32.mxu0 0.0
  %3499 = vmatmul.mubr.f32.gmra.mrb[0].mxu0 %v2999
  %v3500 = vpop.f32.mrb[0].mxu0
  %v3501 = vadd.f32 0.0, %v3500
  %v3502 = vpop.f32.mrb[0].mxu0
  %3503 = vdwg.mxu0
  %3504 = vxpose.xlu0.b32.start [1/16] %v2964, 128
  %3505 = vxpose.xlu0.b32.cont [2/16] 0.0, 128
  %3506 = vxpose.xlu0.b32.cont [3/16] 0.0, 128
  %3507 = vxpose.xlu0.b32.cont [4/16] 0.0, 128
  %3508 = vxpose.xlu0.b32.cont [5/16] 0.0, 128
  %3509 = vxpose.xlu0.b32.cont [6/16] 0.0, 128
  %3510 = vxpose.xlu0.b32.cont [7/16] 0.0, 128
  %3511 = vxpose.xlu0.b32.cont [8/16] 0.0, 128
  %3512 = vxpose.xlu0.b32.cont [9/16] 0.0, 128
  %3513 = vxpose.xlu0.b32.cont [10/16] 0.0, 128
  %3514 = vxpose.xlu0.b32.cont [11/16] 0.0, 128
  %3515 = vxpose.xlu0.b32.cont [12/16] 0.0, 128
  %3516 = vxpose.xlu0.b32.cont [13/16] 0.0, 128
  %3517 = vxpose.xlu0.b32.cont [14/16] 0.0, 128
  %3518 = vxpose.xlu0.b32.cont [15/16] 0.0, 128
  %3519 = vxpose.xlu0.b32.end [16/16] 0.0, 128
  %v3520 = vpop.trf.xlu0
  %v3521 = vpop.trf.xlu0
  %v3522 = vpop.trf.xlu0
  %v3523 = vpop.trf.xlu0
  %v3524 = vpop.trf.xlu0
  %v3525 = vpop.trf.xlu0
  %v3526 = vpop.trf.xlu0
  %v3527 = vpop.trf.xlu0
  %v3528 = vpop.trf.xlu0
  %v3529 = vpop.trf.xlu0
  %v3530 = vpop.trf.xlu0
  %v3531 = vpop.trf.xlu0
  %v3532 = vpop.trf.xlu0
  %v3533 = vpop.trf.xlu0
  %v3534 = vpop.trf.xlu0
  %v3535 = vpop.trf.xlu0
  %v3537 = vsel %vm117, %v3520, 0
  %v3540 = vsel %vm117, %v3521, 0
  %v3543 = vsel %vm117, %v3522, 0
  %v3546 = vsel %vm117, %v3523, 0
  %v3549 = vsel %vm117, %v3524, 0
  %v3552 = vsel %vm117, %v3525, 0
  %v3555 = vsel %vm117, %v3526, 0
  %v3558 = vsel %vm117, %v3527, 0
  %v3561 = vsel %vm117, %v3528, 0
  %v3564 = vsel %vm117, %v3529, 0
  %v3567 = vsel %vm117, %v3530, 0
  %v3570 = vsel %vm117, %v3531, 0
  %v3573 = vsel %vm117, %v3532, 0
  %v3576 = vsel %vm117, %v3533, 0
  %v3579 = vsel %vm117, %v3534, 0
  %v3582 = vsel %vm117, %v3535, 0
  %3584 = vmatprep.subr.mxu0 0.0
  %3585 = vmatpush1.msra.mxu0 %v2984
  %3586 = vmatprep.subr.mxu0 0.0
  %3587 = vmatpush1.msra.mxu0 0.0
  %3588 = vmatprep.subr.mxu0 0.0
  %3589 = vmatpush1.msra.mxu0 0.0
  %3590 = vmatprep.subr.mxu0 0.0
  %3591 = vmatpush1.msra.mxu0 0.0
  %3592 = vmatprep.subr.mxu0 0.0
  %3593 = vmatpush1.msra.mxu0 0.0
  %3594 = vmatprep.subr.mxu0 0.0
  %3595 = vmatpush1.msra.mxu0 0.0
  %3596 = vmatprep.subr.mxu0 0.0
  %3597 = vmatpush1.msra.mxu0 0.0
  %3598 = vmatprep.subr.mxu0 0.0
  %3599 = vmatpush1.msra.mxu0 0.0
  %3600 = vmatprep.subr.mxu0 0.0
  %3601 = vmatpush1.msra.mxu0 0.0
  %3602 = vmatprep.subr.mxu0 0.0
  %3603 = vmatpush1.msra.mxu0 0.0
  %3604 = vmatprep.subr.mxu0 0.0
  %3605 = vmatpush1.msra.mxu0 0.0
  %3606 = vmatprep.subr.mxu0 0.0
  %3607 = vmatpush1.msra.mxu0 0.0
  %3608 = vmatprep.subr.mxu0 0.0
  %3609 = vmatpush1.msra.mxu0 0.0
  %3610 = vmatprep.subr.mxu0 0.0
  %3611 = vmatpush1.msra.mxu0 0.0
  %3612 = vmatprep.subr.mxu0 0.0
  %3613 = vmatpush1.msra.mxu0 0.0
  %3614 = vmatprep.subr.mxu0 0.0
  %3615 = vmatpush1.msra.mxu0 0.0
  %3616 = vmatprep.subr.mxu0 0.0
  %3617 = vmatpush1.msra.mxu0 0.0
  %3618 = vmatprep.subr.mxu0 0.0
  %3619 = vmatpush1.msra.mxu0 0.0
  %3620 = vmatprep.subr.mxu0 0.0
  %3621 = vmatpush1.msra.mxu0 0.0
  %3622 = vmatprep.subr.mxu0 0.0
  %3623 = vmatpush1.msra.mxu0 0.0
  %3624 = vmatprep.subr.mxu0 0.0
  %3625 = vmatpush1.msra.mxu0 0.0
  %3626 = vmatprep.subr.mxu0 0.0
  %3627 = vmatpush1.msra.mxu0 0.0
  %3628 = vmatprep.subr.mxu0 0.0
  %3629 = vmatpush1.msra.mxu0 0.0
  %3630 = vmatprep.subr.mxu0 0.0
  %3631 = vmatpush1.msra.mxu0 0.0
  %3632 = vmatprep.subr.mxu0 0.0
  %3633 = vmatpush1.msra.mxu0 0.0
  %3634 = vmatprep.subr.mxu0 0.0
  %3635 = vmatpush1.msra.mxu0 0.0
  %3636 = vmatprep.subr.mxu0 0.0
  %3637 = vmatpush1.msra.mxu0 0.0
  %3638 = vmatprep.subr.mxu0 0.0
  %3639 = vmatpush1.msra.mxu0 0.0
  %3640 = vmatprep.subr.mxu0 0.0
  %3641 = vmatpush1.msra.mxu0 0.0
  %3642 = vmatprep.subr.mxu0 0.0
  %3643 = vmatpush1.msra.mxu0 0.0
  %3644 = vmatprep.subr.mxu0 0.0
  %3645 = vmatpush1.msra.mxu0 0.0
  %3646 = vmatprep.subr.mxu0 0.0
  %3647 = vmatpush1.msra.mxu0 0.0
  %3648 = vmatprep.mubr.f32.mxu0 0.0
  %3649 = vmatmul.mubr.f32.gmra.mrb[0].mxu0 %v3537
  %v3650 = vpop.f32.mrb[0].mxu0
  %v3651 = vadd.f32 0.0, %v3650
  %v3652 = vpop.f32.mrb[0].mxu0
  %3653 = vmatprep.mubr.f32.mxu0 0.0
  %3654 = vmatmul.mubr.f32.gmra.mrb[0].mxu0 %v3540
  %v3655 = vpop.f32.mrb[0].mxu0
  %v3656 = vadd.f32 0.0, %v3655
  %v3657 = vpop.f32.mrb[0].mxu0
  %3658 = vmatprep.mubr.f32.mxu0 0.0
  %3659 = vmatmul.mubr.f32.gmra.mrb[0].mxu0 %v3543
  %v3660 = vpop.f32.mrb[0].mxu0
  %v3661 = vadd.f32 0.0, %v3660
  %v3662 = vpop.f32.mrb[0].mxu0
  %3663 = vmatprep.mubr.f32.mxu0 0.0
  %3664 = vmatmul.mubr.f32.gmra.mrb[0].mxu0 %v3546
  %v3665 = vpop.f32.mrb[0].mxu0
  %v3666 = vadd.f32 0.0, %v3665
  %v3667 = vpop.f32.mrb[0].mxu0
  %3668 = vmatprep.mubr.f32.mxu0 0.0
  %3669 = vmatmul.mubr.f32.gmra.mrb[0].mxu0 %v3549
  %v3670 = vpop.f32.mrb[0].mxu0
  %v3671 = vadd.f32 0.0, %v3670
  %v3672 = vpop.f32.mrb[0].mxu0
  %3673 = vmatprep.mubr.f32.mxu0 0.0
  %3674 = vmatmul.mubr.f32.gmra.mrb[0].mxu0 %v3552
  %v3675 = vpop.f32.mrb[0].mxu0
  %v3676 = vadd.f32 0.0, %v3675
  %v3677 = vpop.f32.mrb[0].mxu0
  %3678 = vmatprep.mubr.f32.mxu0 0.0
  %3679 = vmatmul.mubr.f32.gmra.mrb[0].mxu0 %v3555
  %v3680 = vpop.f32.mrb[0].mxu0
  %v3681 = vadd.f32 0.0, %v3680
  %v3682 = vpop.f32.mrb[0].mxu0
  %3683 = vmatprep.mubr.f32.mxu0 0.0
  %3684 = vmatmul.mubr.f32.gmra.mrb[0].mxu0 %v3558
  %v3685 = vpop.f32.mrb[0].mxu0
  %v3686 = vadd.f32 0.0, %v3685
  %v3687 = vpop.f32.mrb[0].mxu0
  %3688 = vmatprep.mubr.f32.mxu0 0.0
  %3689 = vmatmul.mubr.f32.gmra.mrb[0].mxu0 %v3561
  %v3690 = vpop.f32.mrb[0].mxu0
  %v3691 = vadd.f32 0.0, %v3690
  %v3692 = vpop.f32.mrb[0].mxu0
  %3693 = vmatprep.mubr.f32.mxu0 0.0
  %3694 = vmatmul.mubr.f32.gmra.mrb[0].mxu0 %v3564
  %v3695 = vpop.f32.mrb[0].mxu0
  %v3696 = vadd.f32 0.0, %v3695
  %v3697 = vpop.f32.mrb[0].mxu0
  %3698 = vmatprep.mubr.f32.mxu0 0.0
  %3699 = vmatmul.mubr.f32.gmra.mrb[0].mxu0 %v3567
  %v3700 = vpop.f32.mrb[0].mxu0
  %v3701 = vadd.f32 0.0, %v3700
  %v3702 = vpop.f32.mrb[0].mxu0
  %3703 = vmatprep.mubr.f32.mxu0 0.0
  %3704 = vmatmul.mubr.f32.gmra.mrb[0].mxu0 %v3570
  %v3705 = vpop.f32.mrb[0].mxu0
  %v3706 = vadd.f32 0.0, %v3705
  %v3707 = vpop.f32.mrb[0].mxu0
  %3708 = vmatprep.mubr.f32.mxu0 0.0
  %3709 = vmatmul.mubr.f32.gmra.mrb[0].mxu0 %v3573
  %v3710 = vpop.f32.mrb[0].mxu0
  %v3711 = vadd.f32 0.0, %v3710
  %v3712 = vpop.f32.mrb[0].mxu0
  %3713 = vmatprep.mubr.f32.mxu0 0.0
  %3714 = vmatmul.mubr.f32.gmra.mrb[0].mxu0 %v3576
  %v3715 = vpop.f32.mrb[0].mxu0
  %v3716 = vadd.f32 0.0, %v3715
  %v3717 = vpop.f32.mrb[0].mxu0
  %3718 = vmatprep.mubr.f32.mxu0 0.0
  %3719 = vmatmul.mubr.f32.gmra.mrb[0].mxu0 %v3579
  %v3720 = vpop.f32.mrb[0].mxu0
  %v3721 = vadd.f32 0.0, %v3720
  %v3722 = vpop.f32.mrb[0].mxu0
  %3723 = vmatprep.mubr.f32.mxu0 0.0
  %3724 = vmatmul.mubr.f32.gmra.mrb[0].mxu0 %v3582
  %v3725 = vpop.f32.mrb[0].mxu0
  %v3726 = vadd.f32 0.0, %v3725
  %v3727 = vpop.f32.mrb[0].mxu0
  %3728 = vdwg.mxu0
  %v3729 = vmul.f32 %v3651, 0.5
  %v3730 = vmul.f32 %v3656, 0.5
  %v3731 = vmul.f32 %v3661, 0.5
  %v3732 = vmul.f32 %v3666, 0.5
  %v3733 = vmul.f32 %v3671, 0.5
  %v3734 = vmul.f32 %v3676, 0.5
  %v3735 = vmul.f32 %v3681, 0.5
  %v3736 = vmul.f32 %v3686, 0.5
  %v3737 = vmul.f32 %v3691, 0.5
  %v3738 = vmul.f32 %v3696, 0.5
  %v3739 = vmul.f32 %v3701, 0.5
  %v3740 = vmul.f32 %v3706, 0.5
  %v3741 = vmul.f32 %v3711, 0.5
  %v3742 = vmul.f32 %v3716, 0.5
  %v3743 = vmul.f32 %v3721, 0.5
  %v3744 = vmul.f32 %v3726, 0.5
  %v3745 = vsel %vm3258, %v3729, -1e+09
  %v3746 = vsel %vm3259, %v3730, -1e+09
  %v3747 = vsel %vm3260, %v3731, -1e+09
  %v3748 = vsel %vm3261, %v3732, -1e+09
  %v3749 = vsel %vm3262, %v3733, -1e+09
  %v3750 = vsel %vm3263, %v3734, -1e+09
  %v3751 = vsel %vm3264, %v3735, -1e+09
  %v3752 = vsel %vm3265, %v3736, -1e+09
  %v3753 = vsel %vm3266, %v3737, -1e+09
  %v3754 = vsel %vm3267, %v3738, -1e+09
  %v3755 = vsel %vm3268, %v3739, -1e+09
  %v3756 = vsel %vm3269, %v3740, -1e+09
  %v3757 = vsel %vm3270, %v3741, -1e+09
  %v3758 = vsel %vm3271, %v3742, -1e+09
  %v3759 = vsel %vm3272, %v3743, -1e+09
  %v3760 = vsel %vm3273, %v3744, -1e+09
  %3761 = vmax.xlane.f32.xlu0 %v3745
  %v3762 = vpop.xlane.xlu0 %3761
  %3763 = vmax.xlane.f32.xlu0 %v3746
  %v3764 = vpop.xlane.xlu0 %3763
  %3765 = vmax.xlane.f32.xlu0 %v3747
  %v3766 = vpop.xlane.xlu0 %3765
  %3767 = vmax.xlane.f32.xlu0 %v3748
  %v3768 = vpop.xlane.xlu0 %3767
  %3769 = vmax.xlane.f32.xlu0 %v3749
  %v3770 = vpop.xlane.xlu0 %3769
  %3771 = vmax.xlane.f32.xlu0 %v3750
  %v3772 = vpop.xlane.xlu0 %3771
  %3773 = vmax.xlane.f32.xlu0 %v3751
  %v3774 = vpop.xlane.xlu0 %3773
  %3775 = vmax.xlane.f32.xlu0 %v3752
  %v3776 = vpop.xlane.xlu0 %3775
  %3777 = vmax.xlane.f32.xlu0 %v3753
  %v3778 = vpop.xlane.xlu0 %3777
  %3779 = vmax.xlane.f32.xlu0 %v3754
  %v3780 = vpop.xlane.xlu0 %3779
  %3781 = vmax.xlane.f32.xlu0 %v3755
  %v3782 = vpop.xlane.xlu0 %3781
  %3783 = vmax.xlane.f32.xlu0 %v3756
  %v3784 = vpop.xlane.xlu0 %3783
  %3785 = vmax.xlane.f32.xlu0 %v3757
  %v3786 = vpop.xlane.xlu0 %3785
  %3787 = vmax.xlane.f32.xlu0 %v3758
  %v3788 = vpop.xlane.xlu0 %3787
  %3789 = vmax.xlane.f32.xlu0 %v3759
  %v3790 = vpop.xlane.xlu0 %3789
  %3791 = vmax.xlane.f32.xlu0 %v3760
  %v3792 = vpop.xlane.xlu0 %3791
  %v3793 = vsub.f32 %v3745, %v3762
  %v3794 = vsub.f32 %v3746, %v3764
  %v3795 = vsub.f32 %v3747, %v3766
  %v3796 = vsub.f32 %v3748, %v3768
  %v3797 = vsub.f32 %v3749, %v3770
  %v3798 = vsub.f32 %v3750, %v3772
  %v3799 = vsub.f32 %v3751, %v3774
  %v3800 = vsub.f32 %v3752, %v3776
  %v3801 = vsub.f32 %v3753, %v3778
  %v3802 = vsub.f32 %v3754, %v3780
  %v3803 = vsub.f32 %v3755, %v3782
  %v3804 = vsub.f32 %v3756, %v3784
  %v3805 = vsub.f32 %v3757, %v3786
  %v3806 = vsub.f32 %v3758, %v3788
  %v3807 = vsub.f32 %v3759, %v3790
  %v3808 = vsub.f32 %v3760, %v3792
  %v3809 = vmul.f32 %v3793, 1.442695
  %v3810 = vpow.pop %v3809
  %v3811 = vmul.f32 %v3794, 1.442695
  %v3812 = vpow.pop %v3811
  %v3813 = vmul.f32 %v3795, 1.442695
  %v3814 = vpow.pop %v3813
  %v3815 = vmul.f32 %v3796, 1.442695
  %v3816 = vpow.pop %v3815
  %v3817 = vmul.f32 %v3797, 1.442695
  %v3818 = vpow.pop %v3817
  %v3819 = vmul.f32 %v3798, 1.442695
  %v3820 = vpow.pop %v3819
  %v3821 = vmul.f32 %v3799, 1.442695
  %v3822 = vpow.pop %v3821
  %v3823 = vmul.f32 %v3800, 1.442695
  %v3824 = vpow.pop %v3823
  %v3825 = vmul.f32 %v3801, 1.442695
  %v3826 = vpow.pop %v3825
  %v3827 = vmul.f32 %v3802, 1.442695
  %v3828 = vpow.pop %v3827
  %v3829 = vmul.f32 %v3803, 1.442695
  %v3830 = vpow.pop %v3829
  %v3831 = vmul.f32 %v3804, 1.442695
  %v3832 = vpow.pop %v3831
  %v3833 = vmul.f32 %v3805, 1.442695
  %v3834 = vpow.pop %v3833
  %v3835 = vmul.f32 %v3806, 1.442695
  %v3836 = vpow.pop %v3835
  %v3837 = vmul.f32 %v3807, 1.442695
  %v3838 = vpow.pop %v3837
  %v3839 = vmul.f32 %v3808, 1.442695
  %v3840 = vpow.pop %v3839
  %3841 = vadd.xlane.f32.xlu0 %v3810
  %v3842 = vpop.xlane.xlu0 %3841
  %3843 = vadd.xlane.f32.xlu0 %v3812
  %v3844 = vpop.xlane.xlu0 %3843
  %3845 = vadd.xlane.f32.xlu0 %v3814
  %v3846 = vpop.xlane.xlu0 %3845
  %3847 = vadd.xlane.f32.xlu0 %v3816
  %v3848 = vpop.xlane.xlu0 %3847
  %3849 = vadd.xlane.f32.xlu0 %v3818
  %v3850 = vpop.xlane.xlu0 %3849
  %3851 = vadd.xlane.f32.xlu0 %v3820
  %v3852 = vpop.xlane.xlu0 %3851
  %3853 = vadd.xlane.f32.xlu0 %v3822
  %v3854 = vpop.xlane.xlu0 %3853
  %3855 = vadd.xlane.f32.xlu0 %v3824
  %v3856 = vpop.xlane.xlu0 %3855
  %3857 = vadd.xlane.f32.xlu0 %v3826
  %v3858 = vpop.xlane.xlu0 %3857
  %3859 = vadd.xlane.f32.xlu0 %v3828
  %v3860 = vpop.xlane.xlu0 %3859
  %3861 = vadd.xlane.f32.xlu0 %v3830
  %v3862 = vpop.xlane.xlu0 %3861
  %3863 = vadd.xlane.f32.xlu0 %v3832
  %v3864 = vpop.xlane.xlu0 %3863
  %3865 = vadd.xlane.f32.xlu0 %v3834
  %v3866 = vpop.xlane.xlu0 %3865
  %3867 = vadd.xlane.f32.xlu0 %v3836
  %v3868 = vpop.xlane.xlu0 %3867
  %3869 = vadd.xlane.f32.xlu0 %v3838
  %v3870 = vpop.xlane.xlu0 %3869
  %3871 = vadd.xlane.f32.xlu0 %v3840
  %v3872 = vpop.xlane.xlu0 %3871
  %v3873 = vrcp.pop %v3842
  %v3874 = vmul.f32 %v3810, %v3873
  %v3875 = vrcp.pop %v3844
  %v3876 = vmul.f32 %v3812, %v3875
  %v3877 = vrcp.pop %v3846
  %v3878 = vmul.f32 %v3814, %v3877
  %v3879 = vrcp.pop %v3848
  %v3880 = vmul.f32 %v3816, %v3879
  %v3881 = vrcp.pop %v3850
  %v3882 = vmul.f32 %v3818, %v3881
  %v3883 = vrcp.pop %v3852
  %v3884 = vmul.f32 %v3820, %v3883
  %v3885 = vrcp.pop %v3854
  %v3886 = vmul.f32 %v3822, %v3885
  %v3887 = vrcp.pop %v3856
  %v3888 = vmul.f32 %v3824, %v3887
  %v3889 = vrcp.pop %v3858
  %v3890 = vmul.f32 %v3826, %v3889
  %v3891 = vrcp.pop %v3860
  %v3892 = vmul.f32 %v3828, %v3891
  %v3893 = vrcp.pop %v3862
  %v3894 = vmul.f32 %v3830, %v3893
  %v3895 = vrcp.pop %v3864
  %v3896 = vmul.f32 %v3832, %v3895
  %v3897 = vrcp.pop %v3866
  %v3898 = vmul.f32 %v3834, %v3897
  %v3899 = vrcp.pop %v3868
  %v3900 = vmul.f32 %v3836, %v3899
  %v3901 = vrcp.pop %v3870
  %v3902 = vmul.f32 %v3838, %v3901
  %v3903 = vrcp.pop %v3872
  %v3904 = vmul.f32 %v3840, %v3903
  %3905 = vmatprep.subr.mxu0 0.0
  %3906 = vmatpush1.xpose.msra.mxu0 %v3874
  %3907 = vmatprep.subr.mxu0 0.0
  %3908 = vmatpush1.xpose.msra.mxu0 %v3876
  %3909 = vmatprep.subr.mxu0 0.0
  %3910 = vmatpush1.xpose.msra.mxu0 %v3878
  %3911 = vmatprep.subr.mxu0 0.0
  %3912 = vmatpush1.xpose.msra.mxu0 %v3880
  %3913 = vmatprep.subr.mxu0 0.0
  %3914 = vmatpush1.xpose.msra.mxu0 %v3882
  %3915 = vmatprep.subr.mxu0 0.0
  %3916 = vmatpush1.xpose.msra.mxu0 %v3884
  %3917 = vmatprep.subr.mxu0 0.0
  %3918 = vmatpush1.xpose.msra.mxu0 %v3886
  %3919 = vmatprep.subr.mxu0 0.0
  %3920 = vmatpush1.xpose.msra.mxu0 %v3888
  %3921 = vmatprep.subr.mxu0 0.0
  %3922 = vmatpush1.xpose.msra.mxu0 %v3890
  %3923 = vmatprep.subr.mxu0 0.0
  %3924 = vmatpush1.xpose.msra.mxu0 %v3892
  %3925 = vmatprep.subr.mxu0 0.0
  %3926 = vmatpush1.xpose.msra.mxu0 %v3894
  %3927 = vmatprep.subr.mxu0 0.0
  %3928 = vmatpush1.xpose.msra.mxu0 %v3896
  %3929 = vmatprep.subr.mxu0 0.0
  %3930 = vmatpush1.xpose.msra.mxu0 %v3898
  %3931 = vmatprep.subr.mxu0 0.0
  %3932 = vmatpush1.xpose.msra.mxu0 %v3900
  %3933 = vmatprep.subr.mxu0 0.0
  %3934 = vmatpush1.xpose.msra.mxu0 %v3902
  %3935 = vmatprep.subr.mxu0 0.0
  %3936 = vmatpush1.xpose.msra.mxu0 %v3904
  %3937 = vmatprep.subr.mxu0 0.0
  %3938 = vmatpush1.xpose.msra.mxu0 0.0
  %3939 = vmatprep.subr.mxu0 0.0
  %3940 = vmatpush1.xpose.msra.mxu0 0.0
  %3941 = vmatprep.subr.mxu0 0.0
  %3942 = vmatpush1.xpose.msra.mxu0 0.0
  %3943 = vmatprep.subr.mxu0 0.0
  %3944 = vmatpush1.xpose.msra.mxu0 0.0
  %3945 = vmatprep.subr.mxu0 0.0
  %3946 = vmatpush1.xpose.msra.mxu0 0.0
  %3947 = vmatprep.subr.mxu0 0.0
  %3948 = vmatpush1.xpose.msra.mxu0 0.0
  %3949 = vmatprep.subr.mxu0 0.0
  %3950 = vmatpush1.xpose.msra.mxu0 0.0
  %3951 = vmatprep.subr.mxu0 0.0
  %3952 = vmatpush1.xpose.msra.mxu0 0.0
  %3953 = vmatprep.subr.mxu0 0.0
  %3954 = vmatpush1.xpose.msra.mxu0 0.0
  %3955 = vmatprep.subr.mxu0 0.0
  %3956 = vmatpush1.xpose.msra.mxu0 0.0
  %3957 = vmatprep.subr.mxu0 0.0
  %3958 = vmatpush1.xpose.msra.mxu0 0.0
  %3959 = vmatprep.subr.mxu0 0.0
  %3960 = vmatpush1.xpose.msra.mxu0 0.0
  %3961 = vmatprep.subr.mxu0 0.0
  %3962 = vmatpush1.xpose.msra.mxu0 0.0
  %3963 = vmatprep.subr.mxu0 0.0
  %3964 = vmatpush1.xpose.msra.mxu0 0.0
  %3965 = vmatprep.subr.mxu0 0.0
  %3966 = vmatpush1.xpose.msra.mxu0 0.0
  %3967 = vmatprep.subr.mxu0 0.0
  %3968 = vmatpush1.xpose.msra.mxu0 0.0
  %3969 = vmatprep.mubr.f32.mxu0 0.0
  %3970 = vmatmul.mubr.f32.gmra.mrb[0].mxu0 %v3004
  %v3971 = vpop.f32.mrb[0].mxu0
  %v3972 = vadd.f32 0.0, %v3971
  %v3973 = vpop.f32.mrb[0].mxu0
  %3974 = vdwg.mxu0
  %3975 = vxpose.xlu0.b32.start [1/16] %v2969, 128
  %3976 = vxpose.xlu0.b32.cont [2/16] 0.0, 128
  %3977 = vxpose.xlu0.b32.cont [3/16] 0.0, 128
  %3978 = vxpose.xlu0.b32.cont [4/16] 0.0, 128
  %3979 = vxpose.xlu0.b32.cont [5/16] 0.0, 128
  %3980 = vxpose.xlu0.b32.cont [6/16] 0.0, 128
  %3981 = vxpose.xlu0.b32.cont [7/16] 0.0, 128
  %3982 = vxpose.xlu0.b32.cont [8/16] 0.0, 128
  %3983 = vxpose.xlu0.b32.cont [9/16] 0.0, 128
  %3984 = vxpose.xlu0.b32.cont [10/16] 0.0, 128
  %3985 = vxpose.xlu0.b32.cont [11/16] 0.0, 128
  %3986 = vxpose.xlu0.b32.cont [12/16] 0.0, 128
  %3987 = vxpose.xlu0.b32.cont [13/16] 0.0, 128
  %3988 = vxpose.xlu0.b32.cont [14/16] 0.0, 128
  %3989 = vxpose.xlu0.b32.cont [15/16] 0.0, 128
  %3990 = vxpose.xlu0.b32.end [16/16] 0.0, 128
  %v3991 = vpop.trf.xlu0
  %v3992 = vpop.trf.xlu0
  %v3993 = vpop.trf.xlu0
  %v3994 = vpop.trf.xlu0
  %v3995 = vpop.trf.xlu0
  %v3996 = vpop.trf.xlu0
  %v3997 = vpop.trf.xlu0
  %v3998 = vpop.trf.xlu0
  %v3999 = vpop.trf.xlu0
  %v4000 = vpop.trf.xlu0
  %v4001 = vpop.trf.xlu0
  %v4002 = vpop.trf.xlu0
  %v4003 = vpop.trf.xlu0
  %v4004 = vpop.trf.xlu0
  %v4005 = vpop.trf.xlu0
  %v4006 = vpop.trf.xlu0
  %v4008 = vsel %vm117, %v3991, 0
  %v4011 = vsel %vm117, %v3992, 0
  %v4014 = vsel %vm117, %v3993, 0
  %v4017 = vsel %vm117, %v3994, 0
  %v4020 = vsel %vm117, %v3995, 0
  %v4023 = vsel %vm117, %v3996, 0
  %v4026 = vsel %vm117, %v3997, 0
  %v4029 = vsel %vm117, %v3998, 0
  %v4032 = vsel %vm117, %v3999, 0
  %v4035 = vsel %vm117, %v4000, 0
  %v4038 = vsel %vm117, %v4001, 0
  %v4041 = vsel %vm117, %v4002, 0
  %v4044 = vsel %vm117, %v4003, 0
  %v4047 = vsel %vm117, %v4004, 0
  %v4050 = vsel %vm117, %v4005, 0
  %v4053 = vsel %vm117, %v4006, 0
  %4055 = vmatprep.subr.mxu0 0.0
  %4056 = vmatpush1.msra.mxu0 %v2989
  %4057 = vmatprep.subr.mxu0 0.0
  %4058 = vmatpush1.msra.mxu0 0.0
  %4059 = vmatprep.subr.mxu0 0.0
  %4060 = vmatpush1.msra.mxu0 0.0
  %4061 = vmatprep.subr.mxu0 0.0
  %4062 = vmatpush1.msra.mxu0 0.0
  %4063 = vmatprep.subr.mxu0 0.0
  %4064 = vmatpush1.msra.mxu0 0.0
  %4065 = vmatprep.subr.mxu0 0.0
  %4066 = vmatpush1.msra.mxu0 0.0
  %4067 = vmatprep.subr.mxu0 0.0
  %4068 = vmatpush1.msra.mxu0 0.0
  %4069 = vmatprep.subr.mxu0 0.0
  %4070 = vmatpush1.msra.mxu0 0.0
  %4071 = vmatprep.subr.mxu0 0.0
  %4072 = vmatpush1.msra.mxu0 0.0
  %4073 = vmatprep.subr.mxu0 0.0
  %4074 = vmatpush1.msra.mxu0 0.0
  %4075 = vmatprep.subr.mxu0 0.0
  %4076 = vmatpush1.msra.mxu0 0.0
  %4077 = vmatprep.subr.mxu0 0.0
  %4078 = vmatpush1.msra.mxu0 0.0
  %4079 = vmatprep.subr.mxu0 0.0
  %4080 = vmatpush1.msra.mxu0 0.0
  %4081 = vmatprep.subr.mxu0 0.0
  %4082 = vmatpush1.msra.mxu0 0.0
  %4083 = vmatprep.subr.mxu0 0.0
  %4084 = vmatpush1.msra.mxu0 0.0
  %4085 = vmatprep.subr.mxu0 0.0
  %4086 = vmatpush1.msra.mxu0 0.0
  %4087 = vmatprep.subr.mxu0 0.0
  %4088 = vmatpush1.msra.mxu0 0.0
  %4089 = vmatprep.subr.mxu0 0.0
  %4090 = vmatpush1.msra.mxu0 0.0
  %4091 = vmatprep.subr.mxu0 0.0
  %4092 = vmatpush1.msra.mxu0 0.0
  %4093 = vmatprep.subr.mxu0 0.0
  %4094 = vmatpush1.msra.mxu0 0.0
  %4095 = vmatprep.subr.mxu0 0.0
  %4096 = vmatpush1.msra.mxu0 0.0
  %4097 = vmatprep.subr.mxu0 0.0
  %4098 = vmatpush1.msra.mxu0 0.0
  %4099 = vmatprep.subr.mxu0 0.0
  %4100 = vmatpush1.msra.mxu0 0.0
  %4101 = vmatprep.subr.mxu0 0.0
  %4102 = vmatpush1.msra.mxu0 0.0
  %4103 = vmatprep.subr.mxu0 0.0
  %4104 = vmatpush1.msra.mxu0 0.0
  %4105 = vmatprep.subr.mxu0 0.0
  %4106 = vmatpush1.msra.mxu0 0.0
  %4107 = vmatprep.subr.mxu0 0.0
  %4108 = vmatpush1.msra.mxu0 0.0
  %4109 = vmatprep.subr.mxu0 0.0
  %4110 = vmatpush1.msra.mxu0 0.0
  %4111 = vmatprep.subr.mxu0 0.0
  %4112 = vmatpush1.msra.mxu0 0.0
  %4113 = vmatprep.subr.mxu0 0.0
  %4114 = vmatpush1.msra.mxu0 0.0
  %4115 = vmatprep.subr.mxu0 0.0
  %4116 = vmatpush1.msra.mxu0 0.0
  %4117 = vmatprep.subr.mxu0 0.0
  %4118 = vmatpush1.msra.mxu0 0.0
  %4119 = vmatprep.mubr.f32.mxu0 0.0
  %4120 = vmatmul.mubr.f32.gmra.mrb[0].mxu0 %v4008
  %v4121 = vpop.f32.mrb[0].mxu0
  %v4122 = vadd.f32 0.0, %v4121
  %v4123 = vpop.f32.mrb[0].mxu0
  %4124 = vmatprep.mubr.f32.mxu0 0.0
  %4125 = vmatmul.mubr.f32.gmra.mrb[0].mxu0 %v4011
  %v4126 = vpop.f32.mrb[0].mxu0
  %v4127 = vadd.f32 0.0, %v4126
  %v4128 = vpop.f32.mrb[0].mxu0
  %4129 = vmatprep.mubr.f32.mxu0 0.0
  %4130 = vmatmul.mubr.f32.gmra.mrb[0].mxu0 %v4014
  %v4131 = vpop.f32.mrb[0].mxu0
  %v4132 = vadd.f32 0.0, %v4131
  %v4133 = vpop.f32.mrb[0].mxu0
  %4134 = vmatprep.mubr.f32.mxu0 0.0
  %4135 = vmatmul.mubr.f32.gmra.mrb[0].mxu0 %v4017
  %v4136 = vpop.f32.mrb[0].mxu0
  %v4137 = vadd.f32 0.0, %v4136
  %v4138 = vpop.f32.mrb[0].mxu0
  %4139 = vmatprep.mubr.f32.mxu0 0.0
  %4140 = vmatmul.mubr.f32.gmra.mrb[0].mxu0 %v4020
  %v4141 = vpop.f32.mrb[0].mxu0
  %v4142 = vadd.f32 0.0, %v4141
  %v4143 = vpop.f32.mrb[0].mxu0
  %4144 = vmatprep.mubr.f32.mxu0 0.0
  %4145 = vmatmul.mubr.f32.gmra.mrb[0].mxu0 %v4023
  %v4146 = vpop.f32.mrb[0].mxu0
  %v4147 = vadd.f32 0.0, %v4146
  %v4148 = vpop.f32.mrb[0].mxu0
  %4149 = vmatprep.mubr.f32.mxu0 0.0
  %4150 = vmatmul.mubr.f32.gmra.mrb[0].mxu0 %v4026
  %v4151 = vpop.f32.mrb[0].mxu0
  %v4152 = vadd.f32 0.0, %v4151
  %v4153 = vpop.f32.mrb[0].mxu0
  %4154 = vmatprep.mubr.f32.mxu0 0.0
  %4155 = vmatmul.mubr.f32.gmra.mrb[0].mxu0 %v4029
  %v4156 = vpop.f32.mrb[0].mxu0
  %v4157 = vadd.f32 0.0, %v4156
  %v4158 = vpop.f32.mrb[0].mxu0
  %4159 = vmatprep.mubr.f32.mxu0 0.0
  %4160 = vmatmul.mubr.f32.gmra.mrb[0].mxu0 %v4032
  %v4161 = vpop.f32.mrb[0].mxu0
  %v4162 = vadd.f32 0.0, %v4161
  %v4163 = vpop.f32.mrb[0].mxu0
  %4164 = vmatprep.mubr.f32.mxu0 0.0
  %4165 = vmatmul.mubr.f32.gmra.mrb[0].mxu0 %v4035
  %v4166 = vpop.f32.mrb[0].mxu0
  %v4167 = vadd.f32 0.0, %v4166
  %v4168 = vpop.f32.mrb[0].mxu0
  %4169 = vmatprep.mubr.f32.mxu0 0.0
  %4170 = vmatmul.mubr.f32.gmra.mrb[0].mxu0 %v4038
  %v4171 = vpop.f32.mrb[0].mxu0
  %v4172 = vadd.f32 0.0, %v4171
  %v4173 = vpop.f32.mrb[0].mxu0
  %4174 = vmatprep.mubr.f32.mxu0 0.0
  %4175 = vmatmul.mubr.f32.gmra.mrb[0].mxu0 %v4041
  %v4176 = vpop.f32.mrb[0].mxu0
  %v4177 = vadd.f32 0.0, %v4176
  %v4178 = vpop.f32.mrb[0].mxu0
  %4179 = vmatprep.mubr.f32.mxu0 0.0
  %4180 = vmatmul.mubr.f32.gmra.mrb[0].mxu0 %v4044
  %v4181 = vpop.f32.mrb[0].mxu0
  %v4182 = vadd.f32 0.0, %v4181
  %v4183 = vpop.f32.mrb[0].mxu0
  %4184 = vmatprep.mubr.f32.mxu0 0.0
  %4185 = vmatmul.mubr.f32.gmra.mrb[0].mxu0 %v4047
  %v4186 = vpop.f32.mrb[0].mxu0
  %v4187 = vadd.f32 0.0, %v4186
  %v4188 = vpop.f32.mrb[0].mxu0
  %4189 = vmatprep.mubr.f32.mxu0 0.0
  %4190 = vmatmul.mubr.f32.gmra.mrb[0].mxu0 %v4050
  %v4191 = vpop.f32.mrb[0].mxu0
  %v4192 = vadd.f32 0.0, %v4191
  %v4193 = vpop.f32.mrb[0].mxu0
  %4194 = vmatprep.mubr.f32.mxu0 0.0
  %4195 = vmatmul.mubr.f32.gmra.mrb[0].mxu0 %v4053
  %v4196 = vpop.f32.mrb[0].mxu0
  %v4197 = vadd.f32 0.0, %v4196
  %v4198 = vpop.f32.mrb[0].mxu0
  %4199 = vdwg.mxu0
  %v4200 = vmul.f32 %v4122, 0.5
  %v4201 = vmul.f32 %v4127, 0.5
  %v4202 = vmul.f32 %v4132, 0.5
  %v4203 = vmul.f32 %v4137, 0.5
  %v4204 = vmul.f32 %v4142, 0.5
  %v4205 = vmul.f32 %v4147, 0.5
  %v4206 = vmul.f32 %v4152, 0.5
  %v4207 = vmul.f32 %v4157, 0.5
  %v4208 = vmul.f32 %v4162, 0.5
  %v4209 = vmul.f32 %v4167, 0.5
  %v4210 = vmul.f32 %v4172, 0.5
  %v4211 = vmul.f32 %v4177, 0.5
  %v4212 = vmul.f32 %v4182, 0.5
  %v4213 = vmul.f32 %v4187, 0.5
  %v4214 = vmul.f32 %v4192, 0.5
  %v4215 = vmul.f32 %v4197, 0.5
  %v4216 = vsel %vm3258, %v4200, -1e+09
  %v4217 = vsel %vm3259, %v4201, -1e+09
  %v4218 = vsel %vm3260, %v4202, -1e+09
  %v4219 = vsel %vm3261, %v4203, -1e+09
  %v4220 = vsel %vm3262, %v4204, -1e+09
  %v4221 = vsel %vm3263, %v4205, -1e+09
  %v4222 = vsel %vm3264, %v4206, -1e+09
  %v4223 = vsel %vm3265, %v4207, -1e+09
  %v4224 = vsel %vm3266, %v4208, -1e+09
  %v4225 = vsel %vm3267, %v4209, -1e+09
  %v4226 = vsel %vm3268, %v4210, -1e+09
  %v4227 = vsel %vm3269, %v4211, -1e+09
  %v4228 = vsel %vm3270, %v4212, -1e+09
  %v4229 = vsel %vm3271, %v4213, -1e+09
  %v4230 = vsel %vm3272, %v4214, -1e+09
  %v4231 = vsel %vm3273, %v4215, -1e+09
  %4232 = vmax.xlane.f32.xlu0 %v4216
  %v4233 = vpop.xlane.xlu0 %4232
  %4234 = vmax.xlane.f32.xlu0 %v4217
  %v4235 = vpop.xlane.xlu0 %4234
  %4236 = vmax.xlane.f32.xlu0 %v4218
  %v4237 = vpop.xlane.xlu0 %4236
  %4238 = vmax.xlane.f32.xlu0 %v4219
  %v4239 = vpop.xlane.xlu0 %4238
  %4240 = vmax.xlane.f32.xlu0 %v4220
  %v4241 = vpop.xlane.xlu0 %4240
  %4242 = vmax.xlane.f32.xlu0 %v4221
  %v4243 = vpop.xlane.xlu0 %4242
  %4244 = vmax.xlane.f32.xlu0 %v4222
  %v4245 = vpop.xlane.xlu0 %4244
  %4246 = vmax.xlane.f32.xlu0 %v4223
  %v4247 = vpop.xlane.xlu0 %4246
  %4248 = vmax.xlane.f32.xlu0 %v4224
  %v4249 = vpop.xlane.xlu0 %4248
  %4250 = vmax.xlane.f32.xlu0 %v4225
  %v4251 = vpop.xlane.xlu0 %4250
  %4252 = vmax.xlane.f32.xlu0 %v4226
  %v4253 = vpop.xlane.xlu0 %4252
  %4254 = vmax.xlane.f32.xlu0 %v4227
  %v4255 = vpop.xlane.xlu0 %4254
  %4256 = vmax.xlane.f32.xlu0 %v4228
  %v4257 = vpop.xlane.xlu0 %4256
  %4258 = vmax.xlane.f32.xlu0 %v4229
  %v4259 = vpop.xlane.xlu0 %4258
  %4260 = vmax.xlane.f32.xlu0 %v4230
  %v4261 = vpop.xlane.xlu0 %4260
  %4262 = vmax.xlane.f32.xlu0 %v4231
  %v4263 = vpop.xlane.xlu0 %4262
  %v4264 = vsub.f32 %v4216, %v4233
  %v4265 = vsub.f32 %v4217, %v4235
  %v4266 = vsub.f32 %v4218, %v4237
  %v4267 = vsub.f32 %v4219, %v4239
  %v4268 = vsub.f32 %v4220, %v4241
  %v4269 = vsub.f32 %v4221, %v4243
  %v4270 = vsub.f32 %v4222, %v4245
  %v4271 = vsub.f32 %v4223, %v4247
  %v4272 = vsub.f32 %v4224, %v4249
  %v4273 = vsub.f32 %v4225, %v4251
  %v4274 = vsub.f32 %v4226, %v4253
  %v4275 = vsub.f32 %v4227, %v4255
  %v4276 = vsub.f32 %v4228, %v4257
  %v4277 = vsub.f32 %v4229, %v4259
  %v4278 = vsub.f32 %v4230, %v4261
  %v4279 = vsub.f32 %v4231, %v4263
  %v4280 = vmul.f32 %v4264, 1.442695
  %v4281 = vpow.pop %v4280
  %v4282 = vmul.f32 %v4265, 1.442695
  %v4283 = vpow.pop %v4282
  %v4284 = vmul.f32 %v4266, 1.442695
  %v4285 = vpow.pop %v4284
  %v4286 = vmul.f32 %v4267, 1.442695
  %v4287 = vpow.pop %v4286
  %v4288 = vmul.f32 %v4268, 1.442695
  %v4289 = vpow.pop %v4288
  %v4290 = vmul.f32 %v4269, 1.442695
  %v4291 = vpow.pop %v4290
  %v4292 = vmul.f32 %v4270, 1.442695
  %v4293 = vpow.pop %v4292
  %v4294 = vmul.f32 %v4271, 1.442695
  %v4295 = vpow.pop %v4294
  %v4296 = vmul.f32 %v4272, 1.442695
  %v4297 = vpow.pop %v4296
  %v4298 = vmul.f32 %v4273, 1.442695
  %v4299 = vpow.pop %v4298
  %v4300 = vmul.f32 %v4274, 1.442695
  %v4301 = vpow.pop %v4300
  %v4302 = vmul.f32 %v4275, 1.442695
  %v4303 = vpow.pop %v4302
  %v4304 = vmul.f32 %v4276, 1.442695
  %v4305 = vpow.pop %v4304
  %v4306 = vmul.f32 %v4277, 1.442695
  %v4307 = vpow.pop %v4306
  %v4308 = vmul.f32 %v4278, 1.442695
  %v4309 = vpow.pop %v4308
  %v4310 = vmul.f32 %v4279, 1.442695
  %v4311 = vpow.pop %v4310
  %4312 = vadd.xlane.f32.xlu0 %v4281
  %v4313 = vpop.xlane.xlu0 %4312
  %4314 = vadd.xlane.f32.xlu0 %v4283
  %v4315 = vpop.xlane.xlu0 %4314
  %4316 = vadd.xlane.f32.xlu0 %v4285
  %v4317 = vpop.xlane.xlu0 %4316
  %4318 = vadd.xlane.f32.xlu0 %v4287
  %v4319 = vpop.xlane.xlu0 %4318
  %4320 = vadd.xlane.f32.xlu0 %v4289
  %v4321 = vpop.xlane.xlu0 %4320
  %4322 = vadd.xlane.f32.xlu0 %v4291
  %v4323 = vpop.xlane.xlu0 %4322
  %4324 = vadd.xlane.f32.xlu0 %v4293
  %v4325 = vpop.xlane.xlu0 %4324
  %4326 = vadd.xlane.f32.xlu0 %v4295
  %v4327 = vpop.xlane.xlu0 %4326
  %4328 = vadd.xlane.f32.xlu0 %v4297
  %v4329 = vpop.xlane.xlu0 %4328
  %4330 = vadd.xlane.f32.xlu0 %v4299
  %v4331 = vpop.xlane.xlu0 %4330
  %4332 = vadd.xlane.f32.xlu0 %v4301
  %v4333 = vpop.xlane.xlu0 %4332
  %4334 = vadd.xlane.f32.xlu0 %v4303
  %v4335 = vpop.xlane.xlu0 %4334
  %4336 = vadd.xlane.f32.xlu0 %v4305
  %v4337 = vpop.xlane.xlu0 %4336
  %4338 = vadd.xlane.f32.xlu0 %v4307
  %v4339 = vpop.xlane.xlu0 %4338
  %4340 = vadd.xlane.f32.xlu0 %v4309
  %v4341 = vpop.xlane.xlu0 %4340
  %4342 = vadd.xlane.f32.xlu0 %v4311
  %v4343 = vpop.xlane.xlu0 %4342
  %v4344 = vrcp.pop %v4313
  %v4345 = vmul.f32 %v4281, %v4344
  %v4346 = vrcp.pop %v4315
  %v4347 = vmul.f32 %v4283, %v4346
  %v4348 = vrcp.pop %v4317
  %v4349 = vmul.f32 %v4285, %v4348
  %v4350 = vrcp.pop %v4319
  %v4351 = vmul.f32 %v4287, %v4350
  %v4352 = vrcp.pop %v4321
  %v4353 = vmul.f32 %v4289, %v4352
  %v4354 = vrcp.pop %v4323
  %v4355 = vmul.f32 %v4291, %v4354
  %v4356 = vrcp.pop %v4325
  %v4357 = vmul.f32 %v4293, %v4356
  %v4358 = vrcp.pop %v4327
  %v4359 = vmul.f32 %v4295, %v4358
  %v4360 = vrcp.pop %v4329
  %v4361 = vmul.f32 %v4297, %v4360
  %v4362 = vrcp.pop %v4331
  %v4363 = vmul.f32 %v4299, %v4362
  %v4364 = vrcp.pop %v4333
  %v4365 = vmul.f32 %v4301, %v4364
  %v4366 = vrcp.pop %v4335
  %v4367 = vmul.f32 %v4303, %v4366
  %v4368 = vrcp.pop %v4337
  %v4369 = vmul.f32 %v4305, %v4368
  %v4370 = vrcp.pop %v4339
  %v4371 = vmul.f32 %v4307, %v4370
  %v4372 = vrcp.pop %v4341
  %v4373 = vmul.f32 %v4309, %v4372
  %v4374 = vrcp.pop %v4343
  %v4375 = vmul.f32 %v4311, %v4374
  %4376 = vmatprep.subr.mxu0 0.0
  %4377 = vmatpush1.xpose.msra.mxu0 %v4345
  %4378 = vmatprep.subr.mxu0 0.0
  %4379 = vmatpush1.xpose.msra.mxu0 %v4347
  %4380 = vmatprep.subr.mxu0 0.0
  %4381 = vmatpush1.xpose.msra.mxu0 %v4349
  %4382 = vmatprep.subr.mxu0 0.0
  %4383 = vmatpush1.xpose.msra.mxu0 %v4351
  %4384 = vmatprep.subr.mxu0 0.0
  %4385 = vmatpush1.xpose.msra.mxu0 %v4353
  %4386 = vmatprep.subr.mxu0 0.0
  %4387 = vmatpush1.xpose.msra.mxu0 %v4355
  %4388 = vmatprep.subr.mxu0 0.0
  %4389 = vmatpush1.xpose.msra.mxu0 %v4357
  %4390 = vmatprep.subr.mxu0 0.0
  %4391 = vmatpush1.xpose.msra.mxu0 %v4359
  %4392 = vmatprep.subr.mxu0 0.0
  %4393 = vmatpush1.xpose.msra.mxu0 %v4361
  %4394 = vmatprep.subr.mxu0 0.0
  %4395 = vmatpush1.xpose.msra.mxu0 %v4363
  %4396 = vmatprep.subr.mxu0 0.0
  %4397 = vmatpush1.xpose.msra.mxu0 %v4365
  %4398 = vmatprep.subr.mxu0 0.0
  %4399 = vmatpush1.xpose.msra.mxu0 %v4367
  %4400 = vmatprep.subr.mxu0 0.0
  %4401 = vmatpush1.xpose.msra.mxu0 %v4369
  %4402 = vmatprep.subr.mxu0 0.0
  %4403 = vmatpush1.xpose.msra.mxu0 %v4371
  %4404 = vmatprep.subr.mxu0 0.0
  %4405 = vmatpush1.xpose.msra.mxu0 %v4373
  %4406 = vmatprep.subr.mxu0 0.0
  %4407 = vmatpush1.xpose.msra.mxu0 %v4375
  %4408 = vmatprep.subr.mxu0 0.0
  %4409 = vmatpush1.xpose.msra.mxu0 0.0
  %4410 = vmatprep.subr.mxu0 0.0
  %4411 = vmatpush1.xpose.msra.mxu0 0.0
  %4412 = vmatprep.subr.mxu0 0.0
  %4413 = vmatpush1.xpose.msra.mxu0 0.0
  %4414 = vmatprep.subr.mxu0 0.0
  %4415 = vmatpush1.xpose.msra.mxu0 0.0
  %4416 = vmatprep.subr.mxu0 0.0
  %4417 = vmatpush1.xpose.msra.mxu0 0.0
  %4418 = vmatprep.subr.mxu0 0.0
  %4419 = vmatpush1.xpose.msra.mxu0 0.0
  %4420 = vmatprep.subr.mxu0 0.0
  %4421 = vmatpush1.xpose.msra.mxu0 0.0
  %4422 = vmatprep.subr.mxu0 0.0
  %4423 = vmatpush1.xpose.msra.mxu0 0.0
  %4424 = vmatprep.subr.mxu0 0.0
  %4425 = vmatpush1.xpose.msra.mxu0 0.0
  %4426 = vmatprep.subr.mxu0 0.0
  %4427 = vmatpush1.xpose.msra.mxu0 0.0
  %4428 = vmatprep.subr.mxu0 0.0
  %4429 = vmatpush1.xpose.msra.mxu0 0.0
  %4430 = vmatprep.subr.mxu0 0.0
  %4431 = vmatpush1.xpose.msra.mxu0 0.0
  %4432 = vmatprep.subr.mxu0 0.0
  %4433 = vmatpush1.xpose.msra.mxu0 0.0
  %4434 = vmatprep.subr.mxu0 0.0
  %4435 = vmatpush1.xpose.msra.mxu0 0.0
  %4436 = vmatprep.subr.mxu0 0.0
  %4437 = vmatpush1.xpose.msra.mxu0 0.0
  %4438 = vmatprep.subr.mxu0 0.0
  %4439 = vmatpush1.xpose.msra.mxu0 0.0
  %4440 = vmatprep.mubr.f32.mxu0 0.0
  %4441 = vmatmul.mubr.f32.gmra.mrb[0].mxu0 %v3009
  %v4442 = vpop.f32.mrb[0].mxu0
  %v4443 = vadd.f32 0.0, %v4442
  %v4444 = vpop.f32.mrb[0].mxu0
  %4445 = vdwg.mxu0
  %4446 = vxpose.xlu0.b32.start [1/16] %v2974, 128
  %4447 = vxpose.xlu0.b32.cont [2/16] 0.0, 128
  %4448 = vxpose.xlu0.b32.cont [3/16] 0.0, 128
  %4449 = vxpose.xlu0.b32.cont [4/16] 0.0, 128
  %4450 = vxpose.xlu0.b32.cont [5/16] 0.0, 128
  %4451 = vxpose.xlu0.b32.cont [6/16] 0.0, 128
  %4452 = vxpose.xlu0.b32.cont [7/16] 0.0, 128
  %4453 = vxpose.xlu0.b32.cont [8/16] 0.0, 128
  %4454 = vxpose.xlu0.b32.cont [9/16] 0.0, 128
  %4455 = vxpose.xlu0.b32.cont [10/16] 0.0, 128
  %4456 = vxpose.xlu0.b32.cont [11/16] 0.0, 128
  %4457 = vxpose.xlu0.b32.cont [12/16] 0.0, 128
  %4458 = vxpose.xlu0.b32.cont [13/16] 0.0, 128
  %4459 = vxpose.xlu0.b32.cont [14/16] 0.0, 128
  %4460 = vxpose.xlu0.b32.cont [15/16] 0.0, 128
  %4461 = vxpose.xlu0.b32.end [16/16] 0.0, 128
  %v4462 = vpop.trf.xlu0
  %v4463 = vpop.trf.xlu0
  %v4464 = vpop.trf.xlu0
  %v4465 = vpop.trf.xlu0
  %v4466 = vpop.trf.xlu0
  %v4467 = vpop.trf.xlu0
  %v4468 = vpop.trf.xlu0
  %v4469 = vpop.trf.xlu0
  %v4470 = vpop.trf.xlu0
  %v4471 = vpop.trf.xlu0
  %v4472 = vpop.trf.xlu0
  %v4473 = vpop.trf.xlu0
  %v4474 = vpop.trf.xlu0
  %v4475 = vpop.trf.xlu0
  %v4476 = vpop.trf.xlu0
  %v4477 = vpop.trf.xlu0
  %v4479 = vsel %vm117, %v4462, 0
  %v4482 = vsel %vm117, %v4463, 0
  %v4485 = vsel %vm117, %v4464, 0
  %v4488 = vsel %vm117, %v4465, 0
  %v4491 = vsel %vm117, %v4466, 0
  %v4494 = vsel %vm117, %v4467, 0
  %v4497 = vsel %vm117, %v4468, 0
  %v4500 = vsel %vm117, %v4469, 0
  %v4503 = vsel %vm117, %v4470, 0
  %v4506 = vsel %vm117, %v4471, 0
  %v4509 = vsel %vm117, %v4472, 0
  %v4512 = vsel %vm117, %v4473, 0
  %v4515 = vsel %vm117, %v4474, 0
  %v4518 = vsel %vm117, %v4475, 0
  %v4521 = vsel %vm117, %v4476, 0
  %v4524 = vsel %vm117, %v4477, 0
  %4526 = vmatprep.subr.mxu0 0.0
  %4527 = vmatpush1.msra.mxu0 %v2994
  %4528 = vmatprep.subr.mxu0 0.0
  %4529 = vmatpush1.msra.mxu0 0.0
  %4530 = vmatprep.subr.mxu0 0.0
  %4531 = vmatpush1.msra.mxu0 0.0
  %4532 = vmatprep.subr.mxu0 0.0
  %4533 = vmatpush1.msra.mxu0 0.0
  %4534 = vmatprep.subr.mxu0 0.0
  %4535 = vmatpush1.msra.mxu0 0.0
  %4536 = vmatprep.subr.mxu0 0.0
  %4537 = vmatpush1.msra.mxu0 0.0
  %4538 = vmatprep.subr.mxu0 0.0
  %4539 = vmatpush1.msra.mxu0 0.0
  %4540 = vmatprep.subr.mxu0 0.0
  %4541 = vmatpush1.msra.mxu0 0.0
  %4542 = vmatprep.subr.mxu0 0.0
  %4543 = vmatpush1.msra.mxu0 0.0
  %4544 = vmatprep.subr.mxu0 0.0
  %4545 = vmatpush1.msra.mxu0 0.0
  %4546 = vmatprep.subr.mxu0 0.0
  %4547 = vmatpush1.msra.mxu0 0.0
  %4548 = vmatprep.subr.mxu0 0.0
  %4549 = vmatpush1.msra.mxu0 0.0
  %4550 = vmatprep.subr.mxu0 0.0
  %4551 = vmatpush1.msra.mxu0 0.0
  %4552 = vmatprep.subr.mxu0 0.0
  %4553 = vmatpush1.msra.mxu0 0.0
  %4554 = vmatprep.subr.mxu0 0.0
  %4555 = vmatpush1.msra.mxu0 0.0
  %4556 = vmatprep.subr.mxu0 0.0
  %4557 = vmatpush1.msra.mxu0 0.0
  %4558 = vmatprep.subr.mxu0 0.0
  %4559 = vmatpush1.msra.mxu0 0.0
  %4560 = vmatprep.subr.mxu0 0.0
  %4561 = vmatpush1.msra.mxu0 0.0
  %4562 = vmatprep.subr.mxu0 0.0
  %4563 = vmatpush1.msra.mxu0 0.0
  %4564 = vmatprep.subr.mxu0 0.0
  %4565 = vmatpush1.msra.mxu0 0.0
  %4566 = vmatprep.subr.mxu0 0.0
  %4567 = vmatpush1.msra.mxu0 0.0
  %4568 = vmatprep.subr.mxu0 0.0
  %4569 = vmatpush1.msra.mxu0 0.0
  %4570 = vmatprep.subr.mxu0 0.0
  %4571 = vmatpush1.msra.mxu0 0.0
  %4572 = vmatprep.subr.mxu0 0.0
  %4573 = vmatpush1.msra.mxu0 0.0
  %4574 = vmatprep.subr.mxu0 0.0
  %4575 = vmatpush1.msra.mxu0 0.0
  %4576 = vmatprep.subr.mxu0 0.0
  %4577 = vmatpush1.msra.mxu0 0.0
  %4578 = vmatprep.subr.mxu0 0.0
  %4579 = vmatpush1.msra.mxu0 0.0
  %4580 = vmatprep.subr.mxu0 0.0
  %4581 = vmatpush1.msra.mxu0 0.0
  %4582 = vmatprep.subr.mxu0 0.0
  %4583 = vmatpush1.msra.mxu0 0.0
  %4584 = vmatprep.subr.mxu0 0.0
  %4585 = vmatpush1.msra.mxu0 0.0
  %4586 = vmatprep.subr.mxu0 0.0
  %4587 = vmatpush1.msra.mxu0 0.0
  %4588 = vmatprep.subr.mxu0 0.0
  %4589 = vmatpush1.msra.mxu0 0.0
  %4590 = vmatprep.mubr.f32.mxu0 0.0
  %4591 = vmatmul.mubr.f32.gmra.mrb[0].mxu0 %v4479
  %v4592 = vpop.f32.mrb[0].mxu0
  %v4593 = vadd.f32 0.0, %v4592
  %v4594 = vpop.f32.mrb[0].mxu0
  %4595 = vmatprep.mubr.f32.mxu0 0.0
  %4596 = vmatmul.mubr.f32.gmra.mrb[0].mxu0 %v4482
  %v4597 = vpop.f32.mrb[0].mxu0
  %v4598 = vadd.f32 0.0, %v4597
  %v4599 = vpop.f32.mrb[0].mxu0
  %4600 = vmatprep.mubr.f32.mxu0 0.0
  %4601 = vmatmul.mubr.f32.gmra.mrb[0].mxu0 %v4485
  %v4602 = vpop.f32.mrb[0].mxu0
  %v4603 = vadd.f32 0.0, %v4602
  %v4604 = vpop.f32.mrb[0].mxu0
  %4605 = vmatprep.mubr.f32.mxu0 0.0
  %4606 = vmatmul.mubr.f32.gmra.mrb[0].mxu0 %v4488
  %v4607 = vpop.f32.mrb[0].mxu0
  %v4608 = vadd.f32 0.0, %v4607
  %v4609 = vpop.f32.mrb[0].mxu0
  %4610 = vmatprep.mubr.f32.mxu0 0.0
  %4611 = vmatmul.mubr.f32.gmra.mrb[0].mxu0 %v4491
  %v4612 = vpop.f32.mrb[0].mxu0
  %v4613 = vadd.f32 0.0, %v4612
  %v4614 = vpop.f32.mrb[0].mxu0
  %4615 = vmatprep.mubr.f32.mxu0 0.0
  %4616 = vmatmul.mubr.f32.gmra.mrb[0].mxu0 %v4494
  %v4617 = vpop.f32.mrb[0].mxu0
  %v4618 = vadd.f32 0.0, %v4617
  %v4619 = vpop.f32.mrb[0].mxu0
  %4620 = vmatprep.mubr.f32.mxu0 0.0
  %4621 = vmatmul.mubr.f32.gmra.mrb[0].mxu0 %v4497
  %v4622 = vpop.f32.mrb[0].mxu0
  %v4623 = vadd.f32 0.0, %v4622
  %v4624 = vpop.f32.mrb[0].mxu0
  %4625 = vmatprep.mubr.f32.mxu0 0.0
  %4626 = vmatmul.mubr.f32.gmra.mrb[0].mxu0 %v4500
  %v4627 = vpop.f32.mrb[0].mxu0
  %v4628 = vadd.f32 0.0, %v4627
  %v4629 = vpop.f32.mrb[0].mxu0
  %4630 = vmatprep.mubr.f32.mxu0 0.0
  %4631 = vmatmul.mubr.f32.gmra.mrb[0].mxu0 %v4503
  %v4632 = vpop.f32.mrb[0].mxu0
  %v4633 = vadd.f32 0.0, %v4632
  %v4634 = vpop.f32.mrb[0].mxu0
  %4635 = vmatprep.mubr.f32.mxu0 0.0
  %4636 = vmatmul.mubr.f32.gmra.mrb[0].mxu0 %v4506
  %v4637 = vpop.f32.mrb[0].mxu0
  %v4638 = vadd.f32 0.0, %v4637
  %v4639 = vpop.f32.mrb[0].mxu0
  %4640 = vmatprep.mubr.f32.mxu0 0.0
  %4641 = vmatmul.mubr.f32.gmra.mrb[0].mxu0 %v4509
  %v4642 = vpop.f32.mrb[0].mxu0
  %v4643 = vadd.f32 0.0, %v4642
  %v4644 = vpop.f32.mrb[0].mxu0
  %4645 = vmatprep.mubr.f32.mxu0 0.0
  %4646 = vmatmul.mubr.f32.gmra.mrb[0].mxu0 %v4512
  %v4647 = vpop.f32.mrb[0].mxu0
  %v4648 = vadd.f32 0.0, %v4647
  %v4649 = vpop.f32.mrb[0].mxu0
  %4650 = vmatprep.mubr.f32.mxu0 0.0
  %4651 = vmatmul.mubr.f32.gmra.mrb[0].mxu0 %v4515
  %v4652 = vpop.f32.mrb[0].mxu0
  %v4653 = vadd.f32 0.0, %v4652
  %v4654 = vpop.f32.mrb[0].mxu0
  %4655 = vmatprep.mubr.f32.mxu0 0.0
  %4656 = vmatmul.mubr.f32.gmra.mrb[0].mxu0 %v4518
  %v4657 = vpop.f32.mrb[0].mxu0
  %v4658 = vadd.f32 0.0, %v4657
  %v4659 = vpop.f32.mrb[0].mxu0
  %4660 = vmatprep.mubr.f32.mxu0 0.0
  %4661 = vmatmul.mubr.f32.gmra.mrb[0].mxu0 %v4521
  %v4662 = vpop.f32.mrb[0].mxu0
  %v4663 = vadd.f32 0.0, %v4662
  %v4664 = vpop.f32.mrb[0].mxu0
  %4665 = vmatprep.mubr.f32.mxu0 0.0
  %4666 = vmatmul.mubr.f32.gmra.mrb[0].mxu0 %v4524
  %v4667 = vpop.f32.mrb[0].mxu0
  %v4668 = vadd.f32 0.0, %v4667
  %v4669 = vpop.f32.mrb[0].mxu0
  %4670 = vdwg.mxu0
  %v4671 = vmul.f32 %v4593, 0.5
  %v4672 = vmul.f32 %v4598, 0.5
  %v4673 = vmul.f32 %v4603, 0.5
  %v4674 = vmul.f32 %v4608, 0.5
  %v4675 = vmul.f32 %v4613, 0.5
  %v4676 = vmul.f32 %v4618, 0.5
  %v4677 = vmul.f32 %v4623, 0.5
  %v4678 = vmul.f32 %v4628, 0.5
  %v4679 = vmul.f32 %v4633, 0.5
  %v4680 = vmul.f32 %v4638, 0.5
  %v4681 = vmul.f32 %v4643, 0.5
  %v4682 = vmul.f32 %v4648, 0.5
  %v4683 = vmul.f32 %v4653, 0.5
  %v4684 = vmul.f32 %v4658, 0.5
  %v4685 = vmul.f32 %v4663, 0.5
  %v4686 = vmul.f32 %v4668, 0.5
  %v4687 = vsel %vm3258, %v4671, -1e+09
  %v4688 = vsel %vm3259, %v4672, -1e+09
  %v4689 = vsel %vm3260, %v4673, -1e+09
  %v4690 = vsel %vm3261, %v4674, -1e+09
  %v4691 = vsel %vm3262, %v4675, -1e+09
  %v4692 = vsel %vm3263, %v4676, -1e+09
  %v4693 = vsel %vm3264, %v4677, -1e+09
  %v4694 = vsel %vm3265, %v4678, -1e+09
  %v4695 = vsel %vm3266, %v4679, -1e+09
  %v4696 = vsel %vm3267, %v4680, -1e+09
  %v4697 = vsel %vm3268, %v4681, -1e+09
  %v4698 = vsel %vm3269, %v4682, -1e+09
  %v4699 = vsel %vm3270, %v4683, -1e+09
  %v4700 = vsel %vm3271, %v4684, -1e+09
  %v4701 = vsel %vm3272, %v4685, -1e+09
  %v4702 = vsel %vm3273, %v4686, -1e+09
  %4703 = vmax.xlane.f32.xlu0 %v4687
  %v4704 = vpop.xlane.xlu0 %4703
  %4705 = vmax.xlane.f32.xlu0 %v4688
  %v4706 = vpop.xlane.xlu0 %4705
  %4707 = vmax.xlane.f32.xlu0 %v4689
  %v4708 = vpop.xlane.xlu0 %4707
  %4709 = vmax.xlane.f32.xlu0 %v4690
  %v4710 = vpop.xlane.xlu0 %4709
  %4711 = vmax.xlane.f32.xlu0 %v4691
  %v4712 = vpop.xlane.xlu0 %4711
  %4713 = vmax.xlane.f32.xlu0 %v4692
  %v4714 = vpop.xlane.xlu0 %4713
  %4715 = vmax.xlane.f32.xlu0 %v4693
  %v4716 = vpop.xlane.xlu0 %4715
  %4717 = vmax.xlane.f32.xlu0 %v4694
  %v4718 = vpop.xlane.xlu0 %4717
  %4719 = vmax.xlane.f32.xlu0 %v4695
  %v4720 = vpop.xlane.xlu0 %4719
  %4721 = vmax.xlane.f32.xlu0 %v4696
  %v4722 = vpop.xlane.xlu0 %4721
  %4723 = vmax.xlane.f32.xlu0 %v4697
  %v4724 = vpop.xlane.xlu0 %4723
  %4725 = vmax.xlane.f32.xlu0 %v4698
  %v4726 = vpop.xlane.xlu0 %4725
  %4727 = vmax.xlane.f32.xlu0 %v4699
  %v4728 = vpop.xlane.xlu0 %4727
  %4729 = vmax.xlane.f32.xlu0 %v4700
  %v4730 = vpop.xlane.xlu0 %4729
  %4731 = vmax.xlane.f32.xlu0 %v4701
  %v4732 = vpop.xlane.xlu0 %4731
  %4733 = vmax.xlane.f32.xlu0 %v4702
  %v4734 = vpop.xlane.xlu0 %4733
  %v4735 = vsub.f32 %v4687, %v4704
  %v4736 = vsub.f32 %v4688, %v4706
  %v4737 = vsub.f32 %v4689, %v4708
  %v4738 = vsub.f32 %v4690, %v4710
  %v4739 = vsub.f32 %v4691, %v4712
  %v4740 = vsub.f32 %v4692, %v4714
  %v4741 = vsub.f32 %v4693, %v4716
  %v4742 = vsub.f32 %v4694, %v4718
  %v4743 = vsub.f32 %v4695, %v4720
  %v4744 = vsub.f32 %v4696, %v4722
  %v4745 = vsub.f32 %v4697, %v4724
  %v4746 = vsub.f32 %v4698, %v4726
  %v4747 = vsub.f32 %v4699, %v4728
  %v4748 = vsub.f32 %v4700, %v4730
  %v4749 = vsub.f32 %v4701, %v4732
  %v4750 = vsub.f32 %v4702, %v4734
  %v4751 = vmul.f32 %v4735, 1.442695
  %v4752 = vpow.pop %v4751
  %v4753 = vmul.f32 %v4736, 1.442695
  %v4754 = vpow.pop %v4753
  %v4755 = vmul.f32 %v4737, 1.442695
  %v4756 = vpow.pop %v4755
  %v4757 = vmul.f32 %v4738, 1.442695
  %v4758 = vpow.pop %v4757
  %v4759 = vmul.f32 %v4739, 1.442695
  %v4760 = vpow.pop %v4759
  %v4761 = vmul.f32 %v4740, 1.442695
  %v4762 = vpow.pop %v4761
  %v4763 = vmul.f32 %v4741, 1.442695
  %v4764 = vpow.pop %v4763
  %v4765 = vmul.f32 %v4742, 1.442695
  %v4766 = vpow.pop %v4765
  %v4767 = vmul.f32 %v4743, 1.442695
  %v4768 = vpow.pop %v4767
  %v4769 = vmul.f32 %v4744, 1.442695
  %v4770 = vpow.pop %v4769
  %v4771 = vmul.f32 %v4745, 1.442695
  %v4772 = vpow.pop %v4771
  %v4773 = vmul.f32 %v4746, 1.442695
  %v4774 = vpow.pop %v4773
  %v4775 = vmul.f32 %v4747, 1.442695
  %v4776 = vpow.pop %v4775
  %v4777 = vmul.f32 %v4748, 1.442695
  %v4778 = vpow.pop %v4777
  %v4779 = vmul.f32 %v4749, 1.442695
  %v4780 = vpow.pop %v4779
  %v4781 = vmul.f32 %v4750, 1.442695
  %v4782 = vpow.pop %v4781
  %4783 = vadd.xlane.f32.xlu0 %v4752
  %v4784 = vpop.xlane.xlu0 %4783
  %4785 = vadd.xlane.f32.xlu0 %v4754
  %v4786 = vpop.xlane.xlu0 %4785
  %4787 = vadd.xlane.f32.xlu0 %v4756
  %v4788 = vpop.xlane.xlu0 %4787
  %4789 = vadd.xlane.f32.xlu0 %v4758
  %v4790 = vpop.xlane.xlu0 %4789
  %4791 = vadd.xlane.f32.xlu0 %v4760
  %v4792 = vpop.xlane.xlu0 %4791
  %4793 = vadd.xlane.f32.xlu0 %v4762
  %v4794 = vpop.xlane.xlu0 %4793
  %4795 = vadd.xlane.f32.xlu0 %v4764
  %v4796 = vpop.xlane.xlu0 %4795
  %4797 = vadd.xlane.f32.xlu0 %v4766
  %v4798 = vpop.xlane.xlu0 %4797
  %4799 = vadd.xlane.f32.xlu0 %v4768
  %v4800 = vpop.xlane.xlu0 %4799
  %4801 = vadd.xlane.f32.xlu0 %v4770
  %v4802 = vpop.xlane.xlu0 %4801
  %4803 = vadd.xlane.f32.xlu0 %v4772
  %v4804 = vpop.xlane.xlu0 %4803
  %4805 = vadd.xlane.f32.xlu0 %v4774
  %v4806 = vpop.xlane.xlu0 %4805
  %4807 = vadd.xlane.f32.xlu0 %v4776
  %v4808 = vpop.xlane.xlu0 %4807
  %4809 = vadd.xlane.f32.xlu0 %v4778
  %v4810 = vpop.xlane.xlu0 %4809
  %4811 = vadd.xlane.f32.xlu0 %v4780
  %v4812 = vpop.xlane.xlu0 %4811
  %4813 = vadd.xlane.f32.xlu0 %v4782
  %v4814 = vpop.xlane.xlu0 %4813
  %v4815 = vrcp.pop %v4784
  %v4816 = vmul.f32 %v4752, %v4815
  %v4817 = vrcp.pop %v4786
  %v4818 = vmul.f32 %v4754, %v4817
  %v4819 = vrcp.pop %v4788
  %v4820 = vmul.f32 %v4756, %v4819
  %v4821 = vrcp.pop %v4790
  %v4822 = vmul.f32 %v4758, %v4821
  %v4823 = vrcp.pop %v4792
  %v4824 = vmul.f32 %v4760, %v4823
  %v4825 = vrcp.pop %v4794
  %v4826 = vmul.f32 %v4762, %v4825
  %v4827 = vrcp.pop %v4796
  %v4828 = vmul.f32 %v4764, %v4827
  %v4829 = vrcp.pop %v4798
  %v4830 = vmul.f32 %v4766, %v4829
  %v4831 = vrcp.pop %v4800
  %v4832 = vmul.f32 %v4768, %v4831
  %v4833 = vrcp.pop %v4802
  %v4834 = vmul.f32 %v4770, %v4833
  %v4835 = vrcp.pop %v4804
  %v4836 = vmul.f32 %v4772, %v4835
  %v4837 = vrcp.pop %v4806
  %v4838 = vmul.f32 %v4774, %v4837
  %v4839 = vrcp.pop %v4808
  %v4840 = vmul.f32 %v4776, %v4839
  %v4841 = vrcp.pop %v4810
  %v4842 = vmul.f32 %v4778, %v4841
  %v4843 = vrcp.pop %v4812
  %v4844 = vmul.f32 %v4780, %v4843
  %v4845 = vrcp.pop %v4814
  %v4846 = vmul.f32 %v4782, %v4845
  %4847 = vmatprep.subr.mxu0 0.0
  %4848 = vmatpush1.xpose.msra.mxu0 %v4816
  %4849 = vmatprep.subr.mxu0 0.0
  %4850 = vmatpush1.xpose.msra.mxu0 %v4818
  %4851 = vmatprep.subr.mxu0 0.0
  %4852 = vmatpush1.xpose.msra.mxu0 %v4820
  %4853 = vmatprep.subr.mxu0 0.0
  %4854 = vmatpush1.xpose.msra.mxu0 %v4822
  %4855 = vmatprep.subr.mxu0 0.0
  %4856 = vmatpush1.xpose.msra.mxu0 %v4824
  %4857 = vmatprep.subr.mxu0 0.0
  %4858 = vmatpush1.xpose.msra.mxu0 %v4826
  %4859 = vmatprep.subr.mxu0 0.0
  %4860 = vmatpush1.xpose.msra.mxu0 %v4828
  %4861 = vmatprep.subr.mxu0 0.0
  %4862 = vmatpush1.xpose.msra.mxu0 %v4830
  %4863 = vmatprep.subr.mxu0 0.0
  %4864 = vmatpush1.xpose.msra.mxu0 %v4832
  %4865 = vmatprep.subr.mxu0 0.0
  %4866 = vmatpush1.xpose.msra.mxu0 %v4834
  %4867 = vmatprep.subr.mxu0 0.0
  %4868 = vmatpush1.xpose.msra.mxu0 %v4836
  %4869 = vmatprep.subr.mxu0 0.0
  %4870 = vmatpush1.xpose.msra.mxu0 %v4838
  %4871 = vmatprep.subr.mxu0 0.0
  %4872 = vmatpush1.xpose.msra.mxu0 %v4840
  %4873 = vmatprep.subr.mxu0 0.0
  %4874 = vmatpush1.xpose.msra.mxu0 %v4842
  %4875 = vmatprep.subr.mxu0 0.0
  %4876 = vmatpush1.xpose.msra.mxu0 %v4844
  %4877 = vmatprep.subr.mxu0 0.0
  %4878 = vmatpush1.xpose.msra.mxu0 %v4846
  %4879 = vmatprep.subr.mxu0 0.0
  %4880 = vmatpush1.xpose.msra.mxu0 0.0
  %4881 = vmatprep.subr.mxu0 0.0
  %4882 = vmatpush1.xpose.msra.mxu0 0.0
  %4883 = vmatprep.subr.mxu0 0.0
  %4884 = vmatpush1.xpose.msra.mxu0 0.0
  %4885 = vmatprep.subr.mxu0 0.0
  %4886 = vmatpush1.xpose.msra.mxu0 0.0
  %4887 = vmatprep.subr.mxu0 0.0
  %4888 = vmatpush1.xpose.msra.mxu0 0.0
  %4889 = vmatprep.subr.mxu0 0.0
  %4890 = vmatpush1.xpose.msra.mxu0 0.0
  %4891 = vmatprep.subr.mxu0 0.0
  %4892 = vmatpush1.xpose.msra.mxu0 0.0
  %4893 = vmatprep.subr.mxu0 0.0
  %4894 = vmatpush1.xpose.msra.mxu0 0.0
  %4895 = vmatprep.subr.mxu0 0.0
  %4896 = vmatpush1.xpose.msra.mxu0 0.0
  %4897 = vmatprep.subr.mxu0 0.0
  %4898 = vmatpush1.xpose.msra.mxu0 0.0
  %4899 = vmatprep.subr.mxu0 0.0
  %4900 = vmatpush1.xpose.msra.mxu0 0.0
  %4901 = vmatprep.subr.mxu0 0.0
  %4902 = vmatpush1.xpose.msra.mxu0 0.0
  %4903 = vmatprep.subr.mxu0 0.0
  %4904 = vmatpush1.xpose.msra.mxu0 0.0
  %4905 = vmatprep.subr.mxu0 0.0
  %4906 = vmatpush1.xpose.msra.mxu0 0.0
  %4907 = vmatprep.subr.mxu0 0.0
  %4908 = vmatpush1.xpose.msra.mxu0 0.0
  %4909 = vmatprep.subr.mxu0 0.0
  %4910 = vmatpush1.xpose.msra.mxu0 0.0
  %4911 = vmatprep.mubr.f32.mxu0 0.0
  %4912 = vmatmul.mubr.f32.gmra.mrb[0].mxu0 %v3014
  %v4913 = vpop.f32.mrb[0].mxu0
  %v4914 = vadd.f32 0.0, %v4913
  %v4915 = vpop.f32.mrb[0].mxu0
  %4916 = vdwg.mxu0
  %v4917 = vld [vmem:[%s11] sm:$0xff]
  %v4918 = vld [vmem:[%s11 + $0x8] sm:$0xff]
  %v4919 = vld [vmem:[%s11 + $0x10] sm:$0xff]
  %v4920 = vld [vmem:[%s11 + $0x18] sm:$0xff]
  %v4921 = vmul.f32 %v3501, %v3501
  %v4922 = vmul.f32 %v3972, %v3972
  %v4923 = vmul.f32 %v4443, %v4443
  %v4924 = vmul.f32 %v4914, %v4914
  %v4925 = vmul.f32 %v3501, %v4921
  %v4926 = vmul.f32 %v3972, %v4922
  %v4927 = vmul.f32 %v4443, %v4923
  %v4928 = vmul.f32 %v4914, %v4924
  %v4929 = vmul.f32 %v4925, 0.044715
  %v4930 = vmul.f32 %v4926, 0.044715
  %v4931 = vmul.f32 %v4927, 0.044715
  %v4932 = vmul.f32 %v4928, 0.044715
  %v4933 = vadd.f32 %v3501, %v4929
  %v4934 = vadd.f32 %v3972, %v4930
  %v4935 = vadd.f32 %v4443, %v4931
  %v4936 = vadd.f32 %v4914, %v4932
  %v4937 = vmul.f32 %v4933, 0.7978846
  %v4938 = vmul.f32 %v4934, 0.7978846
  %v4939 = vmul.f32 %v4935, 0.7978846
  %v4940 = vmul.f32 %v4936, 0.7978846
  %v4941 = vtanh.pop %v4937
  %v4942 = vtanh.pop %v4938
  %v4943 = vtanh.pop %v4939
  %v4944 = vtanh.pop %v4940
  %v4945 = vadd.f32 %v4941, 1.0
  %v4946 = vadd.f32 %v4942, 1.0
  %v4947 = vadd.f32 %v4943, 1.0
  %v4948 = vadd.f32 %v4944, 1.0
  %v4949 = vmul.f32 %v4945, 0.5
  %v4950 = vmul.f32 %v4946, 0.5
  %v4951 = vmul.f32 %v4947, 0.5
  %v4952 = vmul.f32 %v4948, 0.5
  %v4953 = vmul.f32 %v3501, %v4949
  %v4954 = vmul.f32 %v3972, %v4950
  %v4955 = vmul.f32 %v4443, %v4951
  %v4956 = vmul.f32 %v4914, %v4952
  %4958 = vset.pattern.permute.xlu0 0
  %4959 = vperm.xlu0 %4958, %v84
  %v4960 = vpop.permute.xlu0 %4959
  %4963 = vset.pattern.permute.xlu0 0
  %4964 = vperm.xlu0 %4963, %v85
  %v4965 = vpop.permute.xlu0 %4964
  %4968 = vset.pattern.permute.xlu0 0
  %4969 = vperm.xlu0 %4968, %v86
  %v4970 = vpop.permute.xlu0 %4969
  %4973 = vset.pattern.permute.xlu0 0
  %4974 = vperm.xlu0 %4973, %v87
  %v4975 = vpop.permute.xlu0 %4974
  %v4978 = vsel %vm525, %v4917, 0
  %v4981 = vsel %vm525, %v4918, 0
  %v4984 = vsel %vm525, %v4919, 0
  %v4987 = vsel %vm525, %v4920, 0
  %4989 = vmatprep.subr.mxu0 0.0
  %4990 = vmatpush1.msra.mxu0 %v4953
  %4991 = vmatprep.subr.mxu0 0.0
  %4992 = vmatpush1.msra.mxu0 %v4954
  %4993 = vmatprep.subr.mxu0 0.0
  %4994 = vmatpush1.msra.mxu0 %v4955
  %4995 = vmatprep.subr.mxu0 0.0
  %4996 = vmatpush1.msra.mxu0 %v4956
  %4997 = vmatprep.subr.mxu0 0.0
  %4998 = vmatpush1.msra.mxu0 0.0
  %4999 = vmatprep.subr.mxu0 0.0
  %5000 = vmatpush1.msra.mxu0 0.0
  %5001 = vmatprep.subr.mxu0 0.0
  %5002 = vmatpush1.msra.mxu0 0.0
  %5003 = vmatprep.subr.mxu0 0.0
  %5004 = vmatpush1.msra.mxu0 0.0
  %5005 = vmatprep.subr.mxu0 0.0
  %5006 = vmatpush1.msra.mxu0 0.0
  %5007 = vmatprep.subr.mxu0 0.0
  %5008 = vmatpush1.msra.mxu0 0.0
  %5009 = vmatprep.subr.mxu0 0.0
  %5010 = vmatpush1.msra.mxu0 0.0
  %5011 = vmatprep.subr.mxu0 0.0
  %5012 = vmatpush1.msra.mxu0 0.0
  %5013 = vmatprep.subr.mxu0 0.0
  %5014 = vmatpush1.msra.mxu0 0.0
  %5015 = vmatprep.subr.mxu0 0.0
  %5016 = vmatpush1.msra.mxu0 0.0
  %5017 = vmatprep.subr.mxu0 0.0
  %5018 = vmatpush1.msra.mxu0 0.0
  %5019 = vmatprep.subr.mxu0 0.0
  %5020 = vmatpush1.msra.mxu0 0.0
  %5021 = vmatprep.subr.mxu0 0.0
  %5022 = vmatpush1.msra.mxu0 0.0
  %5023 = vmatprep.subr.mxu0 0.0
  %5024 = vmatpush1.msra.mxu0 0.0
  %5025 = vmatprep.subr.mxu0 0.0
  %5026 = vmatpush1.msra.mxu0 0.0
  %5027 = vmatprep.subr.mxu0 0.0
  %5028 = vmatpush1.msra.mxu0 0.0
  %5029 = vmatprep.subr.mxu0 0.0
  %5030 = vmatpush1.msra.mxu0 0.0
  %5031 = vmatprep.subr.mxu0 0.0
  %5032 = vmatpush1.msra.mxu0 0.0
  %5033 = vmatprep.subr.mxu0 0.0
  %5034 = vmatpush1.msra.mxu0 0.0
  %5035 = vmatprep.subr.mxu0 0.0
  %5036 = vmatpush1.msra.mxu0 0.0
  %5037 = vmatprep.subr.mxu0 0.0
  %5038 = vmatpush1.msra.mxu0 0.0
  %5039 = vmatprep.subr.mxu0 0.0
  %5040 = vmatpush1.msra.mxu0 0.0
  %5041 = vmatprep.subr.mxu0 0.0
  %5042 = vmatpush1.msra.mxu0 0.0
  %5043 = vmatprep.subr.mxu0 0.0
  %5044 = vmatpush1.msra.mxu0 0.0
  %5045 = vmatprep.subr.mxu0 0.0
  %5046 = vmatpush1.msra.mxu0 0.0
  %5047 = vmatprep.subr.mxu0 0.0
  %5048 = vmatpush1.msra.mxu0 0.0
  %5049 = vmatprep.subr.mxu0 0.0
  %5050 = vmatpush1.msra.mxu0 0.0
  %5051 = vmatprep.subr.mxu0 0.0
  %5052 = vmatpush1.msra.mxu0 0.0
  %5053 = vmatprep.mubr.f32.mxu0 0.0
  %5054 = vmatmul.mubr.f32.gmra.mrb[0].mxu0 %v4978
  %v5055 = vpop.f32.mrb[0].mxu0
  %v5056 = vadd.f32 %v4960, %v5055
  %v5057 = vpop.f32.mrb[0].mxu0
  %5058 = vmatprep.mubr.f32.mxu0 0.0
  %5059 = vmatmul.mubr.f32.gmra.mrb[0].mxu0 %v4981
  %v5060 = vpop.f32.mrb[0].mxu0
  %v5061 = vadd.f32 %v4965, %v5060
  %v5062 = vpop.f32.mrb[0].mxu0
  %5063 = vmatprep.mubr.f32.mxu0 0.0
  %5064 = vmatmul.mubr.f32.gmra.mrb[0].mxu0 %v4984
  %v5065 = vpop.f32.mrb[0].mxu0
  %v5066 = vadd.f32 %v4970, %v5065
  %v5067 = vpop.f32.mrb[0].mxu0
  %5068 = vmatprep.mubr.f32.mxu0 0.0
  %5069 = vmatmul.mubr.f32.gmra.mrb[0].mxu0 %v4987
  %v5070 = vpop.f32.mrb[0].mxu0
  %v5071 = vadd.f32 %v4975, %v5070
  %v5072 = vpop.f32.mrb[0].mxu0
  %5073 = vdwg.mxu0
  %v5074 = vmul.f32 %v5056, %v415
  %v5075 = vmul.f32 %v5061, %v415
  %v5076 = vmul.f32 %v5066, %v415
  %v5077 = vmul.f32 %v5071, %v415
  %v5078 = vadd.f32 %v2748, %v5074
  %v5079 = vadd.f32 %v2749, %v5075
  %v5080 = vadd.f32 %v2750, %v5076
  %v5081 = vadd.f32 %v2751, %v5077
  %v5082 = vld [vmem:[%s12] sm:$0xff]
  %v5083 = vld [vmem:[%s12 + $0x8] sm:$0xff]
  %v5084 = vld [vmem:[%s12 + $0x10] sm:$0xff]
  %v5085 = vld [vmem:[%s12 + $0x18] sm:$0xff]
  %5087 = vset.pattern.permute.xlu0 0
  %5088 = vperm.xlu0 %5087, %v88
  %v5089 = vpop.permute.xlu0 %5088
  %5092 = vset.pattern.permute.xlu0 0
  %5093 = vperm.xlu0 %5092, %v89
  %v5094 = vpop.permute.xlu0 %5093
  %5097 = vset.pattern.permute.xlu0 0
  %5098 = vperm.xlu0 %5097, %v90
  %v5099 = vpop.permute.xlu0 %5098
  %5102 = vset.pattern.permute.xlu0 0
  %5103 = vperm.xlu0 %5102, %v91
  %v5104 = vpop.permute.xlu0 %5103
  %v5107 = vsel %vm525, %v5082, 0
  %v5110 = vsel %vm525, %v5083, 0
  %v5113 = vsel %vm525, %v5084, 0
  %v5116 = vsel %vm525, %v5085, 0
  %5118 = vmatprep.subr.mxu0 0.0
  %5119 = vmatpush1.msra.mxu0 %v5078
  %5120 = vmatprep.subr.mxu0 0.0
  %5121 = vmatpush1.msra.mxu0 %v5079
  %5122 = vmatprep.subr.mxu0 0.0
  %5123 = vmatpush1.msra.mxu0 %v5080
  %5124 = vmatprep.subr.mxu0 0.0
  %5125 = vmatpush1.msra.mxu0 %v5081
  %5126 = vmatprep.subr.mxu0 0.0
  %5127 = vmatpush1.msra.mxu0 0.0
  %5128 = vmatprep.subr.mxu0 0.0
  %5129 = vmatpush1.msra.mxu0 0.0
  %5130 = vmatprep.subr.mxu0 0.0
  %5131 = vmatpush1.msra.mxu0 0.0
  %5132 = vmatprep.subr.mxu0 0.0
  %5133 = vmatpush1.msra.mxu0 0.0
  %5134 = vmatprep.subr.mxu0 0.0
  %5135 = vmatpush1.msra.mxu0 0.0
  %5136 = vmatprep.subr.mxu0 0.0
  %5137 = vmatpush1.msra.mxu0 0.0
  %5138 = vmatprep.subr.mxu0 0.0
  %5139 = vmatpush1.msra.mxu0 0.0
  %5140 = vmatprep.subr.mxu0 0.0
  %5141 = vmatpush1.msra.mxu0 0.0
  %5142 = vmatprep.subr.mxu0 0.0
  %5143 = vmatpush1.msra.mxu0 0.0
  %5144 = vmatprep.subr.mxu0 0.0
  %5145 = vmatpush1.msra.mxu0 0.0
  %5146 = vmatprep.subr.mxu0 0.0
  %5147 = vmatpush1.msra.mxu0 0.0
  %5148 = vmatprep.subr.mxu0 0.0
  %5149 = vmatpush1.msra.mxu0 0.0
  %5150 = vmatprep.subr.mxu0 0.0
  %5151 = vmatpush1.msra.mxu0 0.0
  %5152 = vmatprep.subr.mxu0 0.0
  %5153 = vmatpush1.msra.mxu0 0.0
  %5154 = vmatprep.subr.mxu0 0.0
  %5155 = vmatpush1.msra.mxu0 0.0
  %5156 = vmatprep.subr.mxu0 0.0
  %5157 = vmatpush1.msra.mxu0 0.0
  %5158 = vmatprep.subr.mxu0 0.0
  %5159 = vmatpush1.msra.mxu0 0.0
  %5160 = vmatprep.subr.mxu0 0.0
  %5161 = vmatpush1.msra.mxu0 0.0
  %5162 = vmatprep.subr.mxu0 0.0
  %5163 = vmatpush1.msra.mxu0 0.0
  %5164 = vmatprep.subr.mxu0 0.0
  %5165 = vmatpush1.msra.mxu0 0.0
  %5166 = vmatprep.subr.mxu0 0.0
  %5167 = vmatpush1.msra.mxu0 0.0
  %5168 = vmatprep.subr.mxu0 0.0
  %5169 = vmatpush1.msra.mxu0 0.0
  %5170 = vmatprep.subr.mxu0 0.0
  %5171 = vmatpush1.msra.mxu0 0.0
  %5172 = vmatprep.subr.mxu0 0.0
  %5173 = vmatpush1.msra.mxu0 0.0
  %5174 = vmatprep.subr.mxu0 0.0
  %5175 = vmatpush1.msra.mxu0 0.0
  %5176 = vmatprep.subr.mxu0 0.0
  %5177 = vmatpush1.msra.mxu0 0.0
  %5178 = vmatprep.subr.mxu0 0.0
  %5179 = vmatpush1.msra.mxu0 0.0
  %5180 = vmatprep.subr.mxu0 0.0
  %5181 = vmatpush1.msra.mxu0 0.0
  %5182 = vmatprep.mubr.f32.mxu0 0.0
  %5183 = vmatmul.mubr.f32.gmra.mrb[0].mxu0 %v5107
  %v5184 = vpop.f32.mrb[0].mxu0
  %v5185 = vadd.f32 %v5089, %v5184
  %v5186 = vpop.f32.mrb[0].mxu0
  %5187 = vmatprep.mubr.f32.mxu0 0.0
  %5188 = vmatmul.mubr.f32.gmra.mrb[0].mxu0 %v5110
  %v5189 = vpop.f32.mrb[0].mxu0
  %v5190 = vadd.f32 %v5094, %v5189
  %v5191 = vpop.f32.mrb[0].mxu0
  %5192 = vmatprep.mubr.f32.mxu0 0.0
  %5193 = vmatmul.mubr.f32.gmra.mrb[0].mxu0 %v5113
  %v5194 = vpop.f32.mrb[0].mxu0
  %v5195 = vadd.f32 %v5099, %v5194
  %v5196 = vpop.f32.mrb[0].mxu0
  %5197 = vmatprep.mubr.f32.mxu0 0.0
  %5198 = vmatmul.mubr.f32.gmra.mrb[0].mxu0 %v5116
  %v5199 = vpop.f32.mrb[0].mxu0
  %v5200 = vadd.f32 %v5104, %v5199
  %v5201 = vpop.f32.mrb[0].mxu0
  %5202 = vdwg.mxu0
  %v5203 = vadd.f32 %v5185, %v197
  %v5204 = vadd.f32 %v5190, %v202
  %v5205 = vadd.f32 %v5195, %v207
  %v5206 = vadd.f32 %v5200, %v212
  %v5207 = vmul.f32 %v5203, %v415
  %v5208 = vmul.f32 %v5204, %v415
  %v5209 = vmul.f32 %v5205, %v415
  %v5210 = vmul.f32 %v5206, %v415
  %5211 = vst [vmem:[%s14] sm:$0xff] %v5207
  %5212 = vst [vmem:[%s14 + $0x8] sm:$0xff] %v5208
  %5213 = vst [vmem:[%s14 + $0x10] sm:$0xff] %v5209
  %5214 = vst [vmem:[%s14 + $0x18] sm:$0xff] %v5210
  // Predicated region
  $region58: #{_lambda_.2} parent=0 // pred_check
    _
  $region59: #{_lambda_.2} parent=0 // pred_check_branch
    %5216 = sbr.rel (0) target = $region61
  $region60: #{_lambda_.2} parent=0 // pred_region
    _
  $region61: #{_lambda_.2} parent=0 // pred_fallthru
    _
  // Predicated region
  $region62: #{_lambda_.2} parent=0 // pred_check
    _
  $region63: #{_lambda_.2} parent=0 // pred_check_branch
    %5218 = sbr.rel (0) target = $region65
  $region64: #{_lambda_.2} parent=0 // pred_region
    _
  $region65: #{_lambda_.2} parent=0 // pred_fallthru
    _

// kernel: _lambda_.3
$region0: #{_lambda_.3}
  #allocation0 [shape = 'u32[]', space=smem, size = 0x4, offset = 0x4, fixed_abs, tag = 'smem constant byte address 0x4 - core index']
  #allocation1 [shape = 'u32[144,128]{1,0:T(1,128)}', space=vmem, size = 0x12000, scoped, tag = 'internal scratch']
  %s0 = inlined_call_operand.vmem [shape: f32[32,128], index: 0, kind: input, shape index: {}]
  %s1 = inlined_call_operand.vmem [shape: f32[1,128], index: 1, kind: input, shape index: {}]
  %s2 = inlined_call_operand.vmem [shape: f32[1,128], index: 2, kind: input, shape index: {}]
  %s3 = inlined_call_operand.vmem [shape: f32[1,128], index: 3, kind: input, shape index: {}]
  %s4 = inlined_call_operand.vmem [shape: f32[128,128], index: 4, kind: input, shape index: {}]
  %s5 = inlined_call_operand.vmem [shape: f32[128,128], index: 5, kind: input, shape index: {}]
  %s6 = inlined_call_operand.vmem [shape: f32[32,96], index: 6, kind: input, shape index: {}]
  %s7 = inlined_call_operand.vmem [shape: f32[96,32], index: 7, kind: input, shape index: {}]
  %s8 = inlined_call_operand.vmem [shape: f32[32,32], index: 8, kind: input, shape index: {}]
  %s9 = inlined_call_operand.vmem [shape: f32[96,32], index: 9, kind: input, shape index: {}]
  %s10 = inlined_call_operand.vmem [shape: f32[32,32], index: 10, kind: input, shape index: {}]
  %s11 = inlined_call_operand.vmem [shape: f32[32,32], index: 11, kind: input, shape index: {}]
  %s12 = inlined_call_operand.vmem [shape: f32[8,32], index: 12, kind: input, shape index: {}]
  %s13 = inlined_call_operand.vmem [shape: f32[328,1], index: 13, kind: input, shape index: {}]
  %s14 = inlined_call_operand.vmem [shape: f32[32,128], index: 14, kind: output, shape index: {0}]
  %s15 = inlined_call_operand.vmem [shape: f32[8,128], index: 15, kind: output, shape index: {1}]
  %16 = xla_tuple %s14, %s15
  %s17 = sld [smem:[#allocation0]]
  $region74: #{_lambda_.3} parent=0
    _
  %s19 = ssub.s32 1, %s17
  %s20 = scalar_select 0, %s19, %s17
  // Predicated region
  $region2: #{_lambda_.3} parent=0 // pred_check
    _
  $region3: #{_lambda_.3} parent=0 // pred_check_branch
    %22 = sbr.rel (0) target = $region5
  $region4: #{_lambda_.3} parent=0 // pred_region
    _
  $region5: #{_lambda_.3} parent=0 // pred_fallthru
    _
  // Predicated region
  $region6: #{_lambda_.3} parent=0 // pred_check
    _
  $region7: #{_lambda_.3} parent=0 // pred_check_branch
    %24 = sbr.rel (0) target = $region9
  $region8: #{_lambda_.3} parent=0 // pred_region
    _
  $region9: #{_lambda_.3} parent=0 // pred_fallthru
    _
  // Predicated region
  $region10: #{_lambda_.3} parent=0 // pred_check
    _
  $region11: #{_lambda_.3} parent=0 // pred_check_branch
    %26 = sbr.rel (0) target = $region13
  $region12: #{_lambda_.3} parent=0 // pred_region
    _
  $region13: #{_lambda_.3} parent=0 // pred_fallthru
    _
  // Predicated region
  $region14: #{_lambda_.3} parent=0 // pred_check
    _
  $region15: #{_lambda_.3} parent=0 // pred_check_branch
    %28 = sbr.rel (0) target = $region17
  $region16: #{_lambda_.3} parent=0 // pred_region
    _
  $region17: #{_lambda_.3} parent=0 // pred_fallthru
    _
  // Predicated region
  $region18: #{_lambda_.3} parent=0 // pred_check
    _
  $region19: #{_lambda_.3} parent=0 // pred_check_branch
    %30 = sbr.rel (0) target = $region21
  $region20: #{_lambda_.3} parent=0 // pred_region
    _
  $region21: #{_lambda_.3} parent=0 // pred_fallthru
    _
  // Predicated region
  $region22: #{_lambda_.3} parent=0 // pred_check
    _
  $region23: #{_lambda_.3} parent=0 // pred_check_branch
    %32 = sbr.rel (0) target = $region25
  $region24: #{_lambda_.3} parent=0 // pred_region
    _
  $region25: #{_lambda_.3} parent=0 // pred_fallthru
    _
  // Predicated region
  $region26: #{_lambda_.3} parent=0 // pred_check
    _
  $region27: #{_lambda_.3} parent=0 // pred_check_branch
    %34 = sbr.rel (0) target = $region29
  $region28: #{_lambda_.3} parent=0 // pred_region
    _
  $region29: #{_lambda_.3} parent=0 // pred_fallthru
    _
  // Predicated region
  $region30: #{_lambda_.3} parent=0 // pred_check
    _
  $region31: #{_lambda_.3} parent=0 // pred_check_branch
    %36 = sbr.rel (0) target = $region33
  $region32: #{_lambda_.3} parent=0 // pred_region
    _
  $region33: #{_lambda_.3} parent=0 // pred_fallthru
    _
  // Predicated region
  $region34: #{_lambda_.3} parent=0 // pred_check
    _
  $region35: #{_lambda_.3} parent=0 // pred_check_branch
    %38 = sbr.rel (0) target = $region37
  $region36: #{_lambda_.3} parent=0 // pred_region
    _
  $region37: #{_lambda_.3} parent=0 // pred_fallthru
    _
  // Predicated region
  $region38: #{_lambda_.3} parent=0 // pred_check
    _
  $region39: #{_lambda_.3} parent=0 // pred_check_branch
    %40 = sbr.rel (0) target = $region41
  $region40: #{_lambda_.3} parent=0 // pred_region
    _
  $region41: #{_lambda_.3} parent=0 // pred_fallthru
    _
  // Predicated region
  $region42: #{_lambda_.3} parent=0 // pred_check
    _
  $region43: #{_lambda_.3} parent=0 // pred_check_branch
    %42 = sbr.rel (0) target = $region45
  $region44: #{_lambda_.3} parent=0 // pred_region
    _
  $region45: #{_lambda_.3} parent=0 // pred_fallthru
    _
  // Predicated region
  $region46: #{_lambda_.3} parent=0 // pred_check
    _
  $region47: #{_lambda_.3} parent=0 // pred_check_branch
    %44 = sbr.rel (0) target = $region49
  $region48: #{_lambda_.3} parent=0 // pred_region
    _
  $region49: #{_lambda_.3} parent=0 // pred_fallthru
    _
  // Predicated region
  $region50: #{_lambda_.3} parent=0 // pred_check
    _
  $region51: #{_lambda_.3} parent=0 // pred_check_branch
    %46 = sbr.rel (0) target = $region53
  $region52: #{_lambda_.3} parent=0 // pred_region
    _
  $region53: #{_lambda_.3} parent=0 // pred_fallthru
    _
  // Predicated region
  $region54: #{_lambda_.3} parent=0 // pred_check
    _
  $region55: #{_lambda_.3} parent=0 // pred_check_branch
    %48 = sbr.rel (0) target = $region57
  $region56: #{_lambda_.3} parent=0 // pred_region
    _
  $region57: #{_lambda_.3} parent=0 // pred_fallthru
    _
  %v49 = vld [vmem:[%s1] sm:$0x1]
  %v50 = vld [vmem:[%s13] sm:$0xff]
  %v51 = vld [vmem:[%s13 + $0x8] sm:$0xff]
  %v52 = vld [vmem:[%s13 + $0x10] sm:$0xff]
  %v53 = vld [vmem:[%s13 + $0x18] sm:$0xff]
  %v54 = vld [vmem:[%s13 + $0x20] sm:$0xff]
  %v55 = vld [vmem:[%s13 + $0x28] sm:$0xff]
  %v56 = vld [vmem:[%s13 + $0x30] sm:$0xff]
  %v57 = vld [vmem:[%s13 + $0x38] sm:$0xff]
  %v58 = vld [vmem:[%s13 + $0x40] sm:$0xff]
  %v59 = vld [vmem:[%s13 + $0x48] sm:$0xff]
  %v60 = vld [vmem:[%s13 + $0x50] sm:$0xff]
  %v61 = vld [vmem:[%s13 + $0x58] sm:$0xff]
  %v62 = vld [vmem:[%s13 + $0x60] sm:$0xff]
  %v63 = vld [vmem:[%s13 + $0x68] sm:$0xff]
  %v64 = vld [vmem:[%s13 + $0x70] sm:$0xff]
  %v65 = vld [vmem:[%s13 + $0x78] sm:$0xff]
  %v66 = vld [vmem:[%s13 + $0x80] sm:$0xff]
  %v67 = vld [vmem:[%s13 + $0x88] sm:$0xff]
  %v68 = vld [vmem:[%s13 + $0x90] sm:$0xff]
  %v69 = vld [vmem:[%s13 + $0x98] sm:$0xff]
  %v70 = vld [vmem:[%s13 + $0xa0] sm:$0xff]
  %v71 = vld [vmem:[%s13 + $0xa8] sm:$0xff]
  %v72 = vld [vmem:[%s13 + $0xb0] sm:$0xff]
  %v73 = vld [vmem:[%s13 + $0xb8] sm:$0xff]
  %v74 = vld [vmem:[%s13 + $0xc0] sm:$0xff]
  %v75 = vld [vmem:[%s13 + $0xc8] sm:$0xff]
  %v76 = vld [vmem:[%s13 + $0xd0] sm:$0xff]
  %v77 = vld [vmem:[%s13 + $0xd8] sm:$0xff]
  %v78 = vld [vmem:[%s13 + $0xe0] sm:$0xff]
  %v79 = vld [vmem:[%s13 + $0xe8] sm:$0xff]
  %v80 = vld [vmem:[%s13 + $0xf0] sm:$0xff]
  %v81 = vld [vmem:[%s13 + $0xf8] sm:$0xff]
  %v82 = vld [vmem:[%s13 + $0x100] sm:$0xff]
  %v83 = vld [vmem:[%s13 + $0x108] sm:$0xff]
  %v84 = vld [vmem:[%s13 + $0x110] sm:$0xff]
  %v85 = vld [vmem:[%s13 + $0x118] sm:$0xff]
  %v86 = vld [vmem:[%s13 + $0x120] sm:$0xff]
  %v87 = vld [vmem:[%s13 + $0x128] sm:$0xff]
  %v88 = vld [vmem:[%s13 + $0x130] sm:$0xff]
  %v89 = vld [vmem:[%s13 + $0x138] sm:$0xff]
  %v90 = vld [vmem:[%s13 + $0x140] sm:$0xff]
  %v91 = vld [vmem:[%s0] sm:$0xff]
  %v92 = vld [vmem:[%s0 + $0x8] sm:$0xff]
  %v93 = vld [vmem:[%s0 + $0x10] sm:$0xff]
  %v94 = vld [vmem:[%s0 + $0x18] sm:$0xff]
  %95 = vrot.lane.b32.xlu0 %v91, 2
  %v96 = vpop.permute.xlu0 %95
  %97 = vrot.lane.b32.xlu0 %v92, 2
  %v98 = vpop.permute.xlu0 %97
  %99 = vrot.lane.b32.xlu0 %v93, 2
  %v100 = vpop.permute.xlu0 %99
  %101 = vrot.lane.b32.xlu0 %v94, 2
  %v102 = vpop.permute.xlu0 %101
  %v103 = vld [vmem:[%s2] sm:$0x1]
  %v105 = vlaneseq
  %v106 = vshrl.u32 %v105, 7
  %v107 = vsub.s32 0, %v106
  %v108 = vrot.slane %v103, %v107
  %v110 = vmul.f32 %v96, %v108
  %v111 = vmul.f32 %v98, %v108
  %v112 = vmul.f32 %v100, %v108
  %v113 = vmul.f32 %v102, %v108
  %114 = vrot.lane.b32.xlu0 %v91, 126
  %v115 = vpop.permute.xlu0 %114
  %116 = vrot.lane.b32.xlu0 %v92, 126
  %v117 = vpop.permute.xlu0 %116
  %118 = vrot.lane.b32.xlu0 %v93, 126
  %v119 = vpop.permute.xlu0 %118
  %120 = vrot.lane.b32.xlu0 %v94, 126
  %v121 = vpop.permute.xlu0 %120
  %v122 = vld [vmem:[%s3] sm:$0x1]
  %v124 = vlaneseq
  %v125 = vshrl.u32 %v124, 7
  %v126 = vsub.s32 0, %v125
  %v127 = vrot.slane %v122, %v126
  %v129 = vmul.f32 %v115, %v127
  %v130 = vmul.f32 %v117, %v127
  %v131 = vmul.f32 %v119, %v127
  %v132 = vmul.f32 %v121, %v127
  %v133 = vld [vmem:[%s6] sm:$0xff]
  %v134 = vld [vmem:[%s6 + $0x8] sm:$0xff]
  %v135 = vld [vmem:[%s6 + $0x10] sm:$0xff]
  %v136 = vld [vmem:[%s6 + $0x18] sm:$0xff]
  %138 = vset.pattern.permute.xlu0 0
  %139 = vperm.xlu0 %138, %v50
  %v140 = vpop.permute.xlu0 %139
  %143 = vset.pattern.permute.xlu0 0
  %144 = vperm.xlu0 %143, %v51
  %v145 = vpop.permute.xlu0 %144
  %148 = vset.pattern.permute.xlu0 0
  %149 = vperm.xlu0 %148, %v52
  %v150 = vpop.permute.xlu0 %149
  %153 = vset.pattern.permute.xlu0 0
  %154 = vperm.xlu0 %153, %v53
  %v155 = vpop.permute.xlu0 %154
  %vm157 = vcmask 785408
  %v159 = vsel %vm157, %v133, 0
  %v162 = vsel %vm157, %v134, 0
  %v165 = vsel %vm157, %v135, 0
  %v168 = vsel %vm157, %v136, 0
  %170 = vmatprep.subr.mxu0 0.0
  %171 = vmatpush1.msra.mxu0 %v110
  %172 = vmatprep.subr.mxu0 0.0
  %173 = vmatpush1.msra.mxu0 %v111
  %174 = vmatprep.subr.mxu0 0.0
  %175 = vmatpush1.msra.mxu0 %v112
  %176 = vmatprep.subr.mxu0 0.0
  %177 = vmatpush1.msra.mxu0 %v113
  %178 = vmatprep.subr.mxu0 0.0
  %179 = vmatpush1.msra.mxu0 %v91
  %180 = vmatprep.subr.mxu0 0.0
  %181 = vmatpush1.msra.mxu0 %v92
  %182 = vmatprep.subr.mxu0 0.0
  %183 = vmatpush1.msra.mxu0 %v93
  %184 = vmatprep.subr.mxu0 0.0
  %185 = vmatpush1.msra.mxu0 %v94
  %186 = vmatprep.subr.mxu0 0.0
  %187 = vmatpush1.msra.mxu0 %v129
  %188 = vmatprep.subr.mxu0 0.0
  %189 = vmatpush1.msra.mxu0 %v130
  %190 = vmatprep.subr.mxu0 0.0
  %191 = vmatpush1.msra.mxu0 %v131
  %192 = vmatprep.subr.mxu0 0.0
  %193 = vmatpush1.msra.mxu0 %v132
  %194 = vmatprep.subr.mxu0 0.0
  %195 = vmatpush1.msra.mxu0 0.0
  %196 = vmatprep.subr.mxu0 0.0
  %197 = vmatpush1.msra.mxu0 0.0
  %198 = vmatprep.subr.mxu0 0.0
  %199 = vmatpush1.msra.mxu0 0.0
  %200 = vmatprep.subr.mxu0 0.0
  %201 = vmatpush1.msra.mxu0 0.0
  %202 = vmatprep.subr.mxu0 0.0
  %203 = vmatpush1.msra.mxu0 0.0
  %204 = vmatprep.subr.mxu0 0.0
  %205 = vmatpush1.msra.mxu0 0.0
  %206 = vmatprep.subr.mxu0 0.0
  %207 = vmatpush1.msra.mxu0 0.0
  %208 = vmatprep.subr.mxu0 0.0
  %209 = vmatpush1.msra.mxu0 0.0
  %210 = vmatprep.subr.mxu0 0.0
  %211 = vmatpush1.msra.mxu0 0.0
  %212 = vmatprep.subr.mxu0 0.0
  %213 = vmatpush1.msra.mxu0 0.0
  %214 = vmatprep.subr.mxu0 0.0
  %215 = vmatpush1.msra.mxu0 0.0
  %216 = vmatprep.subr.mxu0 0.0
  %217 = vmatpush1.msra.mxu0 0.0
  %218 = vmatprep.subr.mxu0 0.0
  %219 = vmatpush1.msra.mxu0 0.0
  %220 = vmatprep.subr.mxu0 0.0
  %221 = vmatpush1.msra.mxu0 0.0
  %222 = vmatprep.subr.mxu0 0.0
  %223 = vmatpush1.msra.mxu0 0.0
  %224 = vmatprep.subr.mxu0 0.0
  %225 = vmatpush1.msra.mxu0 0.0
  %226 = vmatprep.subr.mxu0 0.0
  %227 = vmatpush1.msra.mxu0 0.0
  %228 = vmatprep.subr.mxu0 0.0
  %229 = vmatpush1.msra.mxu0 0.0
  %230 = vmatprep.subr.mxu0 0.0
  %231 = vmatpush1.msra.mxu0 0.0
  %232 = vmatprep.subr.mxu0 0.0
  %233 = vmatpush1.msra.mxu0 0.0
  %234 = vmatprep.mubr.f32.mxu0 0.0
  %235 = vmatmul.mubr.f32.gmra.mrb[0].mxu0 %v159
  %v236 = vpop.f32.mrb[0].mxu0
  %v237 = vadd.f32 %v140, %v236
  %v238 = vpop.f32.mrb[0].mxu0
  %239 = vmatprep.mubr.f32.mxu0 0.0
  %240 = vmatmul.mubr.f32.gmra.mrb[0].mxu0 %v162
  %v241 = vpop.f32.mrb[0].mxu0
  %v242 = vadd.f32 %v145, %v241
  %v243 = vpop.f32.mrb[0].mxu0
  %244 = vmatprep.mubr.f32.mxu0 0.0
  %245 = vmatmul.mubr.f32.gmra.mrb[0].mxu0 %v165
  %v246 = vpop.f32.mrb[0].mxu0
  %v247 = vadd.f32 %v150, %v246
  %v248 = vpop.f32.mrb[0].mxu0
  %249 = vmatprep.mubr.f32.mxu0 0.0
  %250 = vmatmul.mubr.f32.gmra.mrb[0].mxu0 %v168
  %v251 = vpop.f32.mrb[0].mxu0
  %v252 = vadd.f32 %v155, %v251
  %v253 = vpop.f32.mrb[0].mxu0
  %254 = vdwg.mxu0
  %v255 = vmul.f32 %v237, %v237
  %v256 = vmul.f32 %v242, %v242
  %v257 = vmul.f32 %v247, %v247
  %v258 = vmul.f32 %v252, %v252
  %v259 = vmul.f32 %v237, %v255
  %v260 = vmul.f32 %v242, %v256
  %v261 = vmul.f32 %v247, %v257
  %v262 = vmul.f32 %v252, %v258
  %v263 = vmul.f32 %v259, 0.044715
  %v264 = vmul.f32 %v260, 0.044715
  %v265 = vmul.f32 %v261, 0.044715
  %v266 = vmul.f32 %v262, 0.044715
  %v267 = vadd.f32 %v237, %v263
  %v268 = vadd.f32 %v242, %v264
  %v269 = vadd.f32 %v247, %v265
  %v270 = vadd.f32 %v252, %v266
  %v271 = vmul.f32 %v267, 0.7978846
  %v272 = vmul.f32 %v268, 0.7978846
  %v273 = vmul.f32 %v269, 0.7978846
  %v274 = vmul.f32 %v270, 0.7978846
  %v275 = vtanh.pop %v271
  %v276 = vtanh.pop %v272
  %v277 = vtanh.pop %v273
  %v278 = vtanh.pop %v274
  %v279 = vadd.f32 %v275, 1.0
  %v280 = vadd.f32 %v276, 1.0
  %v281 = vadd.f32 %v277, 1.0
  %v282 = vadd.f32 %v278, 1.0
  %v283 = vmul.f32 %v279, 0.5
  %v284 = vmul.f32 %v280, 0.5
  %v285 = vmul.f32 %v281, 0.5
  %v286 = vmul.f32 %v282, 0.5
  %v287 = vmul.f32 %v237, %v283
  %v288 = vmul.f32 %v242, %v284
  %v289 = vmul.f32 %v247, %v285
  %v290 = vmul.f32 %v252, %v286
  %v292 = vlaneseq
  %v293 = vshrl.u32 %v292, 7
  %v294 = vsub.s32 0, %v293
  %v295 = vrot.slane %v49, %v294
  %v297 = vmul.f32 %v287, %v295
  %v298 = vmul.f32 %v288, %v295
  %v299 = vmul.f32 %v289, %v295
  %v300 = vmul.f32 %v290, %v295
  %v301 = vld [vmem:[%s4] sm:$0xff]
  %v302 = vld [vmem:[%s4 + $0x8] sm:$0xff]
  %v303 = vld [vmem:[%s4 + $0x10] sm:$0xff]
  %v304 = vld [vmem:[%s4 + $0x18] sm:$0xff]
  %v305 = vld [vmem:[%s4 + $0x20] sm:$0xff]
  %v306 = vld [vmem:[%s4 + $0x28] sm:$0xff]
  %v307 = vld [vmem:[%s4 + $0x30] sm:$0xff]
  %v308 = vld [vmem:[%s4 + $0x38] sm:$0xff]
  %v309 = vld [vmem:[%s4 + $0x40] sm:$0xff]
  %v310 = vld [vmem:[%s4 + $0x48] sm:$0xff]
  %v311 = vld [vmem:[%s4 + $0x50] sm:$0xff]
  %v312 = vld [vmem:[%s4 + $0x58] sm:$0xff]
  %v313 = vld [vmem:[%s4 + $0x60] sm:$0xff]
  %v314 = vld [vmem:[%s4 + $0x68] sm:$0xff]
  %v315 = vld [vmem:[%s4 + $0x70] sm:$0xff]
  %v316 = vld [vmem:[%s4 + $0x78] sm:$0xff]
  %v317 = vmul.f32 %v301, %v295
  %v318 = vmul.f32 %v302, %v295
  %v319 = vmul.f32 %v303, %v295
  %v320 = vmul.f32 %v304, %v295
  %v321 = vmul.f32 %v305, %v295
  %v322 = vmul.f32 %v306, %v295
  %v323 = vmul.f32 %v307, %v295
  %v324 = vmul.f32 %v308, %v295
  %v325 = vmul.f32 %v309, %v295
  %v326 = vmul.f32 %v310, %v295
  %v327 = vmul.f32 %v311, %v295
  %v328 = vmul.f32 %v312, %v295
  %v329 = vmul.f32 %v313, %v295
  %v330 = vmul.f32 %v314, %v295
  %v331 = vmul.f32 %v315, %v295
  %v332 = vmul.f32 %v316, %v295
  %v333 = vld [vmem:[%s7] sm:$0xff]
  %v334 = vld [vmem:[%s7 + $0x8] sm:$0xff]
  %v335 = vld [vmem:[%s7 + $0x10] sm:$0xff]
  %v336 = vld [vmem:[%s7 + $0x18] sm:$0xff]
  %v337 = vld [vmem:[%s7 + $0x20] sm:$0xff]
  %v338 = vld [vmem:[%s7 + $0x28] sm:$0xff]
  %v339 = vld [vmem:[%s7 + $0x30] sm:$0xff]
  %v340 = vld [vmem:[%s7 + $0x38] sm:$0xff]
  %v341 = vld [vmem:[%s7 + $0x40] sm:$0xff]
  %v342 = vld [vmem:[%s7 + $0x48] sm:$0xff]
  %v343 = vld [vmem:[%s7 + $0x50] sm:$0xff]
  %v344 = vld [vmem:[%s7 + $0x58] sm:$0xff]
  %346 = vset.pattern.permute.xlu0 0
  %347 = vperm.xlu0 %346, %v54
  %v348 = vpop.permute.xlu0 %347
  %351 = vset.pattern.permute.xlu0 0
  %352 = vperm.xlu0 %351, %v55
  %v353 = vpop.permute.xlu0 %352
  %356 = vset.pattern.permute.xlu0 0
  %357 = vperm.xlu0 %356, %v56
  %v358 = vpop.permute.xlu0 %357
  %361 = vset.pattern.permute.xlu0 0
  %362 = vperm.xlu0 %361, %v57
  %v363 = vpop.permute.xlu0 %362
  %366 = vset.pattern.permute.xlu0 0
  %367 = vperm.xlu0 %366, %v58
  %v368 = vpop.permute.xlu0 %367
  %371 = vset.pattern.permute.xlu0 0
  %372 = vperm.xlu0 %371, %v59
  %v373 = vpop.permute.xlu0 %372
  %376 = vset.pattern.permute.xlu0 0
  %377 = vperm.xlu0 %376, %v60
  %v378 = vpop.permute.xlu0 %377
  %381 = vset.pattern.permute.xlu0 0
  %382 = vperm.xlu0 %381, %v61
  %v383 = vpop.permute.xlu0 %382
  %386 = vset.pattern.permute.xlu0 0
  %387 = vperm.xlu0 %386, %v62
  %v388 = vpop.permute.xlu0 %387
  %391 = vset.pattern.permute.xlu0 0
  %392 = vperm.xlu0 %391, %v63
  %v393 = vpop.permute.xlu0 %392
  %396 = vset.pattern.permute.xlu0 0
  %397 = vperm.xlu0 %396, %v64
  %v398 = vpop.permute.xlu0 %397
  %401 = vset.pattern.permute.xlu0 0
  %402 = vperm.xlu0 %401, %v65
  %v403 = vpop.permute.xlu0 %402
  %vm405 = vcmask 261120
  %v407 = vsel %vm405, %v333, 0
  %v410 = vsel %vm405, %v334, 0
  %v413 = vsel %vm405, %v335, 0
  %v416 = vsel %vm405, %v336, 0
  %v419 = vsel %vm405, %v337, 0
  %v422 = vsel %vm405, %v338, 0
  %v425 = vsel %vm405, %v339, 0
  %v428 = vsel %vm405, %v340, 0
  %v431 = vsel %vm405, %v341, 0
  %v434 = vsel %vm405, %v342, 0
  %v437 = vsel %vm405, %v343, 0
  %v440 = vsel %vm405, %v344, 0
  %442 = vmatprep.subr.mxu0 0.0
  %443 = vmatpush1.msra.mxu0 %v297
  %444 = vmatprep.subr.mxu0 0.0
  %445 = vmatpush1.msra.mxu0 %v298
  %446 = vmatprep.subr.mxu0 0.0
  %447 = vmatpush1.msra.mxu0 %v299
  %448 = vmatprep.subr.mxu0 0.0
  %449 = vmatpush1.msra.mxu0 %v300
  %450 = vmatprep.subr.mxu0 0.0
  %451 = vmatpush1.msra.mxu0 0.0
  %452 = vmatprep.subr.mxu0 0.0
  %453 = vmatpush1.msra.mxu0 0.0
  %454 = vmatprep.subr.mxu0 0.0
  %455 = vmatpush1.msra.mxu0 0.0
  %456 = vmatprep.subr.mxu0 0.0
  %457 = vmatpush1.msra.mxu0 0.0
  %458 = vmatprep.subr.mxu0 0.0
  %459 = vmatpush1.msra.mxu0 0.0
  %460 = vmatprep.subr.mxu0 0.0
  %461 = vmatpush1.msra.mxu0 0.0
  %462 = vmatprep.subr.mxu0 0.0
  %463 = vmatpush1.msra.mxu0 0.0
  %464 = vmatprep.subr.mxu0 0.0
  %465 = vmatpush1.msra.mxu0 0.0
  %466 = vmatprep.subr.mxu0 0.0
  %467 = vmatpush1.msra.mxu0 0.0
  %468 = vmatprep.subr.mxu0 0.0
  %469 = vmatpush1.msra.mxu0 0.0
  %470 = vmatprep.subr.mxu0 0.0
  %471 = vmatpush1.msra.mxu0 0.0
  %472 = vmatprep.subr.mxu0 0.0
  %473 = vmatpush1.msra.mxu0 0.0
  %474 = vmatprep.subr.mxu0 0.0
  %475 = vmatpush1.msra.mxu0 0.0
  %476 = vmatprep.subr.mxu0 0.0
  %477 = vmatpush1.msra.mxu0 0.0
  %478 = vmatprep.subr.mxu0 0.0
  %479 = vmatpush1.msra.mxu0 0.0
  %480 = vmatprep.subr.mxu0 0.0
  %481 = vmatpush1.msra.mxu0 0.0
  %482 = vmatprep.subr.mxu0 0.0
  %483 = vmatpush1.msra.mxu0 0.0
  %484 = vmatprep.subr.mxu0 0.0
  %485 = vmatpush1.msra.mxu0 0.0
  %486 = vmatprep.subr.mxu0 0.0
  %487 = vmatpush1.msra.mxu0 0.0
  %488 = vmatprep.subr.mxu0 0.0
  %489 = vmatpush1.msra.mxu0 0.0
  %490 = vmatprep.subr.mxu0 0.0
  %491 = vmatpush1.msra.mxu0 0.0
  %492 = vmatprep.subr.mxu0 0.0
  %493 = vmatpush1.msra.mxu0 0.0
  %494 = vmatprep.subr.mxu0 0.0
  %495 = vmatpush1.msra.mxu0 0.0
  %496 = vmatprep.subr.mxu0 0.0
  %497 = vmatpush1.msra.mxu0 0.0
  %498 = vmatprep.subr.mxu0 0.0
  %499 = vmatpush1.msra.mxu0 0.0
  %500 = vmatprep.subr.mxu0 0.0
  %501 = vmatpush1.msra.mxu0 0.0
  %502 = vmatprep.subr.mxu0 0.0
  %503 = vmatpush1.msra.mxu0 0.0
  %504 = vmatprep.subr.mxu0 0.0
  %505 = vmatpush1.msra.mxu0 0.0
  %506 = vmatprep.mubr.f32.mxu0 0.0
  %507 = vmatmul.mubr.f32.gmra.mrb[0].mxu0 %v407
  %v508 = vpop.f32.mrb[0].mxu0
  %v509 = vadd.f32 %v348, %v508
  %v510 = vpop.f32.mrb[0].mxu0
  %511 = vmatprep.mubr.f32.mxu0 0.0
  %512 = vmatmul.mubr.f32.gmra.mrb[0].mxu0 %v410
  %v513 = vpop.f32.mrb[0].mxu0
  %v514 = vadd.f32 %v353, %v513
  %v515 = vpop.f32.mrb[0].mxu0
  %516 = vmatprep.mubr.f32.mxu0 0.0
  %517 = vmatmul.mubr.f32.gmra.mrb[0].mxu0 %v413
  %v518 = vpop.f32.mrb[0].mxu0
  %v519 = vadd.f32 %v358, %v518
  %v520 = vpop.f32.mrb[0].mxu0
  %521 = vmatprep.mubr.f32.mxu0 0.0
  %522 = vmatmul.mubr.f32.gmra.mrb[0].mxu0 %v416
  %v523 = vpop.f32.mrb[0].mxu0
  %v524 = vadd.f32 %v363, %v523
  %v525 = vpop.f32.mrb[0].mxu0
  %526 = vmatprep.mubr.f32.mxu0 0.0
  %527 = vmatmul.mubr.f32.gmra.mrb[0].mxu0 %v419
  %v528 = vpop.f32.mrb[0].mxu0
  %v529 = vadd.f32 %v368, %v528
  %v530 = vpop.f32.mrb[0].mxu0
  %531 = vmatprep.mubr.f32.mxu0 0.0
  %532 = vmatmul.mubr.f32.gmra.mrb[0].mxu0 %v422
  %v533 = vpop.f32.mrb[0].mxu0
  %v534 = vadd.f32 %v373, %v533
  %v535 = vpop.f32.mrb[0].mxu0
  %536 = vmatprep.mubr.f32.mxu0 0.0
  %537 = vmatmul.mubr.f32.gmra.mrb[0].mxu0 %v425
  %v538 = vpop.f32.mrb[0].mxu0
  %v539 = vadd.f32 %v378, %v538
  %v540 = vpop.f32.mrb[0].mxu0
  %541 = vmatprep.mubr.f32.mxu0 0.0
  %542 = vmatmul.mubr.f32.gmra.mrb[0].mxu0 %v428
  %v543 = vpop.f32.mrb[0].mxu0
  %v544 = vadd.f32 %v383, %v543
  %v545 = vpop.f32.mrb[0].mxu0
  %546 = vmatprep.mubr.f32.mxu0 0.0
  %547 = vmatmul.mubr.f32.gmra.mrb[0].mxu0 %v431
  %v548 = vpop.f32.mrb[0].mxu0
  %v549 = vadd.f32 %v388, %v548
  %v550 = vpop.f32.mrb[0].mxu0
  %551 = vmatprep.mubr.f32.mxu0 0.0
  %552 = vmatmul.mubr.f32.gmra.mrb[0].mxu0 %v434
  %v553 = vpop.f32.mrb[0].mxu0
  %v554 = vadd.f32 %v393, %v553
  %v555 = vpop.f32.mrb[0].mxu0
  %556 = vmatprep.mubr.f32.mxu0 0.0
  %557 = vmatmul.mubr.f32.gmra.mrb[0].mxu0 %v437
  %v558 = vpop.f32.mrb[0].mxu0
  %v559 = vadd.f32 %v398, %v558
  %v560 = vpop.f32.mrb[0].mxu0
  %561 = vmatprep.mubr.f32.mxu0 0.0
  %562 = vmatmul.mubr.f32.gmra.mrb[0].mxu0 %v440
  %v563 = vpop.f32.mrb[0].mxu0
  %v564 = vadd.f32 %v403, %v563
  %v565 = vpop.f32.mrb[0].mxu0
  %566 = vdwg.mxu0
  %567 = vxpose.xlu0.b32.start [1/16] %v509, 128
  %568 = vxpose.xlu0.b32.cont [2/16] 0.0, 128
  %569 = vxpose.xlu0.b32.cont [3/16] 0.0, 128
  %570 = vxpose.xlu0.b32.cont [4/16] 0.0, 128
  %571 = vxpose.xlu0.b32.cont [5/16] 0.0, 128
  %572 = vxpose.xlu0.b32.cont [6/16] 0.0, 128
  %573 = vxpose.xlu0.b32.cont [7/16] 0.0, 128
  %574 = vxpose.xlu0.b32.cont [8/16] 0.0, 128
  %575 = vxpose.xlu0.b32.cont [9/16] 0.0, 128
  %576 = vxpose.xlu0.b32.cont [10/16] 0.0, 128
  %577 = vxpose.xlu0.b32.cont [11/16] 0.0, 128
  %578 = vxpose.xlu0.b32.cont [12/16] 0.0, 128
  %579 = vxpose.xlu0.b32.cont [13/16] 0.0, 128
  %580 = vxpose.xlu0.b32.cont [14/16] 0.0, 128
  %581 = vxpose.xlu0.b32.cont [15/16] 0.0, 128
  %582 = vxpose.xlu0.b32.end [16/16] 0.0, 128
  %v583 = vpop.trf.xlu0
  %v584 = vpop.trf.xlu0
  %v585 = vpop.trf.xlu0
  %v586 = vpop.trf.xlu0
  %v587 = vpop.trf.xlu0
  %v588 = vpop.trf.xlu0
  %v589 = vpop.trf.xlu0
  %v590 = vpop.trf.xlu0
  %v591 = vpop.trf.xlu0
  %v592 = vpop.trf.xlu0
  %v593 = vpop.trf.xlu0
  %v594 = vpop.trf.xlu0
  %v595 = vpop.trf.xlu0
  %v596 = vpop.trf.xlu0
  %v597 = vpop.trf.xlu0
  %v598 = vpop.trf.xlu0
  %vm599 = vcmask 64512
  %v601 = vsel %vm599, %v583, 0
  %v604 = vsel %vm599, %v584, 0
  %v607 = vsel %vm599, %v585, 0
  %v610 = vsel %vm599, %v586, 0
  %v613 = vsel %vm599, %v587, 0
  %v616 = vsel %vm599, %v588, 0
  %v619 = vsel %vm599, %v589, 0
  %v622 = vsel %vm599, %v590, 0
  %v625 = vsel %vm599, %v591, 0
  %v628 = vsel %vm599, %v592, 0
  %v631 = vsel %vm599, %v593, 0
  %v634 = vsel %vm599, %v594, 0
  %v637 = vsel %vm599, %v595, 0
  %v640 = vsel %vm599, %v596, 0
  %v643 = vsel %vm599, %v597, 0
  %v646 = vsel %vm599, %v598, 0
  %648 = vmatprep.subr.mxu0 0.0
  %649 = vmatpush1.msra.mxu0 %v529
  %650 = vmatprep.subr.mxu0 0.0
  %651 = vmatpush1.msra.mxu0 0.0
  %652 = vmatprep.subr.mxu0 0.0
  %653 = vmatpush1.msra.mxu0 0.0
  %654 = vmatprep.subr.mxu0 0.0
  %655 = vmatpush1.msra.mxu0 0.0
  %656 = vmatprep.subr.mxu0 0.0
  %657 = vmatpush1.msra.mxu0 0.0
  %658 = vmatprep.subr.mxu0 0.0
  %659 = vmatpush1.msra.mxu0 0.0
  %660 = vmatprep.subr.mxu0 0.0
  %661 = vmatpush1.msra.mxu0 0.0
  %662 = vmatprep.subr.mxu0 0.0
  %663 = vmatpush1.msra.mxu0 0.0
  %664 = vmatprep.subr.mxu0 0.0
  %665 = vmatpush1.msra.mxu0 0.0
  %666 = vmatprep.subr.mxu0 0.0
  %667 = vmatpush1.msra.mxu0 0.0
  %668 = vmatprep.subr.mxu0 0.0
  %669 = vmatpush1.msra.mxu0 0.0
  %670 = vmatprep.subr.mxu0 0.0
  %671 = vmatpush1.msra.mxu0 0.0
  %672 = vmatprep.subr.mxu0 0.0
  %673 = vmatpush1.msra.mxu0 0.0
  %674 = vmatprep.subr.mxu0 0.0
  %675 = vmatpush1.msra.mxu0 0.0
  %676 = vmatprep.subr.mxu0 0.0
  %677 = vmatpush1.msra.mxu0 0.0
  %678 = vmatprep.subr.mxu0 0.0
  %679 = vmatpush1.msra.mxu0 0.0
  %680 = vmatprep.subr.mxu0 0.0
  %681 = vmatpush1.msra.mxu0 0.0
  %682 = vmatprep.subr.mxu0 0.0
  %683 = vmatpush1.msra.mxu0 0.0
  %684 = vmatprep.subr.mxu0 0.0
  %685 = vmatpush1.msra.mxu0 0.0
  %686 = vmatprep.subr.mxu0 0.0
  %687 = vmatpush1.msra.mxu0 0.0
  %688 = vmatprep.subr.mxu0 0.0
  %689 = vmatpush1.msra.mxu0 0.0
  %690 = vmatprep.subr.mxu0 0.0
  %691 = vmatpush1.msra.mxu0 0.0
  %692 = vmatprep.subr.mxu0 0.0
  %693 = vmatpush1.msra.mxu0 0.0
  %694 = vmatprep.subr.mxu0 0.0
  %695 = vmatpush1.msra.mxu0 0.0
  %696 = vmatprep.subr.mxu0 0.0
  %697 = vmatpush1.msra.mxu0 0.0
  %698 = vmatprep.subr.mxu0 0.0
  %699 = vmatpush1.msra.mxu0 0.0
  %700 = vmatprep.subr.mxu0 0.0
  %701 = vmatpush1.msra.mxu0 0.0
  %702 = vmatprep.subr.mxu0 0.0
  %703 = vmatpush1.msra.mxu0 0.0
  %704 = vmatprep.subr.mxu0 0.0
  %705 = vmatpush1.msra.mxu0 0.0
  %706 = vmatprep.subr.mxu0 0.0
  %707 = vmatpush1.msra.mxu0 0.0
  %708 = vmatprep.subr.mxu0 0.0
  %709 = vmatpush1.msra.mxu0 0.0
  %710 = vmatprep.subr.mxu0 0.0
  %711 = vmatpush1.msra.mxu0 0.0
  %712 = vmatprep.mubr.f32.mxu0 0.0
  %713 = vmatmul.mubr.f32.gmra.mrb[0].mxu0 %v601
  %v714 = vpop.f32.mrb[0].mxu0
  %v715 = vadd.f32 0.0, %v714
  %v716 = vpop.f32.mrb[0].mxu0
  %717 = vmatprep.mubr.f32.mxu0 0.0
  %718 = vmatmul.mubr.f32.gmra.mrb[0].mxu0 %v604
  %v719 = vpop.f32.mrb[0].mxu0
  %v720 = vadd.f32 0.0, %v719
  %v721 = vpop.f32.mrb[0].mxu0
  %722 = vmatprep.mubr.f32.mxu0 0.0
  %723 = vmatmul.mubr.f32.gmra.mrb[0].mxu0 %v607
  %v724 = vpop.f32.mrb[0].mxu0
  %v725 = vadd.f32 0.0, %v724
  %v726 = vpop.f32.mrb[0].mxu0
  %727 = vmatprep.mubr.f32.mxu0 0.0
  %728 = vmatmul.mubr.f32.gmra.mrb[0].mxu0 %v610
  %v729 = vpop.f32.mrb[0].mxu0
  %v730 = vadd.f32 0.0, %v729
  %v731 = vpop.f32.mrb[0].mxu0
  %732 = vmatprep.mubr.f32.mxu0 0.0
  %733 = vmatmul.mubr.f32.gmra.mrb[0].mxu0 %v613
  %v734 = vpop.f32.mrb[0].mxu0
  %v735 = vadd.f32 0.0, %v734
  %v736 = vpop.f32.mrb[0].mxu0
  %737 = vmatprep.mubr.f32.mxu0 0.0
  %738 = vmatmul.mubr.f32.gmra.mrb[0].mxu0 %v616
  %v739 = vpop.f32.mrb[0].mxu0
  %v740 = vadd.f32 0.0, %v739
  %v741 = vpop.f32.mrb[0].mxu0
  %742 = vmatprep.mubr.f32.mxu0 0.0
  %743 = vmatmul.mubr.f32.gmra.mrb[0].mxu0 %v619
  %v744 = vpop.f32.mrb[0].mxu0
  %v745 = vadd.f32 0.0, %v744
  %v746 = vpop.f32.mrb[0].mxu0
  %747 = vmatprep.mubr.f32.mxu0 0.0
  %748 = vmatmul.mubr.f32.gmra.mrb[0].mxu0 %v622
  %v749 = vpop.f32.mrb[0].mxu0
  %v750 = vadd.f32 0.0, %v749
  %v751 = vpop.f32.mrb[0].mxu0
  %752 = vmatprep.mubr.f32.mxu0 0.0
  %753 = vmatmul.mubr.f32.gmra.mrb[0].mxu0 %v625
  %v754 = vpop.f32.mrb[0].mxu0
  %v755 = vadd.f32 0.0, %v754
  %v756 = vpop.f32.mrb[0].mxu0
  %757 = vmatprep.mubr.f32.mxu0 0.0
  %758 = vmatmul.mubr.f32.gmra.mrb[0].mxu0 %v628
  %v759 = vpop.f32.mrb[0].mxu0
  %v760 = vadd.f32 0.0, %v759
  %v761 = vpop.f32.mrb[0].mxu0
  %762 = vmatprep.mubr.f32.mxu0 0.0
  %763 = vmatmul.mubr.f32.gmra.mrb[0].mxu0 %v631
  %v764 = vpop.f32.mrb[0].mxu0
  %v765 = vadd.f32 0.0, %v764
  %v766 = vpop.f32.mrb[0].mxu0
  %767 = vmatprep.mubr.f32.mxu0 0.0
  %768 = vmatmul.mubr.f32.gmra.mrb[0].mxu0 %v634
  %v769 = vpop.f32.mrb[0].mxu0
  %v770 = vadd.f32 0.0, %v769
  %v771 = vpop.f32.mrb[0].mxu0
  %772 = vmatprep.mubr.f32.mxu0 0.0
  %773 = vmatmul.mubr.f32.gmra.mrb[0].mxu0 %v637
  %v774 = vpop.f32.mrb[0].mxu0
  %v775 = vadd.f32 0.0, %v774
  %v776 = vpop.f32.mrb[0].mxu0
  %777 = vmatprep.mubr.f32.mxu0 0.0
  %778 = vmatmul.mubr.f32.gmra.mrb[0].mxu0 %v640
  %v779 = vpop.f32.mrb[0].mxu0
  %v780 = vadd.f32 0.0, %v779
  %v781 = vpop.f32.mrb[0].mxu0
  %782 = vmatprep.mubr.f32.mxu0 0.0
  %783 = vmatmul.mubr.f32.gmra.mrb[0].mxu0 %v643
  %v784 = vpop.f32.mrb[0].mxu0
  %v785 = vadd.f32 0.0, %v784
  %v786 = vpop.f32.mrb[0].mxu0
  %787 = vmatprep.mubr.f32.mxu0 0.0
  %788 = vmatmul.mubr.f32.gmra.mrb[0].mxu0 %v646
  %v789 = vpop.f32.mrb[0].mxu0
  %v790 = vadd.f32 0.0, %v789
  %v791 = vpop.f32.mrb[0].mxu0
  %792 = vdwg.mxu0
  %v793 = vmul.f32 %v715, 0.5
  %v794 = vmul.f32 %v720, 0.5
  %v795 = vmul.f32 %v725, 0.5
  %v796 = vmul.f32 %v730, 0.5
  %v797 = vmul.f32 %v735, 0.5
  %v798 = vmul.f32 %v740, 0.5
  %v799 = vmul.f32 %v745, 0.5
  %v800 = vmul.f32 %v750, 0.5
  %v801 = vmul.f32 %v755, 0.5
  %v802 = vmul.f32 %v760, 0.5
  %v803 = vmul.f32 %v765, 0.5
  %v804 = vmul.f32 %v770, 0.5
  %v805 = vmul.f32 %v775, 0.5
  %v806 = vmul.f32 %v780, 0.5
  %v807 = vmul.f32 %v785, 0.5
  %v808 = vmul.f32 %v790, 0.5
  %vm809 = vcmp.gt.f32.partialorder %v317, 0.0
  %vm810 = vcmp.gt.f32.partialorder %v318, 0.0
  %vm811 = vcmp.gt.f32.partialorder %v319, 0.0
  %vm812 = vcmp.gt.f32.partialorder %v320, 0.0
  %vm813 = vcmp.gt.f32.partialorder %v321, 0.0
  %vm814 = vcmp.gt.f32.partialorder %v322, 0.0
  %vm815 = vcmp.gt.f32.partialorder %v323, 0.0
  %vm816 = vcmp.gt.f32.partialorder %v324, 0.0
  %vm817 = vcmp.gt.f32.partialorder %v325, 0.0
  %vm818 = vcmp.gt.f32.partialorder %v326, 0.0
  %vm819 = vcmp.gt.f32.partialorder %v327, 0.0
  %vm820 = vcmp.gt.f32.partialorder %v328, 0.0
  %vm821 = vcmp.gt.f32.partialorder %v329, 0.0
  %vm822 = vcmp.gt.f32.partialorder %v330, 0.0
  %vm823 = vcmp.gt.f32.partialorder %v331, 0.0
  %vm824 = vcmp.gt.f32.partialorder %v332, 0.0
  %v825 = vsel %vm809, %v793, -1e+09
  %v826 = vsel %vm810, %v794, -1e+09
  %v827 = vsel %vm811, %v795, -1e+09
  %v828 = vsel %vm812, %v796, -1e+09
  %v829 = vsel %vm813, %v797, -1e+09
  %v830 = vsel %vm814, %v798, -1e+09
  %v831 = vsel %vm815, %v799, -1e+09
  %v832 = vsel %vm816, %v800, -1e+09
  %v833 = vsel %vm817, %v801, -1e+09
  %v834 = vsel %vm818, %v802, -1e+09
  %v835 = vsel %vm819, %v803, -1e+09
  %v836 = vsel %vm820, %v804, -1e+09
  %v837 = vsel %vm821, %v805, -1e+09
  %v838 = vsel %vm822, %v806, -1e+09
  %v839 = vsel %vm823, %v807, -1e+09
  %v840 = vsel %vm824, %v808, -1e+09
  %841 = vmax.xlane.f32.xlu0 %v825
  %v842 = vpop.xlane.xlu0 %841
  %843 = vmax.xlane.f32.xlu0 %v826
  %v844 = vpop.xlane.xlu0 %843
  %845 = vmax.xlane.f32.xlu0 %v827
  %v846 = vpop.xlane.xlu0 %845
  %847 = vmax.xlane.f32.xlu0 %v828
  %v848 = vpop.xlane.xlu0 %847
  %849 = vmax.xlane.f32.xlu0 %v829
  %v850 = vpop.xlane.xlu0 %849
  %851 = vmax.xlane.f32.xlu0 %v830
  %v852 = vpop.xlane.xlu0 %851
  %853 = vmax.xlane.f32.xlu0 %v831
  %v854 = vpop.xlane.xlu0 %853
  %855 = vmax.xlane.f32.xlu0 %v832
  %v856 = vpop.xlane.xlu0 %855
  %857 = vmax.xlane.f32.xlu0 %v833
  %v858 = vpop.xlane.xlu0 %857
  %859 = vmax.xlane.f32.xlu0 %v834
  %v860 = vpop.xlane.xlu0 %859
  %861 = vmax.xlane.f32.xlu0 %v835
  %v862 = vpop.xlane.xlu0 %861
  %863 = vmax.xlane.f32.xlu0 %v836
  %v864 = vpop.xlane.xlu0 %863
  %865 = vmax.xlane.f32.xlu0 %v837
  %v866 = vpop.xlane.xlu0 %865
  %867 = vmax.xlane.f32.xlu0 %v838
  %v868 = vpop.xlane.xlu0 %867
  %869 = vmax.xlane.f32.xlu0 %v839
  %v870 = vpop.xlane.xlu0 %869
  %871 = vmax.xlane.f32.xlu0 %v840
  %v872 = vpop.xlane.xlu0 %871
  %v873 = vsub.f32 %v825, %v842
  %v874 = vsub.f32 %v826, %v844
  %v875 = vsub.f32 %v827, %v846
  %v876 = vsub.f32 %v828, %v848
  %v877 = vsub.f32 %v829, %v850
  %v878 = vsub.f32 %v830, %v852
  %v879 = vsub.f32 %v831, %v854
  %v880 = vsub.f32 %v832, %v856
  %v881 = vsub.f32 %v833, %v858
  %v882 = vsub.f32 %v834, %v860
  %v883 = vsub.f32 %v835, %v862
  %v884 = vsub.f32 %v836, %v864
  %v885 = vsub.f32 %v837, %v866
  %v886 = vsub.f32 %v838, %v868
  %v887 = vsub.f32 %v839, %v870
  %v888 = vsub.f32 %v840, %v872
  %v889 = vmul.f32 %v873, 1.442695
  %v890 = vpow.pop %v889
  %v891 = vmul.f32 %v874, 1.442695
  %v892 = vpow.pop %v891
  %v893 = vmul.f32 %v875, 1.442695
  %v894 = vpow.pop %v893
  %v895 = vmul.f32 %v876, 1.442695
  %v896 = vpow.pop %v895
  %v897 = vmul.f32 %v877, 1.442695
  %v898 = vpow.pop %v897
  %v899 = vmul.f32 %v878, 1.442695
  %v900 = vpow.pop %v899
  %v901 = vmul.f32 %v879, 1.442695
  %v902 = vpow.pop %v901
  %v903 = vmul.f32 %v880, 1.442695
  %v904 = vpow.pop %v903
  %v905 = vmul.f32 %v881, 1.442695
  %v906 = vpow.pop %v905
  %v907 = vmul.f32 %v882, 1.442695
  %v908 = vpow.pop %v907
  %v909 = vmul.f32 %v883, 1.442695
  %v910 = vpow.pop %v909
  %v911 = vmul.f32 %v884, 1.442695
  %v912 = vpow.pop %v911
  %v913 = vmul.f32 %v885, 1.442695
  %v914 = vpow.pop %v913
  %v915 = vmul.f32 %v886, 1.442695
  %v916 = vpow.pop %v915
  %v917 = vmul.f32 %v887, 1.442695
  %v918 = vpow.pop %v917
  %v919 = vmul.f32 %v888, 1.442695
  %v920 = vpow.pop %v919
  %921 = vadd.xlane.f32.xlu0 %v890
  %v922 = vpop.xlane.xlu0 %921
  %923 = vadd.xlane.f32.xlu0 %v892
  %v924 = vpop.xlane.xlu0 %923
  %925 = vadd.xlane.f32.xlu0 %v894
  %v926 = vpop.xlane.xlu0 %925
  %927 = vadd.xlane.f32.xlu0 %v896
  %v928 = vpop.xlane.xlu0 %927
  %929 = vadd.xlane.f32.xlu0 %v898
  %v930 = vpop.xlane.xlu0 %929
  %931 = vadd.xlane.f32.xlu0 %v900
  %v932 = vpop.xlane.xlu0 %931
  %933 = vadd.xlane.f32.xlu0 %v902
  %v934 = vpop.xlane.xlu0 %933
  %935 = vadd.xlane.f32.xlu0 %v904
  %v936 = vpop.xlane.xlu0 %935
  %937 = vadd.xlane.f32.xlu0 %v906
  %v938 = vpop.xlane.xlu0 %937
  %939 = vadd.xlane.f32.xlu0 %v908
  %v940 = vpop.xlane.xlu0 %939
  %941 = vadd.xlane.f32.xlu0 %v910
  %v942 = vpop.xlane.xlu0 %941
  %943 = vadd.xlane.f32.xlu0 %v912
  %v944 = vpop.xlane.xlu0 %943
  %945 = vadd.xlane.f32.xlu0 %v914
  %v946 = vpop.xlane.xlu0 %945
  %947 = vadd.xlane.f32.xlu0 %v916
  %v948 = vpop.xlane.xlu0 %947
  %949 = vadd.xlane.f32.xlu0 %v918
  %v950 = vpop.xlane.xlu0 %949
  %951 = vadd.xlane.f32.xlu0 %v920
  %v952 = vpop.xlane.xlu0 %951
  %v953 = vrcp.pop %v922
  %v954 = vmul.f32 %v890, %v953
  %v955 = vrcp.pop %v924
  %v956 = vmul.f32 %v892, %v955
  %v957 = vrcp.pop %v926
  %v958 = vmul.f32 %v894, %v957
  %v959 = vrcp.pop %v928
  %v960 = vmul.f32 %v896, %v959
  %v961 = vrcp.pop %v930
  %v962 = vmul.f32 %v898, %v961
  %v963 = vrcp.pop %v932
  %v964 = vmul.f32 %v900, %v963
  %v965 = vrcp.pop %v934
  %v966 = vmul.f32 %v902, %v965
  %v967 = vrcp.pop %v936
  %v968 = vmul.f32 %v904, %v967
  %v969 = vrcp.pop %v938
  %v970 = vmul.f32 %v906, %v969
  %v971 = vrcp.pop %v940
  %v972 = vmul.f32 %v908, %v971
  %v973 = vrcp.pop %v942
  %v974 = vmul.f32 %v910, %v973
  %v975 = vrcp.pop %v944
  %v976 = vmul.f32 %v912, %v975
  %v977 = vrcp.pop %v946
  %v978 = vmul.f32 %v914, %v977
  %v979 = vrcp.pop %v948
  %v980 = vmul.f32 %v916, %v979
  %v981 = vrcp.pop %v950
  %v982 = vmul.f32 %v918, %v981
  %v983 = vrcp.pop %v952
  %v984 = vmul.f32 %v920, %v983
  %985 = vmatprep.subr.mxu0 0.0
  %986 = vmatpush1.xpose.msra.mxu0 %v954
  %987 = vmatprep.subr.mxu0 0.0
  %988 = vmatpush1.xpose.msra.mxu0 %v956
  %989 = vmatprep.subr.mxu0 0.0
  %990 = vmatpush1.xpose.msra.mxu0 %v958
  %991 = vmatprep.subr.mxu0 0.0
  %992 = vmatpush1.xpose.msra.mxu0 %v960
  %993 = vmatprep.subr.mxu0 0.0
  %994 = vmatpush1.xpose.msra.mxu0 %v962
  %995 = vmatprep.subr.mxu0 0.0
  %996 = vmatpush1.xpose.msra.mxu0 %v964
  %997 = vmatprep.subr.mxu0 0.0
  %998 = vmatpush1.xpose.msra.mxu0 %v966
  %999 = vmatprep.subr.mxu0 0.0
  %1000 = vmatpush1.xpose.msra.mxu0 %v968
  %1001 = vmatprep.subr.mxu0 0.0
  %1002 = vmatpush1.xpose.msra.mxu0 %v970
  %1003 = vmatprep.subr.mxu0 0.0
  %1004 = vmatpush1.xpose.msra.mxu0 %v972
  %1005 = vmatprep.subr.mxu0 0.0
  %1006 = vmatpush1.xpose.msra.mxu0 %v974
  %1007 = vmatprep.subr.mxu0 0.0
  %1008 = vmatpush1.xpose.msra.mxu0 %v976
  %1009 = vmatprep.subr.mxu0 0.0
  %1010 = vmatpush1.xpose.msra.mxu0 %v978
  %1011 = vmatprep.subr.mxu0 0.0
  %1012 = vmatpush1.xpose.msra.mxu0 %v980
  %1013 = vmatprep.subr.mxu0 0.0
  %1014 = vmatpush1.xpose.msra.mxu0 %v982
  %1015 = vmatprep.subr.mxu0 0.0
  %1016 = vmatpush1.xpose.msra.mxu0 %v984
  %1017 = vmatprep.subr.mxu0 0.0
  %1018 = vmatpush1.xpose.msra.mxu0 0.0
  %1019 = vmatprep.subr.mxu0 0.0
  %1020 = vmatpush1.xpose.msra.mxu0 0.0
  %1021 = vmatprep.subr.mxu0 0.0
  %1022 = vmatpush1.xpose.msra.mxu0 0.0
  %1023 = vmatprep.subr.mxu0 0.0
  %1024 = vmatpush1.xpose.msra.mxu0 0.0
  %1025 = vmatprep.subr.mxu0 0.0
  %1026 = vmatpush1.xpose.msra.mxu0 0.0
  %1027 = vmatprep.subr.mxu0 0.0
  %1028 = vmatpush1.xpose.msra.mxu0 0.0
  %1029 = vmatprep.subr.mxu0 0.0
  %1030 = vmatpush1.xpose.msra.mxu0 0.0
  %1031 = vmatprep.subr.mxu0 0.0
  %1032 = vmatpush1.xpose.msra.mxu0 0.0
  %1033 = vmatprep.subr.mxu0 0.0
  %1034 = vmatpush1.xpose.msra.mxu0 0.0
  %1035 = vmatprep.subr.mxu0 0.0
  %1036 = vmatpush1.xpose.msra.mxu0 0.0
  %1037 = vmatprep.subr.mxu0 0.0
  %1038 = vmatpush1.xpose.msra.mxu0 0.0
  %1039 = vmatprep.subr.mxu0 0.0
  %1040 = vmatpush1.xpose.msra.mxu0 0.0
  %1041 = vmatprep.subr.mxu0 0.0
  %1042 = vmatpush1.xpose.msra.mxu0 0.0
  %1043 = vmatprep.subr.mxu0 0.0
  %1044 = vmatpush1.xpose.msra.mxu0 0.0
  %1045 = vmatprep.subr.mxu0 0.0
  %1046 = vmatpush1.xpose.msra.mxu0 0.0
  %1047 = vmatprep.subr.mxu0 0.0
  %1048 = vmatpush1.xpose.msra.mxu0 0.0
  %1049 = vmatprep.mubr.f32.mxu0 0.0
  %1050 = vmatmul.mubr.f32.gmra.mrb[0].mxu0 %v549
  %v1051 = vpop.f32.mrb[0].mxu0
  %v1052 = vadd.f32 0.0, %v1051
  %v1053 = vpop.f32.mrb[0].mxu0
  %1054 = vdwg.mxu0
  %1055 = vxpose.xlu0.b32.start [1/16] %v514, 128
  %1056 = vxpose.xlu0.b32.cont [2/16] 0.0, 128
  %1057 = vxpose.xlu0.b32.cont [3/16] 0.0, 128
  %1058 = vxpose.xlu0.b32.cont [4/16] 0.0, 128
  %1059 = vxpose.xlu0.b32.cont [5/16] 0.0, 128
  %1060 = vxpose.xlu0.b32.cont [6/16] 0.0, 128
  %1061 = vxpose.xlu0.b32.cont [7/16] 0.0, 128
  %1062 = vxpose.xlu0.b32.cont [8/16] 0.0, 128
  %1063 = vxpose.xlu0.b32.cont [9/16] 0.0, 128
  %1064 = vxpose.xlu0.b32.cont [10/16] 0.0, 128
  %1065 = vxpose.xlu0.b32.cont [11/16] 0.0, 128
  %1066 = vxpose.xlu0.b32.cont [12/16] 0.0, 128
  %1067 = vxpose.xlu0.b32.cont [13/16] 0.0, 128
  %1068 = vxpose.xlu0.b32.cont [14/16] 0.0, 128
  %1069 = vxpose.xlu0.b32.cont [15/16] 0.0, 128
  %1070 = vxpose.xlu0.b32.end [16/16] 0.0, 128
  %v1071 = vpop.trf.xlu0
  %v1072 = vpop.trf.xlu0
  %v1073 = vpop.trf.xlu0
  %v1074 = vpop.trf.xlu0
  %v1075 = vpop.trf.xlu0
  %v1076 = vpop.trf.xlu0
  %v1077 = vpop.trf.xlu0
  %v1078 = vpop.trf.xlu0
  %v1079 = vpop.trf.xlu0
  %v1080 = vpop.trf.xlu0
  %v1081 = vpop.trf.xlu0
  %v1082 = vpop.trf.xlu0
  %v1083 = vpop.trf.xlu0
  %v1084 = vpop.trf.xlu0
  %v1085 = vpop.trf.xlu0
  %v1086 = vpop.trf.xlu0
  %v1088 = vsel %vm599, %v1071, 0
  %v1091 = vsel %vm599, %v1072, 0
  %v1094 = vsel %vm599, %v1073, 0
  %v1097 = vsel %vm599, %v1074, 0
  %v1100 = vsel %vm599, %v1075, 0
  %v1103 = vsel %vm599, %v1076, 0
  %v1106 = vsel %vm599, %v1077, 0
  %v1109 = vsel %vm599, %v1078, 0
  %v1112 = vsel %vm599, %v1079, 0
  %v1115 = vsel %vm599, %v1080, 0
  %v1118 = vsel %vm599, %v1081, 0
  %v1121 = vsel %vm599, %v1082, 0
  %v1124 = vsel %vm599, %v1083, 0
  %v1127 = vsel %vm599, %v1084, 0
  %v1130 = vsel %vm599, %v1085, 0
  %v1133 = vsel %vm599, %v1086, 0
  %1135 = vmatprep.subr.mxu0 0.0
  %1136 = vmatpush1.msra.mxu0 %v534
  %1137 = vmatprep.subr.mxu0 0.0
  %1138 = vmatpush1.msra.mxu0 0.0
  %1139 = vmatprep.subr.mxu0 0.0
  %1140 = vmatpush1.msra.mxu0 0.0
  %1141 = vmatprep.subr.mxu0 0.0
  %1142 = vmatpush1.msra.mxu0 0.0
  %1143 = vmatprep.subr.mxu0 0.0
  %1144 = vmatpush1.msra.mxu0 0.0
  %1145 = vmatprep.subr.mxu0 0.0
  %1146 = vmatpush1.msra.mxu0 0.0
  %1147 = vmatprep.subr.mxu0 0.0
  %1148 = vmatpush1.msra.mxu0 0.0
  %1149 = vmatprep.subr.mxu0 0.0
  %1150 = vmatpush1.msra.mxu0 0.0
  %1151 = vmatprep.subr.mxu0 0.0
  %1152 = vmatpush1.msra.mxu0 0.0
  %1153 = vmatprep.subr.mxu0 0.0
  %1154 = vmatpush1.msra.mxu0 0.0
  %1155 = vmatprep.subr.mxu0 0.0
  %1156 = vmatpush1.msra.mxu0 0.0
  %1157 = vmatprep.subr.mxu0 0.0
  %1158 = vmatpush1.msra.mxu0 0.0
  %1159 = vmatprep.subr.mxu0 0.0
  %1160 = vmatpush1.msra.mxu0 0.0
  %1161 = vmatprep.subr.mxu0 0.0
  %1162 = vmatpush1.msra.mxu0 0.0
  %1163 = vmatprep.subr.mxu0 0.0
  %1164 = vmatpush1.msra.mxu0 0.0
  %1165 = vmatprep.subr.mxu0 0.0
  %1166 = vmatpush1.msra.mxu0 0.0
  %1167 = vmatprep.subr.mxu0 0.0
  %1168 = vmatpush1.msra.mxu0 0.0
  %1169 = vmatprep.subr.mxu0 0.0
  %1170 = vmatpush1.msra.mxu0 0.0
  %1171 = vmatprep.subr.mxu0 0.0
  %1172 = vmatpush1.msra.mxu0 0.0
  %1173 = vmatprep.subr.mxu0 0.0
  %1174 = vmatpush1.msra.mxu0 0.0
  %1175 = vmatprep.subr.mxu0 0.0
  %1176 = vmatpush1.msra.mxu0 0.0
  %1177 = vmatprep.subr.mxu0 0.0
  %1178 = vmatpush1.msra.mxu0 0.0
  %1179 = vmatprep.subr.mxu0 0.0
  %1180 = vmatpush1.msra.mxu0 0.0
  %1181 = vmatprep.subr.mxu0 0.0
  %1182 = vmatpush1.msra.mxu0 0.0
  %1183 = vmatprep.subr.mxu0 0.0
  %1184 = vmatpush1.msra.mxu0 0.0
  %1185 = vmatprep.subr.mxu0 0.0
  %1186 = vmatpush1.msra.mxu0 0.0
  %1187 = vmatprep.subr.mxu0 0.0
  %1188 = vmatpush1.msra.mxu0 0.0
  %1189 = vmatprep.subr.mxu0 0.0
  %1190 = vmatpush1.msra.mxu0 0.0
  %1191 = vmatprep.subr.mxu0 0.0
  %1192 = vmatpush1.msra.mxu0 0.0
  %1193 = vmatprep.subr.mxu0 0.0
  %1194 = vmatpush1.msra.mxu0 0.0
  %1195 = vmatprep.subr.mxu0 0.0
  %1196 = vmatpush1.msra.mxu0 0.0
  %1197 = vmatprep.subr.mxu0 0.0
  %1198 = vmatpush1.msra.mxu0 0.0
  %1199 = vmatprep.mubr.f32.mxu0 0.0
  %1200 = vmatmul.mubr.f32.gmra.mrb[0].mxu0 %v1088
  %v1201 = vpop.f32.mrb[0].mxu0
  %v1202 = vadd.f32 0.0, %v1201
  %v1203 = vpop.f32.mrb[0].mxu0
  %1204 = vmatprep.mubr.f32.mxu0 0.0
  %1205 = vmatmul.mubr.f32.gmra.mrb[0].mxu0 %v1091
  %v1206 = vpop.f32.mrb[0].mxu0
  %v1207 = vadd.f32 0.0, %v1206
  %v1208 = vpop.f32.mrb[0].mxu0
  %1209 = vmatprep.mubr.f32.mxu0 0.0
  %1210 = vmatmul.mubr.f32.gmra.mrb[0].mxu0 %v1094
  %v1211 = vpop.f32.mrb[0].mxu0
  %v1212 = vadd.f32 0.0, %v1211
  %v1213 = vpop.f32.mrb[0].mxu0
  %1214 = vmatprep.mubr.f32.mxu0 0.0
  %1215 = vmatmul.mubr.f32.gmra.mrb[0].mxu0 %v1097
  %v1216 = vpop.f32.mrb[0].mxu0
  %v1217 = vadd.f32 0.0, %v1216
  %v1218 = vpop.f32.mrb[0].mxu0
  %1219 = vmatprep.mubr.f32.mxu0 0.0
  %1220 = vmatmul.mubr.f32.gmra.mrb[0].mxu0 %v1100
  %v1221 = vpop.f32.mrb[0].mxu0
  %v1222 = vadd.f32 0.0, %v1221
  %v1223 = vpop.f32.mrb[0].mxu0
  %1224 = vmatprep.mubr.f32.mxu0 0.0
  %1225 = vmatmul.mubr.f32.gmra.mrb[0].mxu0 %v1103
  %v1226 = vpop.f32.mrb[0].mxu0
  %v1227 = vadd.f32 0.0, %v1226
  %v1228 = vpop.f32.mrb[0].mxu0
  %1229 = vmatprep.mubr.f32.mxu0 0.0
  %1230 = vmatmul.mubr.f32.gmra.mrb[0].mxu0 %v1106
  %v1231 = vpop.f32.mrb[0].mxu0
  %v1232 = vadd.f32 0.0, %v1231
  %v1233 = vpop.f32.mrb[0].mxu0
  %1234 = vmatprep.mubr.f32.mxu0 0.0
  %1235 = vmatmul.mubr.f32.gmra.mrb[0].mxu0 %v1109
  %v1236 = vpop.f32.mrb[0].mxu0
  %v1237 = vadd.f32 0.0, %v1236
  %v1238 = vpop.f32.mrb[0].mxu0
  %1239 = vmatprep.mubr.f32.mxu0 0.0
  %1240 = vmatmul.mubr.f32.gmra.mrb[0].mxu0 %v1112
  %v1241 = vpop.f32.mrb[0].mxu0
  %v1242 = vadd.f32 0.0, %v1241
  %v1243 = vpop.f32.mrb[0].mxu0
  %1244 = vmatprep.mubr.f32.mxu0 0.0
  %1245 = vmatmul.mubr.f32.gmra.mrb[0].mxu0 %v1115
  %v1246 = vpop.f32.mrb[0].mxu0
  %v1247 = vadd.f32 0.0, %v1246
  %v1248 = vpop.f32.mrb[0].mxu0
  %1249 = vmatprep.mubr.f32.mxu0 0.0
  %1250 = vmatmul.mubr.f32.gmra.mrb[0].mxu0 %v1118
  %v1251 = vpop.f32.mrb[0].mxu0
  %v1252 = vadd.f32 0.0, %v1251
  %v1253 = vpop.f32.mrb[0].mxu0
  %1254 = vmatprep.mubr.f32.mxu0 0.0
  %1255 = vmatmul.mubr.f32.gmra.mrb[0].mxu0 %v1121
  %v1256 = vpop.f32.mrb[0].mxu0
  %v1257 = vadd.f32 0.0, %v1256
  %v1258 = vpop.f32.mrb[0].mxu0
  %1259 = vmatprep.mubr.f32.mxu0 0.0
  %1260 = vmatmul.mubr.f32.gmra.mrb[0].mxu0 %v1124
  %v1261 = vpop.f32.mrb[0].mxu0
  %v1262 = vadd.f32 0.0, %v1261
  %v1263 = vpop.f32.mrb[0].mxu0
  %1264 = vmatprep.mubr.f32.mxu0 0.0
  %1265 = vmatmul.mubr.f32.gmra.mrb[0].mxu0 %v1127
  %v1266 = vpop.f32.mrb[0].mxu0
  %v1267 = vadd.f32 0.0, %v1266
  %v1268 = vpop.f32.mrb[0].mxu0
  %1269 = vmatprep.mubr.f32.mxu0 0.0
  %1270 = vmatmul.mubr.f32.gmra.mrb[0].mxu0 %v1130
  %v1271 = vpop.f32.mrb[0].mxu0
  %v1272 = vadd.f32 0.0, %v1271
  %v1273 = vpop.f32.mrb[0].mxu0
  %1274 = vmatprep.mubr.f32.mxu0 0.0
  %1275 = vmatmul.mubr.f32.gmra.mrb[0].mxu0 %v1133
  %v1276 = vpop.f32.mrb[0].mxu0
  %v1277 = vadd.f32 0.0, %v1276
  %v1278 = vpop.f32.mrb[0].mxu0
  %1279 = vdwg.mxu0
  %v1280 = vmul.f32 %v1202, 0.5
  %v1281 = vmul.f32 %v1207, 0.5
  %v1282 = vmul.f32 %v1212, 0.5
  %v1283 = vmul.f32 %v1217, 0.5
  %v1284 = vmul.f32 %v1222, 0.5
  %v1285 = vmul.f32 %v1227, 0.5
  %v1286 = vmul.f32 %v1232, 0.5
  %v1287 = vmul.f32 %v1237, 0.5
  %v1288 = vmul.f32 %v1242, 0.5
  %v1289 = vmul.f32 %v1247, 0.5
  %v1290 = vmul.f32 %v1252, 0.5
  %v1291 = vmul.f32 %v1257, 0.5
  %v1292 = vmul.f32 %v1262, 0.5
  %v1293 = vmul.f32 %v1267, 0.5
  %v1294 = vmul.f32 %v1272, 0.5
  %v1295 = vmul.f32 %v1277, 0.5
  %v1296 = vsel %vm809, %v1280, -1e+09
  %v1297 = vsel %vm810, %v1281, -1e+09
  %v1298 = vsel %vm811, %v1282, -1e+09
  %v1299 = vsel %vm812, %v1283, -1e+09
  %v1300 = vsel %vm813, %v1284, -1e+09
  %v1301 = vsel %vm814, %v1285, -1e+09
  %v1302 = vsel %vm815, %v1286, -1e+09
  %v1303 = vsel %vm816, %v1287, -1e+09
  %v1304 = vsel %vm817, %v1288, -1e+09
  %v1305 = vsel %vm818, %v1289, -1e+09
  %v1306 = vsel %vm819, %v1290, -1e+09
  %v1307 = vsel %vm820, %v1291, -1e+09
  %v1308 = vsel %vm821, %v1292, -1e+09
  %v1309 = vsel %vm822, %v1293, -1e+09
  %v1310 = vsel %vm823, %v1294, -1e+09
  %v1311 = vsel %vm824, %v1295, -1e+09
  %1312 = vmax.xlane.f32.xlu0 %v1296
  %v1313 = vpop.xlane.xlu0 %1312
  %1314 = vmax.xlane.f32.xlu0 %v1297
  %v1315 = vpop.xlane.xlu0 %1314
  %1316 = vmax.xlane.f32.xlu0 %v1298
  %v1317 = vpop.xlane.xlu0 %1316
  %1318 = vmax.xlane.f32.xlu0 %v1299
  %v1319 = vpop.xlane.xlu0 %1318
  %1320 = vmax.xlane.f32.xlu0 %v1300
  %v1321 = vpop.xlane.xlu0 %1320
  %1322 = vmax.xlane.f32.xlu0 %v1301
  %v1323 = vpop.xlane.xlu0 %1322
  %1324 = vmax.xlane.f32.xlu0 %v1302
  %v1325 = vpop.xlane.xlu0 %1324
  %1326 = vmax.xlane.f32.xlu0 %v1303
  %v1327 = vpop.xlane.xlu0 %1326
  %1328 = vmax.xlane.f32.xlu0 %v1304
  %v1329 = vpop.xlane.xlu0 %1328
  %1330 = vmax.xlane.f32.xlu0 %v1305
  %v1331 = vpop.xlane.xlu0 %1330
  %1332 = vmax.xlane.f32.xlu0 %v1306
  %v1333 = vpop.xlane.xlu0 %1332
  %1334 = vmax.xlane.f32.xlu0 %v1307
  %v1335 = vpop.xlane.xlu0 %1334
  %1336 = vmax.xlane.f32.xlu0 %v1308
  %v1337 = vpop.xlane.xlu0 %1336
  %1338 = vmax.xlane.f32.xlu0 %v1309
  %v1339 = vpop.xlane.xlu0 %1338
  %1340 = vmax.xlane.f32.xlu0 %v1310
  %v1341 = vpop.xlane.xlu0 %1340
  %1342 = vmax.xlane.f32.xlu0 %v1311
  %v1343 = vpop.xlane.xlu0 %1342
  %v1344 = vsub.f32 %v1296, %v1313
  %v1345 = vsub.f32 %v1297, %v1315
  %v1346 = vsub.f32 %v1298, %v1317
  %v1347 = vsub.f32 %v1299, %v1319
  %v1348 = vsub.f32 %v1300, %v1321
  %v1349 = vsub.f32 %v1301, %v1323
  %v1350 = vsub.f32 %v1302, %v1325
  %v1351 = vsub.f32 %v1303, %v1327
  %v1352 = vsub.f32 %v1304, %v1329
  %v1353 = vsub.f32 %v1305, %v1331
  %v1354 = vsub.f32 %v1306, %v1333
  %v1355 = vsub.f32 %v1307, %v1335
  %v1356 = vsub.f32 %v1308, %v1337
  %v1357 = vsub.f32 %v1309, %v1339
  %v1358 = vsub.f32 %v1310, %v1341
  %v1359 = vsub.f32 %v1311, %v1343
  %v1360 = vmul.f32 %v1344, 1.442695
  %v1361 = vpow.pop %v1360
  %v1362 = vmul.f32 %v1345, 1.442695
  %v1363 = vpow.pop %v1362
  %v1364 = vmul.f32 %v1346, 1.442695
  %v1365 = vpow.pop %v1364
  %v1366 = vmul.f32 %v1347, 1.442695
  %v1367 = vpow.pop %v1366
  %v1368 = vmul.f32 %v1348, 1.442695
  %v1369 = vpow.pop %v1368
  %v1370 = vmul.f32 %v1349, 1.442695
  %v1371 = vpow.pop %v1370
  %v1372 = vmul.f32 %v1350, 1.442695
  %v1373 = vpow.pop %v1372
  %v1374 = vmul.f32 %v1351, 1.442695
  %v1375 = vpow.pop %v1374
  %v1376 = vmul.f32 %v1352, 1.442695
  %v1377 = vpow.pop %v1376
  %v1378 = vmul.f32 %v1353, 1.442695
  %v1379 = vpow.pop %v1378
  %v1380 = vmul.f32 %v1354, 1.442695
  %v1381 = vpow.pop %v1380
  %v1382 = vmul.f32 %v1355, 1.442695
  %v1383 = vpow.pop %v1382
  %v1384 = vmul.f32 %v1356, 1.442695
  %v1385 = vpow.pop %v1384
  %v1386 = vmul.f32 %v1357, 1.442695
  %v1387 = vpow.pop %v1386
  %v1388 = vmul.f32 %v1358, 1.442695
  %v1389 = vpow.pop %v1388
  %v1390 = vmul.f32 %v1359, 1.442695
  %v1391 = vpow.pop %v1390
  %1392 = vadd.xlane.f32.xlu0 %v1361
  %v1393 = vpop.xlane.xlu0 %1392
  %1394 = vadd.xlane.f32.xlu0 %v1363
  %v1395 = vpop.xlane.xlu0 %1394
  %1396 = vadd.xlane.f32.xlu0 %v1365
  %v1397 = vpop.xlane.xlu0 %1396
  %1398 = vadd.xlane.f32.xlu0 %v1367
  %v1399 = vpop.xlane.xlu0 %1398
  %1400 = vadd.xlane.f32.xlu0 %v1369
  %v1401 = vpop.xlane.xlu0 %1400
  %1402 = vadd.xlane.f32.xlu0 %v1371
  %v1403 = vpop.xlane.xlu0 %1402
  %1404 = vadd.xlane.f32.xlu0 %v1373
  %v1405 = vpop.xlane.xlu0 %1404
  %1406 = vadd.xlane.f32.xlu0 %v1375
  %v1407 = vpop.xlane.xlu0 %1406
  %1408 = vadd.xlane.f32.xlu0 %v1377
  %v1409 = vpop.xlane.xlu0 %1408
  %1410 = vadd.xlane.f32.xlu0 %v1379
  %v1411 = vpop.xlane.xlu0 %1410
  %1412 = vadd.xlane.f32.xlu0 %v1381
  %v1413 = vpop.xlane.xlu0 %1412
  %1414 = vadd.xlane.f32.xlu0 %v1383
  %v1415 = vpop.xlane.xlu0 %1414
  %1416 = vadd.xlane.f32.xlu0 %v1385
  %v1417 = vpop.xlane.xlu0 %1416
  %1418 = vadd.xlane.f32.xlu0 %v1387
  %v1419 = vpop.xlane.xlu0 %1418
  %1420 = vadd.xlane.f32.xlu0 %v1389
  %v1421 = vpop.xlane.xlu0 %1420
  %1422 = vadd.xlane.f32.xlu0 %v1391
  %v1423 = vpop.xlane.xlu0 %1422
  %v1424 = vrcp.pop %v1393
  %v1425 = vmul.f32 %v1361, %v1424
  %v1426 = vrcp.pop %v1395
  %v1427 = vmul.f32 %v1363, %v1426
  %v1428 = vrcp.pop %v1397
  %v1429 = vmul.f32 %v1365, %v1428
  %v1430 = vrcp.pop %v1399
  %v1431 = vmul.f32 %v1367, %v1430
  %v1432 = vrcp.pop %v1401
  %v1433 = vmul.f32 %v1369, %v1432
  %v1434 = vrcp.pop %v1403
  %v1435 = vmul.f32 %v1371, %v1434
  %v1436 = vrcp.pop %v1405
  %v1437 = vmul.f32 %v1373, %v1436
  %v1438 = vrcp.pop %v1407
  %v1439 = vmul.f32 %v1375, %v1438
  %v1440 = vrcp.pop %v1409
  %v1441 = vmul.f32 %v1377, %v1440
  %v1442 = vrcp.pop %v1411
  %v1443 = vmul.f32 %v1379, %v1442
  %v1444 = vrcp.pop %v1413
  %v1445 = vmul.f32 %v1381, %v1444
  %v1446 = vrcp.pop %v1415
  %v1447 = vmul.f32 %v1383, %v1446
  %v1448 = vrcp.pop %v1417
  %v1449 = vmul.f32 %v1385, %v1448
  %v1450 = vrcp.pop %v1419
  %v1451 = vmul.f32 %v1387, %v1450
  %v1452 = vrcp.pop %v1421
  %v1453 = vmul.f32 %v1389, %v1452
  %v1454 = vrcp.pop %v1423
  %v1455 = vmul.f32 %v1391, %v1454
  %1456 = vmatprep.subr.mxu0 0.0
  %1457 = vmatpush1.xpose.msra.mxu0 %v1425
  %1458 = vmatprep.subr.mxu0 0.0
  %1459 = vmatpush1.xpose.msra.mxu0 %v1427
  %1460 = vmatprep.subr.mxu0 0.0
  %1461 = vmatpush1.xpose.msra.mxu0 %v1429
  %1462 = vmatprep.subr.mxu0 0.0
  %1463 = vmatpush1.xpose.msra.mxu0 %v1431
  %1464 = vmatprep.subr.mxu0 0.0
  %1465 = vmatpush1.xpose.msra.mxu0 %v1433
  %1466 = vmatprep.subr.mxu0 0.0
  %1467 = vmatpush1.xpose.msra.mxu0 %v1435
  %1468 = vmatprep.subr.mxu0 0.0
  %1469 = vmatpush1.xpose.msra.mxu0 %v1437
  %1470 = vmatprep.subr.mxu0 0.0
  %1471 = vmatpush1.xpose.msra.mxu0 %v1439
  %1472 = vmatprep.subr.mxu0 0.0
  %1473 = vmatpush1.xpose.msra.mxu0 %v1441
  %1474 = vmatprep.subr.mxu0 0.0
  %1475 = vmatpush1.xpose.msra.mxu0 %v1443
  %1476 = vmatprep.subr.mxu0 0.0
  %1477 = vmatpush1.xpose.msra.mxu0 %v1445
  %1478 = vmatprep.subr.mxu0 0.0
  %1479 = vmatpush1.xpose.msra.mxu0 %v1447
  %1480 = vmatprep.subr.mxu0 0.0
  %1481 = vmatpush1.xpose.msra.mxu0 %v1449
  %1482 = vmatprep.subr.mxu0 0.0
  %1483 = vmatpush1.xpose.msra.mxu0 %v1451
  %1484 = vmatprep.subr.mxu0 0.0
  %1485 = vmatpush1.xpose.msra.mxu0 %v1453
  %1486 = vmatprep.subr.mxu0 0.0
  %1487 = vmatpush1.xpose.msra.mxu0 %v1455
  %1488 = vmatprep.subr.mxu0 0.0
  %1489 = vmatpush1.xpose.msra.mxu0 0.0
  %1490 = vmatprep.subr.mxu0 0.0
  %1491 = vmatpush1.xpose.msra.mxu0 0.0
  %1492 = vmatprep.subr.mxu0 0.0
  %1493 = vmatpush1.xpose.msra.mxu0 0.0
  %1494 = vmatprep.subr.mxu0 0.0
  %1495 = vmatpush1.xpose.msra.mxu0 0.0
  %1496 = vmatprep.subr.mxu0 0.0
  %1497 = vmatpush1.xpose.msra.mxu0 0.0
  %1498 = vmatprep.subr.mxu0 0.0
  %1499 = vmatpush1.xpose.msra.mxu0 0.0
  %1500 = vmatprep.subr.mxu0 0.0
  %1501 = vmatpush1.xpose.msra.mxu0 0.0
  %1502 = vmatprep.subr.mxu0 0.0
  %1503 = vmatpush1.xpose.msra.mxu0 0.0
  %1504 = vmatprep.subr.mxu0 0.0
  %1505 = vmatpush1.xpose.msra.mxu0 0.0
  %1506 = vmatprep.subr.mxu0 0.0
  %1507 = vmatpush1.xpose.msra.mxu0 0.0
  %1508 = vmatprep.subr.mxu0 0.0
  %1509 = vmatpush1.xpose.msra.mxu0 0.0
  %1510 = vmatprep.subr.mxu0 0.0
  %1511 = vmatpush1.xpose.msra.mxu0 0.0
  %1512 = vmatprep.subr.mxu0 0.0
  %1513 = vmatpush1.xpose.msra.mxu0 0.0
  %1514 = vmatprep.subr.mxu0 0.0
  %1515 = vmatpush1.xpose.msra.mxu0 0.0
  %1516 = vmatprep.subr.mxu0 0.0
  %1517 = vmatpush1.xpose.msra.mxu0 0.0
  %1518 = vmatprep.subr.mxu0 0.0
  %1519 = vmatpush1.xpose.msra.mxu0 0.0
  %1520 = vmatprep.mubr.f32.mxu0 0.0
  %1521 = vmatmul.mubr.f32.gmra.mrb[0].mxu0 %v554
  %v1522 = vpop.f32.mrb[0].mxu0
  %v1523 = vadd.f32 0.0, %v1522
  %v1524 = vpop.f32.mrb[0].mxu0
  %1525 = vdwg.mxu0
  %1526 = vxpose.xlu0.b32.start [1/16] %v519, 128
  %1527 = vxpose.xlu0.b32.cont [2/16] 0.0, 128
  %1528 = vxpose.xlu0.b32.cont [3/16] 0.0, 128
  %1529 = vxpose.xlu0.b32.cont [4/16] 0.0, 128
  %1530 = vxpose.xlu0.b32.cont [5/16] 0.0, 128
  %1531 = vxpose.xlu0.b32.cont [6/16] 0.0, 128
  %1532 = vxpose.xlu0.b32.cont [7/16] 0.0, 128
  %1533 = vxpose.xlu0.b32.cont [8/16] 0.0, 128
  %1534 = vxpose.xlu0.b32.cont [9/16] 0.0, 128
  %1535 = vxpose.xlu0.b32.cont [10/16] 0.0, 128
  %1536 = vxpose.xlu0.b32.cont [11/16] 0.0, 128
  %1537 = vxpose.xlu0.b32.cont [12/16] 0.0, 128
  %1538 = vxpose.xlu0.b32.cont [13/16] 0.0, 128
  %1539 = vxpose.xlu0.b32.cont [14/16] 0.0, 128
  %1540 = vxpose.xlu0.b32.cont [15/16] 0.0, 128
  %1541 = vxpose.xlu0.b32.end [16/16] 0.0, 128
  %v1542 = vpop.trf.xlu0
  %v1543 = vpop.trf.xlu0
  %v1544 = vpop.trf.xlu0
  %v1545 = vpop.trf.xlu0
  %v1546 = vpop.trf.xlu0
  %v1547 = vpop.trf.xlu0
  %v1548 = vpop.trf.xlu0
  %v1549 = vpop.trf.xlu0
  %v1550 = vpop.trf.xlu0
  %v1551 = vpop.trf.xlu0
  %v1552 = vpop.trf.xlu0
  %v1553 = vpop.trf.xlu0
  %v1554 = vpop.trf.xlu0
  %v1555 = vpop.trf.xlu0
  %v1556 = vpop.trf.xlu0
  %v1557 = vpop.trf.xlu0
  %v1559 = vsel %vm599, %v1542, 0
  %v1562 = vsel %vm599, %v1543, 0
  %v1565 = vsel %vm599, %v1544, 0
  %v1568 = vsel %vm599, %v1545, 0
  %v1571 = vsel %vm599, %v1546, 0
  %v1574 = vsel %vm599, %v1547, 0
  %v1577 = vsel %vm599, %v1548, 0
  %v1580 = vsel %vm599, %v1549, 0
  %v1583 = vsel %vm599, %v1550, 0
  %v1586 = vsel %vm599, %v1551, 0
  %v1589 = vsel %vm599, %v1552, 0
  %v1592 = vsel %vm599, %v1553, 0
  %v1595 = vsel %vm599, %v1554, 0
  %v1598 = vsel %vm599, %v1555, 0
  %v1601 = vsel %vm599, %v1556, 0
  %v1604 = vsel %vm599, %v1557, 0
  %1606 = vmatprep.subr.mxu0 0.0
  %1607 = vmatpush1.msra.mxu0 %v539
  %1608 = vmatprep.subr.mxu0 0.0
  %1609 = vmatpush1.msra.mxu0 0.0
  %1610 = vmatprep.subr.mxu0 0.0
  %1611 = vmatpush1.msra.mxu0 0.0
  %1612 = vmatprep.subr.mxu0 0.0
  %1613 = vmatpush1.msra.mxu0 0.0
  %1614 = vmatprep.subr.mxu0 0.0
  %1615 = vmatpush1.msra.mxu0 0.0
  %1616 = vmatprep.subr.mxu0 0.0
  %1617 = vmatpush1.msra.mxu0 0.0
  %1618 = vmatprep.subr.mxu0 0.0
  %1619 = vmatpush1.msra.mxu0 0.0
  %1620 = vmatprep.subr.mxu0 0.0
  %1621 = vmatpush1.msra.mxu0 0.0
  %1622 = vmatprep.subr.mxu0 0.0
  %1623 = vmatpush1.msra.mxu0 0.0
  %1624 = vmatprep.subr.mxu0 0.0
  %1625 = vmatpush1.msra.mxu0 0.0
  %1626 = vmatprep.subr.mxu0 0.0
  %1627 = vmatpush1.msra.mxu0 0.0
  %1628 = vmatprep.subr.mxu0 0.0
  %1629 = vmatpush1.msra.mxu0 0.0
  %1630 = vmatprep.subr.mxu0 0.0
  %1631 = vmatpush1.msra.mxu0 0.0
  %1632 = vmatprep.subr.mxu0 0.0
  %1633 = vmatpush1.msra.mxu0 0.0
  %1634 = vmatprep.subr.mxu0 0.0
  %1635 = vmatpush1.msra.mxu0 0.0
  %1636 = vmatprep.subr.mxu0 0.0
  %1637 = vmatpush1.msra.mxu0 0.0
  %1638 = vmatprep.subr.mxu0 0.0
  %1639 = vmatpush1.msra.mxu0 0.0
  %1640 = vmatprep.subr.mxu0 0.0
  %1641 = vmatpush1.msra.mxu0 0.0
  %1642 = vmatprep.subr.mxu0 0.0
  %1643 = vmatpush1.msra.mxu0 0.0
  %1644 = vmatprep.subr.mxu0 0.0
  %1645 = vmatpush1.msra.mxu0 0.0
  %1646 = vmatprep.subr.mxu0 0.0
  %1647 = vmatpush1.msra.mxu0 0.0
  %1648 = vmatprep.subr.mxu0 0.0
  %1649 = vmatpush1.msra.mxu0 0.0
  %1650 = vmatprep.subr.mxu0 0.0
  %1651 = vmatpush1.msra.mxu0 0.0
  %1652 = vmatprep.subr.mxu0 0.0
  %1653 = vmatpush1.msra.mxu0 0.0
  %1654 = vmatprep.subr.mxu0 0.0
  %1655 = vmatpush1.msra.mxu0 0.0
  %1656 = vmatprep.subr.mxu0 0.0
  %1657 = vmatpush1.msra.mxu0 0.0
  %1658 = vmatprep.subr.mxu0 0.0
  %1659 = vmatpush1.msra.mxu0 0.0
  %1660 = vmatprep.subr.mxu0 0.0
  %1661 = vmatpush1.msra.mxu0 0.0
  %1662 = vmatprep.subr.mxu0 0.0
  %1663 = vmatpush1.msra.mxu0 0.0
  %1664 = vmatprep.subr.mxu0 0.0
  %1665 = vmatpush1.msra.mxu0 0.0
  %1666 = vmatprep.subr.mxu0 0.0
  %1667 = vmatpush1.msra.mxu0 0.0
  %1668 = vmatprep.subr.mxu0 0.0
  %1669 = vmatpush1.msra.mxu0 0.0
  %1670 = vmatprep.mubr.f32.mxu0 0.0
  %1671 = vmatmul.mubr.f32.gmra.mrb[0].mxu0 %v1559
  %v1672 = vpop.f32.mrb[0].mxu0
  %v1673 = vadd.f32 0.0, %v1672
  %v1674 = vpop.f32.mrb[0].mxu0
  %1675 = vmatprep.mubr.f32.mxu0 0.0
  %1676 = vmatmul.mubr.f32.gmra.mrb[0].mxu0 %v1562
  %v1677 = vpop.f32.mrb[0].mxu0
  %v1678 = vadd.f32 0.0, %v1677
  %v1679 = vpop.f32.mrb[0].mxu0
  %1680 = vmatprep.mubr.f32.mxu0 0.0
  %1681 = vmatmul.mubr.f32.gmra.mrb[0].mxu0 %v1565
  %v1682 = vpop.f32.mrb[0].mxu0
  %v1683 = vadd.f32 0.0, %v1682
  %v1684 = vpop.f32.mrb[0].mxu0
  %1685 = vmatprep.mubr.f32.mxu0 0.0
  %1686 = vmatmul.mubr.f32.gmra.mrb[0].mxu0 %v1568
  %v1687 = vpop.f32.mrb[0].mxu0
  %v1688 = vadd.f32 0.0, %v1687
  %v1689 = vpop.f32.mrb[0].mxu0
  %1690 = vmatprep.mubr.f32.mxu0 0.0
  %1691 = vmatmul.mubr.f32.gmra.mrb[0].mxu0 %v1571
  %v1692 = vpop.f32.mrb[0].mxu0
  %v1693 = vadd.f32 0.0, %v1692
  %v1694 = vpop.f32.mrb[0].mxu0
  %1695 = vmatprep.mubr.f32.mxu0 0.0
  %1696 = vmatmul.mubr.f32.gmra.mrb[0].mxu0 %v1574
  %v1697 = vpop.f32.mrb[0].mxu0
  %v1698 = vadd.f32 0.0, %v1697
  %v1699 = vpop.f32.mrb[0].mxu0
  %1700 = vmatprep.mubr.f32.mxu0 0.0
  %1701 = vmatmul.mubr.f32.gmra.mrb[0].mxu0 %v1577
  %v1702 = vpop.f32.mrb[0].mxu0
  %v1703 = vadd.f32 0.0, %v1702
  %v1704 = vpop.f32.mrb[0].mxu0
  %1705 = vmatprep.mubr.f32.mxu0 0.0
  %1706 = vmatmul.mubr.f32.gmra.mrb[0].mxu0 %v1580
  %v1707 = vpop.f32.mrb[0].mxu0
  %v1708 = vadd.f32 0.0, %v1707
  %v1709 = vpop.f32.mrb[0].mxu0
  %1710 = vmatprep.mubr.f32.mxu0 0.0
  %1711 = vmatmul.mubr.f32.gmra.mrb[0].mxu0 %v1583
  %v1712 = vpop.f32.mrb[0].mxu0
  %v1713 = vadd.f32 0.0, %v1712
  %v1714 = vpop.f32.mrb[0].mxu0
  %1715 = vmatprep.mubr.f32.mxu0 0.0
  %1716 = vmatmul.mubr.f32.gmra.mrb[0].mxu0 %v1586
  %v1717 = vpop.f32.mrb[0].mxu0
  %v1718 = vadd.f32 0.0, %v1717
  %v1719 = vpop.f32.mrb[0].mxu0
  %1720 = vmatprep.mubr.f32.mxu0 0.0
  %1721 = vmatmul.mubr.f32.gmra.mrb[0].mxu0 %v1589
  %v1722 = vpop.f32.mrb[0].mxu0
  %v1723 = vadd.f32 0.0, %v1722
  %v1724 = vpop.f32.mrb[0].mxu0
  %1725 = vmatprep.mubr.f32.mxu0 0.0
  %1726 = vmatmul.mubr.f32.gmra.mrb[0].mxu0 %v1592
  %v1727 = vpop.f32.mrb[0].mxu0
  %v1728 = vadd.f32 0.0, %v1727
  %v1729 = vpop.f32.mrb[0].mxu0
  %1730 = vmatprep.mubr.f32.mxu0 0.0
  %1731 = vmatmul.mubr.f32.gmra.mrb[0].mxu0 %v1595
  %v1732 = vpop.f32.mrb[0].mxu0
  %v1733 = vadd.f32 0.0, %v1732
  %v1734 = vpop.f32.mrb[0].mxu0
  %1735 = vmatprep.mubr.f32.mxu0 0.0
  %1736 = vmatmul.mubr.f32.gmra.mrb[0].mxu0 %v1598
  %v1737 = vpop.f32.mrb[0].mxu0
  %v1738 = vadd.f32 0.0, %v1737
  %v1739 = vpop.f32.mrb[0].mxu0
  %1740 = vmatprep.mubr.f32.mxu0 0.0
  %1741 = vmatmul.mubr.f32.gmra.mrb[0].mxu0 %v1601
  %v1742 = vpop.f32.mrb[0].mxu0
  %v1743 = vadd.f32 0.0, %v1742
  %v1744 = vpop.f32.mrb[0].mxu0
  %1745 = vmatprep.mubr.f32.mxu0 0.0
  %1746 = vmatmul.mubr.f32.gmra.mrb[0].mxu0 %v1604
  %v1747 = vpop.f32.mrb[0].mxu0
  %v1748 = vadd.f32 0.0, %v1747
  %v1749 = vpop.f32.mrb[0].mxu0
  %1750 = vdwg.mxu0
  %v1751 = vmul.f32 %v1673, 0.5
  %v1752 = vmul.f32 %v1678, 0.5
  %v1753 = vmul.f32 %v1683, 0.5
  %v1754 = vmul.f32 %v1688, 0.5
  %v1755 = vmul.f32 %v1693, 0.5
  %v1756 = vmul.f32 %v1698, 0.5
  %v1757 = vmul.f32 %v1703, 0.5
  %v1758 = vmul.f32 %v1708, 0.5
  %v1759 = vmul.f32 %v1713, 0.5
  %v1760 = vmul.f32 %v1718, 0.5
  %v1761 = vmul.f32 %v1723, 0.5
  %v1762 = vmul.f32 %v1728, 0.5
  %v1763 = vmul.f32 %v1733, 0.5
  %v1764 = vmul.f32 %v1738, 0.5
  %v1765 = vmul.f32 %v1743, 0.5
  %v1766 = vmul.f32 %v1748, 0.5
  %v1767 = vsel %vm809, %v1751, -1e+09
  %v1768 = vsel %vm810, %v1752, -1e+09
  %v1769 = vsel %vm811, %v1753, -1e+09
  %v1770 = vsel %vm812, %v1754, -1e+09
  %v1771 = vsel %vm813, %v1755, -1e+09
  %v1772 = vsel %vm814, %v1756, -1e+09
  %v1773 = vsel %vm815, %v1757, -1e+09
  %v1774 = vsel %vm816, %v1758, -1e+09
  %v1775 = vsel %vm817, %v1759, -1e+09
  %v1776 = vsel %vm818, %v1760, -1e+09
  %v1777 = vsel %vm819, %v1761, -1e+09
  %v1778 = vsel %vm820, %v1762, -1e+09
  %v1779 = vsel %vm821, %v1763, -1e+09
  %v1780 = vsel %vm822, %v1764, -1e+09
  %v1781 = vsel %vm823, %v1765, -1e+09
  %v1782 = vsel %vm824, %v1766, -1e+09
  %1783 = vmax.xlane.f32.xlu0 %v1767
  %v1784 = vpop.xlane.xlu0 %1783
  %1785 = vmax.xlane.f32.xlu0 %v1768
  %v1786 = vpop.xlane.xlu0 %1785
  %1787 = vmax.xlane.f32.xlu0 %v1769
  %v1788 = vpop.xlane.xlu0 %1787
  %1789 = vmax.xlane.f32.xlu0 %v1770
  %v1790 = vpop.xlane.xlu0 %1789
  %1791 = vmax.xlane.f32.xlu0 %v1771
  %v1792 = vpop.xlane.xlu0 %1791
  %1793 = vmax.xlane.f32.xlu0 %v1772
  %v1794 = vpop.xlane.xlu0 %1793
  %1795 = vmax.xlane.f32.xlu0 %v1773
  %v1796 = vpop.xlane.xlu0 %1795
  %1797 = vmax.xlane.f32.xlu0 %v1774
  %v1798 = vpop.xlane.xlu0 %1797
  %1799 = vmax.xlane.f32.xlu0 %v1775
  %v1800 = vpop.xlane.xlu0 %1799
  %1801 = vmax.xlane.f32.xlu0 %v1776
  %v1802 = vpop.xlane.xlu0 %1801
  %1803 = vmax.xlane.f32.xlu0 %v1777
  %v1804 = vpop.xlane.xlu0 %1803
  %1805 = vmax.xlane.f32.xlu0 %v1778
  %v1806 = vpop.xlane.xlu0 %1805
  %1807 = vmax.xlane.f32.xlu0 %v1779
  %v1808 = vpop.xlane.xlu0 %1807
  %1809 = vmax.xlane.f32.xlu0 %v1780
  %v1810 = vpop.xlane.xlu0 %1809
  %1811 = vmax.xlane.f32.xlu0 %v1781
  %v1812 = vpop.xlane.xlu0 %1811
  %1813 = vmax.xlane.f32.xlu0 %v1782
  %v1814 = vpop.xlane.xlu0 %1813
  %v1815 = vsub.f32 %v1767, %v1784
  %v1816 = vsub.f32 %v1768, %v1786
  %v1817 = vsub.f32 %v1769, %v1788
  %v1818 = vsub.f32 %v1770, %v1790
  %v1819 = vsub.f32 %v1771, %v1792
  %v1820 = vsub.f32 %v1772, %v1794
  %v1821 = vsub.f32 %v1773, %v1796
  %v1822 = vsub.f32 %v1774, %v1798
  %v1823 = vsub.f32 %v1775, %v1800
  %v1824 = vsub.f32 %v1776, %v1802
  %v1825 = vsub.f32 %v1777, %v1804
  %v1826 = vsub.f32 %v1778, %v1806
  %v1827 = vsub.f32 %v1779, %v1808
  %v1828 = vsub.f32 %v1780, %v1810
  %v1829 = vsub.f32 %v1781, %v1812
  %v1830 = vsub.f32 %v1782, %v1814
  %v1831 = vmul.f32 %v1815, 1.442695
  %v1832 = vpow.pop %v1831
  %v1833 = vmul.f32 %v1816, 1.442695
  %v1834 = vpow.pop %v1833
  %v1835 = vmul.f32 %v1817, 1.442695
  %v1836 = vpow.pop %v1835
  %v1837 = vmul.f32 %v1818, 1.442695
  %v1838 = vpow.pop %v1837
  %v1839 = vmul.f32 %v1819, 1.442695
  %v1840 = vpow.pop %v1839
  %v1841 = vmul.f32 %v1820, 1.442695
  %v1842 = vpow.pop %v1841
  %v1843 = vmul.f32 %v1821, 1.442695
  %v1844 = vpow.pop %v1843
  %v1845 = vmul.f32 %v1822, 1.442695
  %v1846 = vpow.pop %v1845
  %v1847 = vmul.f32 %v1823, 1.442695
  %v1848 = vpow.pop %v1847
  %v1849 = vmul.f32 %v1824, 1.442695
  %v1850 = vpow.pop %v1849
  %v1851 = vmul.f32 %v1825, 1.442695
  %v1852 = vpow.pop %v1851
  %v1853 = vmul.f32 %v1826, 1.442695
  %v1854 = vpow.pop %v1853
  %v1855 = vmul.f32 %v1827, 1.442695
  %v1856 = vpow.pop %v1855
  %v1857 = vmul.f32 %v1828, 1.442695
  %v1858 = vpow.pop %v1857
  %v1859 = vmul.f32 %v1829, 1.442695
  %v1860 = vpow.pop %v1859
  %v1861 = vmul.f32 %v1830, 1.442695
  %v1862 = vpow.pop %v1861
  %1863 = vadd.xlane.f32.xlu0 %v1832
  %v1864 = vpop.xlane.xlu0 %1863
  %1865 = vadd.xlane.f32.xlu0 %v1834
  %v1866 = vpop.xlane.xlu0 %1865
  %1867 = vadd.xlane.f32.xlu0 %v1836
  %v1868 = vpop.xlane.xlu0 %1867
  %1869 = vadd.xlane.f32.xlu0 %v1838
  %v1870 = vpop.xlane.xlu0 %1869
  %1871 = vadd.xlane.f32.xlu0 %v1840
  %v1872 = vpop.xlane.xlu0 %1871
  %1873 = vadd.xlane.f32.xlu0 %v1842
  %v1874 = vpop.xlane.xlu0 %1873
  %1875 = vadd.xlane.f32.xlu0 %v1844
  %v1876 = vpop.xlane.xlu0 %1875
  %1877 = vadd.xlane.f32.xlu0 %v1846
  %v1878 = vpop.xlane.xlu0 %1877
  %1879 = vadd.xlane.f32.xlu0 %v1848
  %v1880 = vpop.xlane.xlu0 %1879
  %1881 = vadd.xlane.f32.xlu0 %v1850
  %v1882 = vpop.xlane.xlu0 %1881
  %1883 = vadd.xlane.f32.xlu0 %v1852
  %v1884 = vpop.xlane.xlu0 %1883
  %1885 = vadd.xlane.f32.xlu0 %v1854
  %v1886 = vpop.xlane.xlu0 %1885
  %1887 = vadd.xlane.f32.xlu0 %v1856
  %v1888 = vpop.xlane.xlu0 %1887
  %1889 = vadd.xlane.f32.xlu0 %v1858
  %v1890 = vpop.xlane.xlu0 %1889
  %1891 = vadd.xlane.f32.xlu0 %v1860
  %v1892 = vpop.xlane.xlu0 %1891
  %1893 = vadd.xlane.f32.xlu0 %v1862
  %v1894 = vpop.xlane.xlu0 %1893
  %v1895 = vrcp.pop %v1864
  %v1896 = vmul.f32 %v1832, %v1895
  %v1897 = vrcp.pop %v1866
  %v1898 = vmul.f32 %v1834, %v1897
  %v1899 = vrcp.pop %v1868
  %v1900 = vmul.f32 %v1836, %v1899
  %v1901 = vrcp.pop %v1870
  %v1902 = vmul.f32 %v1838, %v1901
  %v1903 = vrcp.pop %v1872
  %v1904 = vmul.f32 %v1840, %v1903
  %v1905 = vrcp.pop %v1874
  %v1906 = vmul.f32 %v1842, %v1905
  %v1907 = vrcp.pop %v1876
  %v1908 = vmul.f32 %v1844, %v1907
  %v1909 = vrcp.pop %v1878
  %v1910 = vmul.f32 %v1846, %v1909
  %v1911 = vrcp.pop %v1880
  %v1912 = vmul.f32 %v1848, %v1911
  %v1913 = vrcp.pop %v1882
  %v1914 = vmul.f32 %v1850, %v1913
  %v1915 = vrcp.pop %v1884
  %v1916 = vmul.f32 %v1852, %v1915
  %v1917 = vrcp.pop %v1886
  %v1918 = vmul.f32 %v1854, %v1917
  %v1919 = vrcp.pop %v1888
  %v1920 = vmul.f32 %v1856, %v1919
  %v1921 = vrcp.pop %v1890
  %v1922 = vmul.f32 %v1858, %v1921
  %v1923 = vrcp.pop %v1892
  %v1924 = vmul.f32 %v1860, %v1923
  %v1925 = vrcp.pop %v1894
  %v1926 = vmul.f32 %v1862, %v1925
  %1927 = vmatprep.subr.mxu0 0.0
  %1928 = vmatpush1.xpose.msra.mxu0 %v1896
  %1929 = vmatprep.subr.mxu0 0.0
  %1930 = vmatpush1.xpose.msra.mxu0 %v1898
  %1931 = vmatprep.subr.mxu0 0.0
  %1932 = vmatpush1.xpose.msra.mxu0 %v1900
  %1933 = vmatprep.subr.mxu0 0.0
  %1934 = vmatpush1.xpose.msra.mxu0 %v1902
  %1935 = vmatprep.subr.mxu0 0.0
  %1936 = vmatpush1.xpose.msra.mxu0 %v1904
  %1937 = vmatprep.subr.mxu0 0.0
  %1938 = vmatpush1.xpose.msra.mxu0 %v1906
  %1939 = vmatprep.subr.mxu0 0.0
  %1940 = vmatpush1.xpose.msra.mxu0 %v1908
  %1941 = vmatprep.subr.mxu0 0.0
  %1942 = vmatpush1.xpose.msra.mxu0 %v1910
  %1943 = vmatprep.subr.mxu0 0.0
  %1944 = vmatpush1.xpose.msra.mxu0 %v1912
  %1945 = vmatprep.subr.mxu0 0.0
  %1946 = vmatpush1.xpose.msra.mxu0 %v1914
  %1947 = vmatprep.subr.mxu0 0.0
  %1948 = vmatpush1.xpose.msra.mxu0 %v1916
  %1949 = vmatprep.subr.mxu0 0.0
  %1950 = vmatpush1.xpose.msra.mxu0 %v1918
  %1951 = vmatprep.subr.mxu0 0.0
  %1952 = vmatpush1.xpose.msra.mxu0 %v1920
  %1953 = vmatprep.subr.mxu0 0.0
  %1954 = vmatpush1.xpose.msra.mxu0 %v1922
  %1955 = vmatprep.subr.mxu0 0.0
  %1956 = vmatpush1.xpose.msra.mxu0 %v1924
  %1957 = vmatprep.subr.mxu0 0.0
  %1958 = vmatpush1.xpose.msra.mxu0 %v1926
  %1959 = vmatprep.subr.mxu0 0.0
  %1960 = vmatpush1.xpose.msra.mxu0 0.0
  %1961 = vmatprep.subr.mxu0 0.0
  %1962 = vmatpush1.xpose.msra.mxu0 0.0
  %1963 = vmatprep.subr.mxu0 0.0
  %1964 = vmatpush1.xpose.msra.mxu0 0.0
  %1965 = vmatprep.subr.mxu0 0.0
  %1966 = vmatpush1.xpose.msra.mxu0 0.0
  %1967 = vmatprep.subr.mxu0 0.0
  %1968 = vmatpush1.xpose.msra.mxu0 0.0
  %1969 = vmatprep.subr.mxu0 0.0
  %1970 = vmatpush1.xpose.msra.mxu0 0.0
  %1971 = vmatprep.subr.mxu0 0.0
  %1972 = vmatpush1.xpose.msra.mxu0 0.0
  %1973 = vmatprep.subr.mxu0 0.0
  %1974 = vmatpush1.xpose.msra.mxu0 0.0
  %1975 = vmatprep.subr.mxu0 0.0
  %1976 = vmatpush1.xpose.msra.mxu0 0.0
  %1977 = vmatprep.subr.mxu0 0.0
  %1978 = vmatpush1.xpose.msra.mxu0 0.0
  %1979 = vmatprep.subr.mxu0 0.0
  %1980 = vmatpush1.xpose.msra.mxu0 0.0
  %1981 = vmatprep.subr.mxu0 0.0
  %1982 = vmatpush1.xpose.msra.mxu0 0.0
  %1983 = vmatprep.subr.mxu0 0.0
  %1984 = vmatpush1.xpose.msra.mxu0 0.0
  %1985 = vmatprep.subr.mxu0 0.0
  %1986 = vmatpush1.xpose.msra.mxu0 0.0
  %1987 = vmatprep.subr.mxu0 0.0
  %1988 = vmatpush1.xpose.msra.mxu0 0.0
  %1989 = vmatprep.subr.mxu0 0.0
  %1990 = vmatpush1.xpose.msra.mxu0 0.0
  %1991 = vmatprep.mubr.f32.mxu0 0.0
  %1992 = vmatmul.mubr.f32.gmra.mrb[0].mxu0 %v559
  %v1993 = vpop.f32.mrb[0].mxu0
  %v1994 = vadd.f32 0.0, %v1993
  %v1995 = vpop.f32.mrb[0].mxu0
  %1996 = vdwg.mxu0
  %1997 = vxpose.xlu0.b32.start [1/16] %v524, 128
  %1998 = vxpose.xlu0.b32.cont [2/16] 0.0, 128
  %1999 = vxpose.xlu0.b32.cont [3/16] 0.0, 128
  %2000 = vxpose.xlu0.b32.cont [4/16] 0.0, 128
  %2001 = vxpose.xlu0.b32.cont [5/16] 0.0, 128
  %2002 = vxpose.xlu0.b32.cont [6/16] 0.0, 128
  %2003 = vxpose.xlu0.b32.cont [7/16] 0.0, 128
  %2004 = vxpose.xlu0.b32.cont [8/16] 0.0, 128
  %2005 = vxpose.xlu0.b32.cont [9/16] 0.0, 128
  %2006 = vxpose.xlu0.b32.cont [10/16] 0.0, 128
  %2007 = vxpose.xlu0.b32.cont [11/16] 0.0, 128
  %2008 = vxpose.xlu0.b32.cont [12/16] 0.0, 128
  %2009 = vxpose.xlu0.b32.cont [13/16] 0.0, 128
  %2010 = vxpose.xlu0.b32.cont [14/16] 0.0, 128
  %2011 = vxpose.xlu0.b32.cont [15/16] 0.0, 128
  %2012 = vxpose.xlu0.b32.end [16/16] 0.0, 128
  %v2013 = vpop.trf.xlu0
  %v2014 = vpop.trf.xlu0
  %v2015 = vpop.trf.xlu0
  %v2016 = vpop.trf.xlu0
  %v2017 = vpop.trf.xlu0
  %v2018 = vpop.trf.xlu0
  %v2019 = vpop.trf.xlu0
  %v2020 = vpop.trf.xlu0
  %v2021 = vpop.trf.xlu0
  %v2022 = vpop.trf.xlu0
  %v2023 = vpop.trf.xlu0
  %v2024 = vpop.trf.xlu0
  %v2025 = vpop.trf.xlu0
  %v2026 = vpop.trf.xlu0
  %v2027 = vpop.trf.xlu0
  %v2028 = vpop.trf.xlu0
  %v2030 = vsel %vm599, %v2013, 0
  %v2033 = vsel %vm599, %v2014, 0
  %v2036 = vsel %vm599, %v2015, 0
  %v2039 = vsel %vm599, %v2016, 0
  %v2042 = vsel %vm599, %v2017, 0
  %v2045 = vsel %vm599, %v2018, 0
  %v2048 = vsel %vm599, %v2019, 0
  %v2051 = vsel %vm599, %v2020, 0
  %v2054 = vsel %vm599, %v2021, 0
  %v2057 = vsel %vm599, %v2022, 0
  %v2060 = vsel %vm599, %v2023, 0
  %v2063 = vsel %vm599, %v2024, 0
  %v2066 = vsel %vm599, %v2025, 0
  %v2069 = vsel %vm599, %v2026, 0
  %v2072 = vsel %vm599, %v2027, 0
  %v2075 = vsel %vm599, %v2028, 0
  %2077 = vmatprep.subr.mxu0 0.0
  %2078 = vmatpush1.msra.mxu0 %v544
  %2079 = vmatprep.subr.mxu0 0.0
  %2080 = vmatpush1.msra.mxu0 0.0
  %2081 = vmatprep.subr.mxu0 0.0
  %2082 = vmatpush1.msra.mxu0 0.0
  %2083 = vmatprep.subr.mxu0 0.0
  %2084 = vmatpush1.msra.mxu0 0.0
  %2085 = vmatprep.subr.mxu0 0.0
  %2086 = vmatpush1.msra.mxu0 0.0
  %2087 = vmatprep.subr.mxu0 0.0
  %2088 = vmatpush1.msra.mxu0 0.0
  %2089 = vmatprep.subr.mxu0 0.0
  %2090 = vmatpush1.msra.mxu0 0.0
  %2091 = vmatprep.subr.mxu0 0.0
  %2092 = vmatpush1.msra.mxu0 0.0
  %2093 = vmatprep.subr.mxu0 0.0
  %2094 = vmatpush1.msra.mxu0 0.0
  %2095 = vmatprep.subr.mxu0 0.0
  %2096 = vmatpush1.msra.mxu0 0.0
  %2097 = vmatprep.subr.mxu0 0.0
  %2098 = vmatpush1.msra.mxu0 0.0
  %2099 = vmatprep.subr.mxu0 0.0
  %2100 = vmatpush1.msra.mxu0 0.0
  %2101 = vmatprep.subr.mxu0 0.0
  %2102 = vmatpush1.msra.mxu0 0.0
  %2103 = vmatprep.subr.mxu0 0.0
  %2104 = vmatpush1.msra.mxu0 0.0
  %2105 = vmatprep.subr.mxu0 0.0
  %2106 = vmatpush1.msra.mxu0 0.0
  %2107 = vmatprep.subr.mxu0 0.0
  %2108 = vmatpush1.msra.mxu0 0.0
  %2109 = vmatprep.subr.mxu0 0.0
  %2110 = vmatpush1.msra.mxu0 0.0
  %2111 = vmatprep.subr.mxu0 0.0
  %2112 = vmatpush1.msra.mxu0 0.0
  %2113 = vmatprep.subr.mxu0 0.0
  %2114 = vmatpush1.msra.mxu0 0.0
  %2115 = vmatprep.subr.mxu0 0.0
  %2116 = vmatpush1.msra.mxu0 0.0
  %2117 = vmatprep.subr.mxu0 0.0
  %2118 = vmatpush1.msra.mxu0 0.0
  %2119 = vmatprep.subr.mxu0 0.0
  %2120 = vmatpush1.msra.mxu0 0.0
  %2121 = vmatprep.subr.mxu0 0.0
  %2122 = vmatpush1.msra.mxu0 0.0
  %2123 = vmatprep.subr.mxu0 0.0
  %2124 = vmatpush1.msra.mxu0 0.0
  %2125 = vmatprep.subr.mxu0 0.0
  %2126 = vmatpush1.msra.mxu0 0.0
  %2127 = vmatprep.subr.mxu0 0.0
  %2128 = vmatpush1.msra.mxu0 0.0
  %2129 = vmatprep.subr.mxu0 0.0
  %2130 = vmatpush1.msra.mxu0 0.0
  %2131 = vmatprep.subr.mxu0 0.0
  %2132 = vmatpush1.msra.mxu0 0.0
  %2133 = vmatprep.subr.mxu0 0.0
  %2134 = vmatpush1.msra.mxu0 0.0
  %2135 = vmatprep.subr.mxu0 0.0
  %2136 = vmatpush1.msra.mxu0 0.0
  %2137 = vmatprep.subr.mxu0 0.0
  %2138 = vmatpush1.msra.mxu0 0.0
  %2139 = vmatprep.subr.mxu0 0.0
  %2140 = vmatpush1.msra.mxu0 0.0
  %2141 = vmatprep.mubr.f32.mxu0 0.0
  %2142 = vmatmul.mubr.f32.gmra.mrb[0].mxu0 %v2030
  %v2143 = vpop.f32.mrb[0].mxu0
  %v2144 = vadd.f32 0.0, %v2143
  %v2145 = vpop.f32.mrb[0].mxu0
  %2146 = vmatprep.mubr.f32.mxu0 0.0
  %2147 = vmatmul.mubr.f32.gmra.mrb[0].mxu0 %v2033
  %v2148 = vpop.f32.mrb[0].mxu0
  %v2149 = vadd.f32 0.0, %v2148
  %v2150 = vpop.f32.mrb[0].mxu0
  %2151 = vmatprep.mubr.f32.mxu0 0.0
  %2152 = vmatmul.mubr.f32.gmra.mrb[0].mxu0 %v2036
  %v2153 = vpop.f32.mrb[0].mxu0
  %v2154 = vadd.f32 0.0, %v2153
  %v2155 = vpop.f32.mrb[0].mxu0
  %2156 = vmatprep.mubr.f32.mxu0 0.0
  %2157 = vmatmul.mubr.f32.gmra.mrb[0].mxu0 %v2039
  %v2158 = vpop.f32.mrb[0].mxu0
  %v2159 = vadd.f32 0.0, %v2158
  %v2160 = vpop.f32.mrb[0].mxu0
  %2161 = vmatprep.mubr.f32.mxu0 0.0
  %2162 = vmatmul.mubr.f32.gmra.mrb[0].mxu0 %v2042
  %v2163 = vpop.f32.mrb[0].mxu0
  %v2164 = vadd.f32 0.0, %v2163
  %v2165 = vpop.f32.mrb[0].mxu0
  %2166 = vmatprep.mubr.f32.mxu0 0.0
  %2167 = vmatmul.mubr.f32.gmra.mrb[0].mxu0 %v2045
  %v2168 = vpop.f32.mrb[0].mxu0
  %v2169 = vadd.f32 0.0, %v2168
  %v2170 = vpop.f32.mrb[0].mxu0
  %2171 = vmatprep.mubr.f32.mxu0 0.0
  %2172 = vmatmul.mubr.f32.gmra.mrb[0].mxu0 %v2048
  %v2173 = vpop.f32.mrb[0].mxu0
  %v2174 = vadd.f32 0.0, %v2173
  %v2175 = vpop.f32.mrb[0].mxu0
  %2176 = vmatprep.mubr.f32.mxu0 0.0
  %2177 = vmatmul.mubr.f32.gmra.mrb[0].mxu0 %v2051
  %v2178 = vpop.f32.mrb[0].mxu0
  %v2179 = vadd.f32 0.0, %v2178
  %v2180 = vpop.f32.mrb[0].mxu0
  %2181 = vmatprep.mubr.f32.mxu0 0.0
  %2182 = vmatmul.mubr.f32.gmra.mrb[0].mxu0 %v2054
  %v2183 = vpop.f32.mrb[0].mxu0
  %v2184 = vadd.f32 0.0, %v2183
  %v2185 = vpop.f32.mrb[0].mxu0
  %2186 = vmatprep.mubr.f32.mxu0 0.0
  %2187 = vmatmul.mubr.f32.gmra.mrb[0].mxu0 %v2057
  %v2188 = vpop.f32.mrb[0].mxu0
  %v2189 = vadd.f32 0.0, %v2188
  %v2190 = vpop.f32.mrb[0].mxu0
  %2191 = vmatprep.mubr.f32.mxu0 0.0
  %2192 = vmatmul.mubr.f32.gmra.mrb[0].mxu0 %v2060
  %v2193 = vpop.f32.mrb[0].mxu0
  %v2194 = vadd.f32 0.0, %v2193
  %v2195 = vpop.f32.mrb[0].mxu0
  %2196 = vmatprep.mubr.f32.mxu0 0.0
  %2197 = vmatmul.mubr.f32.gmra.mrb[0].mxu0 %v2063
  %v2198 = vpop.f32.mrb[0].mxu0
  %v2199 = vadd.f32 0.0, %v2198
  %v2200 = vpop.f32.mrb[0].mxu0
  %2201 = vmatprep.mubr.f32.mxu0 0.0
  %2202 = vmatmul.mubr.f32.gmra.mrb[0].mxu0 %v2066
  %v2203 = vpop.f32.mrb[0].mxu0
  %v2204 = vadd.f32 0.0, %v2203
  %v2205 = vpop.f32.mrb[0].mxu0
  %2206 = vmatprep.mubr.f32.mxu0 0.0
  %2207 = vmatmul.mubr.f32.gmra.mrb[0].mxu0 %v2069
  %v2208 = vpop.f32.mrb[0].mxu0
  %v2209 = vadd.f32 0.0, %v2208
  %v2210 = vpop.f32.mrb[0].mxu0
  %2211 = vmatprep.mubr.f32.mxu0 0.0
  %2212 = vmatmul.mubr.f32.gmra.mrb[0].mxu0 %v2072
  %v2213 = vpop.f32.mrb[0].mxu0
  %v2214 = vadd.f32 0.0, %v2213
  %v2215 = vpop.f32.mrb[0].mxu0
  %2216 = vmatprep.mubr.f32.mxu0 0.0
  %2217 = vmatmul.mubr.f32.gmra.mrb[0].mxu0 %v2075
  %v2218 = vpop.f32.mrb[0].mxu0
  %v2219 = vadd.f32 0.0, %v2218
  %v2220 = vpop.f32.mrb[0].mxu0
  %2221 = vdwg.mxu0
  %v2222 = vmul.f32 %v2144, 0.5
  %v2223 = vmul.f32 %v2149, 0.5
  %v2224 = vmul.f32 %v2154, 0.5
  %v2225 = vmul.f32 %v2159, 0.5
  %v2226 = vmul.f32 %v2164, 0.5
  %v2227 = vmul.f32 %v2169, 0.5
  %v2228 = vmul.f32 %v2174, 0.5
  %v2229 = vmul.f32 %v2179, 0.5
  %v2230 = vmul.f32 %v2184, 0.5
  %v2231 = vmul.f32 %v2189, 0.5
  %v2232 = vmul.f32 %v2194, 0.5
  %v2233 = vmul.f32 %v2199, 0.5
  %v2234 = vmul.f32 %v2204, 0.5
  %v2235 = vmul.f32 %v2209, 0.5
  %v2236 = vmul.f32 %v2214, 0.5
  %v2237 = vmul.f32 %v2219, 0.5
  %v2238 = vsel %vm809, %v2222, -1e+09
  %v2239 = vsel %vm810, %v2223, -1e+09
  %v2240 = vsel %vm811, %v2224, -1e+09
  %v2241 = vsel %vm812, %v2225, -1e+09
  %v2242 = vsel %vm813, %v2226, -1e+09
  %v2243 = vsel %vm814, %v2227, -1e+09
  %v2244 = vsel %vm815, %v2228, -1e+09
  %v2245 = vsel %vm816, %v2229, -1e+09
  %v2246 = vsel %vm817, %v2230, -1e+09
  %v2247 = vsel %vm818, %v2231, -1e+09
  %v2248 = vsel %vm819, %v2232, -1e+09
  %v2249 = vsel %vm820, %v2233, -1e+09
  %v2250 = vsel %vm821, %v2234, -1e+09
  %v2251 = vsel %vm822, %v2235, -1e+09
  %v2252 = vsel %vm823, %v2236, -1e+09
  %v2253 = vsel %vm824, %v2237, -1e+09
  %2254 = vmax.xlane.f32.xlu0 %v2238
  %v2255 = vpop.xlane.xlu0 %2254
  %2256 = vmax.xlane.f32.xlu0 %v2239
  %v2257 = vpop.xlane.xlu0 %2256
  %2258 = vmax.xlane.f32.xlu0 %v2240
  %v2259 = vpop.xlane.xlu0 %2258
  %2260 = vmax.xlane.f32.xlu0 %v2241
  %v2261 = vpop.xlane.xlu0 %2260
  %2262 = vmax.xlane.f32.xlu0 %v2242
  %v2263 = vpop.xlane.xlu0 %2262
  %2264 = vmax.xlane.f32.xlu0 %v2243
  %v2265 = vpop.xlane.xlu0 %2264
  %2266 = vmax.xlane.f32.xlu0 %v2244
  %v2267 = vpop.xlane.xlu0 %2266
  %2268 = vmax.xlane.f32.xlu0 %v2245
  %v2269 = vpop.xlane.xlu0 %2268
  %2270 = vmax.xlane.f32.xlu0 %v2246
  %v2271 = vpop.xlane.xlu0 %2270
  %2272 = vmax.xlane.f32.xlu0 %v2247
  %v2273 = vpop.xlane.xlu0 %2272
  %2274 = vmax.xlane.f32.xlu0 %v2248
  %v2275 = vpop.xlane.xlu0 %2274
  %2276 = vmax.xlane.f32.xlu0 %v2249
  %v2277 = vpop.xlane.xlu0 %2276
  %2278 = vmax.xlane.f32.xlu0 %v2250
  %v2279 = vpop.xlane.xlu0 %2278
  %2280 = vmax.xlane.f32.xlu0 %v2251
  %v2281 = vpop.xlane.xlu0 %2280
  %2282 = vmax.xlane.f32.xlu0 %v2252
  %v2283 = vpop.xlane.xlu0 %2282
  %2284 = vmax.xlane.f32.xlu0 %v2253
  %v2285 = vpop.xlane.xlu0 %2284
  %v2286 = vsub.f32 %v2238, %v2255
  %v2287 = vsub.f32 %v2239, %v2257
  %v2288 = vsub.f32 %v2240, %v2259
  %v2289 = vsub.f32 %v2241, %v2261
  %v2290 = vsub.f32 %v2242, %v2263
  %v2291 = vsub.f32 %v2243, %v2265
  %v2292 = vsub.f32 %v2244, %v2267
  %v2293 = vsub.f32 %v2245, %v2269
  %v2294 = vsub.f32 %v2246, %v2271
  %v2295 = vsub.f32 %v2247, %v2273
  %v2296 = vsub.f32 %v2248, %v2275
  %v2297 = vsub.f32 %v2249, %v2277
  %v2298 = vsub.f32 %v2250, %v2279
  %v2299 = vsub.f32 %v2251, %v2281
  %v2300 = vsub.f32 %v2252, %v2283
  %v2301 = vsub.f32 %v2253, %v2285
  %v2302 = vmul.f32 %v2286, 1.442695
  %v2303 = vpow.pop %v2302
  %v2304 = vmul.f32 %v2287, 1.442695
  %v2305 = vpow.pop %v2304
  %v2306 = vmul.f32 %v2288, 1.442695
  %v2307 = vpow.pop %v2306
  %v2308 = vmul.f32 %v2289, 1.442695
  %v2309 = vpow.pop %v2308
  %v2310 = vmul.f32 %v2290, 1.442695
  %v2311 = vpow.pop %v2310
  %v2312 = vmul.f32 %v2291, 1.442695
  %v2313 = vpow.pop %v2312
  %v2314 = vmul.f32 %v2292, 1.442695
  %v2315 = vpow.pop %v2314
  %v2316 = vmul.f32 %v2293, 1.442695
  %v2317 = vpow.pop %v2316
  %v2318 = vmul.f32 %v2294, 1.442695
  %v2319 = vpow.pop %v2318
  %v2320 = vmul.f32 %v2295, 1.442695
  %v2321 = vpow.pop %v2320
  %v2322 = vmul.f32 %v2296, 1.442695
  %v2323 = vpow.pop %v2322
  %v2324 = vmul.f32 %v2297, 1.442695
  %v2325 = vpow.pop %v2324
  %v2326 = vmul.f32 %v2298, 1.442695
  %v2327 = vpow.pop %v2326
  %v2328 = vmul.f32 %v2299, 1.442695
  %v2329 = vpow.pop %v2328
  %v2330 = vmul.f32 %v2300, 1.442695
  %v2331 = vpow.pop %v2330
  %v2332 = vmul.f32 %v2301, 1.442695
  %v2333 = vpow.pop %v2332
  %2334 = vadd.xlane.f32.xlu0 %v2303
  %v2335 = vpop.xlane.xlu0 %2334
  %2336 = vadd.xlane.f32.xlu0 %v2305
  %v2337 = vpop.xlane.xlu0 %2336
  %2338 = vadd.xlane.f32.xlu0 %v2307
  %v2339 = vpop.xlane.xlu0 %2338
  %2340 = vadd.xlane.f32.xlu0 %v2309
  %v2341 = vpop.xlane.xlu0 %2340
  %2342 = vadd.xlane.f32.xlu0 %v2311
  %v2343 = vpop.xlane.xlu0 %2342
  %2344 = vadd.xlane.f32.xlu0 %v2313
  %v2345 = vpop.xlane.xlu0 %2344
  %2346 = vadd.xlane.f32.xlu0 %v2315
  %v2347 = vpop.xlane.xlu0 %2346
  %2348 = vadd.xlane.f32.xlu0 %v2317
  %v2349 = vpop.xlane.xlu0 %2348
  %2350 = vadd.xlane.f32.xlu0 %v2319
  %v2351 = vpop.xlane.xlu0 %2350
  %2352 = vadd.xlane.f32.xlu0 %v2321
  %v2353 = vpop.xlane.xlu0 %2352
  %2354 = vadd.xlane.f32.xlu0 %v2323
  %v2355 = vpop.xlane.xlu0 %2354
  %2356 = vadd.xlane.f32.xlu0 %v2325
  %v2357 = vpop.xlane.xlu0 %2356
  %2358 = vadd.xlane.f32.xlu0 %v2327
  %v2359 = vpop.xlane.xlu0 %2358
  %2360 = vadd.xlane.f32.xlu0 %v2329
  %v2361 = vpop.xlane.xlu0 %2360
  %2362 = vadd.xlane.f32.xlu0 %v2331
  %v2363 = vpop.xlane.xlu0 %2362
  %2364 = vadd.xlane.f32.xlu0 %v2333
  %v2365 = vpop.xlane.xlu0 %2364
  %v2366 = vrcp.pop %v2335
  %v2367 = vmul.f32 %v2303, %v2366
  %v2368 = vrcp.pop %v2337
  %v2369 = vmul.f32 %v2305, %v2368
  %v2370 = vrcp.pop %v2339
  %v2371 = vmul.f32 %v2307, %v2370
  %v2372 = vrcp.pop %v2341
  %v2373 = vmul.f32 %v2309, %v2372
  %v2374 = vrcp.pop %v2343
  %v2375 = vmul.f32 %v2311, %v2374
  %v2376 = vrcp.pop %v2345
  %v2377 = vmul.f32 %v2313, %v2376
  %v2378 = vrcp.pop %v2347
  %v2379 = vmul.f32 %v2315, %v2378
  %v2380 = vrcp.pop %v2349
  %v2381 = vmul.f32 %v2317, %v2380
  %v2382 = vrcp.pop %v2351
  %v2383 = vmul.f32 %v2319, %v2382
  %v2384 = vrcp.pop %v2353
  %v2385 = vmul.f32 %v2321, %v2384
  %v2386 = vrcp.pop %v2355
  %v2387 = vmul.f32 %v2323, %v2386
  %v2388 = vrcp.pop %v2357
  %v2389 = vmul.f32 %v2325, %v2388
  %v2390 = vrcp.pop %v2359
  %v2391 = vmul.f32 %v2327, %v2390
  %v2392 = vrcp.pop %v2361
  %v2393 = vmul.f32 %v2329, %v2392
  %v2394 = vrcp.pop %v2363
  %v2395 = vmul.f32 %v2331, %v2394
  %v2396 = vrcp.pop %v2365
  %v2397 = vmul.f32 %v2333, %v2396
  %2398 = vmatprep.subr.mxu0 0.0
  %2399 = vmatpush1.xpose.msra.mxu0 %v2367
  %2400 = vmatprep.subr.mxu0 0.0
  %2401 = vmatpush1.xpose.msra.mxu0 %v2369
  %2402 = vmatprep.subr.mxu0 0.0
  %2403 = vmatpush1.xpose.msra.mxu0 %v2371
  %2404 = vmatprep.subr.mxu0 0.0
  %2405 = vmatpush1.xpose.msra.mxu0 %v2373
  %2406 = vmatprep.subr.mxu0 0.0
  %2407 = vmatpush1.xpose.msra.mxu0 %v2375
  %2408 = vmatprep.subr.mxu0 0.0
  %2409 = vmatpush1.xpose.msra.mxu0 %v2377
  %2410 = vmatprep.subr.mxu0 0.0
  %2411 = vmatpush1.xpose.msra.mxu0 %v2379
  %2412 = vmatprep.subr.mxu0 0.0
  %2413 = vmatpush1.xpose.msra.mxu0 %v2381
  %2414 = vmatprep.subr.mxu0 0.0
  %2415 = vmatpush1.xpose.msra.mxu0 %v2383
  %2416 = vmatprep.subr.mxu0 0.0
  %2417 = vmatpush1.xpose.msra.mxu0 %v2385
  %2418 = vmatprep.subr.mxu0 0.0
  %2419 = vmatpush1.xpose.msra.mxu0 %v2387
  %2420 = vmatprep.subr.mxu0 0.0
  %2421 = vmatpush1.xpose.msra.mxu0 %v2389
  %2422 = vmatprep.subr.mxu0 0.0
  %2423 = vmatpush1.xpose.msra.mxu0 %v2391
  %2424 = vmatprep.subr.mxu0 0.0
  %2425 = vmatpush1.xpose.msra.mxu0 %v2393
  %2426 = vmatprep.subr.mxu0 0.0
  %2427 = vmatpush1.xpose.msra.mxu0 %v2395
  %2428 = vmatprep.subr.mxu0 0.0
  %2429 = vmatpush1.xpose.msra.mxu0 %v2397
  %2430 = vmatprep.subr.mxu0 0.0
  %2431 = vmatpush1.xpose.msra.mxu0 0.0
  %2432 = vmatprep.subr.mxu0 0.0
  %2433 = vmatpush1.xpose.msra.mxu0 0.0
  %2434 = vmatprep.subr.mxu0 0.0
  %2435 = vmatpush1.xpose.msra.mxu0 0.0
  %2436 = vmatprep.subr.mxu0 0.0
  %2437 = vmatpush1.xpose.msra.mxu0 0.0
  %2438 = vmatprep.subr.mxu0 0.0
  %2439 = vmatpush1.xpose.msra.mxu0 0.0
  %2440 = vmatprep.subr.mxu0 0.0
  %2441 = vmatpush1.xpose.msra.mxu0 0.0
  %2442 = vmatprep.subr.mxu0 0.0
  %2443 = vmatpush1.xpose.msra.mxu0 0.0
  %2444 = vmatprep.subr.mxu0 0.0
  %2445 = vmatpush1.xpose.msra.mxu0 0.0
  %2446 = vmatprep.subr.mxu0 0.0
  %2447 = vmatpush1.xpose.msra.mxu0 0.0
  %2448 = vmatprep.subr.mxu0 0.0
  %2449 = vmatpush1.xpose.msra.mxu0 0.0
  %2450 = vmatprep.subr.mxu0 0.0
  %2451 = vmatpush1.xpose.msra.mxu0 0.0
  %2452 = vmatprep.subr.mxu0 0.0
  %2453 = vmatpush1.xpose.msra.mxu0 0.0
  %2454 = vmatprep.subr.mxu0 0.0
  %2455 = vmatpush1.xpose.msra.mxu0 0.0
  %2456 = vmatprep.subr.mxu0 0.0
  %2457 = vmatpush1.xpose.msra.mxu0 0.0
  %2458 = vmatprep.subr.mxu0 0.0
  %2459 = vmatpush1.xpose.msra.mxu0 0.0
  %2460 = vmatprep.subr.mxu0 0.0
  %2461 = vmatpush1.xpose.msra.mxu0 0.0
  %2462 = vmatprep.mubr.f32.mxu0 0.0
  %2463 = vmatmul.mubr.f32.gmra.mrb[0].mxu0 %v564
  %v2464 = vpop.f32.mrb[0].mxu0
  %v2465 = vadd.f32 0.0, %v2464
  %v2466 = vpop.f32.mrb[0].mxu0
  %2467 = vdwg.mxu0
  %v2468 = vld [vmem:[%s8] sm:$0xff]
  %v2469 = vld [vmem:[%s8 + $0x8] sm:$0xff]
  %v2470 = vld [vmem:[%s8 + $0x10] sm:$0xff]
  %v2471 = vld [vmem:[%s8 + $0x18] sm:$0xff]
  %v2472 = vmul.f32 %v1052, %v1052
  %v2473 = vmul.f32 %v1523, %v1523
  %v2474 = vmul.f32 %v1994, %v1994
  %v2475 = vmul.f32 %v2465, %v2465
  %v2476 = vmul.f32 %v1052, %v2472
  %v2477 = vmul.f32 %v1523, %v2473
  %v2478 = vmul.f32 %v1994, %v2474
  %v2479 = vmul.f32 %v2465, %v2475
  %v2480 = vmul.f32 %v2476, 0.044715
  %v2481 = vmul.f32 %v2477, 0.044715
  %v2482 = vmul.f32 %v2478, 0.044715
  %v2483 = vmul.f32 %v2479, 0.044715
  %v2484 = vadd.f32 %v1052, %v2480
  %v2485 = vadd.f32 %v1523, %v2481
  %v2486 = vadd.f32 %v1994, %v2482
  %v2487 = vadd.f32 %v2465, %v2483
  %v2488 = vmul.f32 %v2484, 0.7978846
  %v2489 = vmul.f32 %v2485, 0.7978846
  %v2490 = vmul.f32 %v2486, 0.7978846
  %v2491 = vmul.f32 %v2487, 0.7978846
  %v2492 = vtanh.pop %v2488
  %v2493 = vtanh.pop %v2489
  %v2494 = vtanh.pop %v2490
  %v2495 = vtanh.pop %v2491
  %v2496 = vadd.f32 %v2492, 1.0
  %v2497 = vadd.f32 %v2493, 1.0
  %v2498 = vadd.f32 %v2494, 1.0
  %v2499 = vadd.f32 %v2495, 1.0
  %v2500 = vmul.f32 %v2496, 0.5
  %v2501 = vmul.f32 %v2497, 0.5
  %v2502 = vmul.f32 %v2498, 0.5
  %v2503 = vmul.f32 %v2499, 0.5
  %v2504 = vmul.f32 %v1052, %v2500
  %v2505 = vmul.f32 %v1523, %v2501
  %v2506 = vmul.f32 %v1994, %v2502
  %v2507 = vmul.f32 %v2465, %v2503
  %2509 = vset.pattern.permute.xlu0 0
  %2510 = vperm.xlu0 %2509, %v66
  %v2511 = vpop.permute.xlu0 %2510
  %2514 = vset.pattern.permute.xlu0 0
  %2515 = vperm.xlu0 %2514, %v67
  %v2516 = vpop.permute.xlu0 %2515
  %2519 = vset.pattern.permute.xlu0 0
  %2520 = vperm.xlu0 %2519, %v68
  %v2521 = vpop.permute.xlu0 %2520
  %2524 = vset.pattern.permute.xlu0 0
  %2525 = vperm.xlu0 %2524, %v69
  %v2526 = vpop.permute.xlu0 %2525
  %v2529 = vsel %vm405, %v2468, 0
  %v2532 = vsel %vm405, %v2469, 0
  %v2535 = vsel %vm405, %v2470, 0
  %v2538 = vsel %vm405, %v2471, 0
  %2540 = vmatprep.subr.mxu0 0.0
  %2541 = vmatpush1.msra.mxu0 %v2504
  %2542 = vmatprep.subr.mxu0 0.0
  %2543 = vmatpush1.msra.mxu0 %v2505
  %2544 = vmatprep.subr.mxu0 0.0
  %2545 = vmatpush1.msra.mxu0 %v2506
  %2546 = vmatprep.subr.mxu0 0.0
  %2547 = vmatpush1.msra.mxu0 %v2507
  %2548 = vmatprep.subr.mxu0 0.0
  %2549 = vmatpush1.msra.mxu0 0.0
  %2550 = vmatprep.subr.mxu0 0.0
  %2551 = vmatpush1.msra.mxu0 0.0
  %2552 = vmatprep.subr.mxu0 0.0
  %2553 = vmatpush1.msra.mxu0 0.0
  %2554 = vmatprep.subr.mxu0 0.0
  %2555 = vmatpush1.msra.mxu0 0.0
  %2556 = vmatprep.subr.mxu0 0.0
  %2557 = vmatpush1.msra.mxu0 0.0
  %2558 = vmatprep.subr.mxu0 0.0
  %2559 = vmatpush1.msra.mxu0 0.0
  %2560 = vmatprep.subr.mxu0 0.0
  %2561 = vmatpush1.msra.mxu0 0.0
  %2562 = vmatprep.subr.mxu0 0.0
  %2563 = vmatpush1.msra.mxu0 0.0
  %2564 = vmatprep.subr.mxu0 0.0
  %2565 = vmatpush1.msra.mxu0 0.0
  %2566 = vmatprep.subr.mxu0 0.0
  %2567 = vmatpush1.msra.mxu0 0.0
  %2568 = vmatprep.subr.mxu0 0.0
  %2569 = vmatpush1.msra.mxu0 0.0
  %2570 = vmatprep.subr.mxu0 0.0
  %2571 = vmatpush1.msra.mxu0 0.0
  %2572 = vmatprep.subr.mxu0 0.0
  %2573 = vmatpush1.msra.mxu0 0.0
  %2574 = vmatprep.subr.mxu0 0.0
  %2575 = vmatpush1.msra.mxu0 0.0
  %2576 = vmatprep.subr.mxu0 0.0
  %2577 = vmatpush1.msra.mxu0 0.0
  %2578 = vmatprep.subr.mxu0 0.0
  %2579 = vmatpush1.msra.mxu0 0.0
  %2580 = vmatprep.subr.mxu0 0.0
  %2581 = vmatpush1.msra.mxu0 0.0
  %2582 = vmatprep.subr.mxu0 0.0
  %2583 = vmatpush1.msra.mxu0 0.0
  %2584 = vmatprep.subr.mxu0 0.0
  %2585 = vmatpush1.msra.mxu0 0.0
  %2586 = vmatprep.subr.mxu0 0.0
  %2587 = vmatpush1.msra.mxu0 0.0
  %2588 = vmatprep.subr.mxu0 0.0
  %2589 = vmatpush1.msra.mxu0 0.0
  %2590 = vmatprep.subr.mxu0 0.0
  %2591 = vmatpush1.msra.mxu0 0.0
  %2592 = vmatprep.subr.mxu0 0.0
  %2593 = vmatpush1.msra.mxu0 0.0
  %2594 = vmatprep.subr.mxu0 0.0
  %2595 = vmatpush1.msra.mxu0 0.0
  %2596 = vmatprep.subr.mxu0 0.0
  %2597 = vmatpush1.msra.mxu0 0.0
  %2598 = vmatprep.subr.mxu0 0.0
  %2599 = vmatpush1.msra.mxu0 0.0
  %2600 = vmatprep.subr.mxu0 0.0
  %2601 = vmatpush1.msra.mxu0 0.0
  %2602 = vmatprep.subr.mxu0 0.0
  %2603 = vmatpush1.msra.mxu0 0.0
  %2604 = vmatprep.mubr.f32.mxu0 0.0
  %2605 = vmatmul.mubr.f32.gmra.mrb[0].mxu0 %v2529
  %v2606 = vpop.f32.mrb[0].mxu0
  %v2607 = vadd.f32 %v2511, %v2606
  %v2608 = vpop.f32.mrb[0].mxu0
  %2609 = vmatprep.mubr.f32.mxu0 0.0
  %2610 = vmatmul.mubr.f32.gmra.mrb[0].mxu0 %v2532
  %v2611 = vpop.f32.mrb[0].mxu0
  %v2612 = vadd.f32 %v2516, %v2611
  %v2613 = vpop.f32.mrb[0].mxu0
  %2614 = vmatprep.mubr.f32.mxu0 0.0
  %2615 = vmatmul.mubr.f32.gmra.mrb[0].mxu0 %v2535
  %v2616 = vpop.f32.mrb[0].mxu0
  %v2617 = vadd.f32 %v2521, %v2616
  %v2618 = vpop.f32.mrb[0].mxu0
  %2619 = vmatprep.mubr.f32.mxu0 0.0
  %2620 = vmatmul.mubr.f32.gmra.mrb[0].mxu0 %v2538
  %v2621 = vpop.f32.mrb[0].mxu0
  %v2622 = vadd.f32 %v2526, %v2621
  %v2623 = vpop.f32.mrb[0].mxu0
  %2624 = vdwg.mxu0
  %v2625 = vmul.f32 %v2607, %v295
  %v2626 = vmul.f32 %v2612, %v295
  %v2627 = vmul.f32 %v2617, %v295
  %v2628 = vmul.f32 %v2622, %v295
  %v2629 = vadd.f32 %v2625, %v297
  %v2630 = vadd.f32 %v2626, %v298
  %v2631 = vadd.f32 %v2627, %v299
  %v2632 = vadd.f32 %v2628, %v300
  %v2633 = vld [vmem:[%s5] sm:$0xff]
  %v2634 = vld [vmem:[%s5 + $0x8] sm:$0xff]
  %v2635 = vld [vmem:[%s5 + $0x10] sm:$0xff]
  %v2636 = vld [vmem:[%s5 + $0x18] sm:$0xff]
  %v2637 = vld [vmem:[%s5 + $0x20] sm:$0xff]
  %v2638 = vld [vmem:[%s5 + $0x28] sm:$0xff]
  %v2639 = vld [vmem:[%s5 + $0x30] sm:$0xff]
  %v2640 = vld [vmem:[%s5 + $0x38] sm:$0xff]
  %v2641 = vld [vmem:[%s5 + $0x40] sm:$0xff]
  %v2642 = vld [vmem:[%s5 + $0x48] sm:$0xff]
  %v2643 = vld [vmem:[%s5 + $0x50] sm:$0xff]
  %v2644 = vld [vmem:[%s5 + $0x58] sm:$0xff]
  %v2645 = vld [vmem:[%s5 + $0x60] sm:$0xff]
  %v2646 = vld [vmem:[%s5 + $0x68] sm:$0xff]
  %v2647 = vld [vmem:[%s5 + $0x70] sm:$0xff]
  %v2648 = vld [vmem:[%s5 + $0x78] sm:$0xff]
  %v2649 = vmul.f32 %v2633, %v295
  %v2650 = vmul.f32 %v2634, %v295
  %v2651 = vmul.f32 %v2635, %v295
  %v2652 = vmul.f32 %v2636, %v295
  %v2653 = vmul.f32 %v2637, %v295
  %v2654 = vmul.f32 %v2638, %v295
  %v2655 = vmul.f32 %v2639, %v295
  %v2656 = vmul.f32 %v2640, %v295
  %v2657 = vmul.f32 %v2641, %v295
  %v2658 = vmul.f32 %v2642, %v295
  %v2659 = vmul.f32 %v2643, %v295
  %v2660 = vmul.f32 %v2644, %v295
  %v2661 = vmul.f32 %v2645, %v295
  %v2662 = vmul.f32 %v2646, %v295
  %v2663 = vmul.f32 %v2647, %v295
  %v2664 = vmul.f32 %v2648, %v295
  %v2665 = vld [vmem:[%s9] sm:$0xff]
  %v2666 = vld [vmem:[%s9 + $0x8] sm:$0xff]
  %v2667 = vld [vmem:[%s9 + $0x10] sm:$0xff]
  %v2668 = vld [vmem:[%s9 + $0x18] sm:$0xff]
  %v2669 = vld [vmem:[%s9 + $0x20] sm:$0xff]
  %v2670 = vld [vmem:[%s9 + $0x28] sm:$0xff]
  %v2671 = vld [vmem:[%s9 + $0x30] sm:$0xff]
  %v2672 = vld [vmem:[%s9 + $0x38] sm:$0xff]
  %v2673 = vld [vmem:[%s9 + $0x40] sm:$0xff]
  %v2674 = vld [vmem:[%s9 + $0x48] sm:$0xff]
  %v2675 = vld [vmem:[%s9 + $0x50] sm:$0xff]
  %v2676 = vld [vmem:[%s9 + $0x58] sm:$0xff]
  %2678 = vset.pattern.permute.xlu0 0
  %2679 = vperm.xlu0 %2678, %v70
  %v2680 = vpop.permute.xlu0 %2679
  %2683 = vset.pattern.permute.xlu0 0
  %2684 = vperm.xlu0 %2683, %v71
  %v2685 = vpop.permute.xlu0 %2684
  %2688 = vset.pattern.permute.xlu0 0
  %2689 = vperm.xlu0 %2688, %v72
  %v2690 = vpop.permute.xlu0 %2689
  %2693 = vset.pattern.permute.xlu0 0
  %2694 = vperm.xlu0 %2693, %v73
  %v2695 = vpop.permute.xlu0 %2694
  %2698 = vset.pattern.permute.xlu0 0
  %2699 = vperm.xlu0 %2698, %v74
  %v2700 = vpop.permute.xlu0 %2699
  %2703 = vset.pattern.permute.xlu0 0
  %2704 = vperm.xlu0 %2703, %v75
  %v2705 = vpop.permute.xlu0 %2704
  %2708 = vset.pattern.permute.xlu0 0
  %2709 = vperm.xlu0 %2708, %v76
  %v2710 = vpop.permute.xlu0 %2709
  %2713 = vset.pattern.permute.xlu0 0
  %2714 = vperm.xlu0 %2713, %v77
  %v2715 = vpop.permute.xlu0 %2714
  %2718 = vset.pattern.permute.xlu0 0
  %2719 = vperm.xlu0 %2718, %v78
  %v2720 = vpop.permute.xlu0 %2719
  %2723 = vset.pattern.permute.xlu0 0
  %2724 = vperm.xlu0 %2723, %v79
  %v2725 = vpop.permute.xlu0 %2724
  %2728 = vset.pattern.permute.xlu0 0
  %2729 = vperm.xlu0 %2728, %v80
  %v2730 = vpop.permute.xlu0 %2729
  %2733 = vset.pattern.permute.xlu0 0
  %2734 = vperm.xlu0 %2733, %v81
  %v2735 = vpop.permute.xlu0 %2734
  %v2738 = vsel %vm405, %v2665, 0
  %v2741 = vsel %vm405, %v2666, 0
  %v2744 = vsel %vm405, %v2667, 0
  %v2747 = vsel %vm405, %v2668, 0
  %v2750 = vsel %vm405, %v2669, 0
  %v2753 = vsel %vm405, %v2670, 0
  %v2756 = vsel %vm405, %v2671, 0
  %v2759 = vsel %vm405, %v2672, 0
  %v2762 = vsel %vm405, %v2673, 0
  %v2765 = vsel %vm405, %v2674, 0
  %v2768 = vsel %vm405, %v2675, 0
  %v2771 = vsel %vm405, %v2676, 0
  %2773 = vmatprep.subr.mxu0 0.0
  %2774 = vmatpush1.msra.mxu0 %v2629
  %2775 = vmatprep.subr.mxu0 0.0
  %2776 = vmatpush1.msra.mxu0 %v2630
  %2777 = vmatprep.subr.mxu0 0.0
  %2778 = vmatpush1.msra.mxu0 %v2631
  %2779 = vmatprep.subr.mxu0 0.0
  %2780 = vmatpush1.msra.mxu0 %v2632
  %2781 = vmatprep.subr.mxu0 0.0
  %2782 = vmatpush1.msra.mxu0 0.0
  %2783 = vmatprep.subr.mxu0 0.0
  %2784 = vmatpush1.msra.mxu0 0.0
  %2785 = vmatprep.subr.mxu0 0.0
  %2786 = vmatpush1.msra.mxu0 0.0
  %2787 = vmatprep.subr.mxu0 0.0
  %2788 = vmatpush1.msra.mxu0 0.0
  %2789 = vmatprep.subr.mxu0 0.0
  %2790 = vmatpush1.msra.mxu0 0.0
  %2791 = vmatprep.subr.mxu0 0.0
  %2792 = vmatpush1.msra.mxu0 0.0
  %2793 = vmatprep.subr.mxu0 0.0
  %2794 = vmatpush1.msra.mxu0 0.0
  %2795 = vmatprep.subr.mxu0 0.0
  %2796 = vmatpush1.msra.mxu0 0.0
  %2797 = vmatprep.subr.mxu0 0.0
  %2798 = vmatpush1.msra.mxu0 0.0
  %2799 = vmatprep.subr.mxu0 0.0
  %2800 = vmatpush1.msra.mxu0 0.0
  %2801 = vmatprep.subr.mxu0 0.0
  %2802 = vmatpush1.msra.mxu0 0.0
  %2803 = vmatprep.subr.mxu0 0.0
  %2804 = vmatpush1.msra.mxu0 0.0
  %2805 = vmatprep.subr.mxu0 0.0
  %2806 = vmatpush1.msra.mxu0 0.0
  %2807 = vmatprep.subr.mxu0 0.0
  %2808 = vmatpush1.msra.mxu0 0.0
  %2809 = vmatprep.subr.mxu0 0.0
  %2810 = vmatpush1.msra.mxu0 0.0
  %2811 = vmatprep.subr.mxu0 0.0
  %2812 = vmatpush1.msra.mxu0 0.0
  %2813 = vmatprep.subr.mxu0 0.0
  %2814 = vmatpush1.msra.mxu0 0.0
  %2815 = vmatprep.subr.mxu0 0.0
  %2816 = vmatpush1.msra.mxu0 0.0
  %2817 = vmatprep.subr.mxu0 0.0
  %2818 = vmatpush1.msra.mxu0 0.0
  %2819 = vmatprep.subr.mxu0 0.0
  %2820 = vmatpush1.msra.mxu0 0.0
  %2821 = vmatprep.subr.mxu0 0.0
  %2822 = vmatpush1.msra.mxu0 0.0
  %2823 = vmatprep.subr.mxu0 0.0
  %2824 = vmatpush1.msra.mxu0 0.0
  %2825 = vmatprep.subr.mxu0 0.0
  %2826 = vmatpush1.msra.mxu0 0.0
  %2827 = vmatprep.subr.mxu0 0.0
  %2828 = vmatpush1.msra.mxu0 0.0
  %2829 = vmatprep.subr.mxu0 0.0
  %2830 = vmatpush1.msra.mxu0 0.0
  %2831 = vmatprep.subr.mxu0 0.0
  %2832 = vmatpush1.msra.mxu0 0.0
  %2833 = vmatprep.subr.mxu0 0.0
  %2834 = vmatpush1.msra.mxu0 0.0
  %2835 = vmatprep.subr.mxu0 0.0
  %2836 = vmatpush1.msra.mxu0 0.0
  %2837 = vmatprep.mubr.f32.mxu0 0.0
  %2838 = vmatmul.mubr.f32.gmra.mrb[0].mxu0 %v2738
  %v2839 = vpop.f32.mrb[0].mxu0
  %v2840 = vadd.f32 %v2680, %v2839
  %v2841 = vpop.f32.mrb[0].mxu0
  %2842 = vmatprep.mubr.f32.mxu0 0.0
  %2843 = vmatmul.mubr.f32.gmra.mrb[0].mxu0 %v2741
  %v2844 = vpop.f32.mrb[0].mxu0
  %v2845 = vadd.f32 %v2685, %v2844
  %v2846 = vpop.f32.mrb[0].mxu0
  %2847 = vmatprep.mubr.f32.mxu0 0.0
  %2848 = vmatmul.mubr.f32.gmra.mrb[0].mxu0 %v2744
  %v2849 = vpop.f32.mrb[0].mxu0
  %v2850 = vadd.f32 %v2690, %v2849
  %v2851 = vpop.f32.mrb[0].mxu0
  %2852 = vmatprep.mubr.f32.mxu0 0.0
  %2853 = vmatmul.mubr.f32.gmra.mrb[0].mxu0 %v2747
  %v2854 = vpop.f32.mrb[0].mxu0
  %v2855 = vadd.f32 %v2695, %v2854
  %v2856 = vpop.f32.mrb[0].mxu0
  %2857 = vmatprep.mubr.f32.mxu0 0.0
  %2858 = vmatmul.mubr.f32.gmra.mrb[0].mxu0 %v2750
  %v2859 = vpop.f32.mrb[0].mxu0
  %v2860 = vadd.f32 %v2700, %v2859
  %v2861 = vpop.f32.mrb[0].mxu0
  %2862 = vmatprep.mubr.f32.mxu0 0.0
  %2863 = vmatmul.mubr.f32.gmra.mrb[0].mxu0 %v2753
  %v2864 = vpop.f32.mrb[0].mxu0
  %v2865 = vadd.f32 %v2705, %v2864
  %v2866 = vpop.f32.mrb[0].mxu0
  %2867 = vmatprep.mubr.f32.mxu0 0.0
  %2868 = vmatmul.mubr.f32.gmra.mrb[0].mxu0 %v2756
  %v2869 = vpop.f32.mrb[0].mxu0
  %v2870 = vadd.f32 %v2710, %v2869
  %v2871 = vpop.f32.mrb[0].mxu0
  %2872 = vmatprep.mubr.f32.mxu0 0.0
  %2873 = vmatmul.mubr.f32.gmra.mrb[0].mxu0 %v2759
  %v2874 = vpop.f32.mrb[0].mxu0
  %v2875 = vadd.f32 %v2715, %v2874
  %v2876 = vpop.f32.mrb[0].mxu0
  %2877 = vmatprep.mubr.f32.mxu0 0.0
  %2878 = vmatmul.mubr.f32.gmra.mrb[0].mxu0 %v2762
  %v2879 = vpop.f32.mrb[0].mxu0
  %v2880 = vadd.f32 %v2720, %v2879
  %v2881 = vpop.f32.mrb[0].mxu0
  %2882 = vmatprep.mubr.f32.mxu0 0.0
  %2883 = vmatmul.mubr.f32.gmra.mrb[0].mxu0 %v2765
  %v2884 = vpop.f32.mrb[0].mxu0
  %v2885 = vadd.f32 %v2725, %v2884
  %v2886 = vpop.f32.mrb[0].mxu0
  %2887 = vmatprep.mubr.f32.mxu0 0.0
  %2888 = vmatmul.mubr.f32.gmra.mrb[0].mxu0 %v2768
  %v2889 = vpop.f32.mrb[0].mxu0
  %v2890 = vadd.f32 %v2730, %v2889
  %v2891 = vpop.f32.mrb[0].mxu0
  %2892 = vmatprep.mubr.f32.mxu0 0.0
  %2893 = vmatmul.mubr.f32.gmra.mrb[0].mxu0 %v2771
  %v2894 = vpop.f32.mrb[0].mxu0
  %v2895 = vadd.f32 %v2735, %v2894
  %v2896 = vpop.f32.mrb[0].mxu0
  %2897 = vdwg.mxu0
  %2898 = vxpose.xlu0.b32.start [1/16] %v2840, 128
  %2899 = vxpose.xlu0.b32.cont [2/16] 0.0, 128
  %2900 = vxpose.xlu0.b32.cont [3/16] 0.0, 128
  %2901 = vxpose.xlu0.b32.cont [4/16] 0.0, 128
  %2902 = vxpose.xlu0.b32.cont [5/16] 0.0, 128
  %2903 = vxpose.xlu0.b32.cont [6/16] 0.0, 128
  %2904 = vxpose.xlu0.b32.cont [7/16] 0.0, 128
  %2905 = vxpose.xlu0.b32.cont [8/16] 0.0, 128
  %2906 = vxpose.xlu0.b32.cont [9/16] 0.0, 128
  %2907 = vxpose.xlu0.b32.cont [10/16] 0.0, 128
  %2908 = vxpose.xlu0.b32.cont [11/16] 0.0, 128
  %2909 = vxpose.xlu0.b32.cont [12/16] 0.0, 128
  %2910 = vxpose.xlu0.b32.cont [13/16] 0.0, 128
  %2911 = vxpose.xlu0.b32.cont [14/16] 0.0, 128
  %2912 = vxpose.xlu0.b32.cont [15/16] 0.0, 128
  %2913 = vxpose.xlu0.b32.end [16/16] 0.0, 128
  %v2914 = vpop.trf.xlu0
  %v2915 = vpop.trf.xlu0
  %v2916 = vpop.trf.xlu0
  %v2917 = vpop.trf.xlu0
  %v2918 = vpop.trf.xlu0
  %v2919 = vpop.trf.xlu0
  %v2920 = vpop.trf.xlu0
  %v2921 = vpop.trf.xlu0
  %v2922 = vpop.trf.xlu0
  %v2923 = vpop.trf.xlu0
  %v2924 = vpop.trf.xlu0
  %v2925 = vpop.trf.xlu0
  %v2926 = vpop.trf.xlu0
  %v2927 = vpop.trf.xlu0
  %v2928 = vpop.trf.xlu0
  %v2929 = vpop.trf.xlu0
  %v2931 = vsel %vm599, %v2914, 0
  %v2934 = vsel %vm599, %v2915, 0
  %v2937 = vsel %vm599, %v2916, 0
  %v2940 = vsel %vm599, %v2917, 0
  %v2943 = vsel %vm599, %v2918, 0
  %v2946 = vsel %vm599, %v2919, 0
  %v2949 = vsel %vm599, %v2920, 0
  %v2952 = vsel %vm599, %v2921, 0
  %v2955 = vsel %vm599, %v2922, 0
  %v2958 = vsel %vm599, %v2923, 0
  %v2961 = vsel %vm599, %v2924, 0
  %v2964 = vsel %vm599, %v2925, 0
  %v2967 = vsel %vm599, %v2926, 0
  %v2970 = vsel %vm599, %v2927, 0
  %v2973 = vsel %vm599, %v2928, 0
  %v2976 = vsel %vm599, %v2929, 0
  %2978 = vmatprep.subr.mxu0 0.0
  %2979 = vmatpush1.msra.mxu0 %v2860
  %2980 = vmatprep.subr.mxu0 0.0
  %2981 = vmatpush1.msra.mxu0 0.0
  %2982 = vmatprep.subr.mxu0 0.0
  %2983 = vmatpush1.msra.mxu0 0.0
  %2984 = vmatprep.subr.mxu0 0.0
  %2985 = vmatpush1.msra.mxu0 0.0
  %2986 = vmatprep.subr.mxu0 0.0
  %2987 = vmatpush1.msra.mxu0 0.0
  %2988 = vmatprep.subr.mxu0 0.0
  %2989 = vmatpush1.msra.mxu0 0.0
  %2990 = vmatprep.subr.mxu0 0.0
  %2991 = vmatpush1.msra.mxu0 0.0
  %2992 = vmatprep.subr.mxu0 0.0
  %2993 = vmatpush1.msra.mxu0 0.0
  %2994 = vmatprep.subr.mxu0 0.0
  %2995 = vmatpush1.msra.mxu0 0.0
  %2996 = vmatprep.subr.mxu0 0.0
  %2997 = vmatpush1.msra.mxu0 0.0
  %2998 = vmatprep.subr.mxu0 0.0
  %2999 = vmatpush1.msra.mxu0 0.0
  %3000 = vmatprep.subr.mxu0 0.0
  %3001 = vmatpush1.msra.mxu0 0.0
  %3002 = vmatprep.subr.mxu0 0.0
  %3003 = vmatpush1.msra.mxu0 0.0
  %3004 = vmatprep.subr.mxu0 0.0
  %3005 = vmatpush1.msra.mxu0 0.0
  %3006 = vmatprep.subr.mxu0 0.0
  %3007 = vmatpush1.msra.mxu0 0.0
  %3008 = vmatprep.subr.mxu0 0.0
  %3009 = vmatpush1.msra.mxu0 0.0
  %3010 = vmatprep.subr.mxu0 0.0
  %3011 = vmatpush1.msra.mxu0 0.0
  %3012 = vmatprep.subr.mxu0 0.0
  %3013 = vmatpush1.msra.mxu0 0.0
  %3014 = vmatprep.subr.mxu0 0.0
  %3015 = vmatpush1.msra.mxu0 0.0
  %3016 = vmatprep.subr.mxu0 0.0
  %3017 = vmatpush1.msra.mxu0 0.0
  %3018 = vmatprep.subr.mxu0 0.0
  %3019 = vmatpush1.msra.mxu0 0.0
  %3020 = vmatprep.subr.mxu0 0.0
  %3021 = vmatpush1.msra.mxu0 0.0
  %3022 = vmatprep.subr.mxu0 0.0
  %3023 = vmatpush1.msra.mxu0 0.0
  %3024 = vmatprep.subr.mxu0 0.0
  %3025 = vmatpush1.msra.mxu0 0.0
  %3026 = vmatprep.subr.mxu0 0.0
  %3027 = vmatpush1.msra.mxu0 0.0
  %3028 = vmatprep.subr.mxu0 0.0
  %3029 = vmatpush1.msra.mxu0 0.0
  %3030 = vmatprep.subr.mxu0 0.0
  %3031 = vmatpush1.msra.mxu0 0.0
  %3032 = vmatprep.subr.mxu0 0.0
  %3033 = vmatpush1.msra.mxu0 0.0
  %3034 = vmatprep.subr.mxu0 0.0
  %3035 = vmatpush1.msra.mxu0 0.0
  %3036 = vmatprep.subr.mxu0 0.0
  %3037 = vmatpush1.msra.mxu0 0.0
  %3038 = vmatprep.subr.mxu0 0.0
  %3039 = vmatpush1.msra.mxu0 0.0
  %3040 = vmatprep.subr.mxu0 0.0
  %3041 = vmatpush1.msra.mxu0 0.0
  %3042 = vmatprep.mubr.f32.mxu0 0.0
  %3043 = vmatmul.mubr.f32.gmra.mrb[0].mxu0 %v2931
  %v3044 = vpop.f32.mrb[0].mxu0
  %v3045 = vadd.f32 0.0, %v3044
  %v3046 = vpop.f32.mrb[0].mxu0
  %3047 = vmatprep.mubr.f32.mxu0 0.0
  %3048 = vmatmul.mubr.f32.gmra.mrb[0].mxu0 %v2934
  %v3049 = vpop.f32.mrb[0].mxu0
  %v3050 = vadd.f32 0.0, %v3049
  %v3051 = vpop.f32.mrb[0].mxu0
  %3052 = vmatprep.mubr.f32.mxu0 0.0
  %3053 = vmatmul.mubr.f32.gmra.mrb[0].mxu0 %v2937
  %v3054 = vpop.f32.mrb[0].mxu0
  %v3055 = vadd.f32 0.0, %v3054
  %v3056 = vpop.f32.mrb[0].mxu0
  %3057 = vmatprep.mubr.f32.mxu0 0.0
  %3058 = vmatmul.mubr.f32.gmra.mrb[0].mxu0 %v2940
  %v3059 = vpop.f32.mrb[0].mxu0
  %v3060 = vadd.f32 0.0, %v3059
  %v3061 = vpop.f32.mrb[0].mxu0
  %3062 = vmatprep.mubr.f32.mxu0 0.0
  %3063 = vmatmul.mubr.f32.gmra.mrb[0].mxu0 %v2943
  %v3064 = vpop.f32.mrb[0].mxu0
  %v3065 = vadd.f32 0.0, %v3064
  %v3066 = vpop.f32.mrb[0].mxu0
  %3067 = vmatprep.mubr.f32.mxu0 0.0
  %3068 = vmatmul.mubr.f32.gmra.mrb[0].mxu0 %v2946
  %v3069 = vpop.f32.mrb[0].mxu0
  %v3070 = vadd.f32 0.0, %v3069
  %v3071 = vpop.f32.mrb[0].mxu0
  %3072 = vmatprep.mubr.f32.mxu0 0.0
  %3073 = vmatmul.mubr.f32.gmra.mrb[0].mxu0 %v2949
  %v3074 = vpop.f32.mrb[0].mxu0
  %v3075 = vadd.f32 0.0, %v3074
  %v3076 = vpop.f32.mrb[0].mxu0
  %3077 = vmatprep.mubr.f32.mxu0 0.0
  %3078 = vmatmul.mubr.f32.gmra.mrb[0].mxu0 %v2952
  %v3079 = vpop.f32.mrb[0].mxu0
  %v3080 = vadd.f32 0.0, %v3079
  %v3081 = vpop.f32.mrb[0].mxu0
  %3082 = vmatprep.mubr.f32.mxu0 0.0
  %3083 = vmatmul.mubr.f32.gmra.mrb[0].mxu0 %v2955
  %v3084 = vpop.f32.mrb[0].mxu0
  %v3085 = vadd.f32 0.0, %v3084
  %v3086 = vpop.f32.mrb[0].mxu0
  %3087 = vmatprep.mubr.f32.mxu0 0.0
  %3088 = vmatmul.mubr.f32.gmra.mrb[0].mxu0 %v2958
  %v3089 = vpop.f32.mrb[0].mxu0
  %v3090 = vadd.f32 0.0, %v3089
  %v3091 = vpop.f32.mrb[0].mxu0
  %3092 = vmatprep.mubr.f32.mxu0 0.0
  %3093 = vmatmul.mubr.f32.gmra.mrb[0].mxu0 %v2961
  %v3094 = vpop.f32.mrb[0].mxu0
  %v3095 = vadd.f32 0.0, %v3094
  %v3096 = vpop.f32.mrb[0].mxu0
  %3097 = vmatprep.mubr.f32.mxu0 0.0
  %3098 = vmatmul.mubr.f32.gmra.mrb[0].mxu0 %v2964
  %v3099 = vpop.f32.mrb[0].mxu0
  %v3100 = vadd.f32 0.0, %v3099
  %v3101 = vpop.f32.mrb[0].mxu0
  %3102 = vmatprep.mubr.f32.mxu0 0.0
  %3103 = vmatmul.mubr.f32.gmra.mrb[0].mxu0 %v2967
  %v3104 = vpop.f32.mrb[0].mxu0
  %v3105 = vadd.f32 0.0, %v3104
  %v3106 = vpop.f32.mrb[0].mxu0
  %3107 = vmatprep.mubr.f32.mxu0 0.0
  %3108 = vmatmul.mubr.f32.gmra.mrb[0].mxu0 %v2970
  %v3109 = vpop.f32.mrb[0].mxu0
  %v3110 = vadd.f32 0.0, %v3109
  %v3111 = vpop.f32.mrb[0].mxu0
  %3112 = vmatprep.mubr.f32.mxu0 0.0
  %3113 = vmatmul.mubr.f32.gmra.mrb[0].mxu0 %v2973
  %v3114 = vpop.f32.mrb[0].mxu0
  %v3115 = vadd.f32 0.0, %v3114
  %v3116 = vpop.f32.mrb[0].mxu0
  %3117 = vmatprep.mubr.f32.mxu0 0.0
  %3118 = vmatmul.mubr.f32.gmra.mrb[0].mxu0 %v2976
  %v3119 = vpop.f32.mrb[0].mxu0
  %v3120 = vadd.f32 0.0, %v3119
  %v3121 = vpop.f32.mrb[0].mxu0
  %3122 = vdwg.mxu0
  %v3123 = vmul.f32 %v3045, 0.5
  %v3124 = vmul.f32 %v3050, 0.5
  %v3125 = vmul.f32 %v3055, 0.5
  %v3126 = vmul.f32 %v3060, 0.5
  %v3127 = vmul.f32 %v3065, 0.5
  %v3128 = vmul.f32 %v3070, 0.5
  %v3129 = vmul.f32 %v3075, 0.5
  %v3130 = vmul.f32 %v3080, 0.5
  %v3131 = vmul.f32 %v3085, 0.5
  %v3132 = vmul.f32 %v3090, 0.5
  %v3133 = vmul.f32 %v3095, 0.5
  %v3134 = vmul.f32 %v3100, 0.5
  %v3135 = vmul.f32 %v3105, 0.5
  %v3136 = vmul.f32 %v3110, 0.5
  %v3137 = vmul.f32 %v3115, 0.5
  %v3138 = vmul.f32 %v3120, 0.5
  %vm3139 = vcmp.gt.f32.partialorder %v2649, 0.0
  %vm3140 = vcmp.gt.f32.partialorder %v2650, 0.0
  %vm3141 = vcmp.gt.f32.partialorder %v2651, 0.0
  %vm3142 = vcmp.gt.f32.partialorder %v2652, 0.0
  %vm3143 = vcmp.gt.f32.partialorder %v2653, 0.0
  %vm3144 = vcmp.gt.f32.partialorder %v2654, 0.0
  %vm3145 = vcmp.gt.f32.partialorder %v2655, 0.0
  %vm3146 = vcmp.gt.f32.partialorder %v2656, 0.0
  %vm3147 = vcmp.gt.f32.partialorder %v2657, 0.0
  %vm3148 = vcmp.gt.f32.partialorder %v2658, 0.0
  %vm3149 = vcmp.gt.f32.partialorder %v2659, 0.0
  %vm3150 = vcmp.gt.f32.partialorder %v2660, 0.0
  %vm3151 = vcmp.gt.f32.partialorder %v2661, 0.0
  %vm3152 = vcmp.gt.f32.partialorder %v2662, 0.0
  %vm3153 = vcmp.gt.f32.partialorder %v2663, 0.0
  %vm3154 = vcmp.gt.f32.partialorder %v2664, 0.0
  %v3155 = vsel %vm3139, %v3123, -1e+09
  %v3156 = vsel %vm3140, %v3124, -1e+09
  %v3157 = vsel %vm3141, %v3125, -1e+09
  %v3158 = vsel %vm3142, %v3126, -1e+09
  %v3159 = vsel %vm3143, %v3127, -1e+09
  %v3160 = vsel %vm3144, %v3128, -1e+09
  %v3161 = vsel %vm3145, %v3129, -1e+09
  %v3162 = vsel %vm3146, %v3130, -1e+09
  %v3163 = vsel %vm3147, %v3131, -1e+09
  %v3164 = vsel %vm3148, %v3132, -1e+09
  %v3165 = vsel %vm3149, %v3133, -1e+09
  %v3166 = vsel %vm3150, %v3134, -1e+09
  %v3167 = vsel %vm3151, %v3135, -1e+09
  %v3168 = vsel %vm3152, %v3136, -1e+09
  %v3169 = vsel %vm3153, %v3137, -1e+09
  %v3170 = vsel %vm3154, %v3138, -1e+09
  %3171 = vmax.xlane.f32.xlu0 %v3155
  %v3172 = vpop.xlane.xlu0 %3171
  %3173 = vmax.xlane.f32.xlu0 %v3156
  %v3174 = vpop.xlane.xlu0 %3173
  %3175 = vmax.xlane.f32.xlu0 %v3157
  %v3176 = vpop.xlane.xlu0 %3175
  %3177 = vmax.xlane.f32.xlu0 %v3158
  %v3178 = vpop.xlane.xlu0 %3177
  %3179 = vmax.xlane.f32.xlu0 %v3159
  %v3180 = vpop.xlane.xlu0 %3179
  %3181 = vmax.xlane.f32.xlu0 %v3160
  %v3182 = vpop.xlane.xlu0 %3181
  %3183 = vmax.xlane.f32.xlu0 %v3161
  %v3184 = vpop.xlane.xlu0 %3183
  %3185 = vmax.xlane.f32.xlu0 %v3162
  %v3186 = vpop.xlane.xlu0 %3185
  %3187 = vmax.xlane.f32.xlu0 %v3163
  %v3188 = vpop.xlane.xlu0 %3187
  %3189 = vmax.xlane.f32.xlu0 %v3164
  %v3190 = vpop.xlane.xlu0 %3189
  %3191 = vmax.xlane.f32.xlu0 %v3165
  %v3192 = vpop.xlane.xlu0 %3191
  %3193 = vmax.xlane.f32.xlu0 %v3166
  %v3194 = vpop.xlane.xlu0 %3193
  %3195 = vmax.xlane.f32.xlu0 %v3167
  %v3196 = vpop.xlane.xlu0 %3195
  %3197 = vmax.xlane.f32.xlu0 %v3168
  %v3198 = vpop.xlane.xlu0 %3197
  %3199 = vmax.xlane.f32.xlu0 %v3169
  %v3200 = vpop.xlane.xlu0 %3199
  %3201 = vmax.xlane.f32.xlu0 %v3170
  %v3202 = vpop.xlane.xlu0 %3201
  %v3203 = vsub.f32 %v3155, %v3172
  %v3204 = vsub.f32 %v3156, %v3174
  %v3205 = vsub.f32 %v3157, %v3176
  %v3206 = vsub.f32 %v3158, %v3178
  %v3207 = vsub.f32 %v3159, %v3180
  %v3208 = vsub.f32 %v3160, %v3182
  %v3209 = vsub.f32 %v3161, %v3184
  %v3210 = vsub.f32 %v3162, %v3186
  %v3211 = vsub.f32 %v3163, %v3188
  %v3212 = vsub.f32 %v3164, %v3190
  %v3213 = vsub.f32 %v3165, %v3192
  %v3214 = vsub.f32 %v3166, %v3194
  %v3215 = vsub.f32 %v3167, %v3196
  %v3216 = vsub.f32 %v3168, %v3198
  %v3217 = vsub.f32 %v3169, %v3200
  %v3218 = vsub.f32 %v3170, %v3202
  %v3219 = vmul.f32 %v3203, 1.442695
  %v3220 = vpow.pop %v3219
  %v3221 = vmul.f32 %v3204, 1.442695
  %v3222 = vpow.pop %v3221
  %v3223 = vmul.f32 %v3205, 1.442695
  %v3224 = vpow.pop %v3223
  %v3225 = vmul.f32 %v3206, 1.442695
  %v3226 = vpow.pop %v3225
  %v3227 = vmul.f32 %v3207, 1.442695
  %v3228 = vpow.pop %v3227
  %v3229 = vmul.f32 %v3208, 1.442695
  %v3230 = vpow.pop %v3229
  %v3231 = vmul.f32 %v3209, 1.442695
  %v3232 = vpow.pop %v3231
  %v3233 = vmul.f32 %v3210, 1.442695
  %v3234 = vpow.pop %v3233
  %v3235 = vmul.f32 %v3211, 1.442695
  %v3236 = vpow.pop %v3235
  %v3237 = vmul.f32 %v3212, 1.442695
  %v3238 = vpow.pop %v3237
  %v3239 = vmul.f32 %v3213, 1.442695
  %v3240 = vpow.pop %v3239
  %v3241 = vmul.f32 %v3214, 1.442695
  %v3242 = vpow.pop %v3241
  %v3243 = vmul.f32 %v3215, 1.442695
  %v3244 = vpow.pop %v3243
  %v3245 = vmul.f32 %v3216, 1.442695
  %v3246 = vpow.pop %v3245
  %v3247 = vmul.f32 %v3217, 1.442695
  %v3248 = vpow.pop %v3247
  %v3249 = vmul.f32 %v3218, 1.442695
  %v3250 = vpow.pop %v3249
  %3251 = vadd.xlane.f32.xlu0 %v3220
  %v3252 = vpop.xlane.xlu0 %3251
  %3253 = vadd.xlane.f32.xlu0 %v3222
  %v3254 = vpop.xlane.xlu0 %3253
  %3255 = vadd.xlane.f32.xlu0 %v3224
  %v3256 = vpop.xlane.xlu0 %3255
  %3257 = vadd.xlane.f32.xlu0 %v3226
  %v3258 = vpop.xlane.xlu0 %3257
  %3259 = vadd.xlane.f32.xlu0 %v3228
  %v3260 = vpop.xlane.xlu0 %3259
  %3261 = vadd.xlane.f32.xlu0 %v3230
  %v3262 = vpop.xlane.xlu0 %3261
  %3263 = vadd.xlane.f32.xlu0 %v3232
  %v3264 = vpop.xlane.xlu0 %3263
  %3265 = vadd.xlane.f32.xlu0 %v3234
  %v3266 = vpop.xlane.xlu0 %3265
  %3267 = vadd.xlane.f32.xlu0 %v3236
  %v3268 = vpop.xlane.xlu0 %3267
  %3269 = vadd.xlane.f32.xlu0 %v3238
  %v3270 = vpop.xlane.xlu0 %3269
  %3271 = vadd.xlane.f32.xlu0 %v3240
  %v3272 = vpop.xlane.xlu0 %3271
  %3273 = vadd.xlane.f32.xlu0 %v3242
  %v3274 = vpop.xlane.xlu0 %3273
  %3275 = vadd.xlane.f32.xlu0 %v3244
  %v3276 = vpop.xlane.xlu0 %3275
  %3277 = vadd.xlane.f32.xlu0 %v3246
  %v3278 = vpop.xlane.xlu0 %3277
  %3279 = vadd.xlane.f32.xlu0 %v3248
  %v3280 = vpop.xlane.xlu0 %3279
  %3281 = vadd.xlane.f32.xlu0 %v3250
  %v3282 = vpop.xlane.xlu0 %3281
  %v3283 = vrcp.pop %v3252
  %v3284 = vmul.f32 %v3220, %v3283
  %v3285 = vrcp.pop %v3254
  %v3286 = vmul.f32 %v3222, %v3285
  %v3287 = vrcp.pop %v3256
  %v3288 = vmul.f32 %v3224, %v3287
  %v3289 = vrcp.pop %v3258
  %v3290 = vmul.f32 %v3226, %v3289
  %v3291 = vrcp.pop %v3260
  %v3292 = vmul.f32 %v3228, %v3291
  %v3293 = vrcp.pop %v3262
  %v3294 = vmul.f32 %v3230, %v3293
  %v3295 = vrcp.pop %v3264
  %v3296 = vmul.f32 %v3232, %v3295
  %v3297 = vrcp.pop %v3266
  %v3298 = vmul.f32 %v3234, %v3297
  %v3299 = vrcp.pop %v3268
  %v3300 = vmul.f32 %v3236, %v3299
  %v3301 = vrcp.pop %v3270
  %v3302 = vmul.f32 %v3238, %v3301
  %v3303 = vrcp.pop %v3272
  %v3304 = vmul.f32 %v3240, %v3303
  %v3305 = vrcp.pop %v3274
  %v3306 = vmul.f32 %v3242, %v3305
  %v3307 = vrcp.pop %v3276
  %v3308 = vmul.f32 %v3244, %v3307
  %v3309 = vrcp.pop %v3278
  %v3310 = vmul.f32 %v3246, %v3309
  %v3311 = vrcp.pop %v3280
  %v3312 = vmul.f32 %v3248, %v3311
  %v3313 = vrcp.pop %v3282
  %v3314 = vmul.f32 %v3250, %v3313
  %3315 = vmatprep.subr.mxu0 0.0
  %3316 = vmatpush1.xpose.msra.mxu0 %v3284
  %3317 = vmatprep.subr.mxu0 0.0
  %3318 = vmatpush1.xpose.msra.mxu0 %v3286
  %3319 = vmatprep.subr.mxu0 0.0
  %3320 = vmatpush1.xpose.msra.mxu0 %v3288
  %3321 = vmatprep.subr.mxu0 0.0
  %3322 = vmatpush1.xpose.msra.mxu0 %v3290
  %3323 = vmatprep.subr.mxu0 0.0
  %3324 = vmatpush1.xpose.msra.mxu0 %v3292
  %3325 = vmatprep.subr.mxu0 0.0
  %3326 = vmatpush1.xpose.msra.mxu0 %v3294
  %3327 = vmatprep.subr.mxu0 0.0
  %3328 = vmatpush1.xpose.msra.mxu0 %v3296
  %3329 = vmatprep.subr.mxu0 0.0
  %3330 = vmatpush1.xpose.msra.mxu0 %v3298
  %3331 = vmatprep.subr.mxu0 0.0
  %3332 = vmatpush1.xpose.msra.mxu0 %v3300
  %3333 = vmatprep.subr.mxu0 0.0
  %3334 = vmatpush1.xpose.msra.mxu0 %v3302
  %3335 = vmatprep.subr.mxu0 0.0
  %3336 = vmatpush1.xpose.msra.mxu0 %v3304
  %3337 = vmatprep.subr.mxu0 0.0
  %3338 = vmatpush1.xpose.msra.mxu0 %v3306
  %3339 = vmatprep.subr.mxu0 0.0
  %3340 = vmatpush1.xpose.msra.mxu0 %v3308
  %3341 = vmatprep.subr.mxu0 0.0
  %3342 = vmatpush1.xpose.msra.mxu0 %v3310
  %3343 = vmatprep.subr.mxu0 0.0
  %3344 = vmatpush1.xpose.msra.mxu0 %v3312
  %3345 = vmatprep.subr.mxu0 0.0
  %3346 = vmatpush1.xpose.msra.mxu0 %v3314
  %3347 = vmatprep.subr.mxu0 0.0
  %3348 = vmatpush1.xpose.msra.mxu0 0.0
  %3349 = vmatprep.subr.mxu0 0.0
  %3350 = vmatpush1.xpose.msra.mxu0 0.0
  %3351 = vmatprep.subr.mxu0 0.0
  %3352 = vmatpush1.xpose.msra.mxu0 0.0
  %3353 = vmatprep.subr.mxu0 0.0
  %3354 = vmatpush1.xpose.msra.mxu0 0.0
  %3355 = vmatprep.subr.mxu0 0.0
  %3356 = vmatpush1.xpose.msra.mxu0 0.0
  %3357 = vmatprep.subr.mxu0 0.0
  %3358 = vmatpush1.xpose.msra.mxu0 0.0
  %3359 = vmatprep.subr.mxu0 0.0
  %3360 = vmatpush1.xpose.msra.mxu0 0.0
  %3361 = vmatprep.subr.mxu0 0.0
  %3362 = vmatpush1.xpose.msra.mxu0 0.0
  %3363 = vmatprep.subr.mxu0 0.0
  %3364 = vmatpush1.xpose.msra.mxu0 0.0
  %3365 = vmatprep.subr.mxu0 0.0
  %3366 = vmatpush1.xpose.msra.mxu0 0.0
  %3367 = vmatprep.subr.mxu0 0.0
  %3368 = vmatpush1.xpose.msra.mxu0 0.0
  %3369 = vmatprep.subr.mxu0 0.0
  %3370 = vmatpush1.xpose.msra.mxu0 0.0
  %3371 = vmatprep.subr.mxu0 0.0
  %3372 = vmatpush1.xpose.msra.mxu0 0.0
  %3373 = vmatprep.subr.mxu0 0.0
  %3374 = vmatpush1.xpose.msra.mxu0 0.0
  %3375 = vmatprep.subr.mxu0 0.0
  %3376 = vmatpush1.xpose.msra.mxu0 0.0
  %3377 = vmatprep.subr.mxu0 0.0
  %3378 = vmatpush1.xpose.msra.mxu0 0.0
  %3379 = vmatprep.mubr.f32.mxu0 0.0
  %3380 = vmatmul.mubr.f32.gmra.mrb[0].mxu0 %v2880
  %v3381 = vpop.f32.mrb[0].mxu0
  %v3382 = vadd.f32 0.0, %v3381
  %v3383 = vpop.f32.mrb[0].mxu0
  %3384 = vdwg.mxu0
  %3385 = vxpose.xlu0.b32.start [1/16] %v2845, 128
  %3386 = vxpose.xlu0.b32.cont [2/16] 0.0, 128
  %3387 = vxpose.xlu0.b32.cont [3/16] 0.0, 128
  %3388 = vxpose.xlu0.b32.cont [4/16] 0.0, 128
  %3389 = vxpose.xlu0.b32.cont [5/16] 0.0, 128
  %3390 = vxpose.xlu0.b32.cont [6/16] 0.0, 128
  %3391 = vxpose.xlu0.b32.cont [7/16] 0.0, 128
  %3392 = vxpose.xlu0.b32.cont [8/16] 0.0, 128
  %3393 = vxpose.xlu0.b32.cont [9/16] 0.0, 128
  %3394 = vxpose.xlu0.b32.cont [10/16] 0.0, 128
  %3395 = vxpose.xlu0.b32.cont [11/16] 0.0, 128
  %3396 = vxpose.xlu0.b32.cont [12/16] 0.0, 128
  %3397 = vxpose.xlu0.b32.cont [13/16] 0.0, 128
  %3398 = vxpose.xlu0.b32.cont [14/16] 0.0, 128
  %3399 = vxpose.xlu0.b32.cont [15/16] 0.0, 128
  %3400 = vxpose.xlu0.b32.end [16/16] 0.0, 128
  %v3401 = vpop.trf.xlu0
  %v3402 = vpop.trf.xlu0
  %v3403 = vpop.trf.xlu0
  %v3404 = vpop.trf.xlu0
  %v3405 = vpop.trf.xlu0
  %v3406 = vpop.trf.xlu0
  %v3407 = vpop.trf.xlu0
  %v3408 = vpop.trf.xlu0
  %v3409 = vpop.trf.xlu0
  %v3410 = vpop.trf.xlu0
  %v3411 = vpop.trf.xlu0
  %v3412 = vpop.trf.xlu0
  %v3413 = vpop.trf.xlu0
  %v3414 = vpop.trf.xlu0
  %v3415 = vpop.trf.xlu0
  %v3416 = vpop.trf.xlu0
  %v3418 = vsel %vm599, %v3401, 0
  %v3421 = vsel %vm599, %v3402, 0
  %v3424 = vsel %vm599, %v3403, 0
  %v3427 = vsel %vm599, %v3404, 0
  %v3430 = vsel %vm599, %v3405, 0
  %v3433 = vsel %vm599, %v3406, 0
  %v3436 = vsel %vm599, %v3407, 0
  %v3439 = vsel %vm599, %v3408, 0
  %v3442 = vsel %vm599, %v3409, 0
  %v3445 = vsel %vm599, %v3410, 0
  %v3448 = vsel %vm599, %v3411, 0
  %v3451 = vsel %vm599, %v3412, 0
  %v3454 = vsel %vm599, %v3413, 0
  %v3457 = vsel %vm599, %v3414, 0
  %v3460 = vsel %vm599, %v3415, 0
  %v3463 = vsel %vm599, %v3416, 0
  %3465 = vmatprep.subr.mxu0 0.0
  %3466 = vmatpush1.msra.mxu0 %v2865
  %3467 = vmatprep.subr.mxu0 0.0
  %3468 = vmatpush1.msra.mxu0 0.0
  %3469 = vmatprep.subr.mxu0 0.0
  %3470 = vmatpush1.msra.mxu0 0.0
  %3471 = vmatprep.subr.mxu0 0.0
  %3472 = vmatpush1.msra.mxu0 0.0
  %3473 = vmatprep.subr.mxu0 0.0
  %3474 = vmatpush1.msra.mxu0 0.0
  %3475 = vmatprep.subr.mxu0 0.0
  %3476 = vmatpush1.msra.mxu0 0.0
  %3477 = vmatprep.subr.mxu0 0.0
  %3478 = vmatpush1.msra.mxu0 0.0
  %3479 = vmatprep.subr.mxu0 0.0
  %3480 = vmatpush1.msra.mxu0 0.0
  %3481 = vmatprep.subr.mxu0 0.0
  %3482 = vmatpush1.msra.mxu0 0.0
  %3483 = vmatprep.subr.mxu0 0.0
  %3484 = vmatpush1.msra.mxu0 0.0
  %3485 = vmatprep.subr.mxu0 0.0
  %3486 = vmatpush1.msra.mxu0 0.0
  %3487 = vmatprep.subr.mxu0 0.0
  %3488 = vmatpush1.msra.mxu0 0.0
  %3489 = vmatprep.subr.mxu0 0.0
  %3490 = vmatpush1.msra.mxu0 0.0
  %3491 = vmatprep.subr.mxu0 0.0
  %3492 = vmatpush1.msra.mxu0 0.0
  %3493 = vmatprep.subr.mxu0 0.0
  %3494 = vmatpush1.msra.mxu0 0.0
  %3495 = vmatprep.subr.mxu0 0.0
  %3496 = vmatpush1.msra.mxu0 0.0
  %3497 = vmatprep.subr.mxu0 0.0
  %3498 = vmatpush1.msra.mxu0 0.0
  %3499 = vmatprep.subr.mxu0 0.0
  %3500 = vmatpush1.msra.mxu0 0.0
  %3501 = vmatprep.subr.mxu0 0.0
  %3502 = vmatpush1.msra.mxu0 0.0
  %3503 = vmatprep.subr.mxu0 0.0
  %3504 = vmatpush1.msra.mxu0 0.0
  %3505 = vmatprep.subr.mxu0 0.0
  %3506 = vmatpush1.msra.mxu0 0.0
  %3507 = vmatprep.subr.mxu0 0.0
  %3508 = vmatpush1.msra.mxu0 0.0
  %3509 = vmatprep.subr.mxu0 0.0
  %3510 = vmatpush1.msra.mxu0 0.0
  %3511 = vmatprep.subr.mxu0 0.0
  %3512 = vmatpush1.msra.mxu0 0.0
  %3513 = vmatprep.subr.mxu0 0.0
  %3514 = vmatpush1.msra.mxu0 0.0
  %3515 = vmatprep.subr.mxu0 0.0
  %3516 = vmatpush1.msra.mxu0 0.0
  %3517 = vmatprep.subr.mxu0 0.0
  %3518 = vmatpush1.msra.mxu0 0.0
  %3519 = vmatprep.subr.mxu0 0.0
  %3520 = vmatpush1.msra.mxu0 0.0
  %3521 = vmatprep.subr.mxu0 0.0
  %3522 = vmatpush1.msra.mxu0 0.0
  %3523 = vmatprep.subr.mxu0 0.0
  %3524 = vmatpush1.msra.mxu0 0.0
  %3525 = vmatprep.subr.mxu0 0.0
  %3526 = vmatpush1.msra.mxu0 0.0
  %3527 = vmatprep.subr.mxu0 0.0
  %3528 = vmatpush1.msra.mxu0 0.0
  %3529 = vmatprep.mubr.f32.mxu0 0.0
  %3530 = vmatmul.mubr.f32.gmra.mrb[0].mxu0 %v3418
  %v3531 = vpop.f32.mrb[0].mxu0
  %v3532 = vadd.f32 0.0, %v3531
  %v3533 = vpop.f32.mrb[0].mxu0
  %3534 = vmatprep.mubr.f32.mxu0 0.0
  %3535 = vmatmul.mubr.f32.gmra.mrb[0].mxu0 %v3421
  %v3536 = vpop.f32.mrb[0].mxu0
  %v3537 = vadd.f32 0.0, %v3536
  %v3538 = vpop.f32.mrb[0].mxu0
  %3539 = vmatprep.mubr.f32.mxu0 0.0
  %3540 = vmatmul.mubr.f32.gmra.mrb[0].mxu0 %v3424
  %v3541 = vpop.f32.mrb[0].mxu0
  %v3542 = vadd.f32 0.0, %v3541
  %v3543 = vpop.f32.mrb[0].mxu0
  %3544 = vmatprep.mubr.f32.mxu0 0.0
  %3545 = vmatmul.mubr.f32.gmra.mrb[0].mxu0 %v3427
  %v3546 = vpop.f32.mrb[0].mxu0
  %v3547 = vadd.f32 0.0, %v3546
  %v3548 = vpop.f32.mrb[0].mxu0
  %3549 = vmatprep.mubr.f32.mxu0 0.0
  %3550 = vmatmul.mubr.f32.gmra.mrb[0].mxu0 %v3430
  %v3551 = vpop.f32.mrb[0].mxu0
  %v3552 = vadd.f32 0.0, %v3551
  %v3553 = vpop.f32.mrb[0].mxu0
  %3554 = vmatprep.mubr.f32.mxu0 0.0
  %3555 = vmatmul.mubr.f32.gmra.mrb[0].mxu0 %v3433
  %v3556 = vpop.f32.mrb[0].mxu0
  %v3557 = vadd.f32 0.0, %v3556
  %v3558 = vpop.f32.mrb[0].mxu0
  %3559 = vmatprep.mubr.f32.mxu0 0.0
  %3560 = vmatmul.mubr.f32.gmra.mrb[0].mxu0 %v3436
  %v3561 = vpop.f32.mrb[0].mxu0
  %v3562 = vadd.f32 0.0, %v3561
  %v3563 = vpop.f32.mrb[0].mxu0
  %3564 = vmatprep.mubr.f32.mxu0 0.0
  %3565 = vmatmul.mubr.f32.gmra.mrb[0].mxu0 %v3439
  %v3566 = vpop.f32.mrb[0].mxu0
  %v3567 = vadd.f32 0.0, %v3566
  %v3568 = vpop.f32.mrb[0].mxu0
  %3569 = vmatprep.mubr.f32.mxu0 0.0
  %3570 = vmatmul.mubr.f32.gmra.mrb[0].mxu0 %v3442
  %v3571 = vpop.f32.mrb[0].mxu0
  %v3572 = vadd.f32 0.0, %v3571
  %v3573 = vpop.f32.mrb[0].mxu0
  %3574 = vmatprep.mubr.f32.mxu0 0.0
  %3575 = vmatmul.mubr.f32.gmra.mrb[0].mxu0 %v3445
  %v3576 = vpop.f32.mrb[0].mxu0
  %v3577 = vadd.f32 0.0, %v3576
  %v3578 = vpop.f32.mrb[0].mxu0
  %3579 = vmatprep.mubr.f32.mxu0 0.0
  %3580 = vmatmul.mubr.f32.gmra.mrb[0].mxu0 %v3448
  %v3581 = vpop.f32.mrb[0].mxu0
  %v3582 = vadd.f32 0.0, %v3581
  %v3583 = vpop.f32.mrb[0].mxu0
  %3584 = vmatprep.mubr.f32.mxu0 0.0
  %3585 = vmatmul.mubr.f32.gmra.mrb[0].mxu0 %v3451
  %v3586 = vpop.f32.mrb[0].mxu0
  %v3587 = vadd.f32 0.0, %v3586
  %v3588 = vpop.f32.mrb[0].mxu0
  %3589 = vmatprep.mubr.f32.mxu0 0.0
  %3590 = vmatmul.mubr.f32.gmra.mrb[0].mxu0 %v3454
  %v3591 = vpop.f32.mrb[0].mxu0
  %v3592 = vadd.f32 0.0, %v3591
  %v3593 = vpop.f32.mrb[0].mxu0
  %3594 = vmatprep.mubr.f32.mxu0 0.0
  %3595 = vmatmul.mubr.f32.gmra.mrb[0].mxu0 %v3457
  %v3596 = vpop.f32.mrb[0].mxu0
  %v3597 = vadd.f32 0.0, %v3596
  %v3598 = vpop.f32.mrb[0].mxu0
  %3599 = vmatprep.mubr.f32.mxu0 0.0
  %3600 = vmatmul.mubr.f32.gmra.mrb[0].mxu0 %v3460
  %v3601 = vpop.f32.mrb[0].mxu0
  %v3602 = vadd.f32 0.0, %v3601
  %v3603 = vpop.f32.mrb[0].mxu0
  %3604 = vmatprep.mubr.f32.mxu0 0.0
  %3605 = vmatmul.mubr.f32.gmra.mrb[0].mxu0 %v3463
  %v3606 = vpop.f32.mrb[0].mxu0
  %v3607 = vadd.f32 0.0, %v3606
  %v3608 = vpop.f32.mrb[0].mxu0
  %3609 = vdwg.mxu0
  %v3610 = vmul.f32 %v3532, 0.5
  %v3611 = vmul.f32 %v3537, 0.5
  %v3612 = vmul.f32 %v3542, 0.5
  %v3613 = vmul.f32 %v3547, 0.5
  %v3614 = vmul.f32 %v3552, 0.5
  %v3615 = vmul.f32 %v3557, 0.5
  %v3616 = vmul.f32 %v3562, 0.5
  %v3617 = vmul.f32 %v3567, 0.5
  %v3618 = vmul.f32 %v3572, 0.5
  %v3619 = vmul.f32 %v3577, 0.5
  %v3620 = vmul.f32 %v3582, 0.5
  %v3621 = vmul.f32 %v3587, 0.5
  %v3622 = vmul.f32 %v3592, 0.5
  %v3623 = vmul.f32 %v3597, 0.5
  %v3624 = vmul.f32 %v3602, 0.5
  %v3625 = vmul.f32 %v3607, 0.5
  %v3626 = vsel %vm3139, %v3610, -1e+09
  %v3627 = vsel %vm3140, %v3611, -1e+09
  %v3628 = vsel %vm3141, %v3612, -1e+09
  %v3629 = vsel %vm3142, %v3613, -1e+09
  %v3630 = vsel %vm3143, %v3614, -1e+09
  %v3631 = vsel %vm3144, %v3615, -1e+09
  %v3632 = vsel %vm3145, %v3616, -1e+09
  %v3633 = vsel %vm3146, %v3617, -1e+09
  %v3634 = vsel %vm3147, %v3618, -1e+09
  %v3635 = vsel %vm3148, %v3619, -1e+09
  %v3636 = vsel %vm3149, %v3620, -1e+09
  %v3637 = vsel %vm3150, %v3621, -1e+09
  %v3638 = vsel %vm3151, %v3622, -1e+09
  %v3639 = vsel %vm3152, %v3623, -1e+09
  %v3640 = vsel %vm3153, %v3624, -1e+09
  %v3641 = vsel %vm3154, %v3625, -1e+09
  %3642 = vmax.xlane.f32.xlu0 %v3626
  %v3643 = vpop.xlane.xlu0 %3642
  %3644 = vmax.xlane.f32.xlu0 %v3627
  %v3645 = vpop.xlane.xlu0 %3644
  %3646 = vmax.xlane.f32.xlu0 %v3628
  %v3647 = vpop.xlane.xlu0 %3646
  %3648 = vmax.xlane.f32.xlu0 %v3629
  %v3649 = vpop.xlane.xlu0 %3648
  %3650 = vmax.xlane.f32.xlu0 %v3630
  %v3651 = vpop.xlane.xlu0 %3650
  %3652 = vmax.xlane.f32.xlu0 %v3631
  %v3653 = vpop.xlane.xlu0 %3652
  %3654 = vmax.xlane.f32.xlu0 %v3632
  %v3655 = vpop.xlane.xlu0 %3654
  %3656 = vmax.xlane.f32.xlu0 %v3633
  %v3657 = vpop.xlane.xlu0 %3656
  %3658 = vmax.xlane.f32.xlu0 %v3634
  %v3659 = vpop.xlane.xlu0 %3658
  %3660 = vmax.xlane.f32.xlu0 %v3635
  %v3661 = vpop.xlane.xlu0 %3660
  %3662 = vmax.xlane.f32.xlu0 %v3636
  %v3663 = vpop.xlane.xlu0 %3662
  %3664 = vmax.xlane.f32.xlu0 %v3637
  %v3665 = vpop.xlane.xlu0 %3664
  %3666 = vmax.xlane.f32.xlu0 %v3638
  %v3667 = vpop.xlane.xlu0 %3666
  %3668 = vmax.xlane.f32.xlu0 %v3639
  %v3669 = vpop.xlane.xlu0 %3668
  %3670 = vmax.xlane.f32.xlu0 %v3640
  %v3671 = vpop.xlane.xlu0 %3670
  %3672 = vmax.xlane.f32.xlu0 %v3641
  %v3673 = vpop.xlane.xlu0 %3672
  %v3674 = vsub.f32 %v3626, %v3643
  %v3675 = vsub.f32 %v3627, %v3645
  %v3676 = vsub.f32 %v3628, %v3647
  %v3677 = vsub.f32 %v3629, %v3649
  %v3678 = vsub.f32 %v3630, %v3651
  %v3679 = vsub.f32 %v3631, %v3653
  %v3680 = vsub.f32 %v3632, %v3655
  %v3681 = vsub.f32 %v3633, %v3657
  %v3682 = vsub.f32 %v3634, %v3659
  %v3683 = vsub.f32 %v3635, %v3661
  %v3684 = vsub.f32 %v3636, %v3663
  %v3685 = vsub.f32 %v3637, %v3665
  %v3686 = vsub.f32 %v3638, %v3667
  %v3687 = vsub.f32 %v3639, %v3669
  %v3688 = vsub.f32 %v3640, %v3671
  %v3689 = vsub.f32 %v3641, %v3673
  %v3690 = vmul.f32 %v3674, 1.442695
  %v3691 = vpow.pop %v3690
  %v3692 = vmul.f32 %v3675, 1.442695
  %v3693 = vpow.pop %v3692
  %v3694 = vmul.f32 %v3676, 1.442695
  %v3695 = vpow.pop %v3694
  %v3696 = vmul.f32 %v3677, 1.442695
  %v3697 = vpow.pop %v3696
  %v3698 = vmul.f32 %v3678, 1.442695
  %v3699 = vpow.pop %v3698
  %v3700 = vmul.f32 %v3679, 1.442695
  %v3701 = vpow.pop %v3700
  %v3702 = vmul.f32 %v3680, 1.442695
  %v3703 = vpow.pop %v3702
  %v3704 = vmul.f32 %v3681, 1.442695
  %v3705 = vpow.pop %v3704
  %v3706 = vmul.f32 %v3682, 1.442695
  %v3707 = vpow.pop %v3706
  %v3708 = vmul.f32 %v3683, 1.442695
  %v3709 = vpow.pop %v3708
  %v3710 = vmul.f32 %v3684, 1.442695
  %v3711 = vpow.pop %v3710
  %v3712 = vmul.f32 %v3685, 1.442695
  %v3713 = vpow.pop %v3712
  %v3714 = vmul.f32 %v3686, 1.442695
  %v3715 = vpow.pop %v3714
  %v3716 = vmul.f32 %v3687, 1.442695
  %v3717 = vpow.pop %v3716
  %v3718 = vmul.f32 %v3688, 1.442695
  %v3719 = vpow.pop %v3718
  %v3720 = vmul.f32 %v3689, 1.442695
  %v3721 = vpow.pop %v3720
  %3722 = vadd.xlane.f32.xlu0 %v3691
  %v3723 = vpop.xlane.xlu0 %3722
  %3724 = vadd.xlane.f32.xlu0 %v3693
  %v3725 = vpop.xlane.xlu0 %3724
  %3726 = vadd.xlane.f32.xlu0 %v3695
  %v3727 = vpop.xlane.xlu0 %3726
  %3728 = vadd.xlane.f32.xlu0 %v3697
  %v3729 = vpop.xlane.xlu0 %3728
  %3730 = vadd.xlane.f32.xlu0 %v3699
  %v3731 = vpop.xlane.xlu0 %3730
  %3732 = vadd.xlane.f32.xlu0 %v3701
  %v3733 = vpop.xlane.xlu0 %3732
  %3734 = vadd.xlane.f32.xlu0 %v3703
  %v3735 = vpop.xlane.xlu0 %3734
  %3736 = vadd.xlane.f32.xlu0 %v3705
  %v3737 = vpop.xlane.xlu0 %3736
  %3738 = vadd.xlane.f32.xlu0 %v3707
  %v3739 = vpop.xlane.xlu0 %3738
  %3740 = vadd.xlane.f32.xlu0 %v3709
  %v3741 = vpop.xlane.xlu0 %3740
  %3742 = vadd.xlane.f32.xlu0 %v3711
  %v3743 = vpop.xlane.xlu0 %3742
  %3744 = vadd.xlane.f32.xlu0 %v3713
  %v3745 = vpop.xlane.xlu0 %3744
  %3746 = vadd.xlane.f32.xlu0 %v3715
  %v3747 = vpop.xlane.xlu0 %3746
  %3748 = vadd.xlane.f32.xlu0 %v3717
  %v3749 = vpop.xlane.xlu0 %3748
  %3750 = vadd.xlane.f32.xlu0 %v3719
  %v3751 = vpop.xlane.xlu0 %3750
  %3752 = vadd.xlane.f32.xlu0 %v3721
  %v3753 = vpop.xlane.xlu0 %3752
  %v3754 = vrcp.pop %v3723
  %v3755 = vmul.f32 %v3691, %v3754
  %v3756 = vrcp.pop %v3725
  %v3757 = vmul.f32 %v3693, %v3756
  %v3758 = vrcp.pop %v3727
  %v3759 = vmul.f32 %v3695, %v3758
  %v3760 = vrcp.pop %v3729
  %v3761 = vmul.f32 %v3697, %v3760
  %v3762 = vrcp.pop %v3731
  %v3763 = vmul.f32 %v3699, %v3762
  %v3764 = vrcp.pop %v3733
  %v3765 = vmul.f32 %v3701, %v3764
  %v3766 = vrcp.pop %v3735
  %v3767 = vmul.f32 %v3703, %v3766
  %v3768 = vrcp.pop %v3737
  %v3769 = vmul.f32 %v3705, %v3768
  %v3770 = vrcp.pop %v3739
  %v3771 = vmul.f32 %v3707, %v3770
  %v3772 = vrcp.pop %v3741
  %v3773 = vmul.f32 %v3709, %v3772
  %v3774 = vrcp.pop %v3743
  %v3775 = vmul.f32 %v3711, %v3774
  %v3776 = vrcp.pop %v3745
  %v3777 = vmul.f32 %v3713, %v3776
  %v3778 = vrcp.pop %v3747
  %v3779 = vmul.f32 %v3715, %v3778
  %v3780 = vrcp.pop %v3749
  %v3781 = vmul.f32 %v3717, %v3780
  %v3782 = vrcp.pop %v3751
  %v3783 = vmul.f32 %v3719, %v3782
  %v3784 = vrcp.pop %v3753
  %v3785 = vmul.f32 %v3721, %v3784
  %3786 = vmatprep.subr.mxu0 0.0
  %3787 = vmatpush1.xpose.msra.mxu0 %v3755
  %3788 = vmatprep.subr.mxu0 0.0
  %3789 = vmatpush1.xpose.msra.mxu0 %v3757
  %3790 = vmatprep.subr.mxu0 0.0
  %3791 = vmatpush1.xpose.msra.mxu0 %v3759
  %3792 = vmatprep.subr.mxu0 0.0
  %3793 = vmatpush1.xpose.msra.mxu0 %v3761
  %3794 = vmatprep.subr.mxu0 0.0
  %3795 = vmatpush1.xpose.msra.mxu0 %v3763
  %3796 = vmatprep.subr.mxu0 0.0
  %3797 = vmatpush1.xpose.msra.mxu0 %v3765
  %3798 = vmatprep.subr.mxu0 0.0
  %3799 = vmatpush1.xpose.msra.mxu0 %v3767
  %3800 = vmatprep.subr.mxu0 0.0
  %3801 = vmatpush1.xpose.msra.mxu0 %v3769
  %3802 = vmatprep.subr.mxu0 0.0
  %3803 = vmatpush1.xpose.msra.mxu0 %v3771
  %3804 = vmatprep.subr.mxu0 0.0
  %3805 = vmatpush1.xpose.msra.mxu0 %v3773
  %3806 = vmatprep.subr.mxu0 0.0
  %3807 = vmatpush1.xpose.msra.mxu0 %v3775
  %3808 = vmatprep.subr.mxu0 0.0
  %3809 = vmatpush1.xpose.msra.mxu0 %v3777
  %3810 = vmatprep.subr.mxu0 0.0
  %3811 = vmatpush1.xpose.msra.mxu0 %v3779
  %3812 = vmatprep.subr.mxu0 0.0
  %3813 = vmatpush1.xpose.msra.mxu0 %v3781
  %3814 = vmatprep.subr.mxu0 0.0
  %3815 = vmatpush1.xpose.msra.mxu0 %v3783
  %3816 = vmatprep.subr.mxu0 0.0
  %3817 = vmatpush1.xpose.msra.mxu0 %v3785
  %3818 = vmatprep.subr.mxu0 0.0
  %3819 = vmatpush1.xpose.msra.mxu0 0.0
  %3820 = vmatprep.subr.mxu0 0.0
  %3821 = vmatpush1.xpose.msra.mxu0 0.0
  %3822 = vmatprep.subr.mxu0 0.0
  %3823 = vmatpush1.xpose.msra.mxu0 0.0
  %3824 = vmatprep.subr.mxu0 0.0
  %3825 = vmatpush1.xpose.msra.mxu0 0.0
  %3826 = vmatprep.subr.mxu0 0.0
  %3827 = vmatpush1.xpose.msra.mxu0 0.0
  %3828 = vmatprep.subr.mxu0 0.0
  %3829 = vmatpush1.xpose.msra.mxu0 0.0
  %3830 = vmatprep.subr.mxu0 0.0
  %3831 = vmatpush1.xpose.msra.mxu0 0.0
  %3832 = vmatprep.subr.mxu0 0.0
  %3833 = vmatpush1.xpose.msra.mxu0 0.0
  %3834 = vmatprep.subr.mxu0 0.0
  %3835 = vmatpush1.xpose.msra.mxu0 0.0
  %3836 = vmatprep.subr.mxu0 0.0
  %3837 = vmatpush1.xpose.msra.mxu0 0.0
  %3838 = vmatprep.subr.mxu0 0.0
  %3839 = vmatpush1.xpose.msra.mxu0 0.0
  %3840 = vmatprep.subr.mxu0 0.0
  %3841 = vmatpush1.xpose.msra.mxu0 0.0
  %3842 = vmatprep.subr.mxu0 0.0
  %3843 = vmatpush1.xpose.msra.mxu0 0.0
  %3844 = vmatprep.subr.mxu0 0.0
  %3845 = vmatpush1.xpose.msra.mxu0 0.0
  %3846 = vmatprep.subr.mxu0 0.0
  %3847 = vmatpush1.xpose.msra.mxu0 0.0
  %3848 = vmatprep.subr.mxu0 0.0
  %3849 = vmatpush1.xpose.msra.mxu0 0.0
  %3850 = vmatprep.mubr.f32.mxu0 0.0
  %3851 = vmatmul.mubr.f32.gmra.mrb[0].mxu0 %v2885
  %v3852 = vpop.f32.mrb[0].mxu0
  %v3853 = vadd.f32 0.0, %v3852
  %v3854 = vpop.f32.mrb[0].mxu0
  %3855 = vdwg.mxu0
  %3856 = vxpose.xlu0.b32.start [1/16] %v2850, 128
  %3857 = vxpose.xlu0.b32.cont [2/16] 0.0, 128
  %3858 = vxpose.xlu0.b32.cont [3/16] 0.0, 128
  %3859 = vxpose.xlu0.b32.cont [4/16] 0.0, 128
  %3860 = vxpose.xlu0.b32.cont [5/16] 0.0, 128
  %3861 = vxpose.xlu0.b32.cont [6/16] 0.0, 128
  %3862 = vxpose.xlu0.b32.cont [7/16] 0.0, 128
  %3863 = vxpose.xlu0.b32.cont [8/16] 0.0, 128
  %3864 = vxpose.xlu0.b32.cont [9/16] 0.0, 128
  %3865 = vxpose.xlu0.b32.cont [10/16] 0.0, 128
  %3866 = vxpose.xlu0.b32.cont [11/16] 0.0, 128
  %3867 = vxpose.xlu0.b32.cont [12/16] 0.0, 128
  %3868 = vxpose.xlu0.b32.cont [13/16] 0.0, 128
  %3869 = vxpose.xlu0.b32.cont [14/16] 0.0, 128
  %3870 = vxpose.xlu0.b32.cont [15/16] 0.0, 128
  %3871 = vxpose.xlu0.b32.end [16/16] 0.0, 128
  %v3872 = vpop.trf.xlu0
  %v3873 = vpop.trf.xlu0
  %v3874 = vpop.trf.xlu0
  %v3875 = vpop.trf.xlu0
  %v3876 = vpop.trf.xlu0
  %v3877 = vpop.trf.xlu0
  %v3878 = vpop.trf.xlu0
  %v3879 = vpop.trf.xlu0
  %v3880 = vpop.trf.xlu0
  %v3881 = vpop.trf.xlu0
  %v3882 = vpop.trf.xlu0
  %v3883 = vpop.trf.xlu0
  %v3884 = vpop.trf.xlu0
  %v3885 = vpop.trf.xlu0
  %v3886 = vpop.trf.xlu0
  %v3887 = vpop.trf.xlu0
  %v3889 = vsel %vm599, %v3872, 0
  %v3892 = vsel %vm599, %v3873, 0
  %v3895 = vsel %vm599, %v3874, 0
  %v3898 = vsel %vm599, %v3875, 0
  %v3901 = vsel %vm599, %v3876, 0
  %v3904 = vsel %vm599, %v3877, 0
  %v3907 = vsel %vm599, %v3878, 0
  %v3910 = vsel %vm599, %v3879, 0
  %v3913 = vsel %vm599, %v3880, 0
  %v3916 = vsel %vm599, %v3881, 0
  %v3919 = vsel %vm599, %v3882, 0
  %v3922 = vsel %vm599, %v3883, 0
  %v3925 = vsel %vm599, %v3884, 0
  %v3928 = vsel %vm599, %v3885, 0
  %v3931 = vsel %vm599, %v3886, 0
  %v3934 = vsel %vm599, %v3887, 0
  %3936 = vmatprep.subr.mxu0 0.0
  %3937 = vmatpush1.msra.mxu0 %v2870
  %3938 = vmatprep.subr.mxu0 0.0
  %3939 = vmatpush1.msra.mxu0 0.0
  %3940 = vmatprep.subr.mxu0 0.0
  %3941 = vmatpush1.msra.mxu0 0.0
  %3942 = vmatprep.subr.mxu0 0.0
  %3943 = vmatpush1.msra.mxu0 0.0
  %3944 = vmatprep.subr.mxu0 0.0
  %3945 = vmatpush1.msra.mxu0 0.0
  %3946 = vmatprep.subr.mxu0 0.0
  %3947 = vmatpush1.msra.mxu0 0.0
  %3948 = vmatprep.subr.mxu0 0.0
  %3949 = vmatpush1.msra.mxu0 0.0
  %3950 = vmatprep.subr.mxu0 0.0
  %3951 = vmatpush1.msra.mxu0 0.0
  %3952 = vmatprep.subr.mxu0 0.0
  %3953 = vmatpush1.msra.mxu0 0.0
  %3954 = vmatprep.subr.mxu0 0.0
  %3955 = vmatpush1.msra.mxu0 0.0
  %3956 = vmatprep.subr.mxu0 0.0
  %3957 = vmatpush1.msra.mxu0 0.0
  %3958 = vmatprep.subr.mxu0 0.0
  %3959 = vmatpush1.msra.mxu0 0.0
  %3960 = vmatprep.subr.mxu0 0.0
  %3961 = vmatpush1.msra.mxu0 0.0
  %3962 = vmatprep.subr.mxu0 0.0
  %3963 = vmatpush1.msra.mxu0 0.0
  %3964 = vmatprep.subr.mxu0 0.0
  %3965 = vmatpush1.msra.mxu0 0.0
  %3966 = vmatprep.subr.mxu0 0.0
  %3967 = vmatpush1.msra.mxu0 0.0
  %3968 = vmatprep.subr.mxu0 0.0
  %3969 = vmatpush1.msra.mxu0 0.0
  %3970 = vmatprep.subr.mxu0 0.0
  %3971 = vmatpush1.msra.mxu0 0.0
  %3972 = vmatprep.subr.mxu0 0.0
  %3973 = vmatpush1.msra.mxu0 0.0
  %3974 = vmatprep.subr.mxu0 0.0
  %3975 = vmatpush1.msra.mxu0 0.0
  %3976 = vmatprep.subr.mxu0 0.0
  %3977 = vmatpush1.msra.mxu0 0.0
  %3978 = vmatprep.subr.mxu0 0.0
  %3979 = vmatpush1.msra.mxu0 0.0
  %3980 = vmatprep.subr.mxu0 0.0
  %3981 = vmatpush1.msra.mxu0 0.0
  %3982 = vmatprep.subr.mxu0 0.0
  %3983 = vmatpush1.msra.mxu0 0.0
  %3984 = vmatprep.subr.mxu0 0.0
  %3985 = vmatpush1.msra.mxu0 0.0
  %3986 = vmatprep.subr.mxu0 0.0
  %3987 = vmatpush1.msra.mxu0 0.0
  %3988 = vmatprep.subr.mxu0 0.0
  %3989 = vmatpush1.msra.mxu0 0.0
  %3990 = vmatprep.subr.mxu0 0.0
  %3991 = vmatpush1.msra.mxu0 0.0
  %3992 = vmatprep.subr.mxu0 0.0
  %3993 = vmatpush1.msra.mxu0 0.0
  %3994 = vmatprep.subr.mxu0 0.0
  %3995 = vmatpush1.msra.mxu0 0.0
  %3996 = vmatprep.subr.mxu0 0.0
  %3997 = vmatpush1.msra.mxu0 0.0
  %3998 = vmatprep.subr.mxu0 0.0
  %3999 = vmatpush1.msra.mxu0 0.0
  %4000 = vmatprep.mubr.f32.mxu0 0.0
  %4001 = vmatmul.mubr.f32.gmra.mrb[0].mxu0 %v3889
  %v4002 = vpop.f32.mrb[0].mxu0
  %v4003 = vadd.f32 0.0, %v4002
  %v4004 = vpop.f32.mrb[0].mxu0
  %4005 = vmatprep.mubr.f32.mxu0 0.0
  %4006 = vmatmul.mubr.f32.gmra.mrb[0].mxu0 %v3892
  %v4007 = vpop.f32.mrb[0].mxu0
  %v4008 = vadd.f32 0.0, %v4007
  %v4009 = vpop.f32.mrb[0].mxu0
  %4010 = vmatprep.mubr.f32.mxu0 0.0
  %4011 = vmatmul.mubr.f32.gmra.mrb[0].mxu0 %v3895
  %v4012 = vpop.f32.mrb[0].mxu0
  %v4013 = vadd.f32 0.0, %v4012
  %v4014 = vpop.f32.mrb[0].mxu0
  %4015 = vmatprep.mubr.f32.mxu0 0.0
  %4016 = vmatmul.mubr.f32.gmra.mrb[0].mxu0 %v3898
  %v4017 = vpop.f32.mrb[0].mxu0
  %v4018 = vadd.f32 0.0, %v4017
  %v4019 = vpop.f32.mrb[0].mxu0
  %4020 = vmatprep.mubr.f32.mxu0 0.0
  %4021 = vmatmul.mubr.f32.gmra.mrb[0].mxu0 %v3901
  %v4022 = vpop.f32.mrb[0].mxu0
  %v4023 = vadd.f32 0.0, %v4022
  %v4024 = vpop.f32.mrb[0].mxu0
  %4025 = vmatprep.mubr.f32.mxu0 0.0
  %4026 = vmatmul.mubr.f32.gmra.mrb[0].mxu0 %v3904
  %v4027 = vpop.f32.mrb[0].mxu0
  %v4028 = vadd.f32 0.0, %v4027
  %v4029 = vpop.f32.mrb[0].mxu0
  %4030 = vmatprep.mubr.f32.mxu0 0.0
  %4031 = vmatmul.mubr.f32.gmra.mrb[0].mxu0 %v3907
  %v4032 = vpop.f32.mrb[0].mxu0
  %v4033 = vadd.f32 0.0, %v4032
  %v4034 = vpop.f32.mrb[0].mxu0
  %4035 = vmatprep.mubr.f32.mxu0 0.0
  %4036 = vmatmul.mubr.f32.gmra.mrb[0].mxu0 %v3910
  %v4037 = vpop.f32.mrb[0].mxu0
  %v4038 = vadd.f32 0.0, %v4037
  %v4039 = vpop.f32.mrb[0].mxu0
  %4040 = vmatprep.mubr.f32.mxu0 0.0
  %4041 = vmatmul.mubr.f32.gmra.mrb[0].mxu0 %v3913
  %v4042 = vpop.f32.mrb[0].mxu0
  %v4043 = vadd.f32 0.0, %v4042
  %v4044 = vpop.f32.mrb[0].mxu0
  %4045 = vmatprep.mubr.f32.mxu0 0.0
  %4046 = vmatmul.mubr.f32.gmra.mrb[0].mxu0 %v3916
  %v4047 = vpop.f32.mrb[0].mxu0
  %v4048 = vadd.f32 0.0, %v4047
  %v4049 = vpop.f32.mrb[0].mxu0
  %4050 = vmatprep.mubr.f32.mxu0 0.0
  %4051 = vmatmul.mubr.f32.gmra.mrb[0].mxu0 %v3919
  %v4052 = vpop.f32.mrb[0].mxu0
  %v4053 = vadd.f32 0.0, %v4052
  %v4054 = vpop.f32.mrb[0].mxu0
  %4055 = vmatprep.mubr.f32.mxu0 0.0
  %4056 = vmatmul.mubr.f32.gmra.mrb[0].mxu0 %v3922
  %v4057 = vpop.f32.mrb[0].mxu0
  %v4058 = vadd.f32 0.0, %v4057
  %v4059 = vpop.f32.mrb[0].mxu0
  %4060 = vmatprep.mubr.f32.mxu0 0.0
  %4061 = vmatmul.mubr.f32.gmra.mrb[0].mxu0 %v3925
  %v4062 = vpop.f32.mrb[0].mxu0
  %v4063 = vadd.f32 0.0, %v4062
  %v4064 = vpop.f32.mrb[0].mxu0
  %4065 = vmatprep.mubr.f32.mxu0 0.0
  %4066 = vmatmul.mubr.f32.gmra.mrb[0].mxu0 %v3928
  %v4067 = vpop.f32.mrb[0].mxu0
  %v4068 = vadd.f32 0.0, %v4067
  %v4069 = vpop.f32.mrb[0].mxu0
  %4070 = vmatprep.mubr.f32.mxu0 0.0
  %4071 = vmatmul.mubr.f32.gmra.mrb[0].mxu0 %v3931
  %v4072 = vpop.f32.mrb[0].mxu0
  %v4073 = vadd.f32 0.0, %v4072
  %v4074 = vpop.f32.mrb[0].mxu0
  %4075 = vmatprep.mubr.f32.mxu0 0.0
  %4076 = vmatmul.mubr.f32.gmra.mrb[0].mxu0 %v3934
  %v4077 = vpop.f32.mrb[0].mxu0
  %v4078 = vadd.f32 0.0, %v4077
  %v4079 = vpop.f32.mrb[0].mxu0
  %4080 = vdwg.mxu0
  %v4081 = vmul.f32 %v4003, 0.5
  %v4082 = vmul.f32 %v4008, 0.5
  %v4083 = vmul.f32 %v4013, 0.5
  %v4084 = vmul.f32 %v4018, 0.5
  %v4085 = vmul.f32 %v4023, 0.5
  %v4086 = vmul.f32 %v4028, 0.5
  %v4087 = vmul.f32 %v4033, 0.5
  %v4088 = vmul.f32 %v4038, 0.5
  %v4089 = vmul.f32 %v4043, 0.5
  %v4090 = vmul.f32 %v4048, 0.5
  %v4091 = vmul.f32 %v4053, 0.5
  %v4092 = vmul.f32 %v4058, 0.5
  %v4093 = vmul.f32 %v4063, 0.5
  %v4094 = vmul.f32 %v4068, 0.5
  %v4095 = vmul.f32 %v4073, 0.5
  %v4096 = vmul.f32 %v4078, 0.5
  %v4097 = vsel %vm3139, %v4081, -1e+09
  %v4098 = vsel %vm3140, %v4082, -1e+09
  %v4099 = vsel %vm3141, %v4083, -1e+09
  %v4100 = vsel %vm3142, %v4084, -1e+09
  %v4101 = vsel %vm3143, %v4085, -1e+09
  %v4102 = vsel %vm3144, %v4086, -1e+09
  %v4103 = vsel %vm3145, %v4087, -1e+09
  %v4104 = vsel %vm3146, %v4088, -1e+09
  %v4105 = vsel %vm3147, %v4089, -1e+09
  %v4106 = vsel %vm3148, %v4090, -1e+09
  %v4107 = vsel %vm3149, %v4091, -1e+09
  %v4108 = vsel %vm3150, %v4092, -1e+09
  %v4109 = vsel %vm3151, %v4093, -1e+09
  %v4110 = vsel %vm3152, %v4094, -1e+09
  %v4111 = vsel %vm3153, %v4095, -1e+09
  %v4112 = vsel %vm3154, %v4096, -1e+09
  %4113 = vmax.xlane.f32.xlu0 %v4097
  %v4114 = vpop.xlane.xlu0 %4113
  %4115 = vmax.xlane.f32.xlu0 %v4098
  %v4116 = vpop.xlane.xlu0 %4115
  %4117 = vmax.xlane.f32.xlu0 %v4099
  %v4118 = vpop.xlane.xlu0 %4117
  %4119 = vmax.xlane.f32.xlu0 %v4100
  %v4120 = vpop.xlane.xlu0 %4119
  %4121 = vmax.xlane.f32.xlu0 %v4101
  %v4122 = vpop.xlane.xlu0 %4121
  %4123 = vmax.xlane.f32.xlu0 %v4102
  %v4124 = vpop.xlane.xlu0 %4123
  %4125 = vmax.xlane.f32.xlu0 %v4103
  %v4126 = vpop.xlane.xlu0 %4125
  %4127 = vmax.xlane.f32.xlu0 %v4104
  %v4128 = vpop.xlane.xlu0 %4127
  %4129 = vmax.xlane.f32.xlu0 %v4105
  %v4130 = vpop.xlane.xlu0 %4129
  %4131 = vmax.xlane.f32.xlu0 %v4106
  %v4132 = vpop.xlane.xlu0 %4131
  %4133 = vmax.xlane.f32.xlu0 %v4107
  %v4134 = vpop.xlane.xlu0 %4133
  %4135 = vmax.xlane.f32.xlu0 %v4108
  %v4136 = vpop.xlane.xlu0 %4135
  %4137 = vmax.xlane.f32.xlu0 %v4109
  %v4138 = vpop.xlane.xlu0 %4137
  %4139 = vmax.xlane.f32.xlu0 %v4110
  %v4140 = vpop.xlane.xlu0 %4139
  %4141 = vmax.xlane.f32.xlu0 %v4111
  %v4142 = vpop.xlane.xlu0 %4141
  %4143 = vmax.xlane.f32.xlu0 %v4112
  %v4144 = vpop.xlane.xlu0 %4143
  %v4145 = vsub.f32 %v4097, %v4114
  %v4146 = vsub.f32 %v4098, %v4116
  %v4147 = vsub.f32 %v4099, %v4118
  %v4148 = vsub.f32 %v4100, %v4120
  %v4149 = vsub.f32 %v4101, %v4122
  %v4150 = vsub.f32 %v4102, %v4124
  %v4151 = vsub.f32 %v4103, %v4126
  %v4152 = vsub.f32 %v4104, %v4128
  %v4153 = vsub.f32 %v4105, %v4130
  %v4154 = vsub.f32 %v4106, %v4132
  %v4155 = vsub.f32 %v4107, %v4134
  %v4156 = vsub.f32 %v4108, %v4136
  %v4157 = vsub.f32 %v4109, %v4138
  %v4158 = vsub.f32 %v4110, %v4140
  %v4159 = vsub.f32 %v4111, %v4142
  %v4160 = vsub.f32 %v4112, %v4144
  %v4161 = vmul.f32 %v4145, 1.442695
  %v4162 = vpow.pop %v4161
  %v4163 = vmul.f32 %v4146, 1.442695
  %v4164 = vpow.pop %v4163
  %v4165 = vmul.f32 %v4147, 1.442695
  %v4166 = vpow.pop %v4165
  %v4167 = vmul.f32 %v4148, 1.442695
  %v4168 = vpow.pop %v4167
  %v4169 = vmul.f32 %v4149, 1.442695
  %v4170 = vpow.pop %v4169
  %v4171 = vmul.f32 %v4150, 1.442695
  %v4172 = vpow.pop %v4171
  %v4173 = vmul.f32 %v4151, 1.442695
  %v4174 = vpow.pop %v4173
  %v4175 = vmul.f32 %v4152, 1.442695
  %v4176 = vpow.pop %v4175
  %v4177 = vmul.f32 %v4153, 1.442695
  %v4178 = vpow.pop %v4177
  %v4179 = vmul.f32 %v4154, 1.442695
  %v4180 = vpow.pop %v4179
  %v4181 = vmul.f32 %v4155, 1.442695
  %v4182 = vpow.pop %v4181
  %v4183 = vmul.f32 %v4156, 1.442695
  %v4184 = vpow.pop %v4183
  %v4185 = vmul.f32 %v4157, 1.442695
  %v4186 = vpow.pop %v4185
  %v4187 = vmul.f32 %v4158, 1.442695
  %v4188 = vpow.pop %v4187
  %v4189 = vmul.f32 %v4159, 1.442695
  %v4190 = vpow.pop %v4189
  %v4191 = vmul.f32 %v4160, 1.442695
  %v4192 = vpow.pop %v4191
  %4193 = vadd.xlane.f32.xlu0 %v4162
  %v4194 = vpop.xlane.xlu0 %4193
  %4195 = vadd.xlane.f32.xlu0 %v4164
  %v4196 = vpop.xlane.xlu0 %4195
  %4197 = vadd.xlane.f32.xlu0 %v4166
  %v4198 = vpop.xlane.xlu0 %4197
  %4199 = vadd.xlane.f32.xlu0 %v4168
  %v4200 = vpop.xlane.xlu0 %4199
  %4201 = vadd.xlane.f32.xlu0 %v4170
  %v4202 = vpop.xlane.xlu0 %4201
  %4203 = vadd.xlane.f32.xlu0 %v4172
  %v4204 = vpop.xlane.xlu0 %4203
  %4205 = vadd.xlane.f32.xlu0 %v4174
  %v4206 = vpop.xlane.xlu0 %4205
  %4207 = vadd.xlane.f32.xlu0 %v4176
  %v4208 = vpop.xlane.xlu0 %4207
  %4209 = vadd.xlane.f32.xlu0 %v4178
  %v4210 = vpop.xlane.xlu0 %4209
  %4211 = vadd.xlane.f32.xlu0 %v4180
  %v4212 = vpop.xlane.xlu0 %4211
  %4213 = vadd.xlane.f32.xlu0 %v4182
  %v4214 = vpop.xlane.xlu0 %4213
  %4215 = vadd.xlane.f32.xlu0 %v4184
  %v4216 = vpop.xlane.xlu0 %4215
  %4217 = vadd.xlane.f32.xlu0 %v4186
  %v4218 = vpop.xlane.xlu0 %4217
  %4219 = vadd.xlane.f32.xlu0 %v4188
  %v4220 = vpop.xlane.xlu0 %4219
  %4221 = vadd.xlane.f32.xlu0 %v4190
  %v4222 = vpop.xlane.xlu0 %4221
  %4223 = vadd.xlane.f32.xlu0 %v4192
  %v4224 = vpop.xlane.xlu0 %4223
  %v4225 = vrcp.pop %v4194
  %v4226 = vmul.f32 %v4162, %v4225
  %v4227 = vrcp.pop %v4196
  %v4228 = vmul.f32 %v4164, %v4227
  %v4229 = vrcp.pop %v4198
  %v4230 = vmul.f32 %v4166, %v4229
  %v4231 = vrcp.pop %v4200
  %v4232 = vmul.f32 %v4168, %v4231
  %v4233 = vrcp.pop %v4202
  %v4234 = vmul.f32 %v4170, %v4233
  %v4235 = vrcp.pop %v4204
  %v4236 = vmul.f32 %v4172, %v4235
  %v4237 = vrcp.pop %v4206
  %v4238 = vmul.f32 %v4174, %v4237
  %v4239 = vrcp.pop %v4208
  %v4240 = vmul.f32 %v4176, %v4239
  %v4241 = vrcp.pop %v4210
  %v4242 = vmul.f32 %v4178, %v4241
  %v4243 = vrcp.pop %v4212
  %v4244 = vmul.f32 %v4180, %v4243
  %v4245 = vrcp.pop %v4214
  %v4246 = vmul.f32 %v4182, %v4245
  %v4247 = vrcp.pop %v4216
  %v4248 = vmul.f32 %v4184, %v4247
  %v4249 = vrcp.pop %v4218
  %v4250 = vmul.f32 %v4186, %v4249
  %v4251 = vrcp.pop %v4220
  %v4252 = vmul.f32 %v4188, %v4251
  %v4253 = vrcp.pop %v4222
  %v4254 = vmul.f32 %v4190, %v4253
  %v4255 = vrcp.pop %v4224
  %v4256 = vmul.f32 %v4192, %v4255
  %4257 = vmatprep.subr.mxu0 0.0
  %4258 = vmatpush1.xpose.msra.mxu0 %v4226
  %4259 = vmatprep.subr.mxu0 0.0
  %4260 = vmatpush1.xpose.msra.mxu0 %v4228
  %4261 = vmatprep.subr.mxu0 0.0
  %4262 = vmatpush1.xpose.msra.mxu0 %v4230
  %4263 = vmatprep.subr.mxu0 0.0
  %4264 = vmatpush1.xpose.msra.mxu0 %v4232
  %4265 = vmatprep.subr.mxu0 0.0
  %4266 = vmatpush1.xpose.msra.mxu0 %v4234
  %4267 = vmatprep.subr.mxu0 0.0
  %4268 = vmatpush1.xpose.msra.mxu0 %v4236
  %4269 = vmatprep.subr.mxu0 0.0
  %4270 = vmatpush1.xpose.msra.mxu0 %v4238
  %4271 = vmatprep.subr.mxu0 0.0
  %4272 = vmatpush1.xpose.msra.mxu0 %v4240
  %4273 = vmatprep.subr.mxu0 0.0
  %4274 = vmatpush1.xpose.msra.mxu0 %v4242
  %4275 = vmatprep.subr.mxu0 0.0
  %4276 = vmatpush1.xpose.msra.mxu0 %v4244
  %4277 = vmatprep.subr.mxu0 0.0
  %4278 = vmatpush1.xpose.msra.mxu0 %v4246
  %4279 = vmatprep.subr.mxu0 0.0
  %4280 = vmatpush1.xpose.msra.mxu0 %v4248
  %4281 = vmatprep.subr.mxu0 0.0
  %4282 = vmatpush1.xpose.msra.mxu0 %v4250
  %4283 = vmatprep.subr.mxu0 0.0
  %4284 = vmatpush1.xpose.msra.mxu0 %v4252
  %4285 = vmatprep.subr.mxu0 0.0
  %4286 = vmatpush1.xpose.msra.mxu0 %v4254
  %4287 = vmatprep.subr.mxu0 0.0
  %4288 = vmatpush1.xpose.msra.mxu0 %v4256
  %4289 = vmatprep.subr.mxu0 0.0
  %4290 = vmatpush1.xpose.msra.mxu0 0.0
  %4291 = vmatprep.subr.mxu0 0.0
  %4292 = vmatpush1.xpose.msra.mxu0 0.0
  %4293 = vmatprep.subr.mxu0 0.0
  %4294 = vmatpush1.xpose.msra.mxu0 0.0
  %4295 = vmatprep.subr.mxu0 0.0
  %4296 = vmatpush1.xpose.msra.mxu0 0.0
  %4297 = vmatprep.subr.mxu0 0.0
  %4298 = vmatpush1.xpose.msra.mxu0 0.0
  %4299 = vmatprep.subr.mxu0 0.0
  %4300 = vmatpush1.xpose.msra.mxu0 0.0
  %4301 = vmatprep.subr.mxu0 0.0
  %4302 = vmatpush1.xpose.msra.mxu0 0.0
  %4303 = vmatprep.subr.mxu0 0.0
  %4304 = vmatpush1.xpose.msra.mxu0 0.0
  %4305 = vmatprep.subr.mxu0 0.0
  %4306 = vmatpush1.xpose.msra.mxu0 0.0
  %4307 = vmatprep.subr.mxu0 0.0
  %4308 = vmatpush1.xpose.msra.mxu0 0.0
  %4309 = vmatprep.subr.mxu0 0.0
  %4310 = vmatpush1.xpose.msra.mxu0 0.0
  %4311 = vmatprep.subr.mxu0 0.0
  %4312 = vmatpush1.xpose.msra.mxu0 0.0
  %4313 = vmatprep.subr.mxu0 0.0
  %4314 = vmatpush1.xpose.msra.mxu0 0.0
  %4315 = vmatprep.subr.mxu0 0.0
  %4316 = vmatpush1.xpose.msra.mxu0 0.0
  %4317 = vmatprep.subr.mxu0 0.0
  %4318 = vmatpush1.xpose.msra.mxu0 0.0
  %4319 = vmatprep.subr.mxu0 0.0
  %4320 = vmatpush1.xpose.msra.mxu0 0.0
  %4321 = vmatprep.mubr.f32.mxu0 0.0
  %4322 = vmatmul.mubr.f32.gmra.mrb[0].mxu0 %v2890
  %v4323 = vpop.f32.mrb[0].mxu0
  %v4324 = vadd.f32 0.0, %v4323
  %v4325 = vpop.f32.mrb[0].mxu0
  %4326 = vdwg.mxu0
  %4327 = vxpose.xlu0.b32.start [1/16] %v2855, 128
  %4328 = vxpose.xlu0.b32.cont [2/16] 0.0, 128
  %4329 = vxpose.xlu0.b32.cont [3/16] 0.0, 128
  %4330 = vxpose.xlu0.b32.cont [4/16] 0.0, 128
  %4331 = vxpose.xlu0.b32.cont [5/16] 0.0, 128
  %4332 = vxpose.xlu0.b32.cont [6/16] 0.0, 128
  %4333 = vxpose.xlu0.b32.cont [7/16] 0.0, 128
  %4334 = vxpose.xlu0.b32.cont [8/16] 0.0, 128
  %4335 = vxpose.xlu0.b32.cont [9/16] 0.0, 128
  %4336 = vxpose.xlu0.b32.cont [10/16] 0.0, 128
  %4337 = vxpose.xlu0.b32.cont [11/16] 0.0, 128
  %4338 = vxpose.xlu0.b32.cont [12/16] 0.0, 128
  %4339 = vxpose.xlu0.b32.cont [13/16] 0.0, 128
  %4340 = vxpose.xlu0.b32.cont [14/16] 0.0, 128
  %4341 = vxpose.xlu0.b32.cont [15/16] 0.0, 128
  %4342 = vxpose.xlu0.b32.end [16/16] 0.0, 128
  %v4343 = vpop.trf.xlu0
  %v4344 = vpop.trf.xlu0
  %v4345 = vpop.trf.xlu0
  %v4346 = vpop.trf.xlu0
  %v4347 = vpop.trf.xlu0
  %v4348 = vpop.trf.xlu0
  %v4349 = vpop.trf.xlu0
  %v4350 = vpop.trf.xlu0
  %v4351 = vpop.trf.xlu0
  %v4352 = vpop.trf.xlu0
  %v4353 = vpop.trf.xlu0
  %v4354 = vpop.trf.xlu0
  %v4355 = vpop.trf.xlu0
  %v4356 = vpop.trf.xlu0
  %v4357 = vpop.trf.xlu0
  %v4358 = vpop.trf.xlu0
  %v4360 = vsel %vm599, %v4343, 0
  %v4363 = vsel %vm599, %v4344, 0
  %v4366 = vsel %vm599, %v4345, 0
  %v4369 = vsel %vm599, %v4346, 0
  %v4372 = vsel %vm599, %v4347, 0
  %v4375 = vsel %vm599, %v4348, 0
  %v4378 = vsel %vm599, %v4349, 0
  %v4381 = vsel %vm599, %v4350, 0
  %v4384 = vsel %vm599, %v4351, 0
  %v4387 = vsel %vm599, %v4352, 0
  %v4390 = vsel %vm599, %v4353, 0
  %v4393 = vsel %vm599, %v4354, 0
  %v4396 = vsel %vm599, %v4355, 0
  %v4399 = vsel %vm599, %v4356, 0
  %v4402 = vsel %vm599, %v4357, 0
  %v4405 = vsel %vm599, %v4358, 0
  %4407 = vmatprep.subr.mxu0 0.0
  %4408 = vmatpush1.msra.mxu0 %v2875
  %4409 = vmatprep.subr.mxu0 0.0
  %4410 = vmatpush1.msra.mxu0 0.0
  %4411 = vmatprep.subr.mxu0 0.0
  %4412 = vmatpush1.msra.mxu0 0.0
  %4413 = vmatprep.subr.mxu0 0.0
  %4414 = vmatpush1.msra.mxu0 0.0
  %4415 = vmatprep.subr.mxu0 0.0
  %4416 = vmatpush1.msra.mxu0 0.0
  %4417 = vmatprep.subr.mxu0 0.0
  %4418 = vmatpush1.msra.mxu0 0.0
  %4419 = vmatprep.subr.mxu0 0.0
  %4420 = vmatpush1.msra.mxu0 0.0
  %4421 = vmatprep.subr.mxu0 0.0
  %4422 = vmatpush1.msra.mxu0 0.0
  %4423 = vmatprep.subr.mxu0 0.0
  %4424 = vmatpush1.msra.mxu0 0.0
  %4425 = vmatprep.subr.mxu0 0.0
  %4426 = vmatpush1.msra.mxu0 0.0
  %4427 = vmatprep.subr.mxu0 0.0
  %4428 = vmatpush1.msra.mxu0 0.0
  %4429 = vmatprep.subr.mxu0 0.0
  %4430 = vmatpush1.msra.mxu0 0.0
  %4431 = vmatprep.subr.mxu0 0.0
  %4432 = vmatpush1.msra.mxu0 0.0
  %4433 = vmatprep.subr.mxu0 0.0
  %4434 = vmatpush1.msra.mxu0 0.0
  %4435 = vmatprep.subr.mxu0 0.0
  %4436 = vmatpush1.msra.mxu0 0.0
  %4437 = vmatprep.subr.mxu0 0.0
  %4438 = vmatpush1.msra.mxu0 0.0
  %4439 = vmatprep.subr.mxu0 0.0
  %4440 = vmatpush1.msra.mxu0 0.0
  %4441 = vmatprep.subr.mxu0 0.0
  %4442 = vmatpush1.msra.mxu0 0.0
  %4443 = vmatprep.subr.mxu0 0.0
  %4444 = vmatpush1.msra.mxu0 0.0
  %4445 = vmatprep.subr.mxu0 0.0
  %4446 = vmatpush1.msra.mxu0 0.0
  %4447 = vmatprep.subr.mxu0 0.0
  %4448 = vmatpush1.msra.mxu0 0.0
  %4449 = vmatprep.subr.mxu0 0.0
  %4450 = vmatpush1.msra.mxu0 0.0
  %4451 = vmatprep.subr.mxu0 0.0
  %4452 = vmatpush1.msra.mxu0 0.0
  %4453 = vmatprep.subr.mxu0 0.0
  %4454 = vmatpush1.msra.mxu0 0.0
  %4455 = vmatprep.subr.mxu0 0.0
  %4456 = vmatpush1.msra.mxu0 0.0
  %4457 = vmatprep.subr.mxu0 0.0
  %4458 = vmatpush1.msra.mxu0 0.0
  %4459 = vmatprep.subr.mxu0 0.0
  %4460 = vmatpush1.msra.mxu0 0.0
  %4461 = vmatprep.subr.mxu0 0.0
  %4462 = vmatpush1.msra.mxu0 0.0
  %4463 = vmatprep.subr.mxu0 0.0
  %4464 = vmatpush1.msra.mxu0 0.0
  %4465 = vmatprep.subr.mxu0 0.0
  %4466 = vmatpush1.msra.mxu0 0.0
  %4467 = vmatprep.subr.mxu0 0.0
  %4468 = vmatpush1.msra.mxu0 0.0
  %4469 = vmatprep.subr.mxu0 0.0
  %4470 = vmatpush1.msra.mxu0 0.0
  %4471 = vmatprep.mubr.f32.mxu0 0.0
  %4472 = vmatmul.mubr.f32.gmra.mrb[0].mxu0 %v4360
  %v4473 = vpop.f32.mrb[0].mxu0
  %v4474 = vadd.f32 0.0, %v4473
  %v4475 = vpop.f32.mrb[0].mxu0
  %4476 = vmatprep.mubr.f32.mxu0 0.0
  %4477 = vmatmul.mubr.f32.gmra.mrb[0].mxu0 %v4363
  %v4478 = vpop.f32.mrb[0].mxu0
  %v4479 = vadd.f32 0.0, %v4478
  %v4480 = vpop.f32.mrb[0].mxu0
  %4481 = vmatprep.mubr.f32.mxu0 0.0
  %4482 = vmatmul.mubr.f32.gmra.mrb[0].mxu0 %v4366
  %v4483 = vpop.f32.mrb[0].mxu0
  %v4484 = vadd.f32 0.0, %v4483
  %v4485 = vpop.f32.mrb[0].mxu0
  %4486 = vmatprep.mubr.f32.mxu0 0.0
  %4487 = vmatmul.mubr.f32.gmra.mrb[0].mxu0 %v4369
  %v4488 = vpop.f32.mrb[0].mxu0
  %v4489 = vadd.f32 0.0, %v4488
  %v4490 = vpop.f32.mrb[0].mxu0
  %4491 = vmatprep.mubr.f32.mxu0 0.0
  %4492 = vmatmul.mubr.f32.gmra.mrb[0].mxu0 %v4372
  %v4493 = vpop.f32.mrb[0].mxu0
  %v4494 = vadd.f32 0.0, %v4493
  %v4495 = vpop.f32.mrb[0].mxu0
  %4496 = vmatprep.mubr.f32.mxu0 0.0
  %4497 = vmatmul.mubr.f32.gmra.mrb[0].mxu0 %v4375
  %v4498 = vpop.f32.mrb[0].mxu0
  %v4499 = vadd.f32 0.0, %v4498
  %v4500 = vpop.f32.mrb[0].mxu0
  %4501 = vmatprep.mubr.f32.mxu0 0.0
  %4502 = vmatmul.mubr.f32.gmra.mrb[0].mxu0 %v4378
  %v4503 = vpop.f32.mrb[0].mxu0
  %v4504 = vadd.f32 0.0, %v4503
  %v4505 = vpop.f32.mrb[0].mxu0
  %4506 = vmatprep.mubr.f32.mxu0 0.0
  %4507 = vmatmul.mubr.f32.gmra.mrb[0].mxu0 %v4381
  %v4508 = vpop.f32.mrb[0].mxu0
  %v4509 = vadd.f32 0.0, %v4508
  %v4510 = vpop.f32.mrb[0].mxu0
  %4511 = vmatprep.mubr.f32.mxu0 0.0
  %4512 = vmatmul.mubr.f32.gmra.mrb[0].mxu0 %v4384
  %v4513 = vpop.f32.mrb[0].mxu0
  %v4514 = vadd.f32 0.0, %v4513
  %v4515 = vpop.f32.mrb[0].mxu0
  %4516 = vmatprep.mubr.f32.mxu0 0.0
  %4517 = vmatmul.mubr.f32.gmra.mrb[0].mxu0 %v4387
  %v4518 = vpop.f32.mrb[0].mxu0
  %v4519 = vadd.f32 0.0, %v4518
  %v4520 = vpop.f32.mrb[0].mxu0
  %4521 = vmatprep.mubr.f32.mxu0 0.0
  %4522 = vmatmul.mubr.f32.gmra.mrb[0].mxu0 %v4390
  %v4523 = vpop.f32.mrb[0].mxu0
  %v4524 = vadd.f32 0.0, %v4523
  %v4525 = vpop.f32.mrb[0].mxu0
  %4526 = vmatprep.mubr.f32.mxu0 0.0
  %4527 = vmatmul.mubr.f32.gmra.mrb[0].mxu0 %v4393
  %v4528 = vpop.f32.mrb[0].mxu0
  %v4529 = vadd.f32 0.0, %v4528
  %v4530 = vpop.f32.mrb[0].mxu0
  %4531 = vmatprep.mubr.f32.mxu0 0.0
  %4532 = vmatmul.mubr.f32.gmra.mrb[0].mxu0 %v4396
  %v4533 = vpop.f32.mrb[0].mxu0
  %v4534 = vadd.f32 0.0, %v4533
  %v4535 = vpop.f32.mrb[0].mxu0
  %4536 = vmatprep.mubr.f32.mxu0 0.0
  %4537 = vmatmul.mubr.f32.gmra.mrb[0].mxu0 %v4399
  %v4538 = vpop.f32.mrb[0].mxu0
  %v4539 = vadd.f32 0.0, %v4538
  %v4540 = vpop.f32.mrb[0].mxu0
  %4541 = vmatprep.mubr.f32.mxu0 0.0
  %4542 = vmatmul.mubr.f32.gmra.mrb[0].mxu0 %v4402
  %v4543 = vpop.f32.mrb[0].mxu0
  %v4544 = vadd.f32 0.0, %v4543
  %v4545 = vpop.f32.mrb[0].mxu0
  %4546 = vmatprep.mubr.f32.mxu0 0.0
  %4547 = vmatmul.mubr.f32.gmra.mrb[0].mxu0 %v4405
  %v4548 = vpop.f32.mrb[0].mxu0
  %v4549 = vadd.f32 0.0, %v4548
  %v4550 = vpop.f32.mrb[0].mxu0
  %4551 = vdwg.mxu0
  %v4552 = vmul.f32 %v4474, 0.5
  %v4553 = vmul.f32 %v4479, 0.5
  %v4554 = vmul.f32 %v4484, 0.5
  %v4555 = vmul.f32 %v4489, 0.5
  %v4556 = vmul.f32 %v4494, 0.5
  %v4557 = vmul.f32 %v4499, 0.5
  %v4558 = vmul.f32 %v4504, 0.5
  %v4559 = vmul.f32 %v4509, 0.5
  %v4560 = vmul.f32 %v4514, 0.5
  %v4561 = vmul.f32 %v4519, 0.5
  %v4562 = vmul.f32 %v4524, 0.5
  %v4563 = vmul.f32 %v4529, 0.5
  %v4564 = vmul.f32 %v4534, 0.5
  %v4565 = vmul.f32 %v4539, 0.5
  %v4566 = vmul.f32 %v4544, 0.5
  %v4567 = vmul.f32 %v4549, 0.5
  %v4568 = vsel %vm3139, %v4552, -1e+09
  %v4569 = vsel %vm3140, %v4553, -1e+09
  %v4570 = vsel %vm3141, %v4554, -1e+09
  %v4571 = vsel %vm3142, %v4555, -1e+09
  %v4572 = vsel %vm3143, %v4556, -1e+09
  %v4573 = vsel %vm3144, %v4557, -1e+09
  %v4574 = vsel %vm3145, %v4558, -1e+09
  %v4575 = vsel %vm3146, %v4559, -1e+09
  %v4576 = vsel %vm3147, %v4560, -1e+09
  %v4577 = vsel %vm3148, %v4561, -1e+09
  %v4578 = vsel %vm3149, %v4562, -1e+09
  %v4579 = vsel %vm3150, %v4563, -1e+09
  %v4580 = vsel %vm3151, %v4564, -1e+09
  %v4581 = vsel %vm3152, %v4565, -1e+09
  %v4582 = vsel %vm3153, %v4566, -1e+09
  %v4583 = vsel %vm3154, %v4567, -1e+09
  %4584 = vmax.xlane.f32.xlu0 %v4568
  %v4585 = vpop.xlane.xlu0 %4584
  %4586 = vmax.xlane.f32.xlu0 %v4569
  %v4587 = vpop.xlane.xlu0 %4586
  %4588 = vmax.xlane.f32.xlu0 %v4570
  %v4589 = vpop.xlane.xlu0 %4588
  %4590 = vmax.xlane.f32.xlu0 %v4571
  %v4591 = vpop.xlane.xlu0 %4590
  %4592 = vmax.xlane.f32.xlu0 %v4572
  %v4593 = vpop.xlane.xlu0 %4592
  %4594 = vmax.xlane.f32.xlu0 %v4573
  %v4595 = vpop.xlane.xlu0 %4594
  %4596 = vmax.xlane.f32.xlu0 %v4574
  %v4597 = vpop.xlane.xlu0 %4596
  %4598 = vmax.xlane.f32.xlu0 %v4575
  %v4599 = vpop.xlane.xlu0 %4598
  %4600 = vmax.xlane.f32.xlu0 %v4576
  %v4601 = vpop.xlane.xlu0 %4600
  %4602 = vmax.xlane.f32.xlu0 %v4577
  %v4603 = vpop.xlane.xlu0 %4602
  %4604 = vmax.xlane.f32.xlu0 %v4578
  %v4605 = vpop.xlane.xlu0 %4604
  %4606 = vmax.xlane.f32.xlu0 %v4579
  %v4607 = vpop.xlane.xlu0 %4606
  %4608 = vmax.xlane.f32.xlu0 %v4580
  %v4609 = vpop.xlane.xlu0 %4608
  %4610 = vmax.xlane.f32.xlu0 %v4581
  %v4611 = vpop.xlane.xlu0 %4610
  %4612 = vmax.xlane.f32.xlu0 %v4582
  %v4613 = vpop.xlane.xlu0 %4612
  %4614 = vmax.xlane.f32.xlu0 %v4583
  %v4615 = vpop.xlane.xlu0 %4614
  %v4616 = vsub.f32 %v4568, %v4585
  %v4617 = vsub.f32 %v4569, %v4587
  %v4618 = vsub.f32 %v4570, %v4589
  %v4619 = vsub.f32 %v4571, %v4591
  %v4620 = vsub.f32 %v4572, %v4593
  %v4621 = vsub.f32 %v4573, %v4595
  %v4622 = vsub.f32 %v4574, %v4597
  %v4623 = vsub.f32 %v4575, %v4599
  %v4624 = vsub.f32 %v4576, %v4601
  %v4625 = vsub.f32 %v4577, %v4603
  %v4626 = vsub.f32 %v4578, %v4605
  %v4627 = vsub.f32 %v4579, %v4607
  %v4628 = vsub.f32 %v4580, %v4609
  %v4629 = vsub.f32 %v4581, %v4611
  %v4630 = vsub.f32 %v4582, %v4613
  %v4631 = vsub.f32 %v4583, %v4615
  %v4632 = vmul.f32 %v4616, 1.442695
  %v4633 = vpow.pop %v4632
  %v4634 = vmul.f32 %v4617, 1.442695
  %v4635 = vpow.pop %v4634
  %v4636 = vmul.f32 %v4618, 1.442695
  %v4637 = vpow.pop %v4636
  %v4638 = vmul.f32 %v4619, 1.442695
  %v4639 = vpow.pop %v4638
  %v4640 = vmul.f32 %v4620, 1.442695
  %v4641 = vpow.pop %v4640
  %v4642 = vmul.f32 %v4621, 1.442695
  %v4643 = vpow.pop %v4642
  %v4644 = vmul.f32 %v4622, 1.442695
  %v4645 = vpow.pop %v4644
  %v4646 = vmul.f32 %v4623, 1.442695
  %v4647 = vpow.pop %v4646
  %v4648 = vmul.f32 %v4624, 1.442695
  %v4649 = vpow.pop %v4648
  %v4650 = vmul.f32 %v4625, 1.442695
  %v4651 = vpow.pop %v4650
  %v4652 = vmul.f32 %v4626, 1.442695
  %v4653 = vpow.pop %v4652
  %v4654 = vmul.f32 %v4627, 1.442695
  %v4655 = vpow.pop %v4654
  %v4656 = vmul.f32 %v4628, 1.442695
  %v4657 = vpow.pop %v4656
  %v4658 = vmul.f32 %v4629, 1.442695
  %v4659 = vpow.pop %v4658
  %v4660 = vmul.f32 %v4630, 1.442695
  %v4661 = vpow.pop %v4660
  %v4662 = vmul.f32 %v4631, 1.442695
  %v4663 = vpow.pop %v4662
  %4664 = vadd.xlane.f32.xlu0 %v4633
  %v4665 = vpop.xlane.xlu0 %4664
  %4666 = vadd.xlane.f32.xlu0 %v4635
  %v4667 = vpop.xlane.xlu0 %4666
  %4668 = vadd.xlane.f32.xlu0 %v4637
  %v4669 = vpop.xlane.xlu0 %4668
  %4670 = vadd.xlane.f32.xlu0 %v4639
  %v4671 = vpop.xlane.xlu0 %4670
  %4672 = vadd.xlane.f32.xlu0 %v4641
  %v4673 = vpop.xlane.xlu0 %4672
  %4674 = vadd.xlane.f32.xlu0 %v4643
  %v4675 = vpop.xlane.xlu0 %4674
  %4676 = vadd.xlane.f32.xlu0 %v4645
  %v4677 = vpop.xlane.xlu0 %4676
  %4678 = vadd.xlane.f32.xlu0 %v4647
  %v4679 = vpop.xlane.xlu0 %4678
  %4680 = vadd.xlane.f32.xlu0 %v4649
  %v4681 = vpop.xlane.xlu0 %4680
  %4682 = vadd.xlane.f32.xlu0 %v4651
  %v4683 = vpop.xlane.xlu0 %4682
  %4684 = vadd.xlane.f32.xlu0 %v4653
  %v4685 = vpop.xlane.xlu0 %4684
  %4686 = vadd.xlane.f32.xlu0 %v4655
  %v4687 = vpop.xlane.xlu0 %4686
  %4688 = vadd.xlane.f32.xlu0 %v4657
  %v4689 = vpop.xlane.xlu0 %4688
  %4690 = vadd.xlane.f32.xlu0 %v4659
  %v4691 = vpop.xlane.xlu0 %4690
  %4692 = vadd.xlane.f32.xlu0 %v4661
  %v4693 = vpop.xlane.xlu0 %4692
  %4694 = vadd.xlane.f32.xlu0 %v4663
  %v4695 = vpop.xlane.xlu0 %4694
  %v4696 = vrcp.pop %v4665
  %v4697 = vmul.f32 %v4633, %v4696
  %v4698 = vrcp.pop %v4667
  %v4699 = vmul.f32 %v4635, %v4698
  %v4700 = vrcp.pop %v4669
  %v4701 = vmul.f32 %v4637, %v4700
  %v4702 = vrcp.pop %v4671
  %v4703 = vmul.f32 %v4639, %v4702
  %v4704 = vrcp.pop %v4673
  %v4705 = vmul.f32 %v4641, %v4704
  %v4706 = vrcp.pop %v4675
  %v4707 = vmul.f32 %v4643, %v4706
  %v4708 = vrcp.pop %v4677
  %v4709 = vmul.f32 %v4645, %v4708
  %v4710 = vrcp.pop %v4679
  %v4711 = vmul.f32 %v4647, %v4710
  %v4712 = vrcp.pop %v4681
  %v4713 = vmul.f32 %v4649, %v4712
  %v4714 = vrcp.pop %v4683
  %v4715 = vmul.f32 %v4651, %v4714
  %v4716 = vrcp.pop %v4685
  %v4717 = vmul.f32 %v4653, %v4716
  %v4718 = vrcp.pop %v4687
  %v4719 = vmul.f32 %v4655, %v4718
  %v4720 = vrcp.pop %v4689
  %v4721 = vmul.f32 %v4657, %v4720
  %v4722 = vrcp.pop %v4691
  %v4723 = vmul.f32 %v4659, %v4722
  %v4724 = vrcp.pop %v4693
  %v4725 = vmul.f32 %v4661, %v4724
  %v4726 = vrcp.pop %v4695
  %v4727 = vmul.f32 %v4663, %v4726
  %4728 = vmatprep.subr.mxu0 0.0
  %4729 = vmatpush1.xpose.msra.mxu0 %v4697
  %4730 = vmatprep.subr.mxu0 0.0
  %4731 = vmatpush1.xpose.msra.mxu0 %v4699
  %4732 = vmatprep.subr.mxu0 0.0
  %4733 = vmatpush1.xpose.msra.mxu0 %v4701
  %4734 = vmatprep.subr.mxu0 0.0
  %4735 = vmatpush1.xpose.msra.mxu0 %v4703
  %4736 = vmatprep.subr.mxu0 0.0
  %4737 = vmatpush1.xpose.msra.mxu0 %v4705
  %4738 = vmatprep.subr.mxu0 0.0
  %4739 = vmatpush1.xpose.msra.mxu0 %v4707
  %4740 = vmatprep.subr.mxu0 0.0
  %4741 = vmatpush1.xpose.msra.mxu0 %v4709
  %4742 = vmatprep.subr.mxu0 0.0
  %4743 = vmatpush1.xpose.msra.mxu0 %v4711
  %4744 = vmatprep.subr.mxu0 0.0
  %4745 = vmatpush1.xpose.msra.mxu0 %v4713
  %4746 = vmatprep.subr.mxu0 0.0
  %4747 = vmatpush1.xpose.msra.mxu0 %v4715
  %4748 = vmatprep.subr.mxu0 0.0
  %4749 = vmatpush1.xpose.msra.mxu0 %v4717
  %4750 = vmatprep.subr.mxu0 0.0
  %4751 = vmatpush1.xpose.msra.mxu0 %v4719
  %4752 = vmatprep.subr.mxu0 0.0
  %4753 = vmatpush1.xpose.msra.mxu0 %v4721
  %4754 = vmatprep.subr.mxu0 0.0
  %4755 = vmatpush1.xpose.msra.mxu0 %v4723
  %4756 = vmatprep.subr.mxu0 0.0
  %4757 = vmatpush1.xpose.msra.mxu0 %v4725
  %4758 = vmatprep.subr.mxu0 0.0
  %4759 = vmatpush1.xpose.msra.mxu0 %v4727
  %4760 = vmatprep.subr.mxu0 0.0
  %4761 = vmatpush1.xpose.msra.mxu0 0.0
  %4762 = vmatprep.subr.mxu0 0.0
  %4763 = vmatpush1.xpose.msra.mxu0 0.0
  %4764 = vmatprep.subr.mxu0 0.0
  %4765 = vmatpush1.xpose.msra.mxu0 0.0
  %4766 = vmatprep.subr.mxu0 0.0
  %4767 = vmatpush1.xpose.msra.mxu0 0.0
  %4768 = vmatprep.subr.mxu0 0.0
  %4769 = vmatpush1.xpose.msra.mxu0 0.0
  %4770 = vmatprep.subr.mxu0 0.0
  %4771 = vmatpush1.xpose.msra.mxu0 0.0
  %4772 = vmatprep.subr.mxu0 0.0
  %4773 = vmatpush1.xpose.msra.mxu0 0.0
  %4774 = vmatprep.subr.mxu0 0.0
  %4775 = vmatpush1.xpose.msra.mxu0 0.0
  %4776 = vmatprep.subr.mxu0 0.0
  %4777 = vmatpush1.xpose.msra.mxu0 0.0
  %4778 = vmatprep.subr.mxu0 0.0
  %4779 = vmatpush1.xpose.msra.mxu0 0.0
  %4780 = vmatprep.subr.mxu0 0.0
  %4781 = vmatpush1.xpose.msra.mxu0 0.0
  %4782 = vmatprep.subr.mxu0 0.0
  %4783 = vmatpush1.xpose.msra.mxu0 0.0
  %4784 = vmatprep.subr.mxu0 0.0
  %4785 = vmatpush1.xpose.msra.mxu0 0.0
  %4786 = vmatprep.subr.mxu0 0.0
  %4787 = vmatpush1.xpose.msra.mxu0 0.0
  %4788 = vmatprep.subr.mxu0 0.0
  %4789 = vmatpush1.xpose.msra.mxu0 0.0
  %4790 = vmatprep.subr.mxu0 0.0
  %4791 = vmatpush1.xpose.msra.mxu0 0.0
  %4792 = vmatprep.mubr.f32.mxu0 0.0
  %4793 = vmatmul.mubr.f32.gmra.mrb[0].mxu0 %v2895
  %v4794 = vpop.f32.mrb[0].mxu0
  %v4795 = vadd.f32 0.0, %v4794
  %v4796 = vpop.f32.mrb[0].mxu0
  %4797 = vdwg.mxu0
  %v4798 = vld [vmem:[%s10] sm:$0xff]
  %v4799 = vld [vmem:[%s10 + $0x8] sm:$0xff]
  %v4800 = vld [vmem:[%s10 + $0x10] sm:$0xff]
  %v4801 = vld [vmem:[%s10 + $0x18] sm:$0xff]
  %v4802 = vmul.f32 %v3382, %v3382
  %v4803 = vmul.f32 %v3853, %v3853
  %v4804 = vmul.f32 %v4324, %v4324
  %v4805 = vmul.f32 %v4795, %v4795
  %v4806 = vmul.f32 %v3382, %v4802
  %v4807 = vmul.f32 %v3853, %v4803
  %v4808 = vmul.f32 %v4324, %v4804
  %v4809 = vmul.f32 %v4795, %v4805
  %v4810 = vmul.f32 %v4806, 0.044715
  %v4811 = vmul.f32 %v4807, 0.044715
  %v4812 = vmul.f32 %v4808, 0.044715
  %v4813 = vmul.f32 %v4809, 0.044715
  %v4814 = vadd.f32 %v3382, %v4810
  %v4815 = vadd.f32 %v3853, %v4811
  %v4816 = vadd.f32 %v4324, %v4812
  %v4817 = vadd.f32 %v4795, %v4813
  %v4818 = vmul.f32 %v4814, 0.7978846
  %v4819 = vmul.f32 %v4815, 0.7978846
  %v4820 = vmul.f32 %v4816, 0.7978846
  %v4821 = vmul.f32 %v4817, 0.7978846
  %v4822 = vtanh.pop %v4818
  %v4823 = vtanh.pop %v4819
  %v4824 = vtanh.pop %v4820
  %v4825 = vtanh.pop %v4821
  %v4826 = vadd.f32 %v4822, 1.0
  %v4827 = vadd.f32 %v4823, 1.0
  %v4828 = vadd.f32 %v4824, 1.0
  %v4829 = vadd.f32 %v4825, 1.0
  %v4830 = vmul.f32 %v4826, 0.5
  %v4831 = vmul.f32 %v4827, 0.5
  %v4832 = vmul.f32 %v4828, 0.5
  %v4833 = vmul.f32 %v4829, 0.5
  %v4834 = vmul.f32 %v3382, %v4830
  %v4835 = vmul.f32 %v3853, %v4831
  %v4836 = vmul.f32 %v4324, %v4832
  %v4837 = vmul.f32 %v4795, %v4833
  %4839 = vset.pattern.permute.xlu0 0
  %4840 = vperm.xlu0 %4839, %v82
  %v4841 = vpop.permute.xlu0 %4840
  %4844 = vset.pattern.permute.xlu0 0
  %4845 = vperm.xlu0 %4844, %v83
  %v4846 = vpop.permute.xlu0 %4845
  %4849 = vset.pattern.permute.xlu0 0
  %4850 = vperm.xlu0 %4849, %v84
  %v4851 = vpop.permute.xlu0 %4850
  %4854 = vset.pattern.permute.xlu0 0
  %4855 = vperm.xlu0 %4854, %v85
  %v4856 = vpop.permute.xlu0 %4855
  %v4859 = vsel %vm405, %v4798, 0
  %v4862 = vsel %vm405, %v4799, 0
  %v4865 = vsel %vm405, %v4800, 0
  %v4868 = vsel %vm405, %v4801, 0
  %4870 = vmatprep.subr.mxu0 0.0
  %4871 = vmatpush1.msra.mxu0 %v4834
  %4872 = vmatprep.subr.mxu0 0.0
  %4873 = vmatpush1.msra.mxu0 %v4835
  %4874 = vmatprep.subr.mxu0 0.0
  %4875 = vmatpush1.msra.mxu0 %v4836
  %4876 = vmatprep.subr.mxu0 0.0
  %4877 = vmatpush1.msra.mxu0 %v4837
  %4878 = vmatprep.subr.mxu0 0.0
  %4879 = vmatpush1.msra.mxu0 0.0
  %4880 = vmatprep.subr.mxu0 0.0
  %4881 = vmatpush1.msra.mxu0 0.0
  %4882 = vmatprep.subr.mxu0 0.0
  %4883 = vmatpush1.msra.mxu0 0.0
  %4884 = vmatprep.subr.mxu0 0.0
  %4885 = vmatpush1.msra.mxu0 0.0
  %4886 = vmatprep.subr.mxu0 0.0
  %4887 = vmatpush1.msra.mxu0 0.0
  %4888 = vmatprep.subr.mxu0 0.0
  %4889 = vmatpush1.msra.mxu0 0.0
  %4890 = vmatprep.subr.mxu0 0.0
  %4891 = vmatpush1.msra.mxu0 0.0
  %4892 = vmatprep.subr.mxu0 0.0
  %4893 = vmatpush1.msra.mxu0 0.0
  %4894 = vmatprep.subr.mxu0 0.0
  %4895 = vmatpush1.msra.mxu0 0.0
  %4896 = vmatprep.subr.mxu0 0.0
  %4897 = vmatpush1.msra.mxu0 0.0
  %4898 = vmatprep.subr.mxu0 0.0
  %4899 = vmatpush1.msra.mxu0 0.0
  %4900 = vmatprep.subr.mxu0 0.0
  %4901 = vmatpush1.msra.mxu0 0.0
  %4902 = vmatprep.subr.mxu0 0.0
  %4903 = vmatpush1.msra.mxu0 0.0
  %4904 = vmatprep.subr.mxu0 0.0
  %4905 = vmatpush1.msra.mxu0 0.0
  %4906 = vmatprep.subr.mxu0 0.0
  %4907 = vmatpush1.msra.mxu0 0.0
  %4908 = vmatprep.subr.mxu0 0.0
  %4909 = vmatpush1.msra.mxu0 0.0
  %4910 = vmatprep.subr.mxu0 0.0
  %4911 = vmatpush1.msra.mxu0 0.0
  %4912 = vmatprep.subr.mxu0 0.0
  %4913 = vmatpush1.msra.mxu0 0.0
  %4914 = vmatprep.subr.mxu0 0.0
  %4915 = vmatpush1.msra.mxu0 0.0
  %4916 = vmatprep.subr.mxu0 0.0
  %4917 = vmatpush1.msra.mxu0 0.0
  %4918 = vmatprep.subr.mxu0 0.0
  %4919 = vmatpush1.msra.mxu0 0.0
  %4920 = vmatprep.subr.mxu0 0.0
  %4921 = vmatpush1.msra.mxu0 0.0
  %4922 = vmatprep.subr.mxu0 0.0
  %4923 = vmatpush1.msra.mxu0 0.0
  %4924 = vmatprep.subr.mxu0 0.0
  %4925 = vmatpush1.msra.mxu0 0.0
  %4926 = vmatprep.subr.mxu0 0.0
  %4927 = vmatpush1.msra.mxu0 0.0
  %4928 = vmatprep.subr.mxu0 0.0
  %4929 = vmatpush1.msra.mxu0 0.0
  %4930 = vmatprep.subr.mxu0 0.0
  %4931 = vmatpush1.msra.mxu0 0.0
  %4932 = vmatprep.subr.mxu0 0.0
  %4933 = vmatpush1.msra.mxu0 0.0
  %4934 = vmatprep.mubr.f32.mxu0 0.0
  %4935 = vmatmul.mubr.f32.gmra.mrb[0].mxu0 %v4859
  %v4936 = vpop.f32.mrb[0].mxu0
  %v4937 = vadd.f32 %v4841, %v4936
  %v4938 = vpop.f32.mrb[0].mxu0
  %4939 = vmatprep.mubr.f32.mxu0 0.0
  %4940 = vmatmul.mubr.f32.gmra.mrb[0].mxu0 %v4862
  %v4941 = vpop.f32.mrb[0].mxu0
  %v4942 = vadd.f32 %v4846, %v4941
  %v4943 = vpop.f32.mrb[0].mxu0
  %4944 = vmatprep.mubr.f32.mxu0 0.0
  %4945 = vmatmul.mubr.f32.gmra.mrb[0].mxu0 %v4865
  %v4946 = vpop.f32.mrb[0].mxu0
  %v4947 = vadd.f32 %v4851, %v4946
  %v4948 = vpop.f32.mrb[0].mxu0
  %4949 = vmatprep.mubr.f32.mxu0 0.0
  %4950 = vmatmul.mubr.f32.gmra.mrb[0].mxu0 %v4868
  %v4951 = vpop.f32.mrb[0].mxu0
  %v4952 = vadd.f32 %v4856, %v4951
  %v4953 = vpop.f32.mrb[0].mxu0
  %4954 = vdwg.mxu0
  %v4955 = vmul.f32 %v4937, %v295
  %v4956 = vmul.f32 %v4942, %v295
  %v4957 = vmul.f32 %v4947, %v295
  %v4958 = vmul.f32 %v4952, %v295
  %v4959 = vadd.f32 %v2629, %v4955
  %v4960 = vadd.f32 %v2630, %v4956
  %v4961 = vadd.f32 %v2631, %v4957
  %v4962 = vadd.f32 %v2632, %v4958
  %v4963 = vld [vmem:[%s11] sm:$0xff]
  %v4964 = vld [vmem:[%s11 + $0x8] sm:$0xff]
  %v4965 = vld [vmem:[%s11 + $0x10] sm:$0xff]
  %v4966 = vld [vmem:[%s11 + $0x18] sm:$0xff]
  %4968 = vset.pattern.permute.xlu0 0
  %4969 = vperm.xlu0 %4968, %v86
  %v4970 = vpop.permute.xlu0 %4969
  %4973 = vset.pattern.permute.xlu0 0
  %4974 = vperm.xlu0 %4973, %v87
  %v4975 = vpop.permute.xlu0 %4974
  %4978 = vset.pattern.permute.xlu0 0
  %4979 = vperm.xlu0 %4978, %v88
  %v4980 = vpop.permute.xlu0 %4979
  %4983 = vset.pattern.permute.xlu0 0
  %4984 = vperm.xlu0 %4983, %v89
  %v4985 = vpop.permute.xlu0 %4984
  %v4988 = vsel %vm405, %v4963, 0
  %v4991 = vsel %vm405, %v4964, 0
  %v4994 = vsel %vm405, %v4965, 0
  %v4997 = vsel %vm405, %v4966, 0
  %4999 = vmatprep.subr.mxu0 0.0
  %5000 = vmatpush1.msra.mxu0 %v4959
  %5001 = vmatprep.subr.mxu0 0.0
  %5002 = vmatpush1.msra.mxu0 %v4960
  %5003 = vmatprep.subr.mxu0 0.0
  %5004 = vmatpush1.msra.mxu0 %v4961
  %5005 = vmatprep.subr.mxu0 0.0
  %5006 = vmatpush1.msra.mxu0 %v4962
  %5007 = vmatprep.subr.mxu0 0.0
  %5008 = vmatpush1.msra.mxu0 0.0
  %5009 = vmatprep.subr.mxu0 0.0
  %5010 = vmatpush1.msra.mxu0 0.0
  %5011 = vmatprep.subr.mxu0 0.0
  %5012 = vmatpush1.msra.mxu0 0.0
  %5013 = vmatprep.subr.mxu0 0.0
  %5014 = vmatpush1.msra.mxu0 0.0
  %5015 = vmatprep.subr.mxu0 0.0
  %5016 = vmatpush1.msra.mxu0 0.0
  %5017 = vmatprep.subr.mxu0 0.0
  %5018 = vmatpush1.msra.mxu0 0.0
  %5019 = vmatprep.subr.mxu0 0.0
  %5020 = vmatpush1.msra.mxu0 0.0
  %5021 = vmatprep.subr.mxu0 0.0
  %5022 = vmatpush1.msra.mxu0 0.0
  %5023 = vmatprep.subr.mxu0 0.0
  %5024 = vmatpush1.msra.mxu0 0.0
  %5025 = vmatprep.subr.mxu0 0.0
  %5026 = vmatpush1.msra.mxu0 0.0
  %5027 = vmatprep.subr.mxu0 0.0
  %5028 = vmatpush1.msra.mxu0 0.0
  %5029 = vmatprep.subr.mxu0 0.0
  %5030 = vmatpush1.msra.mxu0 0.0
  %5031 = vmatprep.subr.mxu0 0.0
  %5032 = vmatpush1.msra.mxu0 0.0
  %5033 = vmatprep.subr.mxu0 0.0
  %5034 = vmatpush1.msra.mxu0 0.0
  %5035 = vmatprep.subr.mxu0 0.0
  %5036 = vmatpush1.msra.mxu0 0.0
  %5037 = vmatprep.subr.mxu0 0.0
  %5038 = vmatpush1.msra.mxu0 0.0
  %5039 = vmatprep.subr.mxu0 0.0
  %5040 = vmatpush1.msra.mxu0 0.0
  %5041 = vmatprep.subr.mxu0 0.0
  %5042 = vmatpush1.msra.mxu0 0.0
  %5043 = vmatprep.subr.mxu0 0.0
  %5044 = vmatpush1.msra.mxu0 0.0
  %5045 = vmatprep.subr.mxu0 0.0
  %5046 = vmatpush1.msra.mxu0 0.0
  %5047 = vmatprep.subr.mxu0 0.0
  %5048 = vmatpush1.msra.mxu0 0.0
  %5049 = vmatprep.subr.mxu0 0.0
  %5050 = vmatpush1.msra.mxu0 0.0
  %5051 = vmatprep.subr.mxu0 0.0
  %5052 = vmatpush1.msra.mxu0 0.0
  %5053 = vmatprep.subr.mxu0 0.0
  %5054 = vmatpush1.msra.mxu0 0.0
  %5055 = vmatprep.subr.mxu0 0.0
  %5056 = vmatpush1.msra.mxu0 0.0
  %5057 = vmatprep.subr.mxu0 0.0
  %5058 = vmatpush1.msra.mxu0 0.0
  %5059 = vmatprep.subr.mxu0 0.0
  %5060 = vmatpush1.msra.mxu0 0.0
  %5061 = vmatprep.subr.mxu0 0.0
  %5062 = vmatpush1.msra.mxu0 0.0
  %5063 = vmatprep.mubr.f32.mxu0 0.0
  %5064 = vmatmul.mubr.f32.gmra.mrb[0].mxu0 %v4988
  %v5065 = vpop.f32.mrb[0].mxu0
  %v5066 = vadd.f32 %v4970, %v5065
  %v5067 = vpop.f32.mrb[0].mxu0
  %5068 = vmatprep.mubr.f32.mxu0 0.0
  %5069 = vmatmul.mubr.f32.gmra.mrb[0].mxu0 %v4991
  %v5070 = vpop.f32.mrb[0].mxu0
  %v5071 = vadd.f32 %v4975, %v5070
  %v5072 = vpop.f32.mrb[0].mxu0
  %5073 = vmatprep.mubr.f32.mxu0 0.0
  %5074 = vmatmul.mubr.f32.gmra.mrb[0].mxu0 %v4994
  %v5075 = vpop.f32.mrb[0].mxu0
  %v5076 = vadd.f32 %v4980, %v5075
  %v5077 = vpop.f32.mrb[0].mxu0
  %5078 = vmatprep.mubr.f32.mxu0 0.0
  %5079 = vmatmul.mubr.f32.gmra.mrb[0].mxu0 %v4997
  %v5080 = vpop.f32.mrb[0].mxu0
  %v5081 = vadd.f32 %v4985, %v5080
  %v5082 = vpop.f32.mrb[0].mxu0
  %5083 = vdwg.mxu0
  %v5084 = vadd.f32 %v5066, %v91
  %v5085 = vadd.f32 %v5071, %v92
  %v5086 = vadd.f32 %v5076, %v93
  %v5087 = vadd.f32 %v5081, %v94
  %v5088 = vmul.f32 %v5084, %v295
  %v5089 = vmul.f32 %v5085, %v295
  %v5090 = vmul.f32 %v5086, %v295
  %v5091 = vmul.f32 %v5087, %v295
  %5092 = vst [vmem:[%s14] sm:$0xff] %v5088
  %5093 = vst [vmem:[%s14 + $0x8] sm:$0xff] %v5089
  %5094 = vst [vmem:[%s14 + $0x10] sm:$0xff] %v5090
  %5095 = vst [vmem:[%s14 + $0x18] sm:$0xff] %v5091
  %v5096 = vld [vmem:[%s12] sm:$0xff]
  %5098 = vset.pattern.permute.xlu0 0
  %5099 = vperm.xlu0 %5098, %v90
  %v5100 = vpop.permute.xlu0 %5099
  %v5103 = vsel %vm405, %v5096, 0
  %5105 = vmatprep.subr.mxu0 0.0
  %5106 = vmatpush1.msra.mxu0 %v5088
  %5107 = vmatprep.subr.mxu0 0.0
  %5108 = vmatpush1.msra.mxu0 %v5089
  %5109 = vmatprep.subr.mxu0 0.0
  %5110 = vmatpush1.msra.mxu0 %v5090
  %5111 = vmatprep.subr.mxu0 0.0
  %5112 = vmatpush1.msra.mxu0 %v5091
  %5113 = vmatprep.subr.mxu0 0.0
  %5114 = vmatpush1.msra.mxu0 0.0
  %5115 = vmatprep.subr.mxu0 0.0
  %5116 = vmatpush1.msra.mxu0 0.0
  %5117 = vmatprep.subr.mxu0 0.0
  %5118 = vmatpush1.msra.mxu0 0.0
  %5119 = vmatprep.subr.mxu0 0.0
  %5120 = vmatpush1.msra.mxu0 0.0
  %5121 = vmatprep.subr.mxu0 0.0
  %5122 = vmatpush1.msra.mxu0 0.0
  %5123 = vmatprep.subr.mxu0 0.0
  %5124 = vmatpush1.msra.mxu0 0.0
  %5125 = vmatprep.subr.mxu0 0.0
  %5126 = vmatpush1.msra.mxu0 0.0
  %5127 = vmatprep.subr.mxu0 0.0
  %5128 = vmatpush1.msra.mxu0 0.0
  %5129 = vmatprep.subr.mxu0 0.0
  %5130 = vmatpush1.msra.mxu0 0.0
  %5131 = vmatprep.subr.mxu0 0.0
  %5132 = vmatpush1.msra.mxu0 0.0
  %5133 = vmatprep.subr.mxu0 0.0
  %5134 = vmatpush1.msra.mxu0 0.0
  %5135 = vmatprep.subr.mxu0 0.0
  %5136 = vmatpush1.msra.mxu0 0.0
  %5137 = vmatprep.subr.mxu0 0.0
  %5138 = vmatpush1.msra.mxu0 0.0
  %5139 = vmatprep.subr.mxu0 0.0
  %5140 = vmatpush1.msra.mxu0 0.0
  %5141 = vmatprep.subr.mxu0 0.0
  %5142 = vmatpush1.msra.mxu0 0.0
  %5143 = vmatprep.subr.mxu0 0.0
  %5144 = vmatpush1.msra.mxu0 0.0
  %5145 = vmatprep.subr.mxu0 0.0
  %5146 = vmatpush1.msra.mxu0 0.0
  %5147 = vmatprep.subr.mxu0 0.0
  %5148 = vmatpush1.msra.mxu0 0.0
  %5149 = vmatprep.subr.mxu0 0.0
  %5150 = vmatpush1.msra.mxu0 0.0
  %5151 = vmatprep.subr.mxu0 0.0
  %5152 = vmatpush1.msra.mxu0 0.0
  %5153 = vmatprep.subr.mxu0 0.0
  %5154 = vmatpush1.msra.mxu0 0.0
  %5155 = vmatprep.subr.mxu0 0.0
  %5156 = vmatpush1.msra.mxu0 0.0
  %5157 = vmatprep.subr.mxu0 0.0
  %5158 = vmatpush1.msra.mxu0 0.0
  %5159 = vmatprep.subr.mxu0 0.0
  %5160 = vmatpush1.msra.mxu0 0.0
  %5161 = vmatprep.subr.mxu0 0.0
  %5162 = vmatpush1.msra.mxu0 0.0
  %5163 = vmatprep.subr.mxu0 0.0
  %5164 = vmatpush1.msra.mxu0 0.0
  %5165 = vmatprep.subr.mxu0 0.0
  %5166 = vmatpush1.msra.mxu0 0.0
  %5167 = vmatprep.subr.mxu0 0.0
  %5168 = vmatpush1.msra.mxu0 0.0
  %5169 = vmatprep.mubr.f32.mxu0 0.0
  %5170 = vmatmul.mubr.f32.gmra.mrb[0].mxu0 %v5103
  %v5171 = vpop.f32.mrb[0].mxu0
  %v5172 = vadd.f32 %v5100, %v5171
  %v5173 = vpop.f32.mrb[0].mxu0
  %5174 = vdwg.mxu0
  %v5175 = vmul.f32 %v5172, %v295
  %5176 = vst [vmem:[%s15] sm:$0xff] %v5175
  // Predicated region
  $region58: #{_lambda_.3} parent=0 // pred_check
    _
  $region59: #{_lambda_.3} parent=0 // pred_check_branch
    %5178 = sbr.rel (0) target = $region61
  $region60: #{_lambda_.3} parent=0 // pred_region
    _
  $region61: #{_lambda_.3} parent=0 // pred_fallthru
    _
  // Predicated region
  $region62: #{_lambda_.3} parent=0 // pred_check
    _
  $region63: #{_lambda_.3} parent=0 // pred_check_branch
    %5180 = sbr.rel (0) target = $region65
  $region64: #{_lambda_.3} parent=0 // pred_region
    _
  $region65: #{_lambda_.3} parent=0 // pred_fallthru
    _
  // Predicated region
  $region66: #{_lambda_.3} parent=0 // pred_check
    _
  $region67: #{_lambda_.3} parent=0 // pred_check_branch
    %5182 = sbr.rel (0) target = $region69
  $region68: #{_lambda_.3} parent=0 // pred_region
    _
  $region69: #{_lambda_.3} parent=0 // pred_fallthru
    _
  // Predicated region
  $region70: #{_lambda_.3} parent=0 // pred_check
    _
  $region71: #{_lambda_.3} parent=0 // pred_check_branch
    %5184 = sbr.rel (0) target = $region73
  $region72: #{_lambda_.3} parent=0 // pred_region
    _
  $region73: #{_lambda_.3} parent=0 // pred_fallthru
    _

</llo_original>
